<compile_context>
chip_gen: v7x
topology: tpu7x:2x2x1
jax: 0.10.0
libtpu: 0.0.40
codegen_flags: <defaults>
</compile_context>

<pallas_src>
import functools

import numpy as np
import jax
import jax.numpy as jnp
from jax.experimental import pallas as pl
from jax.experimental.pallas import tpu as pltpu

BN_EPS = 1e-5


def _round_up(x, m):
    return (x + m - 1) // m * m


def _choose_tm(m):
    """Row-tile: one whole-M step for small M (grid is a serial loop on 1-TC
    chips); 2-way split only when M >= 256 so v7x megacore has work to share."""
    if m >= 256:
        return _round_up((m + 1) // 2, 16)
    return _round_up(m, 16)


# ----------------------------- Pallas kernel ----------------------------------

def _mm_affine_kernel(a_ref, w_ref, shift_ref, *rest, act, has_res, relu_cols):
    """act((A @ W) + shift [+ residual]) — bf16 MXU, f32 epilogue, bf16/f32 store.
    BN scale is pre-folded into W; `relu_cols` limits ReLU to the first lanes
    (used when two convs with different activations share one call)."""
    if has_res:
        res_ref, o_ref = rest
    else:
        (o_ref,) = rest
    a = a_ref[...].astype(jnp.bfloat16)                    # no-op for bf16 inputs
    acc = jnp.dot(a, w_ref[...], preferred_element_type=jnp.float32)
    y = acc + shift_ref[...]                               # f32 epilogue (v5e-safe)
    if has_res:
        y = y + res_ref[...].astype(jnp.float32)           # fused residual add
    if act == "relu":
        r = jnp.maximum(y, 0.0)
        if relu_cols is None:
            y = r
        else:
            col = jax.lax.broadcasted_iota(jnp.int32, y.shape, 1)
            y = jnp.where(col < relu_cols, r, y)           # partial-lane ReLU
    elif act == "sigmoid":
        y = pl.reciprocal(1.0 + jnp.exp(-y), approx=True)  # EUP exp + rcp
    o_ref[...] = y.astype(o_ref.dtype)


def matmul_affine(a, pc, act="none", residual=None, out_dtype=jnp.bfloat16):
    """Fused conv matmul. a:(M, Kp), pc: packed conv dict. Returns (M, cout)."""
    m, kp = a.shape
    w, shift = pc["w"], pc["shift"]
    np_ = w.shape[1]
    tm = _choose_tm(m)
    mp = _round_up(m, tm)
    if mp > m:
        a = jnp.pad(a, ((0, mp - m), (0, 0)))
    has_res = residual is not None
    inputs = [a, w, shift]
    in_specs = [
        pl.BlockSpec((tm, kp), lambda i: (i, 0)),
        pl.BlockSpec((kp, np_), lambda i: (0, 0)),
        pl.BlockSpec((1, np_), lambda i: (0, 0)),
    ]
    if has_res:
        r = residual
        if r.shape[1] < np_:
            r = jnp.pad(r, ((0, 0), (0, np_ - r.shape[1])))
        if mp > m:
            r = jnp.pad(r, ((0, mp - m), (0, 0)))
        inputs.append(r)
        in_specs.append(pl.BlockSpec((tm, np_), lambda i: (i, 0)))
    out = pl.pallas_call(
        functools.partial(_mm_affine_kernel, act=act, has_res=has_res,
                          relu_cols=pc.get("relu_cols")),
        out_shape=jax.ShapeDtypeStruct((mp, np_), out_dtype),
        grid=(mp // tm,),
        in_specs=in_specs,
        out_specs=pl.BlockSpec((tm, np_), lambda i: (i, 0)),
        compiler_params=pltpu.CompilerParams(dimension_semantics=("parallel",)),
    )(*inputs)
    return out[:m, :pc["cout"]]


# --------------------------- conv lowering (glue) ------------------------------

def _im2col_nhwc(x, kh, kw, stride, padding, kp):
    n, h, w, c = x.shape
    if padding:
        x = jnp.pad(x, ((0, 0), (padding, padding), (padding, padding), (0, 0)))
    ho = (h + 2 * padding - kh) // stride + 1
    wo = (w + 2 * padding - kw) // stride + 1
    cols = []
    for dy in range(kh):
        for dx in range(kw):
            cols.append(x[:, dy:dy + (ho - 1) * stride + 1:stride,
                          dx:dx + (wo - 1) * stride + 1:stride, :])
    k = kh * kw * c
    if kp > k:
        cols.append(jnp.zeros((n, ho, wo, kp - k), x.dtype))
    a = jnp.concatenate(cols, axis=-1).reshape(n * ho * wo, kp)
    return a, ho, wo


def conv2d_p(x, pc, stride, padding, act, residual=None, out_dtype=jnp.bfloat16):
    """NHWC conv with pre-packed weights; affine/act/residual fused in-kernel."""
    n, h, w, c = x.shape
    kh, kw = pc["kh"], pc["kw"]
    kp = pc["w"].shape[0]
    if kh == 1 and kw == 1 and padding == 0:
        xs = x if stride == 1 else x[:, ::stride, ::stride, :]
        ho, wo = xs.shape[1], xs.shape[2]
        a = xs.reshape(n * ho * wo, c)
        if kp > c:
            a = jnp.pad(a, ((0, 0), (0, kp - c)))
    else:
        a, ho, wo = _im2col_nhwc(x, kh, kw, stride, padding, kp)
    out = matmul_affine(a, pc, act=act, residual=residual, out_dtype=out_dtype)
    return out.reshape(n, ho, wo, pc["cout"])


def conv_transpose_s2(x, pc, act, out_dtype=jnp.bfloat16):
    """ConvTranspose2d(k=4, s=2, p=1) as ONE fused call: 3x3/stride-1 patch
    matrix of the pad-1 input against a (9*cin, 4*cout) parity-packed weight,
    then a pixel-shuffle of the 4 parity column groups."""
    n, h, w, c = x.shape
    kp = pc["w"].shape[0]
    a, _, _ = _im2col_nhwc(x, 3, 3, 1, 1, kp)
    o = matmul_affine(a, pc, act=act, out_dtype=out_dtype)
    cs = pc["cout_sub"]
    o = o.reshape(n, h, w, 2, 2, cs).transpose(0, 1, 3, 2, 4, 5)
    return o.reshape(n, 2 * h, 2 * w, cs)


def maxpool3x3_s2_p1(x):
    """3x3 / stride-2 / pad-1 maxpool as a single XLA reduce_window op.
    TODO(synk): fold into the consumer conv's tap loop once the in-kernel tap
    accumulation exists."""
    return jax.lax.reduce_window(
        x, jnp.array(-jnp.inf, dtype=x.dtype), jax.lax.max,
        window_dimensions=(1, 3, 3, 1), window_strides=(1, 2, 2, 1),
        padding=((0, 0), (1, 1), (1, 1), (0, 0)))


# -------------------------- one-time weight packing ----------------------------

def _fuse_bn(bn, bias=None):
    gamma, beta, mean, var = bn
    scale = gamma / jnp.sqrt(var + BN_EPS)
    b = bias if bias is not None else 0.0
    shift = beta + (b - mean) * scale
    return scale, shift


def _pack(wmat, cout, scale, shift):
    """Fold the per-channel scale into the bf16 weight; keep only shift."""
    k = wmat.shape[0]
    kp = _round_up(k, 128)                      # lane-aligned A loads
    np_ = max(128, _round_up(cout, 128))        # lane-dense output stores
    wmat = wmat * scale[None, :]
    w_p = jnp.zeros((kp, np_), jnp.bfloat16).at[:k, :cout].set(
        wmat.astype(jnp.bfloat16))
    sh = jnp.zeros((1, np_), jnp.float32).at[0, :cout].set(shift)
    return {"w": w_p, "shift": sh, "cout": int(cout)}


def pack_conv(w, bn=None, bias=None):
    """PyTorch Conv2d weight (Cout, Cin, kh, kw) -> (K, Np) bf16 + fused shift."""
    cout, cin, kh, kw = w.shape
    if bn is not None:
        scale, shift = _fuse_bn(bn, bias)
    else:
        scale = jnp.ones((cout,), jnp.float32)
        shift = bias if bias is not None else jnp.zeros((cout,), jnp.float32)
    wmat = w.transpose(2, 3, 1, 0).reshape(kh * kw * cin, cout)   # (dy,dx,c)-major
    pc = _pack(wmat, cout, scale, shift)
    pc.update(kh=int(kh), kw=int(kw))
    return pc


def pack_conv_pair(w1, bn1, wd, bnd):
    """3x3/s2 conv1 and its 1x1/s2 downsample share one im2col A: pack both
    weights side-by-side along N (downsample uses only the centre tap) and run
    them in one pallas_call with ReLU restricted to the conv1 lane group."""
    cout1, cin, kh, kw = w1.shape
    coutd = wd.shape[0]
    s1, sh1 = _fuse_bn(bn1)
    sd, shd = _fuse_bn(bnd)
    wmat1 = w1.transpose(2, 3, 1, 0).reshape(kh * kw * cin, cout1)
    wmatd = jnp.zeros((kh * kw * cin, coutd), jnp.float32)
    centre = (kh // 2) * kw + (kw // 2)
    wmatd = wmatd.at[centre * cin:(centre + 1) * cin, :].set(wd[:, :, 0, 0].T)
    wmat = jnp.concatenate([wmat1, wmatd], axis=1)
    scale = jnp.concatenate([s1, sd])
    shift = jnp.concatenate([sh1, shd])
    pc = _pack(wmat, cout1 + coutd, scale, shift)
    pc.update(kh=int(kh), kw=int(kw), relu_cols=int(cout1), cout1=int(cout1))
    return pc


def pack_convt_1x1(w_t, bn=None, bias=None):
    """ConvTranspose2d k=1/s=1/p=0 == 1x1 conv with transposed weight."""
    return pack_conv(w_t.transpose(1, 0, 2, 3), bn=bn, bias=bias)


def pack_convt_s2(w_t, bn=None, bias=None):
    """ConvTranspose2d k=4/s=2/p=1 -> (9*cin, 4*cout) parity-packed weight for
    the fused sub-pixel matmul (output column group (a,b) = output parity)."""
    cin, cout, kh, kw = w_t.shape
    assert kh == 4 and kw == 4
    if bn is not None:
        scale, shift = _fuse_bn(bn, bias)
    else:
        scale = jnp.ones((cout,), jnp.float32)
        shift = bias if bias is not None else jnp.zeros((cout,), jnp.float32)
    wmat = jnp.zeros((9 * cin, 4 * cout), jnp.float32)
    for oy in range(3):
        for ox in range(3):
            for a in (0, 1):
                for b in (0, 1):
                    dy, dx = oy - a, ox - b
                    if dy in (0, 1) and dx in (0, 1):
                        blk = w_t[:, :, 3 - a - 2 * dy, 3 - b - 2 * dx]
                        wmat = wmat.at[
                            (oy * 3 + ox) * cin:(oy * 3 + ox + 1) * cin,
                            (a * 2 + b) * cout:(a * 2 + b + 1) * cout].set(blk)
    pc = _pack(wmat, 4 * cout, jnp.tile(scale, 4), jnp.tile(shift, 4))
    pc.update(kh=3, kw=3, cout_sub=int(cout))
    return pc


# ------------------------------ raw parameters ---------------------------------

def _conv_w(key, cout, cin, k):
    fan_in = cin * k * k
    return jax.random.normal(key, (cout, cin, k, k), jnp.float32) / np.sqrt(fan_in)


def _convt_w(key, cin, cout, k):
    fan_in = cin * k * k
    return jax.random.normal(key, (cin, cout, k, k), jnp.float32) / np.sqrt(fan_in)


def _bn(key, c):
    k1, k2, k3, k4 = jax.random.split(key, 4)
    gamma = 1.0 + 0.1 * jax.random.normal(k1, (c,), jnp.float32)
    beta = 0.1 * jax.random.normal(k2, (c,), jnp.float32)
    mean = 0.1 * jax.random.normal(k3, (c,), jnp.float32)
    var = 1.0 + jax.random.uniform(k4, (c,), jnp.float32)
    return (gamma, beta, mean, var)


def init_params(key, nb_channels, z_dim, exit_ch):
    keys = iter(jax.random.split(key, 128))
    p = {}
    # resnet_entry: Conv2d(nb_channels, 64, 7, 2, 3, bias=False) + BN + ReLU + maxpool
    p["entry_w"] = _conv_w(next(keys), 64, nb_channels, 7)
    p["entry_bn"] = _bn(next(keys), 64)
    # resnet34 layer1: 3 BasicBlocks (64 -> 64)
    p["layer1"] = [{
        "w1": _conv_w(next(keys), 64, 64, 3), "bn1": _bn(next(keys), 64),
        "w2": _conv_w(next(keys), 64, 64, 3), "bn2": _bn(next(keys), 64),
    } for _ in range(3)]
    # resnet34 layer2: 4 BasicBlocks (64 -> 128, first block stride 2 + downsample)
    layer2 = []
    for b in range(4):
        cin = 64 if b == 0 else 128
        blk = {
            "w1": _conv_w(next(keys), 128, cin, 3), "bn1": _bn(next(keys), 128),
            "w2": _conv_w(next(keys), 128, 128, 3), "bn2": _bn(next(keys), 128),
        }
        if b == 0:
            blk["wd"] = _conv_w(next(keys), 128, 64, 1)
            blk["bnd"] = _bn(next(keys), 128)
        layer2.append(blk)
    p["layer2"] = layer2
    # final_encoder: Conv2d(128, 2*z_dim, 1) with bias
    p["fe_w"] = _conv_w(next(keys), 2 * z_dim, 128, 1)
    p["fe_b"] = 0.01 * jax.random.normal(next(keys), (2 * z_dim,), jnp.float32)
    # initial_decoder: ConvTranspose2d(z_dim, 128, 1) + BN + ReLU
    p["id_wt"] = _convt_w(next(keys), z_dim, 128, 1)
    p["id_b"] = 0.01 * jax.random.normal(next(keys), (128,), jnp.float32)
    p["id_bn"] = _bn(next(keys), 128)
    # conv_decoder: ConvT(128->64)+BN+ReLU, ConvT(64->32)+BN+ReLU, ConvT(32->exit)
    p["d2_wt"] = _convt_w(next(keys), 128, 64, 4)
    p["d2_b"] = 0.01 * jax.random.normal(next(keys), (64,), jnp.float32)
    p["d2_bn"] = _bn(next(keys), 64)
    p["d1_wt"] = _convt_w(next(keys), 64, 32, 4)
    p["d1_b"] = 0.01 * jax.random.normal(next(keys), (32,), jnp.float32)
    p["d1_bn"] = _bn(next(keys), 32)
    p["d0_wt"] = _convt_w(next(keys), 32, exit_ch, 4)
    p["d0_b"] = 0.01 * jax.random.normal(next(keys), (exit_ch,), jnp.float32)
    return p


def prepare_params(p):
    """One-time packing: (K, Np) bf16 weights (BN scale folded in), lane/K
    padding, single shift vector per matmul, parity fusion for the decoder."""
    pk = {
        "entry": pack_conv(p["entry_w"], bn=p["entry_bn"]),
        "layer1": [{"c1": pack_conv(b["w1"], bn=b["bn1"]),
                    "c2": pack_conv(b["w2"], bn=b["bn2"])} for b in p["layer1"]],
        "layer2": [],
        "fe": pack_conv(p["fe_w"], bias=p["fe_b"]),
        "id": pack_convt_1x1(p["id_wt"], bn=p["id_bn"], bias=p["id_b"]),
        "d2": pack_convt_s2(p["d2_wt"], bn=p["d2_bn"], bias=p["d2_b"]),
        "d1": pack_convt_s2(p["d1_wt"], bn=p["d1_bn"], bias=p["d1_b"]),
        "d0": pack_convt_s2(p["d0_wt"], bias=p["d0_b"]),
    }
    for b in p["layer2"]:
        blk = {"c2": pack_conv(b["w2"], bn=b["bn2"])}
        if "wd" in b:
            blk["c1d"] = pack_conv_pair(b["w1"], b["bn1"], b["wd"], b["bnd"])
        else:
            blk["c1"] = pack_conv(b["w1"], bn=b["bn1"])
        pk["layer2"].append(blk)
    return pk


# --------------------------------- forward -------------------------------------

def _basic_block(x, blk, stride):
    n = x.shape[0]
    if "c1d" in blk:
        # conv1 + downsample fused in one call; split the lane groups after.
        both = conv2d_p(x, blk["c1d"], stride=stride, padding=1, act="relu")
        c1 = blk["c1d"]["cout1"]
        out1, identity = both[..., :c1], both[..., c1:]
    else:
        out1 = conv2d_p(x, blk["c1"], stride=stride, padding=1, act="relu")
        identity = x
    ho, wo, cid = identity.shape[1], identity.shape[2], identity.shape[3]
    res = identity.reshape(n * ho * wo, cid)
    # residual add + final ReLU fused into the second conv's matmul epilogue
    return conv2d_p(out1, blk["c2"], stride=1, padding=1, act="relu", residual=res)


def ss_cvae_forward_nhwc(pk, x, z_dim):
    x = x.astype(jnp.bfloat16)                   # bf16 activations everywhere
    # ---- encoder ----
    h = conv2d_p(x, pk["entry"], stride=2, padding=3, act="relu")
    h = maxpool3x3_s2_p1(h)
    for blk in pk["layer1"]:
        h = _basic_block(h, blk, stride=1)
    for i, blk in enumerate(pk["layer2"]):
        h = _basic_block(h, blk, stride=2 if i == 0 else 1)
    stats = conv2d_p(h, pk["fe"], stride=1, padding=0, act="none",
                     out_dtype=jnp.float32)
    mu, logvar = stats[..., :z_dim], stats[..., z_dim:]
    # ---- reparameterize (eval mode) ----
    z = mu
    # ---- decoder ----
    d = conv2d_p(z.astype(jnp.bfloat16), pk["id"], stride=1, padding=0, act="relu")
    d = conv_transpose_s2(d, pk["d2"], act="relu")
    d = conv_transpose_s2(d, pk["d1"], act="relu")
    recon = conv_transpose_s2(d, pk["d0"], act="sigmoid", out_dtype=jnp.float32)
    return recon, mu, logvar


def make_forward(packed, z_dim):
    """Packed weights are closed over -> pre-laid-out compile-time constants."""
    def fwd(x_nchw):
        x = x_nchw.transpose(0, 2, 3, 1)          # NCHW -> NHWC once
        recon, mu, logvar = ss_cvae_forward_nhwc(packed, x, z_dim)
        return (recon.transpose(0, 3, 1, 2),
                (mu.transpose(0, 3, 1, 2), logvar.transpose(0, 3, 1, 2)))
    return jax.jit(fwd)


# ----------------------------------- main ---------------------------------------

if __name__ == "__main__":
    # Config consistent with the module: final_encoder hard-codes 128 input
    # channels => nb_conv == 3 => img_size / latent_img_size == 8.
    img_size = 32
    latent_img_size = 4
    nb_channels = 4
    z_dim = 16
    with_condition = True
    exit_ch = nb_channels - 1 if with_condition else nb_channels

    key = jax.random.PRNGKey(0)
    kparam, kx = jax.random.split(key)
    params = init_params(kparam, nb_channels, z_dim, exit_ch)
    packed = prepare_params(params)      # one-time weight packing / BN folding
    x = jax.random.normal(kx, (2, nb_channels, img_size, img_size), jnp.float32)

    fwd = make_forward(packed, z_dim)
    recon, (mu, logvar) = fwd(x)
    jax.block_until_ready((recon, mu, logvar))

    assert recon.shape == (2, exit_ch, img_size, img_size)
    assert mu.shape == (2, z_dim, latent_img_size, latent_img_size)
    assert logvar.shape == (2, z_dim, latent_img_size, latent_img_size)
    assert bool(jnp.all(jnp.isfinite(recon)))
    assert bool(jnp.all(jnp.isfinite(mu))) and bool(jnp.all(jnp.isfinite(logvar)))
    print("KERNEL_OK")
</pallas_src>

<mosaic_0001>
module attributes {stable_mosaic.version = 11 : i64} {
  func.func @_mm_affine_kernel(%arg0: i32, %arg1: memref<256x256xbf16, #tpu.memory_space<vmem>>, %arg2: memref<256x128xbf16, #tpu.memory_space<vmem>>, %arg3: memref<1x128xf32, #tpu.memory_space<vmem>>, %arg4: memref<256x128xbf16, #tpu.memory_space<vmem>>) attributes {dimension_semantics = [#tpu.dimension_semantics<parallel>], iteration_bounds = array<i64: 2>, scalar_prefetch = 0 : i64, scratch_operands = 0 : i64, tpu.core_type = #tpu.core_type<tc>, window_params = [{transform_indices = @transform_0, window_bounds = array<i64: 256, 256>}, {pipeline_mode = #tpu.pipeline_mode<synchronous>, transform_indices = @transform_1, window_bounds = array<i64: 256, 128>}, {pipeline_mode = #tpu.pipeline_mode<synchronous>, transform_indices = @transform_2, window_bounds = array<i64: 1, 128>}, {transform_indices = @transform_3, window_bounds = array<i64: 256, 128>}]} {
    %c0 = arith.constant 0 : index
    %c0_0 = arith.constant 0 : index
    %0 = vector.load %arg1[%c0, %c0_0] : memref<256x256xbf16, #tpu.memory_space<vmem>>, vector<256x256xbf16>
    %c0_1 = arith.constant 0 : index
    %c0_2 = arith.constant 0 : index
    %1 = vector.load %arg2[%c0_1, %c0_2] : memref<256x128xbf16, #tpu.memory_space<vmem>>, vector<256x128xbf16>
    %cst = arith.constant dense<0.000000e+00> : vector<256x128xf32>
    %2 = tpu.matmul %0, %1, %cst {dimension_numbers = #tpu.dot_dimension_numbers<[1], [0], [0], [1], [0, 0, 1, 1], [], []>} : vector<256x256xbf16>, vector<256x128xbf16>, vector<256x128xf32> -> vector<256x128xf32>
    %c0_3 = arith.constant 0 : index
    %c0_4 = arith.constant 0 : index
    %3 = vector.load %arg3[%c0_3, %c0_4] : memref<1x128xf32, #tpu.memory_space<vmem>>, vector<1x128xf32>
    %4 = vector.broadcast %3 : vector<1x128xf32> to vector<256x128xf32>
    %5 = arith.addf %2, %4 : vector<256x128xf32>
    %cst_5 = arith.constant 0.000000e+00 : f32
    %6 = vector.broadcast %cst_5 : f32 to vector<256x128xf32>
    %7 = arith.maximumf %5, %6 : vector<256x128xf32>
    %8 = arith.truncf %7 : vector<256x128xf32> to vector<256x128xbf16>
    %c0_6 = arith.constant 0 : index
    %c0_7 = arith.constant 0 : index
    %9 = vector.load %arg4[%c0_6, %c0_7] : memref<256x128xbf16, #tpu.memory_space<vmem>>, vector<256x128xbf16>
    tpu.vector_store %arg4[%c0_6, %c0_7], %8 {strides = array<i32>} : memref<256x128xbf16, #tpu.memory_space<vmem>>, vector<256x128xbf16>,
    return
  }
  func.func @transform_0(%arg0: i32) -> (i32, i32) {
    %c0_i32 = arith.constant 0 : i32
    %c0_i32_0 = arith.constant 0 : i32
    return %arg0, %c0_i32 : i32, i32
  }
  func.func @transform_1(%arg0: i32) -> (i32, i32) {
    %c0_i32 = arith.constant 0 : i32
    %c0_i32_0 = arith.constant 0 : i32
    %c0_i32_1 = arith.constant 0 : i32
    return %c0_i32, %c0_i32_0 : i32, i32
  }
  func.func @transform_2(%arg0: i32) -> (i32, i32) {
    %c0_i32 = arith.constant 0 : i32
    %c0_i32_0 = arith.constant 0 : i32
    %c0_i32_1 = arith.constant 0 : i32
    return %c0_i32, %c0_i32_0 : i32, i32
  }
  func.func @transform_3(%arg0: i32) -> (i32, i32) {
    %c0_i32 = arith.constant 0 : i32
    %c0_i32_0 = arith.constant 0 : i32
    return %arg0, %c0_i32 : i32, i32
  }
}

module attributes {stable_mosaic.version = 11 : i64} {
  func.func @_mm_affine_kernel(%arg0: i32, %arg1: memref<128x640xbf16, #tpu.memory_space<vmem>>, %arg2: memref<640x128xbf16, #tpu.memory_space<vmem>>, %arg3: memref<1x128xf32, #tpu.memory_space<vmem>>, %arg4: memref<128x128xbf16, #tpu.memory_space<vmem>>) attributes {dimension_semantics = [#tpu.dimension_semantics<parallel>], iteration_bounds = array<i64: 1>, scalar_prefetch = 0 : i64, scratch_operands = 0 : i64, tpu.core_type = #tpu.core_type<tc>, window_params = [{transform_indices = @transform_0, window_bounds = array<i64: 128, 640>}, {pipeline_mode = #tpu.pipeline_mode<synchronous>, transform_indices = @transform_1, window_bounds = array<i64: 640, 128>}, {pipeline_mode = #tpu.pipeline_mode<synchronous>, transform_indices = @transform_2, window_bounds = array<i64: 1, 128>}, {transform_indices = @transform_3, window_bounds = array<i64: 128, 128>}]} {
    %c0 = arith.constant 0 : index
    %c0_0 = arith.constant 0 : index
    %0 = vector.load %arg1[%c0, %c0_0] : memref<128x640xbf16, #tpu.memory_space<vmem>>, vector<128x640xbf16>
    %c0_1 = arith.constant 0 : index
    %c0_2 = arith.constant 0 : index
    %1 = vector.load %arg2[%c0_1, %c0_2] : memref<640x128xbf16, #tpu.memory_space<vmem>>, vector<640x128xbf16>
    %cst = arith.constant dense<0.000000e+00> : vector<128x128xf32>
    %2 = tpu.matmul %0, %1, %cst {dimension_numbers = #tpu.dot_dimension_numbers<[1], [0], [0], [1], [0, 0, 1, 1], [], []>} : vector<128x640xbf16>, vector<640x128xbf16>, vector<128x128xf32> -> vector<128x128xf32>
    %c0_3 = arith.constant 0 : index
    %c0_4 = arith.constant 0 : index
    %3 = vector.load %arg3[%c0_3, %c0_4] : memref<1x128xf32, #tpu.memory_space<vmem>>, vector<1x128xf32>
    %4 = vector.broadcast %3 : vector<1x128xf32> to vector<128x128xf32>
    %5 = arith.addf %2, %4 : vector<128x128xf32>
    %cst_5 = arith.constant 0.000000e+00 : f32
    %6 = vector.broadcast %cst_5 : f32 to vector<128x128xf32>
    %7 = arith.maximumf %5, %6 : vector<128x128xf32>
    %8 = arith.truncf %7 : vector<128x128xf32> to vector<128x128xbf16>
    %c0_6 = arith.constant 0 : index
    %c0_7 = arith.constant 0 : index
    %9 = vector.load %arg4[%c0_6, %c0_7] : memref<128x128xbf16, #tpu.memory_space<vmem>>, vector<128x128xbf16>
    tpu.vector_store %arg4[%c0_6, %c0_7], %8 {strides = array<i32>} : memref<128x128xbf16, #tpu.memory_space<vmem>>, vector<128x128xbf16>,
    return
  }
  func.func @transform_0(%arg0: i32) -> (i32, i32) {
    %c0_i32 = arith.constant 0 : i32
    %c0_i32_0 = arith.constant 0 : i32
    return %arg0, %c0_i32 : i32, i32
  }
  func.func @transform_1(%arg0: i32) -> (i32, i32) {
    %c0_i32 = arith.constant 0 : i32
    %c0_i32_0 = arith.constant 0 : i32
    %c0_i32_1 = arith.constant 0 : i32
    return %c0_i32, %c0_i32_0 : i32, i32
  }
  func.func @transform_2(%arg0: i32) -> (i32, i32) {
    %c0_i32 = arith.constant 0 : i32
    %c0_i32_0 = arith.constant 0 : i32
    %c0_i32_1 = arith.constant 0 : i32
    return %c0_i32, %c0_i32_0 : i32, i32
  }
  func.func @transform_3(%arg0: i32) -> (i32, i32) {
    %c0_i32 = arith.constant 0 : i32
    %c0_i32_0 = arith.constant 0 : i32
    return %arg0, %c0_i32 : i32, i32
  }
}

module attributes {stable_mosaic.version = 11 : i64} {
  func.func @_mm_affine_kernel(%arg0: i32, %arg1: memref<128x640xbf16, #tpu.memory_space<vmem>>, %arg2: memref<640x128xbf16, #tpu.memory_space<vmem>>, %arg3: memref<1x128xf32, #tpu.memory_space<vmem>>, %arg4: memref<128x128xbf16, #tpu.memory_space<vmem>>, %arg5: memref<128x128xbf16, #tpu.memory_space<vmem>>) attributes {dimension_semantics = [#tpu.dimension_semantics<parallel>], iteration_bounds = array<i64: 1>, scalar_prefetch = 0 : i64, scratch_operands = 0 : i64, tpu.core_type = #tpu.core_type<tc>, window_params = [{transform_indices = @transform_0, window_bounds = array<i64: 128, 640>}, {pipeline_mode = #tpu.pipeline_mode<synchronous>, transform_indices = @transform_1, window_bounds = array<i64: 640, 128>}, {pipeline_mode = #tpu.pipeline_mode<synchronous>, transform_indices = @transform_2, window_bounds = array<i64: 1, 128>}, {transform_indices = @transform_3, window_bounds = array<i64: 128, 128>}, {transform_indices = @transform_4, window_bounds = array<i64: 128, 128>}]} {
    %c0 = arith.constant 0 : index
    %c0_0 = arith.constant 0 : index
    %0 = vector.load %arg1[%c0, %c0_0] : memref<128x640xbf16, #tpu.memory_space<vmem>>, vector<128x640xbf16>
    %c0_1 = arith.constant 0 : index
    %c0_2 = arith.constant 0 : index
    %1 = vector.load %arg2[%c0_1, %c0_2] : memref<640x128xbf16, #tpu.memory_space<vmem>>, vector<640x128xbf16>
    %cst = arith.constant dense<0.000000e+00> : vector<128x128xf32>
    %2 = tpu.matmul %0, %1, %cst {dimension_numbers = #tpu.dot_dimension_numbers<[1], [0], [0], [1], [0, 0, 1, 1], [], []>} : vector<128x640xbf16>, vector<640x128xbf16>, vector<128x128xf32> -> vector<128x128xf32>
    %c0_3 = arith.constant 0 : index
    %c0_4 = arith.constant 0 : index
    %3 = vector.load %arg3[%c0_3, %c0_4] : memref<1x128xf32, #tpu.memory_space<vmem>>, vector<1x128xf32>
    %4 = vector.broadcast %3 : vector<1x128xf32> to vector<128x128xf32>
    %5 = arith.addf %2, %4 : vector<128x128xf32>
    %c0_5 = arith.constant 0 : index
    %c0_6 = arith.constant 0 : index
    %6 = vector.load %arg4[%c0_5, %c0_6] : memref<128x128xbf16, #tpu.memory_space<vmem>>, vector<128x128xbf16>
    %7 = arith.extf %6 : vector<128x128xbf16> to vector<128x128xf32>
    %8 = arith.addf %5, %7 : vector<128x128xf32>
    %cst_7 = arith.constant 0.000000e+00 : f32
    %9 = vector.broadcast %cst_7 : f32 to vector<128x128xf32>
    %10 = arith.maximumf %8, %9 : vector<128x128xf32>
    %11 = arith.truncf %10 : vector<128x128xf32> to vector<128x128xbf16>
    %c0_8 = arith.constant 0 : index
    %c0_9 = arith.constant 0 : index
    %12 = vector.load %arg5[%c0_8, %c0_9] : memref<128x128xbf16, #tpu.memory_space<vmem>>, vector<128x128xbf16>
    tpu.vector_store %arg5[%c0_8, %c0_9], %11 {strides = array<i32>} : memref<128x128xbf16, #tpu.memory_space<vmem>>, vector<128x128xbf16>,
    return
  }
  func.func @transform_0(%arg0: i32) -> (i32, i32) {
    %c0_i32 = arith.constant 0 : i32
    %c0_i32_0 = arith.constant 0 : i32
    return %arg0, %c0_i32 : i32, i32
  }
  func.func @transform_1(%arg0: i32) -> (i32, i32) {
    %c0_i32 = arith.constant 0 : i32
    %c0_i32_0 = arith.constant 0 : i32
    %c0_i32_1 = arith.constant 0 : i32
    return %c0_i32, %c0_i32_0 : i32, i32
  }
  func.func @transform_2(%arg0: i32) -> (i32, i32) {
    %c0_i32 = arith.constant 0 : i32
    %c0_i32_0 = arith.constant 0 : i32
    %c0_i32_1 = arith.constant 0 : i32
    return %c0_i32, %c0_i32_0 : i32, i32
  }
  func.func @transform_3(%arg0: i32) -> (i32, i32) {
    %c0_i32 = arith.constant 0 : i32
    %c0_i32_0 = arith.constant 0 : i32
    return %arg0, %c0_i32 : i32, i32
  }
  func.func @transform_4(%arg0: i32) -> (i32, i32) {
    %c0_i32 = arith.constant 0 : i32
    %c0_i32_0 = arith.constant 0 : i32
    return %arg0, %c0_i32 : i32, i32
  }
}

module attributes {stable_mosaic.version = 11 : i64} {
  func.func @_mm_affine_kernel(%arg0: i32, %arg1: memref<32x640xbf16, #tpu.memory_space<vmem>>, %arg2: memref<640x256xbf16, #tpu.memory_space<vmem>>, %arg3: memref<1x256xf32, #tpu.memory_space<vmem>>, %arg4: memref<32x256xbf16, #tpu.memory_space<vmem>>) attributes {dimension_semantics = [#tpu.dimension_semantics<parallel>], iteration_bounds = array<i64: 1>, scalar_prefetch = 0 : i64, scratch_operands = 0 : i64, tpu.core_type = #tpu.core_type<tc>, window_params = [{transform_indices = @transform_0, window_bounds = array<i64: 32, 640>}, {pipeline_mode = #tpu.pipeline_mode<synchronous>, transform_indices = @transform_1, window_bounds = array<i64: 640, 256>}, {pipeline_mode = #tpu.pipeline_mode<synchronous>, transform_indices = @transform_2, window_bounds = array<i64: 1, 256>}, {transform_indices = @transform_3, window_bounds = array<i64: 32, 256>}]} {
    %c0 = arith.constant 0 : index
    %c0_0 = arith.constant 0 : index
    %0 = vector.load %arg1[%c0, %c0_0] : memref<32x640xbf16, #tpu.memory_space<vmem>>, vector<32x640xbf16>
    %c0_1 = arith.constant 0 : index
    %c0_2 = arith.constant 0 : index
    %1 = vector.load %arg2[%c0_1, %c0_2] : memref<640x256xbf16, #tpu.memory_space<vmem>>, vector<640x256xbf16>
    %cst = arith.constant dense<0.000000e+00> : vector<32x256xf32>
    %2 = tpu.matmul %0, %1, %cst {dimension_numbers = #tpu.dot_dimension_numbers<[1], [0], [0], [1], [0, 0, 1, 1], [], []>} : vector<32x640xbf16>, vector<640x256xbf16>, vector<32x256xf32> -> vector<32x256xf32>
    %c0_3 = arith.constant 0 : index
    %c0_4 = arith.constant 0 : index
    %3 = vector.load %arg3[%c0_3, %c0_4] : memref<1x256xf32, #tpu.memory_space<vmem>>, vector<1x256xf32>
    %4 = vector.broadcast %3 : vector<1x256xf32> to vector<32x256xf32>
    %5 = arith.addf %2, %4 : vector<32x256xf32>
    %cst_5 = arith.constant 0.000000e+00 : f32
    %6 = vector.broadcast %cst_5 : f32 to vector<32x256xf32>
    %7 = arith.maximumf %5, %6 : vector<32x256xf32>
    %8 = tpu.iota {dimensions = array<i32: 1>} : vector<32x256xi32>
    %c128_i32 = arith.constant 128 : i32
    %9 = vector.broadcast %c128_i32 : i32 to vector<32x256xi32>
    %10 = arith.cmpi slt, %8, %9 : vector<32x256xi32>
    %11 = arith.select %10, %7, %5 : vector<32x256xi1>, vector<32x256xf32>
    %12 = arith.truncf %11 : vector<32x256xf32> to vector<32x256xbf16>
    %c0_6 = arith.constant 0 : index
    %c0_7 = arith.constant 0 : index
    %13 = vector.load %arg4[%c0_6, %c0_7] : memref<32x256xbf16, #tpu.memory_space<vmem>>, vector<32x256xbf16>
    tpu.vector_store %arg4[%c0_6, %c0_7], %12 {strides = array<i32>} : memref<32x256xbf16, #tpu.memory_space<vmem>>, vector<32x256xbf16>,
    return
  }
  func.func @transform_0(%arg0: i32) -> (i32, i32) {
    %c0_i32 = arith.constant 0 : i32
    %c0_i32_0 = arith.constant 0 : i32
    return %arg0, %c0_i32 : i32, i32
  }
  func.func @transform_1(%arg0: i32) -> (i32, i32) {
    %c0_i32 = arith.constant 0 : i32
    %c0_i32_0 = arith.constant 0 : i32
    %c0_i32_1 = arith.constant 0 : i32
    return %c0_i32, %c0_i32_0 : i32, i32
  }
  func.func @transform_2(%arg0: i32) -> (i32, i32) {
    %c0_i32 = arith.constant 0 : i32
    %c0_i32_0 = arith.constant 0 : i32
    %c0_i32_1 = arith.constant 0 : i32
    return %c0_i32, %c0_i32_0 : i32, i32
  }
  func.func @transform_3(%arg0: i32) -> (i32, i32) {
    %c0_i32 = arith.constant 0 : i32
    %c0_i32_0 = arith.constant 0 : i32
    return %arg0, %c0_i32 : i32, i32
  }
}

module attributes {stable_mosaic.version = 11 : i64} {
  func.func @_mm_affine_kernel(%arg0: i32, %arg1: memref<32x1152xbf16, #tpu.memory_space<vmem>>, %arg2: memref<1152x128xbf16, #tpu.memory_space<vmem>>, %arg3: memref<1x128xf32, #tpu.memory_space<vmem>>, %arg4: memref<32x128xbf16, #tpu.memory_space<vmem>>, %arg5: memref<32x128xbf16, #tpu.memory_space<vmem>>) attributes {dimension_semantics = [#tpu.dimension_semantics<parallel>], iteration_bounds = array<i64: 1>, scalar_prefetch = 0 : i64, scratch_operands = 0 : i64, tpu.core_type = #tpu.core_type<tc>, window_params = [{transform_indices = @transform_0, window_bounds = array<i64: 32, 1152>}, {pipeline_mode = #tpu.pipeline_mode<synchronous>, transform_indices = @transform_1, window_bounds = array<i64: 1152, 128>}, {pipeline_mode = #tpu.pipeline_mode<synchronous>, transform_indices = @transform_2, window_bounds = array<i64: 1, 128>}, {transform_indices = @transform_3, window_bounds = array<i64: 32, 128>}, {transform_indices = @transform_4, window_bounds = array<i64: 32, 128>}]} {
    %c0 = arith.constant 0 : index
    %c0_0 = arith.constant 0 : index
    %0 = vector.load %arg1[%c0, %c0_0] : memref<32x1152xbf16, #tpu.memory_space<vmem>>, vector<32x1152xbf16>
    %c0_1 = arith.constant 0 : index
    %c0_2 = arith.constant 0 : index
    %1 = vector.load %arg2[%c0_1, %c0_2] : memref<1152x128xbf16, #tpu.memory_space<vmem>>, vector<1152x128xbf16>
    %cst = arith.constant dense<0.000000e+00> : vector<32x128xf32>
    %2 = tpu.matmul %0, %1, %cst {dimension_numbers = #tpu.dot_dimension_numbers<[1], [0], [0], [1], [0, 0, 1, 1], [], []>} : vector<32x1152xbf16>, vector<1152x128xbf16>, vector<32x128xf32> -> vector<32x128xf32>
    %c0_3 = arith.constant 0 : index
    %c0_4 = arith.constant 0 : index
    %3 = vector.load %arg3[%c0_3, %c0_4] : memref<1x128xf32, #tpu.memory_space<vmem>>, vector<1x128xf32>
    %4 = vector.broadcast %3 : vector<1x128xf32> to vector<32x128xf32>
    %5 = arith.addf %2, %4 : vector<32x128xf32>
    %c0_5 = arith.constant 0 : index
    %c0_6 = arith.constant 0 : index
    %6 = vector.load %arg4[%c0_5, %c0_6] : memref<32x128xbf16, #tpu.memory_space<vmem>>, vector<32x128xbf16>
    %7 = arith.extf %6 : vector<32x128xbf16> to vector<32x128xf32>
    %8 = arith.addf %5, %7 : vector<32x128xf32>
    %cst_7 = arith.constant 0.000000e+00 : f32
    %9 = vector.broadcast %cst_7 : f32 to vector<32x128xf32>
    %10 = arith.maximumf %8, %9 : vector<32x128xf32>
    %11 = arith.truncf %10 : vector<32x128xf32> to vector<32x128xbf16>
    %c0_8 = arith.constant 0 : index
    %c0_9 = arith.constant 0 : index
    %12 = vector.load %arg5[%c0_8, %c0_9] : memref<32x128xbf16, #tpu.memory_space<vmem>>, vector<32x128xbf16>
    tpu.vector_store %arg5[%c0_8, %c0_9], %11 {strides = array<i32>} : memref<32x128xbf16, #tpu.memory_space<vmem>>, vector<32x128xbf16>,
    return
  }
  func.func @transform_0(%arg0: i32) -> (i32, i32) {
    %c0_i32 = arith.constant 0 : i32
    %c0_i32_0 = arith.constant 0 : i32
    return %arg0, %c0_i32 : i32, i32
  }
  func.func @transform_1(%arg0: i32) -> (i32, i32) {
    %c0_i32 = arith.constant 0 : i32
    %c0_i32_0 = arith.constant 0 : i32
    %c0_i32_1 = arith.constant 0 : i32
    return %c0_i32, %c0_i32_0 : i32, i32
  }
  func.func @transform_2(%arg0: i32) -> (i32, i32) {
    %c0_i32 = arith.constant 0 : i32
    %c0_i32_0 = arith.constant 0 : i32
    %c0_i32_1 = arith.constant 0 : i32
    return %c0_i32, %c0_i32_0 : i32, i32
  }
  func.func @transform_3(%arg0: i32) -> (i32, i32) {
    %c0_i32 = arith.constant 0 : i32
    %c0_i32_0 = arith.constant 0 : i32
    return %arg0, %c0_i32 : i32, i32
  }
  func.func @transform_4(%arg0: i32) -> (i32, i32) {
    %c0_i32 = arith.constant 0 : i32
    %c0_i32_0 = arith.constant 0 : i32
    return %arg0, %c0_i32 : i32, i32
  }
}

module attributes {stable_mosaic.version = 11 : i64} {
  func.func @_mm_affine_kernel(%arg0: i32, %arg1: memref<32x128xbf16, #tpu.memory_space<vmem>>, %arg2: memref<128x128xbf16, #tpu.memory_space<vmem>>, %arg3: memref<1x128xf32, #tpu.memory_space<vmem>>, %arg4: memref<32x128xf32, #tpu.memory_space<vmem>>) attributes {dimension_semantics = [#tpu.dimension_semantics<parallel>], iteration_bounds = array<i64: 1>, scalar_prefetch = 0 : i64, scratch_operands = 0 : i64, tpu.core_type = #tpu.core_type<tc>, window_params = [{transform_indices = @transform_0, window_bounds = array<i64: 32, 128>}, {pipeline_mode = #tpu.pipeline_mode<synchronous>, transform_indices = @transform_1, window_bounds = array<i64: 128, 128>}, {pipeline_mode = #tpu.pipeline_mode<synchronous>, transform_indices = @transform_2, window_bounds = array<i64: 1, 128>}, {transform_indices = @transform_3, window_bounds = array<i64: 32, 128>}]} {
    %c0 = arith.constant 0 : index
    %c0_0 = arith.constant 0 : index
    %0 = vector.load %arg1[%c0, %c0_0] : memref<32x128xbf16, #tpu.memory_space<vmem>>, vector<32x128xbf16>
    %c0_1 = arith.constant 0 : index
    %c0_2 = arith.constant 0 : index
    %1 = vector.load %arg2[%c0_1, %c0_2] : memref<128x128xbf16, #tpu.memory_space<vmem>>, vector<128x128xbf16>
    %cst = arith.constant dense<0.000000e+00> : vector<32x128xf32>
    %2 = tpu.matmul %0, %1, %cst {dimension_numbers = #tpu.dot_dimension_numbers<[1], [0], [0], [1], [0, 0, 1, 1], [], []>} : vector<32x128xbf16>, vector<128x128xbf16>, vector<32x128xf32> -> vector<32x128xf32>
    %c0_3 = arith.constant 0 : index
    %c0_4 = arith.constant 0 : index
    %3 = vector.load %arg3[%c0_3, %c0_4] : memref<1x128xf32, #tpu.memory_space<vmem>>, vector<1x128xf32>
    %4 = vector.broadcast %3 : vector<1x128xf32> to vector<32x128xf32>
    %5 = arith.addf %2, %4 : vector<32x128xf32>
    %c0_5 = arith.constant 0 : index
    %c0_6 = arith.constant 0 : index
    %6 = vector.load %arg4[%c0_5, %c0_6] : memref<32x128xf32, #tpu.memory_space<vmem>>, vector<32x128xf32>
    tpu.vector_store %arg4[%c0_5, %c0_6], %5 {strides = array<i32>} : memref<32x128xf32, #tpu.memory_space<vmem>>, vector<32x128xf32>,
    return
  }
  func.func @transform_0(%arg0: i32) -> (i32, i32) {
    %c0_i32 = arith.constant 0 : i32
    %c0_i32_0 = arith.constant 0 : i32
    return %arg0, %c0_i32 : i32, i32
  }
  func.func @transform_1(%arg0: i32) -> (i32, i32) {
    %c0_i32 = arith.constant 0 : i32
    %c0_i32_0 = arith.constant 0 : i32
    %c0_i32_1 = arith.constant 0 : i32
    return %c0_i32, %c0_i32_0 : i32, i32
  }
  func.func @transform_2(%arg0: i32) -> (i32, i32) {
    %c0_i32 = arith.constant 0 : i32
    %c0_i32_0 = arith.constant 0 : i32
    %c0_i32_1 = arith.constant 0 : i32
    return %c0_i32, %c0_i32_0 : i32, i32
  }
  func.func @transform_3(%arg0: i32) -> (i32, i32) {
    %c0_i32 = arith.constant 0 : i32
    %c0_i32_0 = arith.constant 0 : i32
    return %arg0, %c0_i32 : i32, i32
  }
}

module attributes {stable_mosaic.version = 11 : i64} {
  func.func @_mm_affine_kernel(%arg0: i32, %arg1: memref<32x1152xbf16, #tpu.memory_space<vmem>>, %arg2: memref<1152x128xbf16, #tpu.memory_space<vmem>>, %arg3: memref<1x128xf32, #tpu.memory_space<vmem>>, %arg4: memref<32x128xbf16, #tpu.memory_space<vmem>>) attributes {dimension_semantics = [#tpu.dimension_semantics<parallel>], iteration_bounds = array<i64: 1>, scalar_prefetch = 0 : i64, scratch_operands = 0 : i64, tpu.core_type = #tpu.core_type<tc>, window_params = [{transform_indices = @transform_0, window_bounds = array<i64: 32, 1152>}, {pipeline_mode = #tpu.pipeline_mode<synchronous>, transform_indices = @transform_1, window_bounds = array<i64: 1152, 128>}, {pipeline_mode = #tpu.pipeline_mode<synchronous>, transform_indices = @transform_2, window_bounds = array<i64: 1, 128>}, {transform_indices = @transform_3, window_bounds = array<i64: 32, 128>}]} {
    %c0 = arith.constant 0 : index
    %c0_0 = arith.constant 0 : index
    %0 = vector.load %arg1[%c0, %c0_0] : memref<32x1152xbf16, #tpu.memory_space<vmem>>, vector<32x1152xbf16>
    %c0_1 = arith.constant 0 : index
    %c0_2 = arith.constant 0 : index
    %1 = vector.load %arg2[%c0_1, %c0_2] : memref<1152x128xbf16, #tpu.memory_space<vmem>>, vector<1152x128xbf16>
    %cst = arith.constant dense<0.000000e+00> : vector<32x128xf32>
    %2 = tpu.matmul %0, %1, %cst {dimension_numbers = #tpu.dot_dimension_numbers<[1], [0], [0], [1], [0, 0, 1, 1], [], []>} : vector<32x1152xbf16>, vector<1152x128xbf16>, vector<32x128xf32> -> vector<32x128xf32>
    %c0_3 = arith.constant 0 : index
    %c0_4 = arith.constant 0 : index
    %3 = vector.load %arg3[%c0_3, %c0_4] : memref<1x128xf32, #tpu.memory_space<vmem>>, vector<1x128xf32>
    %4 = vector.broadcast %3 : vector<1x128xf32> to vector<32x128xf32>
    %5 = arith.addf %2, %4 : vector<32x128xf32>
    %cst_5 = arith.constant 0.000000e+00 : f32
    %6 = vector.broadcast %cst_5 : f32 to vector<32x128xf32>
    %7 = arith.maximumf %5, %6 : vector<32x128xf32>
    %8 = arith.truncf %7 : vector<32x128xf32> to vector<32x128xbf16>
    %c0_6 = arith.constant 0 : index
    %c0_7 = arith.constant 0 : index
    %9 = vector.load %arg4[%c0_6, %c0_7] : memref<32x128xbf16, #tpu.memory_space<vmem>>, vector<32x128xbf16>
    tpu.vector_store %arg4[%c0_6, %c0_7], %8 {strides = array<i32>} : memref<32x128xbf16, #tpu.memory_space<vmem>>, vector<32x128xbf16>,
    return
  }
  func.func @transform_0(%arg0: i32) -> (i32, i32) {
    %c0_i32 = arith.constant 0 : i32
    %c0_i32_0 = arith.constant 0 : i32
    return %arg0, %c0_i32 : i32, i32
  }
  func.func @transform_1(%arg0: i32) -> (i32, i32) {
    %c0_i32 = arith.constant 0 : i32
    %c0_i32_0 = arith.constant 0 : i32
    %c0_i32_1 = arith.constant 0 : i32
    return %c0_i32, %c0_i32_0 : i32, i32
  }
  func.func @transform_2(%arg0: i32) -> (i32, i32) {
    %c0_i32 = arith.constant 0 : i32
    %c0_i32_0 = arith.constant 0 : i32
    %c0_i32_1 = arith.constant 0 : i32
    return %c0_i32, %c0_i32_0 : i32, i32
  }
  func.func @transform_3(%arg0: i32) -> (i32, i32) {
    %c0_i32 = arith.constant 0 : i32
    %c0_i32_0 = arith.constant 0 : i32
    return %arg0, %c0_i32 : i32, i32
  }
}

module attributes {stable_mosaic.version = 11 : i64} {
  func.func @_mm_affine_kernel(%arg0: i32, %arg1: memref<32x128xbf16, #tpu.memory_space<vmem>>, %arg2: memref<128x128xbf16, #tpu.memory_space<vmem>>, %arg3: memref<1x128xf32, #tpu.memory_space<vmem>>, %arg4: memref<32x128xbf16, #tpu.memory_space<vmem>>) attributes {dimension_semantics = [#tpu.dimension_semantics<parallel>], iteration_bounds = array<i64: 1>, scalar_prefetch = 0 : i64, scratch_operands = 0 : i64, tpu.core_type = #tpu.core_type<tc>, window_params = [{transform_indices = @transform_0, window_bounds = array<i64: 32, 128>}, {pipeline_mode = #tpu.pipeline_mode<synchronous>, transform_indices = @transform_1, window_bounds = array<i64: 128, 128>}, {pipeline_mode = #tpu.pipeline_mode<synchronous>, transform_indices = @transform_2, window_bounds = array<i64: 1, 128>}, {transform_indices = @transform_3, window_bounds = array<i64: 32, 128>}]} {
    %c0 = arith.constant 0 : index
    %c0_0 = arith.constant 0 : index
    %0 = vector.load %arg1[%c0, %c0_0] : memref<32x128xbf16, #tpu.memory_space<vmem>>, vector<32x128xbf16>
    %c0_1 = arith.constant 0 : index
    %c0_2 = arith.constant 0 : index
    %1 = vector.load %arg2[%c0_1, %c0_2] : memref<128x128xbf16, #tpu.memory_space<vmem>>, vector<128x128xbf16>
    %cst = arith.constant dense<0.000000e+00> : vector<32x128xf32>
    %2 = tpu.matmul %0, %1, %cst {dimension_numbers = #tpu.dot_dimension_numbers<[1], [0], [0], [1], [0, 0, 1, 1], [], []>} : vector<32x128xbf16>, vector<128x128xbf16>, vector<32x128xf32> -> vector<32x128xf32>
    %c0_3 = arith.constant 0 : index
    %c0_4 = arith.constant 0 : index
    %3 = vector.load %arg3[%c0_3, %c0_4] : memref<1x128xf32, #tpu.memory_space<vmem>>, vector<1x128xf32>
    %4 = vector.broadcast %3 : vector<1x128xf32> to vector<32x128xf32>
    %5 = arith.addf %2, %4 : vector<32x128xf32>
    %cst_5 = arith.constant 0.000000e+00 : f32
    %6 = vector.broadcast %cst_5 : f32 to vector<32x128xf32>
    %7 = arith.maximumf %5, %6 : vector<32x128xf32>
    %8 = arith.truncf %7 : vector<32x128xf32> to vector<32x128xbf16>
    %c0_6 = arith.constant 0 : index
    %c0_7 = arith.constant 0 : index
    %9 = vector.load %arg4[%c0_6, %c0_7] : memref<32x128xbf16, #tpu.memory_space<vmem>>, vector<32x128xbf16>
    tpu.vector_store %arg4[%c0_6, %c0_7], %8 {strides = array<i32>} : memref<32x128xbf16, #tpu.memory_space<vmem>>, vector<32x128xbf16>,
    return
  }
  func.func @transform_0(%arg0: i32) -> (i32, i32) {
    %c0_i32 = arith.constant 0 : i32
    %c0_i32_0 = arith.constant 0 : i32
    return %arg0, %c0_i32 : i32, i32
  }
  func.func @transform_1(%arg0: i32) -> (i32, i32) {
    %c0_i32 = arith.constant 0 : i32
    %c0_i32_0 = arith.constant 0 : i32
    %c0_i32_1 = arith.constant 0 : i32
    return %c0_i32, %c0_i32_0 : i32, i32
  }
  func.func @transform_2(%arg0: i32) -> (i32, i32) {
    %c0_i32 = arith.constant 0 : i32
    %c0_i32_0 = arith.constant 0 : i32
    %c0_i32_1 = arith.constant 0 : i32
    return %c0_i32, %c0_i32_0 : i32, i32
  }
  func.func @transform_3(%arg0: i32) -> (i32, i32) {
    %c0_i32 = arith.constant 0 : i32
    %c0_i32_0 = arith.constant 0 : i32
    return %arg0, %c0_i32 : i32, i32
  }
}

module attributes {stable_mosaic.version = 11 : i64} {
  func.func @_mm_affine_kernel(%arg0: i32, %arg1: memref<32x1152xbf16, #tpu.memory_space<vmem>>, %arg2: memref<1152x256xbf16, #tpu.memory_space<vmem>>, %arg3: memref<1x256xf32, #tpu.memory_space<vmem>>, %arg4: memref<32x256xbf16, #tpu.memory_space<vmem>>) attributes {dimension_semantics = [#tpu.dimension_semantics<parallel>], iteration_bounds = array<i64: 1>, scalar_prefetch = 0 : i64, scratch_operands = 0 : i64, tpu.core_type = #tpu.core_type<tc>, window_params = [{transform_indices = @transform_0, window_bounds = array<i64: 32, 1152>}, {pipeline_mode = #tpu.pipeline_mode<synchronous>, transform_indices = @transform_1, window_bounds = array<i64: 1152, 256>}, {pipeline_mode = #tpu.pipeline_mode<synchronous>, transform_indices = @transform_2, window_bounds = array<i64: 1, 256>}, {transform_indices = @transform_3, window_bounds = array<i64: 32, 256>}]} {
    %c0 = arith.constant 0 : index
    %c0_0 = arith.constant 0 : index
    %0 = vector.load %arg1[%c0, %c0_0] : memref<32x1152xbf16, #tpu.memory_space<vmem>>, vector<32x1152xbf16>
    %c0_1 = arith.constant 0 : index
    %c0_2 = arith.constant 0 : index
    %1 = vector.load %arg2[%c0_1, %c0_2] : memref<1152x256xbf16, #tpu.memory_space<vmem>>, vector<1152x256xbf16>
    %cst = arith.constant dense<0.000000e+00> : vector<32x256xf32>
    %2 = tpu.matmul %0, %1, %cst {dimension_numbers = #tpu.dot_dimension_numbers<[1], [0], [0], [1], [0, 0, 1, 1], [], []>} : vector<32x1152xbf16>, vector<1152x256xbf16>, vector<32x256xf32> -> vector<32x256xf32>
    %c0_3 = arith.constant 0 : index
    %c0_4 = arith.constant 0 : index
    %3 = vector.load %arg3[%c0_3, %c0_4] : memref<1x256xf32, #tpu.memory_space<vmem>>, vector<1x256xf32>
    %4 = vector.broadcast %3 : vector<1x256xf32> to vector<32x256xf32>
    %5 = arith.addf %2, %4 : vector<32x256xf32>
    %cst_5 = arith.constant 0.000000e+00 : f32
    %6 = vector.broadcast %cst_5 : f32 to vector<32x256xf32>
    %7 = arith.maximumf %5, %6 : vector<32x256xf32>
    %8 = arith.truncf %7 : vector<32x256xf32> to vector<32x256xbf16>
    %c0_6 = arith.constant 0 : index
    %c0_7 = arith.constant 0 : index
    %9 = vector.load %arg4[%c0_6, %c0_7] : memref<32x256xbf16, #tpu.memory_space<vmem>>, vector<32x256xbf16>
    tpu.vector_store %arg4[%c0_6, %c0_7], %8 {strides = array<i32>} : memref<32x256xbf16, #tpu.memory_space<vmem>>, vector<32x256xbf16>,
    return
  }
  func.func @transform_0(%arg0: i32) -> (i32, i32) {
    %c0_i32 = arith.constant 0 : i32
    %c0_i32_0 = arith.constant 0 : i32
    return %arg0, %c0_i32 : i32, i32
  }
  func.func @transform_1(%arg0: i32) -> (i32, i32) {
    %c0_i32 = arith.constant 0 : i32
    %c0_i32_0 = arith.constant 0 : i32
    %c0_i32_1 = arith.constant 0 : i32
    return %c0_i32, %c0_i32_0 : i32, i32
  }
  func.func @transform_2(%arg0: i32) -> (i32, i32) {
    %c0_i32 = arith.constant 0 : i32
    %c0_i32_0 = arith.constant 0 : i32
    %c0_i32_1 = arith.constant 0 : i32
    return %c0_i32, %c0_i32_0 : i32, i32
  }
  func.func @transform_3(%arg0: i32) -> (i32, i32) {
    %c0_i32 = arith.constant 0 : i32
    %c0_i32_0 = arith.constant 0 : i32
    return %arg0, %c0_i32 : i32, i32
  }
}

module attributes {stable_mosaic.version = 11 : i64} {
  func.func @_mm_affine_kernel(%arg0: i32, %arg1: memref<256x384xbf16, #tpu.memory_space<vmem>>, %arg2: memref<384x128xbf16, #tpu.memory_space<vmem>>, %arg3: memref<1x128xf32, #tpu.memory_space<vmem>>, %arg4: memref<256x128xf32, #tpu.memory_space<vmem>>) attributes {dimension_semantics = [#tpu.dimension_semantics<parallel>], iteration_bounds = array<i64: 2>, scalar_prefetch = 0 : i64, scratch_operands = 0 : i64, tpu.core_type = #tpu.core_type<tc>, window_params = [{transform_indices = @transform_0, window_bounds = array<i64: 256, 384>}, {pipeline_mode = #tpu.pipeline_mode<synchronous>, transform_indices = @transform_1, window_bounds = array<i64: 384, 128>}, {pipeline_mode = #tpu.pipeline_mode<synchronous>, transform_indices = @transform_2, window_bounds = array<i64: 1, 128>}, {transform_indices = @transform_3, window_bounds = array<i64: 256, 128>}]} {
    %c0 = arith.constant 0 : index
    %c0_0 = arith.constant 0 : index
    %0 = vector.load %arg1[%c0, %c0_0] : memref<256x384xbf16, #tpu.memory_space<vmem>>, vector<256x384xbf16>
    %c0_1 = arith.constant 0 : index
    %c0_2 = arith.constant 0 : index
    %1 = vector.load %arg2[%c0_1, %c0_2] : memref<384x128xbf16, #tpu.memory_space<vmem>>, vector<384x128xbf16>
    %cst = arith.constant dense<0.000000e+00> : vector<256x128xf32>
    %2 = tpu.matmul %0, %1, %cst {dimension_numbers = #tpu.dot_dimension_numbers<[1], [0], [0], [1], [0, 0, 1, 1], [], []>} : vector<256x384xbf16>, vector<384x128xbf16>, vector<256x128xf32> -> vector<256x128xf32>
    %c0_3 = arith.constant 0 : index
    %c0_4 = arith.constant 0 : index
    %3 = vector.load %arg3[%c0_3, %c0_4] : memref<1x128xf32, #tpu.memory_space<vmem>>, vector<1x128xf32>
    %4 = vector.broadcast %3 : vector<1x128xf32> to vector<256x128xf32>
    %5 = arith.addf %2, %4 : vector<256x128xf32>
    %cst_5 = arith.constant 0.000000e+00 : f32
    %6 = vector.broadcast %cst_5 : f32 to vector<256x128xf32>
    %7 = arith.subf %6, %5 : vector<256x128xf32>
    %8 = math.exp %7 : vector<256x128xf32>
    %cst_6 = arith.constant 1.000000e+00 : f32
    %9 = vector.broadcast %cst_6 : f32 to vector<256x128xf32>
    %10 = arith.addf %9, %8 : vector<256x128xf32>
    %11 = tpu.reciprocal %10 {approx = true} : vector<256x128xf32> -> vector<256x128xf32>
    %c0_7 = arith.constant 0 : index
    %c0_8 = arith.constant 0 : index
    %12 = vector.load %arg4[%c0_7, %c0_8] : memref<256x128xf32, #tpu.memory_space<vmem>>, vector<256x128xf32>
    tpu.vector_store %arg4[%c0_7, %c0_8], %11 {strides = array<i32>} : memref<256x128xf32, #tpu.memory_space<vmem>>, vector<256x128xf32>,
    return
  }
  func.func @transform_0(%arg0: i32) -> (i32, i32) {
    %c0_i32 = arith.constant 0 : i32
    %c0_i32_0 = arith.constant 0 : i32
    return %arg0, %c0_i32 : i32, i32
  }
  func.func @transform_1(%arg0: i32) -> (i32, i32) {
    %c0_i32 = arith.constant 0 : i32
    %c0_i32_0 = arith.constant 0 : i32
    %c0_i32_1 = arith.constant 0 : i32
    return %c0_i32, %c0_i32_0 : i32, i32
  }
  func.func @transform_2(%arg0: i32) -> (i32, i32) {
    %c0_i32 = arith.constant 0 : i32
    %c0_i32_0 = arith.constant 0 : i32
    %c0_i32_1 = arith.constant 0 : i32
    return %c0_i32, %c0_i32_0 : i32, i32
  }
  func.func @transform_3(%arg0: i32) -> (i32, i32) {
    %c0_i32 = arith.constant 0 : i32
    %c0_i32_0 = arith.constant 0 : i32
    return %arg0, %c0_i32 : i32, i32
  }
}

</mosaic_0001>

<llo_original>
// kernel: fwd.20
$region0: #{fwd.20}
  #allocation0 [shape = 'u32[]', space=smem, size = 0x4, offset = 0x4, fixed_abs, tag = 'smem constant byte address 0x4 - core index']
  #allocation1 [shape = 'u32[144,128]{1,0:T(1,128)}', space=vmem, size = 0x12000, scoped, tag = 'internal scratch']
  %s0 = inlined_call_operand.vmem [shape: bf16[512,256], index: 0, kind: input, shape index: {}]
  %s1 = inlined_call_operand.vmem [shape: bf16[256,128], index: 1, kind: input, shape index: {}]
  %s2 = inlined_call_operand.vmem [shape: f32[1,128], index: 2, kind: input, shape index: {}]
  %s3 = inlined_call_operand.vmem [shape: bf16[512,128], index: 3, kind: output, shape index: {}]
  %s4 = sld [smem:[#allocation0]]
  $region45: #{fwd.20} parent=0
    _
  %s6 = ssub.s32 1, %s4
  %s7 = scalar_select 0, %s6, %s4
  loop: start=0, step=1, limit=4
  $region2: #{fwd.20} parent=0 // loop_pre_header
    _
  $region3: #{fwd.20} parent=0 // loop_header
    %s9 = sphi 0, %s13
    %p10 = scmp.ge.s32.totalorder %s9, 4
    %s19 = sphi 0, %s21
    %s22 = sphi 0, %s19
    %s23 = sphi 0, %s22
    %s39 = sphi 0, %s23
    %s43 = sphi 0, %s43
    %s45 = sphi 0, %s43
    %s46 = sphi 0, %s45
    %s60 = sphi 0, %s46
    %s64 = sphi 0, %s64
    %s66 = sphi 0, %s64
    %s67 = sphi 0, %s66
    %s81 = sphi 0, %s67
    %s87 = sphi 0, %s89
    %s90 = sphi 0, %s87
    %s91 = sphi 0, %s90
    %s107 = sphi 0, %s91
  $region4: #{fwd.20} parent=0 // loop_header_branch
    %12 = sbr.rel (%p10) target = $region8
  $region5: #{fwd.20} parent=0 // loop_body
    %s14 = ssub.s32 %s9, 1
    %s15 = ssub.s32 %s9, 2
    %s16 = sadd.s32 %s9, 1
    %s17 = ssub.s32 %s9, %s16
    %p18 = scmp.eq.s32.totalorder %s17, 0
    %s20 = sadd.s32 %s19, 1
    %s21 = scalar_select %p18, %s19, %s20
    %p24 = pneg %p18
    %p25 = scmp.eq.s32.totalorder %s9, 1
    %p26 = por %p24, %p25
    %p27 = scmp.ne.s32.totalorder %s19, %s22
    %p28 = scmp.eq.s32.totalorder %s9, 0
    %p29 = por %p27, %p28
    %p30 = scmp.ne.s32.totalorder %s19, %s22
    %p31 = scmp.eq.s32.totalorder %s14, 1
    %p32 = por %p30, %p31
    %p33 = scmp.ne.s32.totalorder %s22, %s23
    %p34 = scmp.eq.s32.totalorder %s14, 0
    %p35 = por %p33, %p34
    %p36 = scmp.ne.s32.totalorder %s22, %s23
    %p37 = scmp.eq.s32.totalorder %s15, 1
    %p38 = por %p36, %p37
    %p40 = scmp.ne.s32.totalorder %s23, %s39
    %p41 = scmp.eq.s32.totalorder %s15, 0
    %p42 = por %p40, %p41
    %s44 = sadd.s32 %s43, 1
    %p47 = scmp.eq.s32.totalorder %s9, 1
    %p48 = scmp.ne.s32.totalorder %s43, %s45
    %p49 = scmp.eq.s32.totalorder %s9, 0
    %p50 = por %p48, %p49
    %p51 = scmp.ne.s32.totalorder %s43, %s45
    %p52 = scmp.eq.s32.totalorder %s14, 1
    %p53 = por %p51, %p52
    %p54 = scmp.ne.s32.totalorder %s45, %s46
    %p55 = scmp.eq.s32.totalorder %s14, 0
    %p56 = por %p54, %p55
    %p57 = scmp.ne.s32.totalorder %s45, %s46
    %p58 = scmp.eq.s32.totalorder %s15, 1
    %p59 = por %p57, %p58
    %p61 = scmp.ne.s32.totalorder %s46, %s60
    %p62 = scmp.eq.s32.totalorder %s15, 0
    %p63 = por %p61, %p62
    %s65 = sadd.s32 %s64, 1
    %p68 = scmp.eq.s32.totalorder %s9, 1
    %p69 = scmp.ne.s32.totalorder %s64, %s66
    %p70 = scmp.eq.s32.totalorder %s9, 0
    %p71 = por %p69, %p70
    %p72 = scmp.ne.s32.totalorder %s64, %s66
    %p73 = scmp.eq.s32.totalorder %s14, 1
    %p74 = por %p72, %p73
    %p75 = scmp.ne.s32.totalorder %s66, %s67
    %p76 = scmp.eq.s32.totalorder %s14, 0
    %p77 = por %p75, %p76
    %p78 = scmp.ne.s32.totalorder %s66, %s67
    %p79 = scmp.eq.s32.totalorder %s15, 1
    %p80 = por %p78, %p79
    %p82 = scmp.ne.s32.totalorder %s67, %s81
    %p83 = scmp.eq.s32.totalorder %s15, 0
    %p84 = por %p82, %p83
    %s85 = ssub.s32 %s9, %s16
    %p86 = scmp.eq.s32.totalorder %s85, 0
    %s88 = sadd.s32 %s87, 1
    %s89 = scalar_select %p86, %s87, %s88
    %p92 = pneg %p86
    %p93 = scmp.eq.s32.totalorder %s9, 1
    %p94 = por %p92, %p93
    %p95 = scmp.ne.s32.totalorder %s87, %s90
    %p96 = scmp.eq.s32.totalorder %s9, 0
    %p97 = por %p95, %p96
    %p98 = scmp.ne.s32.totalorder %s87, %s90
    %p99 = scmp.eq.s32.totalorder %s14, 1
    %p100 = por %p98, %p99
    %p101 = scmp.ne.s32.totalorder %s90, %s91
    %p102 = scmp.eq.s32.totalorder %s14, 0
    %p103 = por %p101, %p102
    %p104 = scmp.ne.s32.totalorder %s90, %s91
    %p105 = scmp.eq.s32.totalorder %s15, 1
    %p106 = por %p104, %p105
    %p108 = scmp.ne.s32.totalorder %s91, %s107
    %p109 = scmp.eq.s32.totalorder %s15, 0
    %p110 = por %p108, %p109
    %p111 = scmp.le.s32.totalorder 1, %s9
    %p112 = scmp.lt.s32.totalorder %s9, 3
    %p113 = pnand %p111, %p112
    %p114 = pneg %p113
    // Predicated region
    $region9: #{fwd.20} parent=5 // pred_check
      _
    $region10: #{fwd.20} parent=5 // pred_check_branch
      %116 = sbr.rel (%p113) target = $region12
    $region11: #{fwd.20} parent=5 // pred_region
      %s117 = ssub.s32 %s9, 1
      // Predicated region
      $region13: #{fwd.20} parent=11 // pred_check
        %p118 = pneg %p56
      $region14: #{fwd.20} parent=11 // pred_check_branch
        %120 = sbr.rel (%p118) target = $region16
      $region15: #{fwd.20} parent=11 // pred_region
        _
      $region16: #{fwd.20} parent=11 // pred_fallthru
        _
      // Predicated region
      $region17: #{fwd.20} parent=11 // pred_check
        %p121 = pneg %p77
      $region18: #{fwd.20} parent=11 // pred_check_branch
        %123 = sbr.rel (%p121) target = $region20
      $region19: #{fwd.20} parent=11 // pred_region
        _
      $region20: #{fwd.20} parent=11 // pred_fallthru
        _
    $region12: #{fwd.20} parent=5 // pred_fallthru
      _
    %p124 = scmp.lt.s32.totalorder %s9, 2
    // Predicated region
    $region21: #{fwd.20} parent=5 // pred_check
      %p125 = pneg %p124
    $region22: #{fwd.20} parent=5 // pred_check_branch
      %127 = sbr.rel (%p125) target = $region24
    $region23: #{fwd.20} parent=5 // pred_region
      // Predicated region
      $region25: #{fwd.20} parent=23 // pred_check
        %p128 = pneg %p29
      $region26: #{fwd.20} parent=23 // pred_check_branch
        %130 = sbr.rel (%p128) target = $region28
      $region27: #{fwd.20} parent=23 // pred_region
        %s131 = smul.u32 32, %s9
        %p132 = scmp.lt.s32.totalorder %s131, 63
        %s133 = scalar_select %p132, %s131, 63
        %s134 = smul.addr %s133, 2
        %s135 = smul.addr %s134, 4
        %s136 = scalar_lea.vmem %s0, %s135
        %s137 = smul.u32 32, %s9
      $region28: #{fwd.20} parent=23 // pred_fallthru
        _
    $region24: #{fwd.20} parent=5 // pred_fallthru
      _
    %p138 = scmp.le.s32.totalorder 1, %s9
    %p139 = scmp.lt.s32.totalorder %s9, 3
    %p140 = pnand %p138, %p139
    %p141 = pneg %p140
    // Predicated region
    $region29: #{fwd.20} parent=5 // pred_check
      _
    $region30: #{fwd.20} parent=5 // pred_check_branch
      %143 = sbr.rel (%p140) target = $region32
    $region31: #{fwd.20} parent=5 // pred_region
      %s144 = ssub.s32 %s9, 1
      %s145 = smul.u32 32, %s14
      %p146 = scmp.lt.s32.totalorder %s145, 63
      %s147 = scalar_select %p146, %s145, 63
      %s148 = smul.addr %s147, 2
      %s149 = smul.addr %s148, 4
      %s150 = scalar_lea.vmem %s0, %s149
      %p151 = pneg %p35
      %p152 = pneg %p32
      %p153 = pneg %p56
      %p154 = pneg %p53
      %p155 = pneg %p77
      %p156 = pneg %p74
      %p157 = pneg %p103
      %p158 = pneg %p100
      %s159 = smul.u32 32, %s14
      %p160 = scmp.lt.s32.totalorder %s159, 63
      %s161 = scalar_select %p160, %s159, 63
      %s162 = smul.addr %s161, 4
      %s163 = scalar_lea.vmem %s3, %s162
      %s164 = smul.u32 32, %s14
      %p165 = scmp.lt.s32.totalorder %s164, 63
      %s166 = scalar_select %p165, %s164, 63
      %s167 = smul.addr %s166, 2
      %s168 = smul.addr %s167, 4
      %s169 = scalar_lea.vmem %s0, %s168
      %s170 = smul.u32 32, %s14
      %s171 = smul.u32 32, %s14
      %p172 = scmp.lt.s32.totalorder %s171, 63
      %s173 = scalar_select %p172, %s171, 63
      %s174 = smul.addr %s173, 4
      %s175 = scalar_lea.vmem %s3, %s174
      %s176 = smul.u32 32, %s14
      %v178 = vld [vmem:[%s169] sm:$0xff]
      %v179 = vld [vmem:[%s169 + $0x8] sm:$0xff]
      %v180 = vld [vmem:[%s169 + $0x10] sm:$0xff]
      %v181 = vld [vmem:[%s169 + $0x18] sm:$0xff]
      %v182 = vld [vmem:[%s169 + $0x20] sm:$0xff]
      %v183 = vld [vmem:[%s169 + $0x28] sm:$0xff]
      %v184 = vld [vmem:[%s169 + $0x30] sm:$0xff]
      %v185 = vld [vmem:[%s169 + $0x38] sm:$0xff]
      %v186 = vld [vmem:[%s169 + $0x40] sm:$0xff]
      %v187 = vld [vmem:[%s169 + $0x48] sm:$0xff]
      %v188 = vld [vmem:[%s169 + $0x50] sm:$0xff]
      %v189 = vld [vmem:[%s169 + $0x58] sm:$0xff]
      %v190 = vld [vmem:[%s169 + $0x60] sm:$0xff]
      %v191 = vld [vmem:[%s169 + $0x68] sm:$0xff]
      %v192 = vld [vmem:[%s169 + $0x70] sm:$0xff]
      %v193 = vld [vmem:[%s169 + $0x78] sm:$0xff]
      %v194 = vld [vmem:[%s169 + $0x80] sm:$0xff]
      %v195 = vld [vmem:[%s169 + $0x88] sm:$0xff]
      %v196 = vld [vmem:[%s169 + $0x90] sm:$0xff]
      %v197 = vld [vmem:[%s169 + $0x98] sm:$0xff]
      %v198 = vld [vmem:[%s169 + $0xa0] sm:$0xff]
      %v199 = vld [vmem:[%s169 + $0xa8] sm:$0xff]
      %v200 = vld [vmem:[%s169 + $0xb0] sm:$0xff]
      %v201 = vld [vmem:[%s169 + $0xb8] sm:$0xff]
      %v202 = vld [vmem:[%s169 + $0xc0] sm:$0xff]
      %v203 = vld [vmem:[%s169 + $0xc8] sm:$0xff]
      %v204 = vld [vmem:[%s169 + $0xd0] sm:$0xff]
      %v205 = vld [vmem:[%s169 + $0xd8] sm:$0xff]
      %v206 = vld [vmem:[%s169 + $0xe0] sm:$0xff]
      %v207 = vld [vmem:[%s169 + $0xe8] sm:$0xff]
      %v208 = vld [vmem:[%s169 + $0xf0] sm:$0xff]
      %v209 = vld [vmem:[%s169 + $0xf8] sm:$0xff]
      %v210 = vld [vmem:[%s1] sm:$0xf]
      %v211 = vld [vmem:[%s1 + $0x4] sm:$0xf]
      %v212 = vld [vmem:[%s1 + $0x8] sm:$0xf]
      %v213 = vld [vmem:[%s1 + $0xc] sm:$0xf]
      %v214 = vld [vmem:[%s1 + $0x10] sm:$0xf]
      %v215 = vld [vmem:[%s1 + $0x14] sm:$0xf]
      %v216 = vld [vmem:[%s1 + $0x18] sm:$0xf]
      %v217 = vld [vmem:[%s1 + $0x1c] sm:$0xf]
      %v218 = vld [vmem:[%s1 + $0x20] sm:$0xf]
      %v219 = vld [vmem:[%s1 + $0x24] sm:$0xf]
      %v220 = vld [vmem:[%s1 + $0x28] sm:$0xf]
      %v221 = vld [vmem:[%s1 + $0x2c] sm:$0xf]
      %v222 = vld [vmem:[%s1 + $0x30] sm:$0xf]
      %v223 = vld [vmem:[%s1 + $0x34] sm:$0xf]
      %v224 = vld [vmem:[%s1 + $0x38] sm:$0xf]
      %v225 = vld [vmem:[%s1 + $0x3c] sm:$0xf]
      %v226 = vld [vmem:[%s1 + $0x40] sm:$0xf]
      %v227 = vld [vmem:[%s1 + $0x44] sm:$0xf]
      %v228 = vld [vmem:[%s1 + $0x48] sm:$0xf]
      %v229 = vld [vmem:[%s1 + $0x4c] sm:$0xf]
      %v230 = vld [vmem:[%s1 + $0x50] sm:$0xf]
      %v231 = vld [vmem:[%s1 + $0x54] sm:$0xf]
      %v232 = vld [vmem:[%s1 + $0x58] sm:$0xf]
      %v233 = vld [vmem:[%s1 + $0x5c] sm:$0xf]
      %v234 = vld [vmem:[%s1 + $0x60] sm:$0xf]
      %v235 = vld [vmem:[%s1 + $0x64] sm:$0xf]
      %v236 = vld [vmem:[%s1 + $0x68] sm:$0xf]
      %v237 = vld [vmem:[%s1 + $0x6c] sm:$0xf]
      %v238 = vld [vmem:[%s1 + $0x70] sm:$0xf]
      %v239 = vld [vmem:[%s1 + $0x74] sm:$0xf]
      %v240 = vld [vmem:[%s1 + $0x78] sm:$0xf]
      %v241 = vld [vmem:[%s1 + $0x7c] sm:$0xf]
      %v242 = vld [vmem:[%s2] sm:$0x1]
      %v244 = vlaneseq
      %v245 = vshrl.u32 %v244, 7
      %v246 = vsub.s32 0, %v245
      %v247 = vrot.slane %v242, %v246
      %v281 = vunpack.c.l.b16 %v178
      %v282 = vunpack.c.h.b16 %v178
      %v283 = vunpack.c.l.b16 %v179
      %v284 = vunpack.c.h.b16 %v179
      %v285 = vunpack.c.l.b16 %v180
      %v286 = vunpack.c.h.b16 %v180
      %v287 = vunpack.c.l.b16 %v181
      %v288 = vunpack.c.h.b16 %v181
      %v289 = vunpack.c.l.b16 %v182
      %v290 = vunpack.c.h.b16 %v182
      %v291 = vunpack.c.l.b16 %v183
      %v292 = vunpack.c.h.b16 %v183
      %v293 = vunpack.c.l.b16 %v184
      %v294 = vunpack.c.h.b16 %v184
      %v295 = vunpack.c.l.b16 %v185
      %v296 = vunpack.c.h.b16 %v185
      %v297 = vunpack.c.l.b16 %v186
      %v298 = vunpack.c.h.b16 %v186
      %v299 = vunpack.c.l.b16 %v187
      %v300 = vunpack.c.h.b16 %v187
      %v301 = vunpack.c.l.b16 %v188
      %v302 = vunpack.c.h.b16 %v188
      %v303 = vunpack.c.l.b16 %v189
      %v304 = vunpack.c.h.b16 %v189
      %v305 = vunpack.c.l.b16 %v190
      %v306 = vunpack.c.h.b16 %v190
      %v307 = vunpack.c.l.b16 %v191
      %v308 = vunpack.c.h.b16 %v191
      %v309 = vunpack.c.l.b16 %v192
      %v310 = vunpack.c.h.b16 %v192
      %v311 = vunpack.c.l.b16 %v193
      %v312 = vunpack.c.h.b16 %v193
      %v313 = vunpack.c.l.b16 %v194
      %v314 = vunpack.c.h.b16 %v194
      %v315 = vunpack.c.l.b16 %v195
      %v316 = vunpack.c.h.b16 %v195
      %v317 = vunpack.c.l.b16 %v196
      %v318 = vunpack.c.h.b16 %v196
      %v319 = vunpack.c.l.b16 %v197
      %v320 = vunpack.c.h.b16 %v197
      %v321 = vunpack.c.l.b16 %v198
      %v322 = vunpack.c.h.b16 %v198
      %v323 = vunpack.c.l.b16 %v199
      %v324 = vunpack.c.h.b16 %v199
      %v325 = vunpack.c.l.b16 %v200
      %v326 = vunpack.c.h.b16 %v200
      %v327 = vunpack.c.l.b16 %v201
      %v328 = vunpack.c.h.b16 %v201
      %v329 = vunpack.c.l.b16 %v202
      %v330 = vunpack.c.h.b16 %v202
      %v331 = vunpack.c.l.b16 %v203
      %v332 = vunpack.c.h.b16 %v203
      %v333 = vunpack.c.l.b16 %v204
      %v334 = vunpack.c.h.b16 %v204
      %v335 = vunpack.c.l.b16 %v205
      %v336 = vunpack.c.h.b16 %v205
      %v337 = vunpack.c.l.b16 %v206
      %v338 = vunpack.c.h.b16 %v206
      %v339 = vunpack.c.l.b16 %v207
      %v340 = vunpack.c.h.b16 %v207
      %v341 = vunpack.c.l.b16 %v208
      %v342 = vunpack.c.h.b16 %v208
      %v343 = vunpack.c.l.b16 %v209
      %v344 = vunpack.c.h.b16 %v209
      %v345 = vpack.c.b16 %v283, %v281
      %v346 = vpack.c.b16 %v284, %v282
      %v347 = vpack.c.b16 %v287, %v285
      %v348 = vpack.c.b16 %v288, %v286
      %v349 = vpack.c.b16 %v291, %v289
      %v350 = vpack.c.b16 %v292, %v290
      %v351 = vpack.c.b16 %v295, %v293
      %v352 = vpack.c.b16 %v296, %v294
      %v353 = vpack.c.b16 %v299, %v297
      %v354 = vpack.c.b16 %v300, %v298
      %v355 = vpack.c.b16 %v303, %v301
      %v356 = vpack.c.b16 %v304, %v302
      %v357 = vpack.c.b16 %v307, %v305
      %v358 = vpack.c.b16 %v308, %v306
      %v359 = vpack.c.b16 %v311, %v309
      %v360 = vpack.c.b16 %v312, %v310
      %v361 = vpack.c.b16 %v315, %v313
      %v362 = vpack.c.b16 %v316, %v314
      %v363 = vpack.c.b16 %v319, %v317
      %v364 = vpack.c.b16 %v320, %v318
      %v365 = vpack.c.b16 %v323, %v321
      %v366 = vpack.c.b16 %v324, %v322
      %v367 = vpack.c.b16 %v327, %v325
      %v368 = vpack.c.b16 %v328, %v326
      %v369 = vpack.c.b16 %v331, %v329
      %v370 = vpack.c.b16 %v332, %v330
      %v371 = vpack.c.b16 %v335, %v333
      %v372 = vpack.c.b16 %v336, %v334
      %v373 = vpack.c.b16 %v339, %v337
      %v374 = vpack.c.b16 %v340, %v338
      %v375 = vpack.c.b16 %v343, %v341
      %v376 = vpack.c.b16 %v344, %v342
      %v441 = vunpack.c.l.b16 %v210
      %v442 = vunpack.c.l.b16 %v211
      %v443 = vunpack.c.l.b16 %v212
      %v444 = vunpack.c.l.b16 %v213
      %v445 = vunpack.c.l.b16 %v214
      %v446 = vunpack.c.l.b16 %v215
      %v447 = vunpack.c.l.b16 %v216
      %v448 = vunpack.c.l.b16 %v217
      %v449 = vunpack.c.l.b16 %v218
      %v450 = vunpack.c.l.b16 %v219
      %v451 = vunpack.c.l.b16 %v220
      %v452 = vunpack.c.l.b16 %v221
      %v453 = vunpack.c.l.b16 %v222
      %v454 = vunpack.c.l.b16 %v223
      %v455 = vunpack.c.l.b16 %v224
      %v456 = vunpack.c.l.b16 %v225
      %v457 = vunpack.c.l.b16 %v226
      %v458 = vunpack.c.l.b16 %v227
      %v459 = vunpack.c.l.b16 %v228
      %v460 = vunpack.c.l.b16 %v229
      %v461 = vunpack.c.l.b16 %v230
      %v462 = vunpack.c.l.b16 %v231
      %v463 = vunpack.c.l.b16 %v232
      %v464 = vunpack.c.l.b16 %v233
      %v465 = vunpack.c.l.b16 %v234
      %v466 = vunpack.c.l.b16 %v235
      %v467 = vunpack.c.l.b16 %v236
      %v468 = vunpack.c.l.b16 %v237
      %v469 = vunpack.c.l.b16 %v238
      %v470 = vunpack.c.l.b16 %v239
      %v471 = vunpack.c.l.b16 %v240
      %v472 = vunpack.c.l.b16 %v241
      %v473 = vpack.c.b16 %v442, %v441
      %v474 = vpack.c.b16 %v444, %v443
      %v475 = vpack.c.b16 %v446, %v445
      %v476 = vpack.c.b16 %v448, %v447
      %v477 = vpack.c.b16 %v450, %v449
      %v478 = vpack.c.b16 %v452, %v451
      %v479 = vpack.c.b16 %v454, %v453
      %v480 = vpack.c.b16 %v456, %v455
      %v481 = vpack.c.b16 %v458, %v457
      %v482 = vpack.c.b16 %v460, %v459
      %v483 = vpack.c.b16 %v462, %v461
      %v484 = vpack.c.b16 %v464, %v463
      %v485 = vpack.c.b16 %v466, %v465
      %v486 = vpack.c.b16 %v468, %v467
      %v487 = vpack.c.b16 %v470, %v469
      %v488 = vpack.c.b16 %v472, %v471
      %505 = vmatprep.subr.bf16.mxu0 0
      %506 = vmatpush1.bf16.msra.mxu0 %v473
      %507 = vmatprep.subr.bf16.mxu0 0
      %508 = vmatpush1.bf16.msra.mxu0 %v474
      %509 = vmatprep.subr.bf16.mxu0 0
      %510 = vmatpush1.bf16.msra.mxu0 %v475
      %511 = vmatprep.subr.bf16.mxu0 0
      %512 = vmatpush1.bf16.msra.mxu0 %v476
      %513 = vmatprep.subr.bf16.mxu0 0
      %514 = vmatpush1.bf16.msra.mxu0 %v477
      %515 = vmatprep.subr.bf16.mxu0 0
      %516 = vmatpush1.bf16.msra.mxu0 %v478
      %517 = vmatprep.subr.bf16.mxu0 0
      %518 = vmatpush1.bf16.msra.mxu0 %v479
      %519 = vmatprep.subr.bf16.mxu0 0
      %520 = vmatpush1.bf16.msra.mxu0 %v480
      %521 = vmatprep.subr.bf16.mxu0 0
      %522 = vmatpush1.bf16.msra.mxu0 %v481
      %523 = vmatprep.subr.bf16.mxu0 0
      %524 = vmatpush1.bf16.msra.mxu0 %v482
      %525 = vmatprep.subr.bf16.mxu0 0
      %526 = vmatpush1.bf16.msra.mxu0 %v483
      %527 = vmatprep.subr.bf16.mxu0 0
      %528 = vmatpush1.bf16.msra.mxu0 %v484
      %529 = vmatprep.subr.bf16.mxu0 0
      %530 = vmatpush1.bf16.msra.mxu0 %v485
      %531 = vmatprep.subr.bf16.mxu0 0
      %532 = vmatpush1.bf16.msra.mxu0 %v486
      %533 = vmatprep.subr.bf16.mxu0 0
      %534 = vmatpush1.bf16.msra.mxu0 %v487
      %535 = vmatprep.subr.bf16.mxu0 0
      %536 = vmatpush1.bf16.msra.mxu0 %v488
      %537 = vmatprep.mubr.bf16.mxu0 %v346
      %538 = vmatmul.mubr.bf16.gmra.mrb[0].mxu0 %v345
      %v539 = vpop.f32.mrb[0].mxu0
      %v540 = vadd.f32 %v247, %v539
      %v541 = vpop.f32.mrb[0].mxu0
      %v542 = vpop.f32.mrb[0].mxu0
      %v543 = vadd.f32 %v247, %v542
      %v544 = vpop.f32.mrb[0].mxu0
      %545 = vmatprep.mubr.bf16.mxu0 %v348
      %546 = vmatmul.mubr.bf16.gmra.mrb[0].mxu0 %v347
      %v547 = vpop.f32.mrb[0].mxu0
      %v548 = vadd.f32 %v247, %v547
      %v549 = vpop.f32.mrb[0].mxu0
      %v550 = vpop.f32.mrb[0].mxu0
      %v551 = vadd.f32 %v247, %v550
      %v552 = vpop.f32.mrb[0].mxu0
      %553 = vmatprep.mubr.bf16.mxu0 %v350
      %554 = vmatmul.mubr.bf16.gmra.mrb[0].mxu0 %v349
      %v555 = vpop.f32.mrb[0].mxu0
      %v556 = vadd.f32 %v247, %v555
      %v557 = vpop.f32.mrb[0].mxu0
      %v558 = vpop.f32.mrb[0].mxu0
      %v559 = vadd.f32 %v247, %v558
      %v560 = vpop.f32.mrb[0].mxu0
      %561 = vmatprep.mubr.bf16.mxu0 %v352
      %562 = vmatmul.mubr.bf16.gmra.mrb[0].mxu0 %v351
      %v563 = vpop.f32.mrb[0].mxu0
      %v564 = vadd.f32 %v247, %v563
      %v565 = vpop.f32.mrb[0].mxu0
      %v566 = vpop.f32.mrb[0].mxu0
      %v567 = vadd.f32 %v247, %v566
      %v568 = vpop.f32.mrb[0].mxu0
      %569 = vmatprep.mubr.bf16.mxu0 %v354
      %570 = vmatmul.mubr.bf16.gmra.mrb[0].mxu0 %v353
      %v571 = vpop.f32.mrb[0].mxu0
      %v572 = vadd.f32 %v247, %v571
      %v573 = vpop.f32.mrb[0].mxu0
      %v574 = vpop.f32.mrb[0].mxu0
      %v575 = vadd.f32 %v247, %v574
      %v576 = vpop.f32.mrb[0].mxu0
      %577 = vmatprep.mubr.bf16.mxu0 %v356
      %578 = vmatmul.mubr.bf16.gmra.mrb[0].mxu0 %v355
      %v579 = vpop.f32.mrb[0].mxu0
      %v580 = vadd.f32 %v247, %v579
      %v581 = vpop.f32.mrb[0].mxu0
      %v582 = vpop.f32.mrb[0].mxu0
      %v583 = vadd.f32 %v247, %v582
      %v584 = vpop.f32.mrb[0].mxu0
      %585 = vmatprep.mubr.bf16.mxu0 %v358
      %586 = vmatmul.mubr.bf16.gmra.mrb[0].mxu0 %v357
      %v587 = vpop.f32.mrb[0].mxu0
      %v588 = vadd.f32 %v247, %v587
      %v589 = vpop.f32.mrb[0].mxu0
      %v590 = vpop.f32.mrb[0].mxu0
      %v591 = vadd.f32 %v247, %v590
      %v592 = vpop.f32.mrb[0].mxu0
      %593 = vmatprep.mubr.bf16.mxu0 %v360
      %594 = vmatmul.mubr.bf16.gmra.mrb[0].mxu0 %v359
      %v595 = vpop.f32.mrb[0].mxu0
      %v596 = vadd.f32 %v247, %v595
      %v597 = vpop.f32.mrb[0].mxu0
      %v598 = vpop.f32.mrb[0].mxu0
      %v599 = vadd.f32 %v247, %v598
      %v600 = vpop.f32.mrb[0].mxu0
      %601 = vmatprep.mubr.bf16.mxu0 %v362
      %602 = vmatmul.mubr.bf16.gmra.mrb[0].mxu0 %v361
      %v603 = vpop.f32.mrb[0].mxu0
      %v604 = vadd.f32 %v247, %v603
      %v605 = vpop.f32.mrb[0].mxu0
      %v606 = vpop.f32.mrb[0].mxu0
      %v607 = vadd.f32 %v247, %v606
      %v608 = vpop.f32.mrb[0].mxu0
      %609 = vmatprep.mubr.bf16.mxu0 %v364
      %610 = vmatmul.mubr.bf16.gmra.mrb[0].mxu0 %v363
      %v611 = vpop.f32.mrb[0].mxu0
      %v612 = vadd.f32 %v247, %v611
      %v613 = vpop.f32.mrb[0].mxu0
      %v614 = vpop.f32.mrb[0].mxu0
      %v615 = vadd.f32 %v247, %v614
      %v616 = vpop.f32.mrb[0].mxu0
      %617 = vmatprep.mubr.bf16.mxu0 %v366
      %618 = vmatmul.mubr.bf16.gmra.mrb[0].mxu0 %v365
      %v619 = vpop.f32.mrb[0].mxu0
      %v620 = vadd.f32 %v247, %v619
      %v621 = vpop.f32.mrb[0].mxu0
      %v622 = vpop.f32.mrb[0].mxu0
      %v623 = vadd.f32 %v247, %v622
      %v624 = vpop.f32.mrb[0].mxu0
      %625 = vmatprep.mubr.bf16.mxu0 %v368
      %626 = vmatmul.mubr.bf16.gmra.mrb[0].mxu0 %v367
      %v627 = vpop.f32.mrb[0].mxu0
      %v628 = vadd.f32 %v247, %v627
      %v629 = vpop.f32.mrb[0].mxu0
      %v630 = vpop.f32.mrb[0].mxu0
      %v631 = vadd.f32 %v247, %v630
      %v632 = vpop.f32.mrb[0].mxu0
      %633 = vmatprep.mubr.bf16.mxu0 %v370
      %634 = vmatmul.mubr.bf16.gmra.mrb[0].mxu0 %v369
      %v635 = vpop.f32.mrb[0].mxu0
      %v636 = vadd.f32 %v247, %v635
      %v637 = vpop.f32.mrb[0].mxu0
      %v638 = vpop.f32.mrb[0].mxu0
      %v639 = vadd.f32 %v247, %v638
      %v640 = vpop.f32.mrb[0].mxu0
      %641 = vmatprep.mubr.bf16.mxu0 %v372
      %642 = vmatmul.mubr.bf16.gmra.mrb[0].mxu0 %v371
      %v643 = vpop.f32.mrb[0].mxu0
      %v644 = vadd.f32 %v247, %v643
      %v645 = vpop.f32.mrb[0].mxu0
      %v646 = vpop.f32.mrb[0].mxu0
      %v647 = vadd.f32 %v247, %v646
      %v648 = vpop.f32.mrb[0].mxu0
      %649 = vmatprep.mubr.bf16.mxu0 %v374
      %650 = vmatmul.mubr.bf16.gmra.mrb[0].mxu0 %v373
      %v651 = vpop.f32.mrb[0].mxu0
      %v652 = vadd.f32 %v247, %v651
      %v653 = vpop.f32.mrb[0].mxu0
      %v654 = vpop.f32.mrb[0].mxu0
      %v655 = vadd.f32 %v247, %v654
      %v656 = vpop.f32.mrb[0].mxu0
      %657 = vmatprep.mubr.bf16.mxu0 %v376
      %658 = vmatmul.mubr.bf16.gmra.mrb[0].mxu0 %v375
      %v659 = vpop.f32.mrb[0].mxu0
      %v660 = vadd.f32 %v247, %v659
      %v661 = vpop.f32.mrb[0].mxu0
      %v662 = vpop.f32.mrb[0].mxu0
      %v663 = vadd.f32 %v247, %v662
      %v664 = vpop.f32.mrb[0].mxu0
      %665 = vdwg.mxu0
      %v666 = vmax.f32 %v540, 0.0
      %v667 = vmax.f32 %v543, 0.0
      %v668 = vmax.f32 %v548, 0.0
      %v669 = vmax.f32 %v551, 0.0
      %v670 = vmax.f32 %v556, 0.0
      %v671 = vmax.f32 %v559, 0.0
      %v672 = vmax.f32 %v564, 0.0
      %v673 = vmax.f32 %v567, 0.0
      %v674 = vmax.f32 %v572, 0.0
      %v675 = vmax.f32 %v575, 0.0
      %v676 = vmax.f32 %v580, 0.0
      %v677 = vmax.f32 %v583, 0.0
      %v678 = vmax.f32 %v588, 0.0
      %v679 = vmax.f32 %v591, 0.0
      %v680 = vmax.f32 %v596, 0.0
      %v681 = vmax.f32 %v599, 0.0
      %v682 = vmax.f32 %v604, 0.0
      %v683 = vmax.f32 %v607, 0.0
      %v684 = vmax.f32 %v612, 0.0
      %v685 = vmax.f32 %v615, 0.0
      %v686 = vmax.f32 %v620, 0.0
      %v687 = vmax.f32 %v623, 0.0
      %v688 = vmax.f32 %v628, 0.0
      %v689 = vmax.f32 %v631, 0.0
      %v690 = vmax.f32 %v636, 0.0
      %v691 = vmax.f32 %v639, 0.0
      %v692 = vmax.f32 %v644, 0.0
      %v693 = vmax.f32 %v647, 0.0
      %v694 = vmax.f32 %v652, 0.0
      %v695 = vmax.f32 %v655, 0.0
      %v696 = vmax.f32 %v660, 0.0
      %v697 = vmax.f32 %v663, 0.0
      %v698 = vpack.c.bf16 %v667, %v666
      %v699 = vpack.c.bf16 %v669, %v668
      %v700 = vpack.c.bf16 %v671, %v670
      %v701 = vpack.c.bf16 %v673, %v672
      %v702 = vpack.c.bf16 %v675, %v674
      %v703 = vpack.c.bf16 %v677, %v676
      %v704 = vpack.c.bf16 %v679, %v678
      %v705 = vpack.c.bf16 %v681, %v680
      %v706 = vpack.c.bf16 %v683, %v682
      %v707 = vpack.c.bf16 %v685, %v684
      %v708 = vpack.c.bf16 %v687, %v686
      %v709 = vpack.c.bf16 %v689, %v688
      %v710 = vpack.c.bf16 %v691, %v690
      %v711 = vpack.c.bf16 %v693, %v692
      %v712 = vpack.c.bf16 %v695, %v694
      %v713 = vpack.c.bf16 %v697, %v696
      %v730 = vunpack.c.l.b16 %v698
      %v731 = vunpack.c.h.b16 %v698
      %v732 = vunpack.c.l.b16 %v699
      %v733 = vunpack.c.h.b16 %v699
      %v734 = vunpack.c.l.b16 %v700
      %v735 = vunpack.c.h.b16 %v700
      %v736 = vunpack.c.l.b16 %v701
      %v737 = vunpack.c.h.b16 %v701
      %v738 = vunpack.c.l.b16 %v702
      %v739 = vunpack.c.h.b16 %v702
      %v740 = vunpack.c.l.b16 %v703
      %v741 = vunpack.c.h.b16 %v703
      %v742 = vunpack.c.l.b16 %v704
      %v743 = vunpack.c.h.b16 %v704
      %v744 = vunpack.c.l.b16 %v705
      %v745 = vunpack.c.h.b16 %v705
      %v746 = vunpack.c.l.b16 %v706
      %v747 = vunpack.c.h.b16 %v706
      %v748 = vunpack.c.l.b16 %v707
      %v749 = vunpack.c.h.b16 %v707
      %v750 = vunpack.c.l.b16 %v708
      %v751 = vunpack.c.h.b16 %v708
      %v752 = vunpack.c.l.b16 %v709
      %v753 = vunpack.c.h.b16 %v709
      %v754 = vunpack.c.l.b16 %v710
      %v755 = vunpack.c.h.b16 %v710
      %v756 = vunpack.c.l.b16 %v711
      %v757 = vunpack.c.h.b16 %v711
      %v758 = vunpack.c.l.b16 %v712
      %v759 = vunpack.c.h.b16 %v712
      %v760 = vunpack.c.l.b16 %v713
      %v761 = vunpack.c.h.b16 %v713
      %v762 = vpack.c.b16 %v730, %v730
      %v763 = vpack.c.b16 %v731, %v731
      %v764 = vpack.c.b16 %v732, %v732
      %v765 = vpack.c.b16 %v733, %v733
      %v766 = vpack.c.b16 %v734, %v734
      %v767 = vpack.c.b16 %v735, %v735
      %v768 = vpack.c.b16 %v736, %v736
      %v769 = vpack.c.b16 %v737, %v737
      %v770 = vpack.c.b16 %v738, %v738
      %v771 = vpack.c.b16 %v739, %v739
      %v772 = vpack.c.b16 %v740, %v740
      %v773 = vpack.c.b16 %v741, %v741
      %v774 = vpack.c.b16 %v742, %v742
      %v775 = vpack.c.b16 %v743, %v743
      %v776 = vpack.c.b16 %v744, %v744
      %v777 = vpack.c.b16 %v745, %v745
      %v778 = vpack.c.b16 %v746, %v746
      %v779 = vpack.c.b16 %v747, %v747
      %v780 = vpack.c.b16 %v748, %v748
      %v781 = vpack.c.b16 %v749, %v749
      %v782 = vpack.c.b16 %v750, %v750
      %v783 = vpack.c.b16 %v751, %v751
      %v784 = vpack.c.b16 %v752, %v752
      %v785 = vpack.c.b16 %v753, %v753
      %v786 = vpack.c.b16 %v754, %v754
      %v787 = vpack.c.b16 %v755, %v755
      %v788 = vpack.c.b16 %v756, %v756
      %v789 = vpack.c.b16 %v757, %v757
      %v790 = vpack.c.b16 %v758, %v758
      %v791 = vpack.c.b16 %v759, %v759
      %v792 = vpack.c.b16 %v760, %v760
      %v793 = vpack.c.b16 %v761, %v761
      %826 = vst [vmem:[%s175] sm:$0xf] %v762
      %827 = vst [vmem:[%s175 + $0x4] sm:$0xf] %v763
      %828 = vst [vmem:[%s175 + $0x8] sm:$0xf] %v764
      %829 = vst [vmem:[%s175 + $0xc] sm:$0xf] %v765
      %830 = vst [vmem:[%s175 + $0x10] sm:$0xf] %v766
      %831 = vst [vmem:[%s175 + $0x14] sm:$0xf] %v767
      %832 = vst [vmem:[%s175 + $0x18] sm:$0xf] %v768
      %833 = vst [vmem:[%s175 + $0x1c] sm:$0xf] %v769
      %834 = vst [vmem:[%s175 + $0x20] sm:$0xf] %v770
      %835 = vst [vmem:[%s175 + $0x24] sm:$0xf] %v771
      %836 = vst [vmem:[%s175 + $0x28] sm:$0xf] %v772
      %837 = vst [vmem:[%s175 + $0x2c] sm:$0xf] %v773
      %838 = vst [vmem:[%s175 + $0x30] sm:$0xf] %v774
      %839 = vst [vmem:[%s175 + $0x34] sm:$0xf] %v775
      %840 = vst [vmem:[%s175 + $0x38] sm:$0xf] %v776
      %841 = vst [vmem:[%s175 + $0x3c] sm:$0xf] %v777
      %842 = vst [vmem:[%s175 + $0x40] sm:$0xf] %v778
      %843 = vst [vmem:[%s175 + $0x44] sm:$0xf] %v779
      %844 = vst [vmem:[%s175 + $0x48] sm:$0xf] %v780
      %845 = vst [vmem:[%s175 + $0x4c] sm:$0xf] %v781
      %846 = vst [vmem:[%s175 + $0x50] sm:$0xf] %v782
      %847 = vst [vmem:[%s175 + $0x54] sm:$0xf] %v783
      %848 = vst [vmem:[%s175 + $0x58] sm:$0xf] %v784
      %849 = vst [vmem:[%s175 + $0x5c] sm:$0xf] %v785
      %850 = vst [vmem:[%s175 + $0x60] sm:$0xf] %v786
      %851 = vst [vmem:[%s175 + $0x64] sm:$0xf] %v787
      %852 = vst [vmem:[%s175 + $0x68] sm:$0xf] %v788
      %853 = vst [vmem:[%s175 + $0x6c] sm:$0xf] %v789
      %854 = vst [vmem:[%s175 + $0x70] sm:$0xf] %v790
      %855 = vst [vmem:[%s175 + $0x74] sm:$0xf] %v791
      %856 = vst [vmem:[%s175 + $0x78] sm:$0xf] %v792
      %857 = vst [vmem:[%s175 + $0x7c] sm:$0xf] %v793
      %s858 = smul.u32 32, %s14
      %p859 = scmp.lt.s32.totalorder %s858, 63
      %s860 = scalar_select %p859, %s858, 63
      %s861 = smul.addr %s860, 4
      %s862 = scalar_lea.vmem %s3, %s861
      // Predicated region
      $region33: #{fwd.20} parent=31 // pred_check
        %p863 = pneg %p100
      $region34: #{fwd.20} parent=31 // pred_check_branch
        %865 = sbr.rel (%p863) target = $region36
      $region35: #{fwd.20} parent=31 // pred_region
        %s866 = smul.u32 32, %s14
      $region36: #{fwd.20} parent=31 // pred_fallthru
        _
    $region32: #{fwd.20} parent=5 // pred_fallthru
      _
    %p867 = scmp.le.s32.totalorder 2, %s9
    // Predicated region
    $region37: #{fwd.20} parent=5 // pred_check
      %p868 = pneg %p867
    $region38: #{fwd.20} parent=5 // pred_check_branch
      %870 = sbr.rel (%p868) target = $region40
    $region39: #{fwd.20} parent=5 // pred_region
      %s871 = ssub.s32 %s9, 2
      // Predicated region
      $region41: #{fwd.20} parent=39 // pred_check
        %p872 = pneg %p106
      $region42: #{fwd.20} parent=39 // pred_check_branch
        %874 = sbr.rel (%p872) target = $region44
      $region43: #{fwd.20} parent=39 // pred_region
        %s875 = smul.u32 32, %s15
        %p876 = scmp.lt.s32.totalorder %s875, 63
        %s877 = scalar_select %p876, %s875, 63
        %s878 = smul.addr %s877, 4
        %s879 = scalar_lea.vmem %s3, %s878
      $region44: #{fwd.20} parent=39 // pred_fallthru
        _
    $region40: #{fwd.20} parent=5 // pred_fallthru
      _
  $region6: #{fwd.20} parent=0 // loop_footer
    %s13 = sadd.s32 1, %s9
  $region7: #{fwd.20} parent=0 // loop_footer_branch
    %8 = sbr.rel target = $region3
  $region8: #{fwd.20} parent=0 // loop_exit
    _

// kernel: fwd.21
$region0: #{fwd.21}
  #allocation0 [shape = 'u32[]', space=smem, size = 0x4, offset = 0x4, fixed_abs, tag = 'smem constant byte address 0x4 - core index']
  #allocation1 [shape = 'u32[144,128]{1,0:T(1,128)}', space=vmem, size = 0x12000, scoped, tag = 'internal scratch']
  %s0 = inlined_call_operand.vmem [shape: bf16[128,640], index: 0, kind: input, shape index: {}]
  %s1 = inlined_call_operand.vmem [shape: bf16[640,128], index: 1, kind: input, shape index: {}]
  %s2 = inlined_call_operand.vmem [shape: f32[1,128], index: 2, kind: input, shape index: {}]
  %s3 = inlined_call_operand.vmem [shape: bf16[128,128], index: 3, kind: output, shape index: {}]
  %s4 = sld [smem:[#allocation0]]
  $region22: #{fwd.21} parent=0
    _
  %s6 = ssub.s32 1, %s4
  %s7 = scalar_select 0, %s6, %s4
  // Predicated region
  $region2: #{fwd.21} parent=0 // pred_check
    _
  $region3: #{fwd.21} parent=0 // pred_check_branch
    %9 = sbr.rel (0) target = $region5
  $region4: #{fwd.21} parent=0 // pred_region
    _
  $region5: #{fwd.21} parent=0 // pred_fallthru
    _
  // Predicated region
  $region6: #{fwd.21} parent=0 // pred_check
    _
  $region7: #{fwd.21} parent=0 // pred_check_branch
    %11 = sbr.rel (0) target = $region9
  $region8: #{fwd.21} parent=0 // pred_region
    _
  $region9: #{fwd.21} parent=0 // pred_fallthru
    _
  // Predicated region
  $region10: #{fwd.21} parent=0 // pred_check
    _
  $region11: #{fwd.21} parent=0 // pred_check_branch
    %13 = sbr.rel (0) target = $region13
  $region12: #{fwd.21} parent=0 // pred_region
    _
  $region13: #{fwd.21} parent=0 // pred_fallthru
    _
  %v15 = vld [vmem:[%s0] sm:$0xff]
  %v16 = vld [vmem:[%s0 + $0x8] sm:$0xff]
  %v17 = vld [vmem:[%s0 + $0x10] sm:$0xf]
  %v18 = vld [vmem:[%s0 + $0x14] sm:$0xff]
  %v19 = vld [vmem:[%s0 + $0x1c] sm:$0xff]
  %v20 = vld [vmem:[%s0 + $0x24] sm:$0xf]
  %v21 = vld [vmem:[%s0 + $0x28] sm:$0xff]
  %v22 = vld [vmem:[%s0 + $0x30] sm:$0xff]
  %v23 = vld [vmem:[%s0 + $0x38] sm:$0xf]
  %v24 = vld [vmem:[%s0 + $0x3c] sm:$0xff]
  %v25 = vld [vmem:[%s0 + $0x44] sm:$0xff]
  %v26 = vld [vmem:[%s0 + $0x4c] sm:$0xf]
  %v27 = vld [vmem:[%s0 + $0x50] sm:$0xff]
  %v28 = vld [vmem:[%s0 + $0x58] sm:$0xff]
  %v29 = vld [vmem:[%s0 + $0x60] sm:$0xf]
  %v30 = vld [vmem:[%s0 + $0x64] sm:$0xff]
  %v31 = vld [vmem:[%s0 + $0x6c] sm:$0xff]
  %v32 = vld [vmem:[%s0 + $0x74] sm:$0xf]
  %v33 = vld [vmem:[%s0 + $0x78] sm:$0xff]
  %v34 = vld [vmem:[%s0 + $0x80] sm:$0xff]
  %v35 = vld [vmem:[%s0 + $0x88] sm:$0xf]
  %v36 = vld [vmem:[%s0 + $0x8c] sm:$0xff]
  %v37 = vld [vmem:[%s0 + $0x94] sm:$0xff]
  %v38 = vld [vmem:[%s0 + $0x9c] sm:$0xf]
  %v39 = vld [vmem:[%s0 + $0xa0] sm:$0xff]
  %v40 = vld [vmem:[%s0 + $0xa8] sm:$0xff]
  %v41 = vld [vmem:[%s0 + $0xb0] sm:$0xf]
  %v42 = vld [vmem:[%s0 + $0xb4] sm:$0xff]
  %v43 = vld [vmem:[%s0 + $0xbc] sm:$0xff]
  %v44 = vld [vmem:[%s0 + $0xc4] sm:$0xf]
  %v45 = vld [vmem:[%s0 + $0xc8] sm:$0xff]
  %v46 = vld [vmem:[%s0 + $0xd0] sm:$0xff]
  %v47 = vld [vmem:[%s0 + $0xd8] sm:$0xf]
  %v48 = vld [vmem:[%s0 + $0xdc] sm:$0xff]
  %v49 = vld [vmem:[%s0 + $0xe4] sm:$0xff]
  %v50 = vld [vmem:[%s0 + $0xec] sm:$0xf]
  %v51 = vld [vmem:[%s0 + $0xf0] sm:$0xff]
  %v52 = vld [vmem:[%s0 + $0xf8] sm:$0xff]
  %v53 = vld [vmem:[%s0 + $0x100] sm:$0xf]
  %v54 = vld [vmem:[%s0 + $0x104] sm:$0xff]
  %v55 = vld [vmem:[%s0 + $0x10c] sm:$0xff]
  %v56 = vld [vmem:[%s0 + $0x114] sm:$0xf]
  %v57 = vld [vmem:[%s0 + $0x118] sm:$0xff]
  %v58 = vld [vmem:[%s0 + $0x120] sm:$0xff]
  %v59 = vld [vmem:[%s0 + $0x128] sm:$0xf]
  %v60 = vld [vmem:[%s0 + $0x12c] sm:$0xff]
  %v61 = vld [vmem:[%s0 + $0x134] sm:$0xff]
  %v62 = vld [vmem:[%s0 + $0x13c] sm:$0xf]
  %v63 = vld [vmem:[%s1] sm:$0xf]
  %v64 = vld [vmem:[%s1 + $0x4] sm:$0xf]
  %v65 = vld [vmem:[%s1 + $0x8] sm:$0xf]
  %v66 = vld [vmem:[%s1 + $0xc] sm:$0xf]
  %v67 = vld [vmem:[%s1 + $0x10] sm:$0xf]
  %v68 = vld [vmem:[%s1 + $0x14] sm:$0xf]
  %v69 = vld [vmem:[%s1 + $0x18] sm:$0xf]
  %v70 = vld [vmem:[%s1 + $0x1c] sm:$0xf]
  %v71 = vld [vmem:[%s1 + $0x20] sm:$0xf]
  %v72 = vld [vmem:[%s1 + $0x24] sm:$0xf]
  %v73 = vld [vmem:[%s1 + $0x28] sm:$0xf]
  %v74 = vld [vmem:[%s1 + $0x2c] sm:$0xf]
  %v75 = vld [vmem:[%s1 + $0x30] sm:$0xf]
  %v76 = vld [vmem:[%s1 + $0x34] sm:$0xf]
  %v77 = vld [vmem:[%s1 + $0x38] sm:$0xf]
  %v78 = vld [vmem:[%s1 + $0x3c] sm:$0xf]
  %v79 = vld [vmem:[%s1 + $0x40] sm:$0xf]
  %v80 = vld [vmem:[%s1 + $0x44] sm:$0xf]
  %v81 = vld [vmem:[%s1 + $0x48] sm:$0xf]
  %v82 = vld [vmem:[%s1 + $0x4c] sm:$0xf]
  %v83 = vld [vmem:[%s1 + $0x50] sm:$0xf]
  %v84 = vld [vmem:[%s1 + $0x54] sm:$0xf]
  %v85 = vld [vmem:[%s1 + $0x58] sm:$0xf]
  %v86 = vld [vmem:[%s1 + $0x5c] sm:$0xf]
  %v87 = vld [vmem:[%s1 + $0x60] sm:$0xf]
  %v88 = vld [vmem:[%s1 + $0x64] sm:$0xf]
  %v89 = vld [vmem:[%s1 + $0x68] sm:$0xf]
  %v90 = vld [vmem:[%s1 + $0x6c] sm:$0xf]
  %v91 = vld [vmem:[%s1 + $0x70] sm:$0xf]
  %v92 = vld [vmem:[%s1 + $0x74] sm:$0xf]
  %v93 = vld [vmem:[%s1 + $0x78] sm:$0xf]
  %v94 = vld [vmem:[%s1 + $0x7c] sm:$0xf]
  %v95 = vld [vmem:[%s1 + $0x80] sm:$0xf]
  %v96 = vld [vmem:[%s1 + $0x84] sm:$0xf]
  %v97 = vld [vmem:[%s1 + $0x88] sm:$0xf]
  %v98 = vld [vmem:[%s1 + $0x8c] sm:$0xf]
  %v99 = vld [vmem:[%s1 + $0x90] sm:$0xf]
  %v100 = vld [vmem:[%s1 + $0x94] sm:$0xf]
  %v101 = vld [vmem:[%s1 + $0x98] sm:$0xf]
  %v102 = vld [vmem:[%s1 + $0x9c] sm:$0xf]
  %v103 = vld [vmem:[%s1 + $0xa0] sm:$0xf]
  %v104 = vld [vmem:[%s1 + $0xa4] sm:$0xf]
  %v105 = vld [vmem:[%s1 + $0xa8] sm:$0xf]
  %v106 = vld [vmem:[%s1 + $0xac] sm:$0xf]
  %v107 = vld [vmem:[%s1 + $0xb0] sm:$0xf]
  %v108 = vld [vmem:[%s1 + $0xb4] sm:$0xf]
  %v109 = vld [vmem:[%s1 + $0xb8] sm:$0xf]
  %v110 = vld [vmem:[%s1 + $0xbc] sm:$0xf]
  %v111 = vld [vmem:[%s1 + $0xc0] sm:$0xf]
  %v112 = vld [vmem:[%s1 + $0xc4] sm:$0xf]
  %v113 = vld [vmem:[%s1 + $0xc8] sm:$0xf]
  %v114 = vld [vmem:[%s1 + $0xcc] sm:$0xf]
  %v115 = vld [vmem:[%s1 + $0xd0] sm:$0xf]
  %v116 = vld [vmem:[%s1 + $0xd4] sm:$0xf]
  %v117 = vld [vmem:[%s1 + $0xd8] sm:$0xf]
  %v118 = vld [vmem:[%s1 + $0xdc] sm:$0xf]
  %v119 = vld [vmem:[%s1 + $0xe0] sm:$0xf]
  %v120 = vld [vmem:[%s1 + $0xe4] sm:$0xf]
  %v121 = vld [vmem:[%s1 + $0xe8] sm:$0xf]
  %v122 = vld [vmem:[%s1 + $0xec] sm:$0xf]
  %v123 = vld [vmem:[%s1 + $0xf0] sm:$0xf]
  %v124 = vld [vmem:[%s1 + $0xf4] sm:$0xf]
  %v125 = vld [vmem:[%s1 + $0xf8] sm:$0xf]
  %v126 = vld [vmem:[%s1 + $0xfc] sm:$0xf]
  %v127 = vld [vmem:[%s1 + $0x100] sm:$0xf]
  %v128 = vld [vmem:[%s1 + $0x104] sm:$0xf]
  %v129 = vld [vmem:[%s1 + $0x108] sm:$0xf]
  %v130 = vld [vmem:[%s1 + $0x10c] sm:$0xf]
  %v131 = vld [vmem:[%s1 + $0x110] sm:$0xf]
  %v132 = vld [vmem:[%s1 + $0x114] sm:$0xf]
  %v133 = vld [vmem:[%s1 + $0x118] sm:$0xf]
  %v134 = vld [vmem:[%s1 + $0x11c] sm:$0xf]
  %v135 = vld [vmem:[%s1 + $0x120] sm:$0xf]
  %v136 = vld [vmem:[%s1 + $0x124] sm:$0xf]
  %v137 = vld [vmem:[%s1 + $0x128] sm:$0xf]
  %v138 = vld [vmem:[%s1 + $0x12c] sm:$0xf]
  %v139 = vld [vmem:[%s1 + $0x130] sm:$0xf]
  %v140 = vld [vmem:[%s1 + $0x134] sm:$0xf]
  %v141 = vld [vmem:[%s1 + $0x138] sm:$0xf]
  %v142 = vld [vmem:[%s1 + $0x13c] sm:$0xf]
  %v143 = vld [vmem:[%s2] sm:$0x1]
  %v145 = vlaneseq
  %v146 = vshrl.u32 %v145, 7
  %v147 = vsub.s32 0, %v146
  %v148 = vrot.slane %v143, %v147
  %v198 = vunpack.c.l.b16 %v15
  %v199 = vunpack.c.h.b16 %v15
  %v200 = vunpack.c.l.b16 %v16
  %v201 = vunpack.c.h.b16 %v16
  %v202 = vunpack.c.l.b16 %v17
  %v203 = vunpack.c.l.b16 %v18
  %v204 = vunpack.c.h.b16 %v18
  %v205 = vunpack.c.l.b16 %v19
  %v206 = vunpack.c.h.b16 %v19
  %v207 = vunpack.c.l.b16 %v20
  %v208 = vunpack.c.l.b16 %v21
  %v209 = vunpack.c.h.b16 %v21
  %v210 = vunpack.c.l.b16 %v22
  %v211 = vunpack.c.h.b16 %v22
  %v212 = vunpack.c.l.b16 %v23
  %v213 = vunpack.c.l.b16 %v24
  %v214 = vunpack.c.h.b16 %v24
  %v215 = vunpack.c.l.b16 %v25
  %v216 = vunpack.c.h.b16 %v25
  %v217 = vunpack.c.l.b16 %v26
  %v218 = vunpack.c.l.b16 %v27
  %v219 = vunpack.c.h.b16 %v27
  %v220 = vunpack.c.l.b16 %v28
  %v221 = vunpack.c.h.b16 %v28
  %v222 = vunpack.c.l.b16 %v29
  %v223 = vunpack.c.l.b16 %v30
  %v224 = vunpack.c.h.b16 %v30
  %v225 = vunpack.c.l.b16 %v31
  %v226 = vunpack.c.h.b16 %v31
  %v227 = vunpack.c.l.b16 %v32
  %v228 = vunpack.c.l.b16 %v33
  %v229 = vunpack.c.h.b16 %v33
  %v230 = vunpack.c.l.b16 %v34
  %v231 = vunpack.c.h.b16 %v34
  %v232 = vunpack.c.l.b16 %v35
  %v233 = vunpack.c.l.b16 %v36
  %v234 = vunpack.c.h.b16 %v36
  %v235 = vunpack.c.l.b16 %v37
  %v236 = vunpack.c.h.b16 %v37
  %v237 = vunpack.c.l.b16 %v38
  %v238 = vunpack.c.l.b16 %v39
  %v239 = vunpack.c.h.b16 %v39
  %v240 = vunpack.c.l.b16 %v40
  %v241 = vunpack.c.h.b16 %v40
  %v242 = vunpack.c.l.b16 %v41
  %v243 = vunpack.c.l.b16 %v42
  %v244 = vunpack.c.h.b16 %v42
  %v245 = vunpack.c.l.b16 %v43
  %v246 = vunpack.c.h.b16 %v43
  %v247 = vunpack.c.l.b16 %v44
  %v248 = vunpack.c.l.b16 %v45
  %v249 = vunpack.c.h.b16 %v45
  %v250 = vunpack.c.l.b16 %v46
  %v251 = vunpack.c.h.b16 %v46
  %v252 = vunpack.c.l.b16 %v47
  %v253 = vunpack.c.l.b16 %v48
  %v254 = vunpack.c.h.b16 %v48
  %v255 = vunpack.c.l.b16 %v49
  %v256 = vunpack.c.h.b16 %v49
  %v257 = vunpack.c.l.b16 %v50
  %v258 = vunpack.c.l.b16 %v51
  %v259 = vunpack.c.h.b16 %v51
  %v260 = vunpack.c.l.b16 %v52
  %v261 = vunpack.c.h.b16 %v52
  %v262 = vunpack.c.l.b16 %v53
  %v263 = vunpack.c.l.b16 %v54
  %v264 = vunpack.c.h.b16 %v54
  %v265 = vunpack.c.l.b16 %v55
  %v266 = vunpack.c.h.b16 %v55
  %v267 = vunpack.c.l.b16 %v56
  %v268 = vunpack.c.l.b16 %v57
  %v269 = vunpack.c.h.b16 %v57
  %v270 = vunpack.c.l.b16 %v58
  %v271 = vunpack.c.h.b16 %v58
  %v272 = vunpack.c.l.b16 %v59
  %v273 = vunpack.c.l.b16 %v60
  %v274 = vunpack.c.h.b16 %v60
  %v275 = vunpack.c.l.b16 %v61
  %v276 = vunpack.c.h.b16 %v61
  %v277 = vunpack.c.l.b16 %v62
  %v278 = vpack.c.b16 %v203, %v198
  %v279 = vpack.c.b16 %v204, %v199
  %v280 = vpack.c.b16 %v205, %v200
  %v281 = vpack.c.b16 %v206, %v201
  %v282 = vpack.c.b16 %v207, %v202
  %v283 = vpack.c.b16 %v213, %v208
  %v284 = vpack.c.b16 %v214, %v209
  %v285 = vpack.c.b16 %v215, %v210
  %v286 = vpack.c.b16 %v216, %v211
  %v287 = vpack.c.b16 %v217, %v212
  %v288 = vpack.c.b16 %v223, %v218
  %v289 = vpack.c.b16 %v224, %v219
  %v290 = vpack.c.b16 %v225, %v220
  %v291 = vpack.c.b16 %v226, %v221
  %v292 = vpack.c.b16 %v227, %v222
  %v293 = vpack.c.b16 %v233, %v228
  %v294 = vpack.c.b16 %v234, %v229
  %v295 = vpack.c.b16 %v235, %v230
  %v296 = vpack.c.b16 %v236, %v231
  %v297 = vpack.c.b16 %v237, %v232
  %v298 = vpack.c.b16 %v243, %v238
  %v299 = vpack.c.b16 %v244, %v239
  %v300 = vpack.c.b16 %v245, %v240
  %v301 = vpack.c.b16 %v246, %v241
  %v302 = vpack.c.b16 %v247, %v242
  %v303 = vpack.c.b16 %v253, %v248
  %v304 = vpack.c.b16 %v254, %v249
  %v305 = vpack.c.b16 %v255, %v250
  %v306 = vpack.c.b16 %v256, %v251
  %v307 = vpack.c.b16 %v257, %v252
  %v308 = vpack.c.b16 %v263, %v258
  %v309 = vpack.c.b16 %v264, %v259
  %v310 = vpack.c.b16 %v265, %v260
  %v311 = vpack.c.b16 %v266, %v261
  %v312 = vpack.c.b16 %v267, %v262
  %v313 = vpack.c.b16 %v273, %v268
  %v314 = vpack.c.b16 %v274, %v269
  %v315 = vpack.c.b16 %v275, %v270
  %v316 = vpack.c.b16 %v276, %v271
  %v317 = vpack.c.b16 %v277, %v272
  %v438 = vunpack.c.l.b16 %v63
  %v439 = vunpack.c.l.b16 %v64
  %v440 = vunpack.c.l.b16 %v65
  %v441 = vunpack.c.l.b16 %v66
  %v442 = vunpack.c.l.b16 %v67
  %v443 = vunpack.c.l.b16 %v68
  %v444 = vunpack.c.l.b16 %v69
  %v445 = vunpack.c.l.b16 %v70
  %v446 = vunpack.c.l.b16 %v71
  %v447 = vunpack.c.l.b16 %v72
  %v448 = vunpack.c.l.b16 %v73
  %v449 = vunpack.c.l.b16 %v74
  %v450 = vunpack.c.l.b16 %v75
  %v451 = vunpack.c.l.b16 %v76
  %v452 = vunpack.c.l.b16 %v77
  %v453 = vunpack.c.l.b16 %v78
  %v454 = vunpack.c.l.b16 %v79
  %v455 = vunpack.c.l.b16 %v80
  %v456 = vunpack.c.l.b16 %v81
  %v457 = vunpack.c.l.b16 %v82
  %v458 = vunpack.c.l.b16 %v83
  %v459 = vunpack.c.l.b16 %v84
  %v460 = vunpack.c.l.b16 %v85
  %v461 = vunpack.c.l.b16 %v86
  %v462 = vunpack.c.l.b16 %v87
  %v463 = vunpack.c.l.b16 %v88
  %v464 = vunpack.c.l.b16 %v89
  %v465 = vunpack.c.l.b16 %v90
  %v466 = vunpack.c.l.b16 %v91
  %v467 = vunpack.c.l.b16 %v92
  %v468 = vunpack.c.l.b16 %v93
  %v469 = vunpack.c.l.b16 %v94
  %v470 = vunpack.c.l.b16 %v95
  %v471 = vunpack.c.l.b16 %v96
  %v472 = vunpack.c.l.b16 %v97
  %v473 = vunpack.c.l.b16 %v98
  %v474 = vunpack.c.l.b16 %v99
  %v475 = vunpack.c.l.b16 %v100
  %v476 = vunpack.c.l.b16 %v101
  %v477 = vunpack.c.l.b16 %v102
  %v478 = vunpack.c.l.b16 %v103
  %v479 = vunpack.c.l.b16 %v104
  %v480 = vunpack.c.l.b16 %v105
  %v481 = vunpack.c.l.b16 %v106
  %v482 = vunpack.c.l.b16 %v107
  %v483 = vunpack.c.l.b16 %v108
  %v484 = vunpack.c.l.b16 %v109
  %v485 = vunpack.c.l.b16 %v110
  %v486 = vunpack.c.l.b16 %v111
  %v487 = vunpack.c.l.b16 %v112
  %v488 = vunpack.c.l.b16 %v113
  %v489 = vunpack.c.l.b16 %v114
  %v490 = vunpack.c.l.b16 %v115
  %v491 = vunpack.c.l.b16 %v116
  %v492 = vunpack.c.l.b16 %v117
  %v493 = vunpack.c.l.b16 %v118
  %v494 = vunpack.c.l.b16 %v119
  %v495 = vunpack.c.l.b16 %v120
  %v496 = vunpack.c.l.b16 %v121
  %v497 = vunpack.c.l.b16 %v122
  %v498 = vunpack.c.l.b16 %v123
  %v499 = vunpack.c.l.b16 %v124
  %v500 = vunpack.c.l.b16 %v125
  %v501 = vunpack.c.l.b16 %v126
  %v502 = vunpack.c.l.b16 %v127
  %v503 = vunpack.c.l.b16 %v128
  %v504 = vunpack.c.l.b16 %v129
  %v505 = vunpack.c.l.b16 %v130
  %v506 = vunpack.c.l.b16 %v131
  %v507 = vunpack.c.l.b16 %v132
  %v508 = vunpack.c.l.b16 %v133
  %v509 = vunpack.c.l.b16 %v134
  %v510 = vunpack.c.l.b16 %v135
  %v511 = vunpack.c.l.b16 %v136
  %v512 = vunpack.c.l.b16 %v137
  %v513 = vunpack.c.l.b16 %v138
  %v514 = vunpack.c.l.b16 %v139
  %v515 = vunpack.c.l.b16 %v140
  %v516 = vunpack.c.l.b16 %v141
  %v517 = vunpack.c.l.b16 %v142
  %v518 = vpack.c.b16 %v439, %v438
  %v519 = vpack.c.b16 %v441, %v440
  %v520 = vpack.c.b16 %v443, %v442
  %v521 = vpack.c.b16 %v445, %v444
  %v522 = vpack.c.b16 %v447, %v446
  %v523 = vpack.c.b16 %v449, %v448
  %v524 = vpack.c.b16 %v451, %v450
  %v525 = vpack.c.b16 %v453, %v452
  %v526 = vpack.c.b16 %v455, %v454
  %v527 = vpack.c.b16 %v457, %v456
  %v528 = vpack.c.b16 %v459, %v458
  %v529 = vpack.c.b16 %v461, %v460
  %v530 = vpack.c.b16 %v463, %v462
  %v531 = vpack.c.b16 %v465, %v464
  %v532 = vpack.c.b16 %v467, %v466
  %v533 = vpack.c.b16 %v469, %v468
  %v534 = vpack.c.b16 %v471, %v470
  %v535 = vpack.c.b16 %v473, %v472
  %v536 = vpack.c.b16 %v475, %v474
  %v537 = vpack.c.b16 %v477, %v476
  %v538 = vpack.c.b16 %v479, %v478
  %v539 = vpack.c.b16 %v481, %v480
  %v540 = vpack.c.b16 %v483, %v482
  %v541 = vpack.c.b16 %v485, %v484
  %v542 = vpack.c.b16 %v487, %v486
  %v543 = vpack.c.b16 %v489, %v488
  %v544 = vpack.c.b16 %v491, %v490
  %v545 = vpack.c.b16 %v493, %v492
  %v546 = vpack.c.b16 %v495, %v494
  %v547 = vpack.c.b16 %v497, %v496
  %v548 = vpack.c.b16 %v499, %v498
  %v549 = vpack.c.b16 %v501, %v500
  %v550 = vpack.c.b16 %v503, %v502
  %v551 = vpack.c.b16 %v505, %v504
  %v552 = vpack.c.b16 %v507, %v506
  %v553 = vpack.c.b16 %v509, %v508
  %v554 = vpack.c.b16 %v511, %v510
  %v555 = vpack.c.b16 %v513, %v512
  %v556 = vpack.c.b16 %v515, %v514
  %v557 = vpack.c.b16 %v517, %v516
  %598 = vmatprep.subr.bf16.mxu0 0
  %599 = vmatpush1.bf16.msra.mxu0 %v518
  %600 = vmatprep.subr.bf16.mxu0 0
  %601 = vmatpush1.bf16.msra.mxu0 %v519
  %602 = vmatprep.subr.bf16.mxu0 0
  %603 = vmatpush1.bf16.msra.mxu0 %v520
  %604 = vmatprep.subr.bf16.mxu0 0
  %605 = vmatpush1.bf16.msra.mxu0 %v521
  %606 = vmatprep.subr.bf16.mxu0 0
  %607 = vmatpush1.bf16.msra.mxu0 %v522
  %608 = vmatprep.subr.bf16.mxu0 0
  %609 = vmatpush1.bf16.msra.mxu0 %v523
  %610 = vmatprep.subr.bf16.mxu0 0
  %611 = vmatpush1.bf16.msra.mxu0 %v524
  %612 = vmatprep.subr.bf16.mxu0 0
  %613 = vmatpush1.bf16.msra.mxu0 %v525
  %614 = vmatprep.subr.bf16.mxu0 0
  %615 = vmatpush1.bf16.msra.mxu0 %v526
  %616 = vmatprep.subr.bf16.mxu0 0
  %617 = vmatpush1.bf16.msra.mxu0 %v527
  %618 = vmatprep.subr.bf16.mxu0 0
  %619 = vmatpush1.bf16.msra.mxu0 %v528
  %620 = vmatprep.subr.bf16.mxu0 0
  %621 = vmatpush1.bf16.msra.mxu0 %v529
  %622 = vmatprep.subr.bf16.mxu0 0
  %623 = vmatpush1.bf16.msra.mxu0 %v530
  %624 = vmatprep.subr.bf16.mxu0 0
  %625 = vmatpush1.bf16.msra.mxu0 %v531
  %626 = vmatprep.subr.bf16.mxu0 0
  %627 = vmatpush1.bf16.msra.mxu0 %v532
  %628 = vmatprep.subr.bf16.mxu0 0
  %629 = vmatpush1.bf16.msra.mxu0 %v533
  %630 = vmatprep.mubr.bf16.mxu0 %v279
  %631 = vmatmul.mubr.bf16.gmra.mrb[0].mxu0 %v278
  %v632 = vpop.f32.mrb[0].mxu0
  %v633 = vadd.f32 %v148, %v632
  %v634 = vpop.f32.mrb[0].mxu0
  %v635 = vpop.f32.mrb[0].mxu0
  %v636 = vadd.f32 %v148, %v635
  %v637 = vpop.f32.mrb[0].mxu0
  %638 = vmatprep.mubr.bf16.mxu0 %v284
  %639 = vmatmul.mubr.bf16.gmra.mrb[0].mxu0 %v283
  %v640 = vpop.f32.mrb[0].mxu0
  %v641 = vadd.f32 %v148, %v640
  %v642 = vpop.f32.mrb[0].mxu0
  %v643 = vpop.f32.mrb[0].mxu0
  %v644 = vadd.f32 %v148, %v643
  %v645 = vpop.f32.mrb[0].mxu0
  %646 = vmatprep.mubr.bf16.mxu0 %v289
  %647 = vmatmul.mubr.bf16.gmra.mrb[0].mxu0 %v288
  %v648 = vpop.f32.mrb[0].mxu0
  %v649 = vadd.f32 %v148, %v648
  %v650 = vpop.f32.mrb[0].mxu0
  %v651 = vpop.f32.mrb[0].mxu0
  %v652 = vadd.f32 %v148, %v651
  %v653 = vpop.f32.mrb[0].mxu0
  %654 = vmatprep.mubr.bf16.mxu0 %v294
  %655 = vmatmul.mubr.bf16.gmra.mrb[0].mxu0 %v293
  %v656 = vpop.f32.mrb[0].mxu0
  %v657 = vadd.f32 %v148, %v656
  %v658 = vpop.f32.mrb[0].mxu0
  %v659 = vpop.f32.mrb[0].mxu0
  %v660 = vadd.f32 %v148, %v659
  %v661 = vpop.f32.mrb[0].mxu0
  %662 = vmatprep.mubr.bf16.mxu0 %v299
  %663 = vmatmul.mubr.bf16.gmra.mrb[0].mxu0 %v298
  %v664 = vpop.f32.mrb[0].mxu0
  %v665 = vadd.f32 %v148, %v664
  %v666 = vpop.f32.mrb[0].mxu0
  %v667 = vpop.f32.mrb[0].mxu0
  %v668 = vadd.f32 %v148, %v667
  %v669 = vpop.f32.mrb[0].mxu0
  %670 = vmatprep.mubr.bf16.mxu0 %v304
  %671 = vmatmul.mubr.bf16.gmra.mrb[0].mxu0 %v303
  %v672 = vpop.f32.mrb[0].mxu0
  %v673 = vadd.f32 %v148, %v672
  %v674 = vpop.f32.mrb[0].mxu0
  %v675 = vpop.f32.mrb[0].mxu0
  %v676 = vadd.f32 %v148, %v675
  %v677 = vpop.f32.mrb[0].mxu0
  %678 = vmatprep.mubr.bf16.mxu0 %v309
  %679 = vmatmul.mubr.bf16.gmra.mrb[0].mxu0 %v308
  %v680 = vpop.f32.mrb[0].mxu0
  %v681 = vadd.f32 %v148, %v680
  %v682 = vpop.f32.mrb[0].mxu0
  %v683 = vpop.f32.mrb[0].mxu0
  %v684 = vadd.f32 %v148, %v683
  %v685 = vpop.f32.mrb[0].mxu0
  %686 = vmatprep.mubr.bf16.mxu0 %v314
  %687 = vmatmul.mubr.bf16.gmra.mrb[0].mxu0 %v313
  %v688 = vpop.f32.mrb[0].mxu0
  %v689 = vadd.f32 %v148, %v688
  %v690 = vpop.f32.mrb[0].mxu0
  %v691 = vpop.f32.mrb[0].mxu0
  %v692 = vadd.f32 %v148, %v691
  %v693 = vpop.f32.mrb[0].mxu0
  %694 = vdwg.mxu0
  %695 = vmatprep.subr.bf16.mxu0 0
  %696 = vmatpush1.bf16.msra.mxu0 %v534
  %697 = vmatprep.subr.bf16.mxu0 0
  %698 = vmatpush1.bf16.msra.mxu0 %v535
  %699 = vmatprep.subr.bf16.mxu0 0
  %700 = vmatpush1.bf16.msra.mxu0 %v536
  %701 = vmatprep.subr.bf16.mxu0 0
  %702 = vmatpush1.bf16.msra.mxu0 %v537
  %703 = vmatprep.subr.bf16.mxu0 0
  %704 = vmatpush1.bf16.msra.mxu0 %v538
  %705 = vmatprep.subr.bf16.mxu0 0
  %706 = vmatpush1.bf16.msra.mxu0 %v539
  %707 = vmatprep.subr.bf16.mxu0 0
  %708 = vmatpush1.bf16.msra.mxu0 %v540
  %709 = vmatprep.subr.bf16.mxu0 0
  %710 = vmatpush1.bf16.msra.mxu0 %v541
  %711 = vmatprep.subr.bf16.mxu0 0
  %712 = vmatpush1.bf16.msra.mxu0 %v542
  %713 = vmatprep.subr.bf16.mxu0 0
  %714 = vmatpush1.bf16.msra.mxu0 %v543
  %715 = vmatprep.subr.bf16.mxu0 0
  %716 = vmatpush1.bf16.msra.mxu0 %v544
  %717 = vmatprep.subr.bf16.mxu0 0
  %718 = vmatpush1.bf16.msra.mxu0 %v545
  %719 = vmatprep.subr.bf16.mxu0 0
  %720 = vmatpush1.bf16.msra.mxu0 %v546
  %721 = vmatprep.subr.bf16.mxu0 0
  %722 = vmatpush1.bf16.msra.mxu0 %v547
  %723 = vmatprep.subr.bf16.mxu0 0
  %724 = vmatpush1.bf16.msra.mxu0 %v548
  %725 = vmatprep.subr.bf16.mxu0 0
  %726 = vmatpush1.bf16.msra.mxu0 %v549
  %727 = vmatprep.mubr.bf16.mxu0 %v281
  %728 = vmatmul.mubr.bf16.gmra.mrb[0].mxu0 %v280
  %v729 = vpop.f32.mrb[0].mxu0
  %v730 = vadd.f32 %v633, %v729
  %v731 = vpop.f32.mrb[0].mxu0
  %v732 = vpop.f32.mrb[0].mxu0
  %v733 = vadd.f32 %v636, %v732
  %v734 = vpop.f32.mrb[0].mxu0
  %735 = vmatprep.mubr.bf16.mxu0 %v286
  %736 = vmatmul.mubr.bf16.gmra.mrb[0].mxu0 %v285
  %v737 = vpop.f32.mrb[0].mxu0
  %v738 = vadd.f32 %v641, %v737
  %v739 = vpop.f32.mrb[0].mxu0
  %v740 = vpop.f32.mrb[0].mxu0
  %v741 = vadd.f32 %v644, %v740
  %v742 = vpop.f32.mrb[0].mxu0
  %743 = vmatprep.mubr.bf16.mxu0 %v291
  %744 = vmatmul.mubr.bf16.gmra.mrb[0].mxu0 %v290
  %v745 = vpop.f32.mrb[0].mxu0
  %v746 = vadd.f32 %v649, %v745
  %v747 = vpop.f32.mrb[0].mxu0
  %v748 = vpop.f32.mrb[0].mxu0
  %v749 = vadd.f32 %v652, %v748
  %v750 = vpop.f32.mrb[0].mxu0
  %751 = vmatprep.mubr.bf16.mxu0 %v296
  %752 = vmatmul.mubr.bf16.gmra.mrb[0].mxu0 %v295
  %v753 = vpop.f32.mrb[0].mxu0
  %v754 = vadd.f32 %v657, %v753
  %v755 = vpop.f32.mrb[0].mxu0
  %v756 = vpop.f32.mrb[0].mxu0
  %v757 = vadd.f32 %v660, %v756
  %v758 = vpop.f32.mrb[0].mxu0
  %759 = vmatprep.mubr.bf16.mxu0 %v301
  %760 = vmatmul.mubr.bf16.gmra.mrb[0].mxu0 %v300
  %v761 = vpop.f32.mrb[0].mxu0
  %v762 = vadd.f32 %v665, %v761
  %v763 = vpop.f32.mrb[0].mxu0
  %v764 = vpop.f32.mrb[0].mxu0
  %v765 = vadd.f32 %v668, %v764
  %v766 = vpop.f32.mrb[0].mxu0
  %767 = vmatprep.mubr.bf16.mxu0 %v306
  %768 = vmatmul.mubr.bf16.gmra.mrb[0].mxu0 %v305
  %v769 = vpop.f32.mrb[0].mxu0
  %v770 = vadd.f32 %v673, %v769
  %v771 = vpop.f32.mrb[0].mxu0
  %v772 = vpop.f32.mrb[0].mxu0
  %v773 = vadd.f32 %v676, %v772
  %v774 = vpop.f32.mrb[0].mxu0
  %775 = vmatprep.mubr.bf16.mxu0 %v311
  %776 = vmatmul.mubr.bf16.gmra.mrb[0].mxu0 %v310
  %v777 = vpop.f32.mrb[0].mxu0
  %v778 = vadd.f32 %v681, %v777
  %v779 = vpop.f32.mrb[0].mxu0
  %v780 = vpop.f32.mrb[0].mxu0
  %v781 = vadd.f32 %v684, %v780
  %v782 = vpop.f32.mrb[0].mxu0
  %783 = vmatprep.mubr.bf16.mxu0 %v316
  %784 = vmatmul.mubr.bf16.gmra.mrb[0].mxu0 %v315
  %v785 = vpop.f32.mrb[0].mxu0
  %v786 = vadd.f32 %v689, %v785
  %v787 = vpop.f32.mrb[0].mxu0
  %v788 = vpop.f32.mrb[0].mxu0
  %v789 = vadd.f32 %v692, %v788
  %v790 = vpop.f32.mrb[0].mxu0
  %791 = vdwg.mxu0
  %792 = vmatprep.subr.bf16.mxu0 0
  %793 = vmatpush1.bf16.msra.mxu0 %v550
  %794 = vmatprep.subr.bf16.mxu0 0
  %795 = vmatpush1.bf16.msra.mxu0 %v551
  %796 = vmatprep.subr.bf16.mxu0 0
  %797 = vmatpush1.bf16.msra.mxu0 %v552
  %798 = vmatprep.subr.bf16.mxu0 0
  %799 = vmatpush1.bf16.msra.mxu0 %v553
  %800 = vmatprep.subr.bf16.mxu0 0
  %801 = vmatpush1.bf16.msra.mxu0 %v554
  %802 = vmatprep.subr.bf16.mxu0 0
  %803 = vmatpush1.bf16.msra.mxu0 %v555
  %804 = vmatprep.subr.bf16.mxu0 0
  %805 = vmatpush1.bf16.msra.mxu0 %v556
  %806 = vmatprep.subr.bf16.mxu0 0
  %807 = vmatpush1.bf16.msra.mxu0 %v557
  %808 = vmatprep.subr.bf16.mxu0 0
  %809 = vmatpush1.bf16.msra.mxu0 0
  %810 = vmatprep.subr.bf16.mxu0 0
  %811 = vmatpush1.bf16.msra.mxu0 0
  %812 = vmatprep.subr.bf16.mxu0 0
  %813 = vmatpush1.bf16.msra.mxu0 0
  %814 = vmatprep.subr.bf16.mxu0 0
  %815 = vmatpush1.bf16.msra.mxu0 0
  %816 = vmatprep.subr.bf16.mxu0 0
  %817 = vmatpush1.bf16.msra.mxu0 0
  %818 = vmatprep.subr.bf16.mxu0 0
  %819 = vmatpush1.bf16.msra.mxu0 0
  %820 = vmatprep.subr.bf16.mxu0 0
  %821 = vmatpush1.bf16.msra.mxu0 0
  %822 = vmatprep.subr.bf16.mxu0 0
  %823 = vmatpush1.bf16.msra.mxu0 0
  %824 = vmatprep.mubr.bf16.mxu0 0
  %825 = vmatmul.mubr.bf16.gmra.mrb[0].mxu0 %v282
  %v826 = vpop.f32.mrb[0].mxu0
  %v827 = vadd.f32 %v730, %v826
  %v828 = vpop.f32.mrb[0].mxu0
  %v829 = vpop.f32.mrb[0].mxu0
  %v830 = vadd.f32 %v733, %v829
  %v831 = vpop.f32.mrb[0].mxu0
  %832 = vmatprep.mubr.bf16.mxu0 0
  %833 = vmatmul.mubr.bf16.gmra.mrb[0].mxu0 %v287
  %v834 = vpop.f32.mrb[0].mxu0
  %v835 = vadd.f32 %v738, %v834
  %v836 = vpop.f32.mrb[0].mxu0
  %v837 = vpop.f32.mrb[0].mxu0
  %v838 = vadd.f32 %v741, %v837
  %v839 = vpop.f32.mrb[0].mxu0
  %840 = vmatprep.mubr.bf16.mxu0 0
  %841 = vmatmul.mubr.bf16.gmra.mrb[0].mxu0 %v292
  %v842 = vpop.f32.mrb[0].mxu0
  %v843 = vadd.f32 %v746, %v842
  %v844 = vpop.f32.mrb[0].mxu0
  %v845 = vpop.f32.mrb[0].mxu0
  %v846 = vadd.f32 %v749, %v845
  %v847 = vpop.f32.mrb[0].mxu0
  %848 = vmatprep.mubr.bf16.mxu0 0
  %849 = vmatmul.mubr.bf16.gmra.mrb[0].mxu0 %v297
  %v850 = vpop.f32.mrb[0].mxu0
  %v851 = vadd.f32 %v754, %v850
  %v852 = vpop.f32.mrb[0].mxu0
  %v853 = vpop.f32.mrb[0].mxu0
  %v854 = vadd.f32 %v757, %v853
  %v855 = vpop.f32.mrb[0].mxu0
  %856 = vmatprep.mubr.bf16.mxu0 0
  %857 = vmatmul.mubr.bf16.gmra.mrb[0].mxu0 %v302
  %v858 = vpop.f32.mrb[0].mxu0
  %v859 = vadd.f32 %v762, %v858
  %v860 = vpop.f32.mrb[0].mxu0
  %v861 = vpop.f32.mrb[0].mxu0
  %v862 = vadd.f32 %v765, %v861
  %v863 = vpop.f32.mrb[0].mxu0
  %864 = vmatprep.mubr.bf16.mxu0 0
  %865 = vmatmul.mubr.bf16.gmra.mrb[0].mxu0 %v307
  %v866 = vpop.f32.mrb[0].mxu0
  %v867 = vadd.f32 %v770, %v866
  %v868 = vpop.f32.mrb[0].mxu0
  %v869 = vpop.f32.mrb[0].mxu0
  %v870 = vadd.f32 %v773, %v869
  %v871 = vpop.f32.mrb[0].mxu0
  %872 = vmatprep.mubr.bf16.mxu0 0
  %873 = vmatmul.mubr.bf16.gmra.mrb[0].mxu0 %v312
  %v874 = vpop.f32.mrb[0].mxu0
  %v875 = vadd.f32 %v778, %v874
  %v876 = vpop.f32.mrb[0].mxu0
  %v877 = vpop.f32.mrb[0].mxu0
  %v878 = vadd.f32 %v781, %v877
  %v879 = vpop.f32.mrb[0].mxu0
  %880 = vmatprep.mubr.bf16.mxu0 0
  %881 = vmatmul.mubr.bf16.gmra.mrb[0].mxu0 %v317
  %v882 = vpop.f32.mrb[0].mxu0
  %v883 = vadd.f32 %v786, %v882
  %v884 = vpop.f32.mrb[0].mxu0
  %v885 = vpop.f32.mrb[0].mxu0
  %v886 = vadd.f32 %v789, %v885
  %v887 = vpop.f32.mrb[0].mxu0
  %888 = vdwg.mxu0
  %v889 = vmax.f32 %v827, 0.0
  %v890 = vmax.f32 %v830, 0.0
  %v891 = vmax.f32 %v835, 0.0
  %v892 = vmax.f32 %v838, 0.0
  %v893 = vmax.f32 %v843, 0.0
  %v894 = vmax.f32 %v846, 0.0
  %v895 = vmax.f32 %v851, 0.0
  %v896 = vmax.f32 %v854, 0.0
  %v897 = vmax.f32 %v859, 0.0
  %v898 = vmax.f32 %v862, 0.0
  %v899 = vmax.f32 %v867, 0.0
  %v900 = vmax.f32 %v870, 0.0
  %v901 = vmax.f32 %v875, 0.0
  %v902 = vmax.f32 %v878, 0.0
  %v903 = vmax.f32 %v883, 0.0
  %v904 = vmax.f32 %v886, 0.0
  %v905 = vpack.c.bf16 %v890, %v889
  %v906 = vpack.c.bf16 %v892, %v891
  %v907 = vpack.c.bf16 %v894, %v893
  %v908 = vpack.c.bf16 %v896, %v895
  %v909 = vpack.c.bf16 %v898, %v897
  %v910 = vpack.c.bf16 %v900, %v899
  %v911 = vpack.c.bf16 %v902, %v901
  %v912 = vpack.c.bf16 %v904, %v903
  %v921 = vunpack.c.l.b16 %v905
  %v922 = vunpack.c.h.b16 %v905
  %v923 = vunpack.c.l.b16 %v906
  %v924 = vunpack.c.h.b16 %v906
  %v925 = vunpack.c.l.b16 %v907
  %v926 = vunpack.c.h.b16 %v907
  %v927 = vunpack.c.l.b16 %v908
  %v928 = vunpack.c.h.b16 %v908
  %v929 = vunpack.c.l.b16 %v909
  %v930 = vunpack.c.h.b16 %v909
  %v931 = vunpack.c.l.b16 %v910
  %v932 = vunpack.c.h.b16 %v910
  %v933 = vunpack.c.l.b16 %v911
  %v934 = vunpack.c.h.b16 %v911
  %v935 = vunpack.c.l.b16 %v912
  %v936 = vunpack.c.h.b16 %v912
  %v937 = vpack.c.b16 %v921, %v921
  %v938 = vpack.c.b16 %v922, %v922
  %v939 = vpack.c.b16 %v923, %v923
  %v940 = vpack.c.b16 %v924, %v924
  %v941 = vpack.c.b16 %v925, %v925
  %v942 = vpack.c.b16 %v926, %v926
  %v943 = vpack.c.b16 %v927, %v927
  %v944 = vpack.c.b16 %v928, %v928
  %v945 = vpack.c.b16 %v929, %v929
  %v946 = vpack.c.b16 %v930, %v930
  %v947 = vpack.c.b16 %v931, %v931
  %v948 = vpack.c.b16 %v932, %v932
  %v949 = vpack.c.b16 %v933, %v933
  %v950 = vpack.c.b16 %v934, %v934
  %v951 = vpack.c.b16 %v935, %v935
  %v952 = vpack.c.b16 %v936, %v936
  %969 = vst [vmem:[%s3] sm:$0xf] %v937
  %970 = vst [vmem:[%s3 + $0x4] sm:$0xf] %v938
  %971 = vst [vmem:[%s3 + $0x8] sm:$0xf] %v939
  %972 = vst [vmem:[%s3 + $0xc] sm:$0xf] %v940
  %973 = vst [vmem:[%s3 + $0x10] sm:$0xf] %v941
  %974 = vst [vmem:[%s3 + $0x14] sm:$0xf] %v942
  %975 = vst [vmem:[%s3 + $0x18] sm:$0xf] %v943
  %976 = vst [vmem:[%s3 + $0x1c] sm:$0xf] %v944
  %977 = vst [vmem:[%s3 + $0x20] sm:$0xf] %v945
  %978 = vst [vmem:[%s3 + $0x24] sm:$0xf] %v946
  %979 = vst [vmem:[%s3 + $0x28] sm:$0xf] %v947
  %980 = vst [vmem:[%s3 + $0x2c] sm:$0xf] %v948
  %981 = vst [vmem:[%s3 + $0x30] sm:$0xf] %v949
  %982 = vst [vmem:[%s3 + $0x34] sm:$0xf] %v950
  %983 = vst [vmem:[%s3 + $0x38] sm:$0xf] %v951
  %984 = vst [vmem:[%s3 + $0x3c] sm:$0xf] %v952
  // Predicated region
  $region14: #{fwd.21} parent=0 // pred_check
    _
  $region15: #{fwd.21} parent=0 // pred_check_branch
    %986 = sbr.rel (0) target = $region17
  $region16: #{fwd.21} parent=0 // pred_region
    _
  $region17: #{fwd.21} parent=0 // pred_fallthru
    _
  // Predicated region
  $region18: #{fwd.21} parent=0 // pred_check
    _
  $region19: #{fwd.21} parent=0 // pred_check_branch
    %988 = sbr.rel (0) target = $region21
  $region20: #{fwd.21} parent=0 // pred_region
    _
  $region21: #{fwd.21} parent=0 // pred_fallthru
    _

// kernel: fwd.22
$region0: #{fwd.22}
  #allocation0 [shape = 'u32[]', space=smem, size = 0x4, offset = 0x4, fixed_abs, tag = 'smem constant byte address 0x4 - core index']
  #allocation1 [shape = 'u32[144,128]{1,0:T(1,128)}', space=vmem, size = 0x12000, scoped, tag = 'internal scratch']
  %s0 = inlined_call_operand.vmem [shape: bf16[128,640], index: 0, kind: input, shape index: {}]
  %s1 = inlined_call_operand.vmem [shape: bf16[640,128], index: 1, kind: input, shape index: {}]
  %s2 = inlined_call_operand.vmem [shape: f32[1,128], index: 2, kind: input, shape index: {}]
  %s3 = inlined_call_operand.vmem [shape: bf16[128,128], index: 3, kind: input, shape index: {}]
  %s4 = inlined_call_operand.vmem [shape: bf16[128,128], index: 4, kind: output, shape index: {}]
  %s5 = sld [smem:[#allocation0]]
  $region26: #{fwd.22} parent=0
    _
  %s7 = ssub.s32 1, %s5
  %s8 = scalar_select 0, %s7, %s5
  // Predicated region
  $region2: #{fwd.22} parent=0 // pred_check
    _
  $region3: #{fwd.22} parent=0 // pred_check_branch
    %10 = sbr.rel (0) target = $region5
  $region4: #{fwd.22} parent=0 // pred_region
    _
  $region5: #{fwd.22} parent=0 // pred_fallthru
    _
  // Predicated region
  $region6: #{fwd.22} parent=0 // pred_check
    _
  $region7: #{fwd.22} parent=0 // pred_check_branch
    %12 = sbr.rel (0) target = $region9
  $region8: #{fwd.22} parent=0 // pred_region
    _
  $region9: #{fwd.22} parent=0 // pred_fallthru
    _
  // Predicated region
  $region10: #{fwd.22} parent=0 // pred_check
    _
  $region11: #{fwd.22} parent=0 // pred_check_branch
    %14 = sbr.rel (0) target = $region13
  $region12: #{fwd.22} parent=0 // pred_region
    _
  $region13: #{fwd.22} parent=0 // pred_fallthru
    _
  // Predicated region
  $region14: #{fwd.22} parent=0 // pred_check
    _
  $region15: #{fwd.22} parent=0 // pred_check_branch
    %16 = sbr.rel (0) target = $region17
  $region16: #{fwd.22} parent=0 // pred_region
    _
  $region17: #{fwd.22} parent=0 // pred_fallthru
    _
  %v18 = vld [vmem:[%s0] sm:$0xff]
  %v19 = vld [vmem:[%s0 + $0x8] sm:$0xff]
  %v20 = vld [vmem:[%s0 + $0x10] sm:$0xf]
  %v21 = vld [vmem:[%s0 + $0x14] sm:$0xff]
  %v22 = vld [vmem:[%s0 + $0x1c] sm:$0xff]
  %v23 = vld [vmem:[%s0 + $0x24] sm:$0xf]
  %v24 = vld [vmem:[%s0 + $0x28] sm:$0xff]
  %v25 = vld [vmem:[%s0 + $0x30] sm:$0xff]
  %v26 = vld [vmem:[%s0 + $0x38] sm:$0xf]
  %v27 = vld [vmem:[%s0 + $0x3c] sm:$0xff]
  %v28 = vld [vmem:[%s0 + $0x44] sm:$0xff]
  %v29 = vld [vmem:[%s0 + $0x4c] sm:$0xf]
  %v30 = vld [vmem:[%s0 + $0x50] sm:$0xff]
  %v31 = vld [vmem:[%s0 + $0x58] sm:$0xff]
  %v32 = vld [vmem:[%s0 + $0x60] sm:$0xf]
  %v33 = vld [vmem:[%s0 + $0x64] sm:$0xff]
  %v34 = vld [vmem:[%s0 + $0x6c] sm:$0xff]
  %v35 = vld [vmem:[%s0 + $0x74] sm:$0xf]
  %v36 = vld [vmem:[%s0 + $0x78] sm:$0xff]
  %v37 = vld [vmem:[%s0 + $0x80] sm:$0xff]
  %v38 = vld [vmem:[%s0 + $0x88] sm:$0xf]
  %v39 = vld [vmem:[%s0 + $0x8c] sm:$0xff]
  %v40 = vld [vmem:[%s0 + $0x94] sm:$0xff]
  %v41 = vld [vmem:[%s0 + $0x9c] sm:$0xf]
  %v42 = vld [vmem:[%s0 + $0xa0] sm:$0xff]
  %v43 = vld [vmem:[%s0 + $0xa8] sm:$0xff]
  %v44 = vld [vmem:[%s0 + $0xb0] sm:$0xf]
  %v45 = vld [vmem:[%s0 + $0xb4] sm:$0xff]
  %v46 = vld [vmem:[%s0 + $0xbc] sm:$0xff]
  %v47 = vld [vmem:[%s0 + $0xc4] sm:$0xf]
  %v48 = vld [vmem:[%s0 + $0xc8] sm:$0xff]
  %v49 = vld [vmem:[%s0 + $0xd0] sm:$0xff]
  %v50 = vld [vmem:[%s0 + $0xd8] sm:$0xf]
  %v51 = vld [vmem:[%s0 + $0xdc] sm:$0xff]
  %v52 = vld [vmem:[%s0 + $0xe4] sm:$0xff]
  %v53 = vld [vmem:[%s0 + $0xec] sm:$0xf]
  %v54 = vld [vmem:[%s0 + $0xf0] sm:$0xff]
  %v55 = vld [vmem:[%s0 + $0xf8] sm:$0xff]
  %v56 = vld [vmem:[%s0 + $0x100] sm:$0xf]
  %v57 = vld [vmem:[%s0 + $0x104] sm:$0xff]
  %v58 = vld [vmem:[%s0 + $0x10c] sm:$0xff]
  %v59 = vld [vmem:[%s0 + $0x114] sm:$0xf]
  %v60 = vld [vmem:[%s0 + $0x118] sm:$0xff]
  %v61 = vld [vmem:[%s0 + $0x120] sm:$0xff]
  %v62 = vld [vmem:[%s0 + $0x128] sm:$0xf]
  %v63 = vld [vmem:[%s0 + $0x12c] sm:$0xff]
  %v64 = vld [vmem:[%s0 + $0x134] sm:$0xff]
  %v65 = vld [vmem:[%s0 + $0x13c] sm:$0xf]
  %v66 = vld [vmem:[%s1] sm:$0xf]
  %v67 = vld [vmem:[%s1 + $0x4] sm:$0xf]
  %v68 = vld [vmem:[%s1 + $0x8] sm:$0xf]
  %v69 = vld [vmem:[%s1 + $0xc] sm:$0xf]
  %v70 = vld [vmem:[%s1 + $0x10] sm:$0xf]
  %v71 = vld [vmem:[%s1 + $0x14] sm:$0xf]
  %v72 = vld [vmem:[%s1 + $0x18] sm:$0xf]
  %v73 = vld [vmem:[%s1 + $0x1c] sm:$0xf]
  %v74 = vld [vmem:[%s1 + $0x20] sm:$0xf]
  %v75 = vld [vmem:[%s1 + $0x24] sm:$0xf]
  %v76 = vld [vmem:[%s1 + $0x28] sm:$0xf]
  %v77 = vld [vmem:[%s1 + $0x2c] sm:$0xf]
  %v78 = vld [vmem:[%s1 + $0x30] sm:$0xf]
  %v79 = vld [vmem:[%s1 + $0x34] sm:$0xf]
  %v80 = vld [vmem:[%s1 + $0x38] sm:$0xf]
  %v81 = vld [vmem:[%s1 + $0x3c] sm:$0xf]
  %v82 = vld [vmem:[%s1 + $0x40] sm:$0xf]
  %v83 = vld [vmem:[%s1 + $0x44] sm:$0xf]
  %v84 = vld [vmem:[%s1 + $0x48] sm:$0xf]
  %v85 = vld [vmem:[%s1 + $0x4c] sm:$0xf]
  %v86 = vld [vmem:[%s1 + $0x50] sm:$0xf]
  %v87 = vld [vmem:[%s1 + $0x54] sm:$0xf]
  %v88 = vld [vmem:[%s1 + $0x58] sm:$0xf]
  %v89 = vld [vmem:[%s1 + $0x5c] sm:$0xf]
  %v90 = vld [vmem:[%s1 + $0x60] sm:$0xf]
  %v91 = vld [vmem:[%s1 + $0x64] sm:$0xf]
  %v92 = vld [vmem:[%s1 + $0x68] sm:$0xf]
  %v93 = vld [vmem:[%s1 + $0x6c] sm:$0xf]
  %v94 = vld [vmem:[%s1 + $0x70] sm:$0xf]
  %v95 = vld [vmem:[%s1 + $0x74] sm:$0xf]
  %v96 = vld [vmem:[%s1 + $0x78] sm:$0xf]
  %v97 = vld [vmem:[%s1 + $0x7c] sm:$0xf]
  %v98 = vld [vmem:[%s1 + $0x80] sm:$0xf]
  %v99 = vld [vmem:[%s1 + $0x84] sm:$0xf]
  %v100 = vld [vmem:[%s1 + $0x88] sm:$0xf]
  %v101 = vld [vmem:[%s1 + $0x8c] sm:$0xf]
  %v102 = vld [vmem:[%s1 + $0x90] sm:$0xf]
  %v103 = vld [vmem:[%s1 + $0x94] sm:$0xf]
  %v104 = vld [vmem:[%s1 + $0x98] sm:$0xf]
  %v105 = vld [vmem:[%s1 + $0x9c] sm:$0xf]
  %v106 = vld [vmem:[%s1 + $0xa0] sm:$0xf]
  %v107 = vld [vmem:[%s1 + $0xa4] sm:$0xf]
  %v108 = vld [vmem:[%s1 + $0xa8] sm:$0xf]
  %v109 = vld [vmem:[%s1 + $0xac] sm:$0xf]
  %v110 = vld [vmem:[%s1 + $0xb0] sm:$0xf]
  %v111 = vld [vmem:[%s1 + $0xb4] sm:$0xf]
  %v112 = vld [vmem:[%s1 + $0xb8] sm:$0xf]
  %v113 = vld [vmem:[%s1 + $0xbc] sm:$0xf]
  %v114 = vld [vmem:[%s1 + $0xc0] sm:$0xf]
  %v115 = vld [vmem:[%s1 + $0xc4] sm:$0xf]
  %v116 = vld [vmem:[%s1 + $0xc8] sm:$0xf]
  %v117 = vld [vmem:[%s1 + $0xcc] sm:$0xf]
  %v118 = vld [vmem:[%s1 + $0xd0] sm:$0xf]
  %v119 = vld [vmem:[%s1 + $0xd4] sm:$0xf]
  %v120 = vld [vmem:[%s1 + $0xd8] sm:$0xf]
  %v121 = vld [vmem:[%s1 + $0xdc] sm:$0xf]
  %v122 = vld [vmem:[%s1 + $0xe0] sm:$0xf]
  %v123 = vld [vmem:[%s1 + $0xe4] sm:$0xf]
  %v124 = vld [vmem:[%s1 + $0xe8] sm:$0xf]
  %v125 = vld [vmem:[%s1 + $0xec] sm:$0xf]
  %v126 = vld [vmem:[%s1 + $0xf0] sm:$0xf]
  %v127 = vld [vmem:[%s1 + $0xf4] sm:$0xf]
  %v128 = vld [vmem:[%s1 + $0xf8] sm:$0xf]
  %v129 = vld [vmem:[%s1 + $0xfc] sm:$0xf]
  %v130 = vld [vmem:[%s1 + $0x100] sm:$0xf]
  %v131 = vld [vmem:[%s1 + $0x104] sm:$0xf]
  %v132 = vld [vmem:[%s1 + $0x108] sm:$0xf]
  %v133 = vld [vmem:[%s1 + $0x10c] sm:$0xf]
  %v134 = vld [vmem:[%s1 + $0x110] sm:$0xf]
  %v135 = vld [vmem:[%s1 + $0x114] sm:$0xf]
  %v136 = vld [vmem:[%s1 + $0x118] sm:$0xf]
  %v137 = vld [vmem:[%s1 + $0x11c] sm:$0xf]
  %v138 = vld [vmem:[%s1 + $0x120] sm:$0xf]
  %v139 = vld [vmem:[%s1 + $0x124] sm:$0xf]
  %v140 = vld [vmem:[%s1 + $0x128] sm:$0xf]
  %v141 = vld [vmem:[%s1 + $0x12c] sm:$0xf]
  %v142 = vld [vmem:[%s1 + $0x130] sm:$0xf]
  %v143 = vld [vmem:[%s1 + $0x134] sm:$0xf]
  %v144 = vld [vmem:[%s1 + $0x138] sm:$0xf]
  %v145 = vld [vmem:[%s1 + $0x13c] sm:$0xf]
  %v146 = vld [vmem:[%s2] sm:$0x1]
  %v148 = vlaneseq
  %v149 = vshrl.u32 %v148, 7
  %v150 = vsub.s32 0, %v149
  %v151 = vrot.slane %v146, %v150
  %v201 = vunpack.c.l.b16 %v18
  %v202 = vunpack.c.h.b16 %v18
  %v203 = vunpack.c.l.b16 %v19
  %v204 = vunpack.c.h.b16 %v19
  %v205 = vunpack.c.l.b16 %v20
  %v206 = vunpack.c.l.b16 %v21
  %v207 = vunpack.c.h.b16 %v21
  %v208 = vunpack.c.l.b16 %v22
  %v209 = vunpack.c.h.b16 %v22
  %v210 = vunpack.c.l.b16 %v23
  %v211 = vunpack.c.l.b16 %v24
  %v212 = vunpack.c.h.b16 %v24
  %v213 = vunpack.c.l.b16 %v25
  %v214 = vunpack.c.h.b16 %v25
  %v215 = vunpack.c.l.b16 %v26
  %v216 = vunpack.c.l.b16 %v27
  %v217 = vunpack.c.h.b16 %v27
  %v218 = vunpack.c.l.b16 %v28
  %v219 = vunpack.c.h.b16 %v28
  %v220 = vunpack.c.l.b16 %v29
  %v221 = vunpack.c.l.b16 %v30
  %v222 = vunpack.c.h.b16 %v30
  %v223 = vunpack.c.l.b16 %v31
  %v224 = vunpack.c.h.b16 %v31
  %v225 = vunpack.c.l.b16 %v32
  %v226 = vunpack.c.l.b16 %v33
  %v227 = vunpack.c.h.b16 %v33
  %v228 = vunpack.c.l.b16 %v34
  %v229 = vunpack.c.h.b16 %v34
  %v230 = vunpack.c.l.b16 %v35
  %v231 = vunpack.c.l.b16 %v36
  %v232 = vunpack.c.h.b16 %v36
  %v233 = vunpack.c.l.b16 %v37
  %v234 = vunpack.c.h.b16 %v37
  %v235 = vunpack.c.l.b16 %v38
  %v236 = vunpack.c.l.b16 %v39
  %v237 = vunpack.c.h.b16 %v39
  %v238 = vunpack.c.l.b16 %v40
  %v239 = vunpack.c.h.b16 %v40
  %v240 = vunpack.c.l.b16 %v41
  %v241 = vunpack.c.l.b16 %v42
  %v242 = vunpack.c.h.b16 %v42
  %v243 = vunpack.c.l.b16 %v43
  %v244 = vunpack.c.h.b16 %v43
  %v245 = vunpack.c.l.b16 %v44
  %v246 = vunpack.c.l.b16 %v45
  %v247 = vunpack.c.h.b16 %v45
  %v248 = vunpack.c.l.b16 %v46
  %v249 = vunpack.c.h.b16 %v46
  %v250 = vunpack.c.l.b16 %v47
  %v251 = vunpack.c.l.b16 %v48
  %v252 = vunpack.c.h.b16 %v48
  %v253 = vunpack.c.l.b16 %v49
  %v254 = vunpack.c.h.b16 %v49
  %v255 = vunpack.c.l.b16 %v50
  %v256 = vunpack.c.l.b16 %v51
  %v257 = vunpack.c.h.b16 %v51
  %v258 = vunpack.c.l.b16 %v52
  %v259 = vunpack.c.h.b16 %v52
  %v260 = vunpack.c.l.b16 %v53
  %v261 = vunpack.c.l.b16 %v54
  %v262 = vunpack.c.h.b16 %v54
  %v263 = vunpack.c.l.b16 %v55
  %v264 = vunpack.c.h.b16 %v55
  %v265 = vunpack.c.l.b16 %v56
  %v266 = vunpack.c.l.b16 %v57
  %v267 = vunpack.c.h.b16 %v57
  %v268 = vunpack.c.l.b16 %v58
  %v269 = vunpack.c.h.b16 %v58
  %v270 = vunpack.c.l.b16 %v59
  %v271 = vunpack.c.l.b16 %v60
  %v272 = vunpack.c.h.b16 %v60
  %v273 = vunpack.c.l.b16 %v61
  %v274 = vunpack.c.h.b16 %v61
  %v275 = vunpack.c.l.b16 %v62
  %v276 = vunpack.c.l.b16 %v63
  %v277 = vunpack.c.h.b16 %v63
  %v278 = vunpack.c.l.b16 %v64
  %v279 = vunpack.c.h.b16 %v64
  %v280 = vunpack.c.l.b16 %v65
  %v281 = vpack.c.b16 %v206, %v201
  %v282 = vpack.c.b16 %v207, %v202
  %v283 = vpack.c.b16 %v208, %v203
  %v284 = vpack.c.b16 %v209, %v204
  %v285 = vpack.c.b16 %v210, %v205
  %v286 = vpack.c.b16 %v216, %v211
  %v287 = vpack.c.b16 %v217, %v212
  %v288 = vpack.c.b16 %v218, %v213
  %v289 = vpack.c.b16 %v219, %v214
  %v290 = vpack.c.b16 %v220, %v215
  %v291 = vpack.c.b16 %v226, %v221
  %v292 = vpack.c.b16 %v227, %v222
  %v293 = vpack.c.b16 %v228, %v223
  %v294 = vpack.c.b16 %v229, %v224
  %v295 = vpack.c.b16 %v230, %v225
  %v296 = vpack.c.b16 %v236, %v231
  %v297 = vpack.c.b16 %v237, %v232
  %v298 = vpack.c.b16 %v238, %v233
  %v299 = vpack.c.b16 %v239, %v234
  %v300 = vpack.c.b16 %v240, %v235
  %v301 = vpack.c.b16 %v246, %v241
  %v302 = vpack.c.b16 %v247, %v242
  %v303 = vpack.c.b16 %v248, %v243
  %v304 = vpack.c.b16 %v249, %v244
  %v305 = vpack.c.b16 %v250, %v245
  %v306 = vpack.c.b16 %v256, %v251
  %v307 = vpack.c.b16 %v257, %v252
  %v308 = vpack.c.b16 %v258, %v253
  %v309 = vpack.c.b16 %v259, %v254
  %v310 = vpack.c.b16 %v260, %v255
  %v311 = vpack.c.b16 %v266, %v261
  %v312 = vpack.c.b16 %v267, %v262
  %v313 = vpack.c.b16 %v268, %v263
  %v314 = vpack.c.b16 %v269, %v264
  %v315 = vpack.c.b16 %v270, %v265
  %v316 = vpack.c.b16 %v276, %v271
  %v317 = vpack.c.b16 %v277, %v272
  %v318 = vpack.c.b16 %v278, %v273
  %v319 = vpack.c.b16 %v279, %v274
  %v320 = vpack.c.b16 %v280, %v275
  %v441 = vunpack.c.l.b16 %v66
  %v442 = vunpack.c.l.b16 %v67
  %v443 = vunpack.c.l.b16 %v68
  %v444 = vunpack.c.l.b16 %v69
  %v445 = vunpack.c.l.b16 %v70
  %v446 = vunpack.c.l.b16 %v71
  %v447 = vunpack.c.l.b16 %v72
  %v448 = vunpack.c.l.b16 %v73
  %v449 = vunpack.c.l.b16 %v74
  %v450 = vunpack.c.l.b16 %v75
  %v451 = vunpack.c.l.b16 %v76
  %v452 = vunpack.c.l.b16 %v77
  %v453 = vunpack.c.l.b16 %v78
  %v454 = vunpack.c.l.b16 %v79
  %v455 = vunpack.c.l.b16 %v80
  %v456 = vunpack.c.l.b16 %v81
  %v457 = vunpack.c.l.b16 %v82
  %v458 = vunpack.c.l.b16 %v83
  %v459 = vunpack.c.l.b16 %v84
  %v460 = vunpack.c.l.b16 %v85
  %v461 = vunpack.c.l.b16 %v86
  %v462 = vunpack.c.l.b16 %v87
  %v463 = vunpack.c.l.b16 %v88
  %v464 = vunpack.c.l.b16 %v89
  %v465 = vunpack.c.l.b16 %v90
  %v466 = vunpack.c.l.b16 %v91
  %v467 = vunpack.c.l.b16 %v92
  %v468 = vunpack.c.l.b16 %v93
  %v469 = vunpack.c.l.b16 %v94
  %v470 = vunpack.c.l.b16 %v95
  %v471 = vunpack.c.l.b16 %v96
  %v472 = vunpack.c.l.b16 %v97
  %v473 = vunpack.c.l.b16 %v98
  %v474 = vunpack.c.l.b16 %v99
  %v475 = vunpack.c.l.b16 %v100
  %v476 = vunpack.c.l.b16 %v101
  %v477 = vunpack.c.l.b16 %v102
  %v478 = vunpack.c.l.b16 %v103
  %v479 = vunpack.c.l.b16 %v104
  %v480 = vunpack.c.l.b16 %v105
  %v481 = vunpack.c.l.b16 %v106
  %v482 = vunpack.c.l.b16 %v107
  %v483 = vunpack.c.l.b16 %v108
  %v484 = vunpack.c.l.b16 %v109
  %v485 = vunpack.c.l.b16 %v110
  %v486 = vunpack.c.l.b16 %v111
  %v487 = vunpack.c.l.b16 %v112
  %v488 = vunpack.c.l.b16 %v113
  %v489 = vunpack.c.l.b16 %v114
  %v490 = vunpack.c.l.b16 %v115
  %v491 = vunpack.c.l.b16 %v116
  %v492 = vunpack.c.l.b16 %v117
  %v493 = vunpack.c.l.b16 %v118
  %v494 = vunpack.c.l.b16 %v119
  %v495 = vunpack.c.l.b16 %v120
  %v496 = vunpack.c.l.b16 %v121
  %v497 = vunpack.c.l.b16 %v122
  %v498 = vunpack.c.l.b16 %v123
  %v499 = vunpack.c.l.b16 %v124
  %v500 = vunpack.c.l.b16 %v125
  %v501 = vunpack.c.l.b16 %v126
  %v502 = vunpack.c.l.b16 %v127
  %v503 = vunpack.c.l.b16 %v128
  %v504 = vunpack.c.l.b16 %v129
  %v505 = vunpack.c.l.b16 %v130
  %v506 = vunpack.c.l.b16 %v131
  %v507 = vunpack.c.l.b16 %v132
  %v508 = vunpack.c.l.b16 %v133
  %v509 = vunpack.c.l.b16 %v134
  %v510 = vunpack.c.l.b16 %v135
  %v511 = vunpack.c.l.b16 %v136
  %v512 = vunpack.c.l.b16 %v137
  %v513 = vunpack.c.l.b16 %v138
  %v514 = vunpack.c.l.b16 %v139
  %v515 = vunpack.c.l.b16 %v140
  %v516 = vunpack.c.l.b16 %v141
  %v517 = vunpack.c.l.b16 %v142
  %v518 = vunpack.c.l.b16 %v143
  %v519 = vunpack.c.l.b16 %v144
  %v520 = vunpack.c.l.b16 %v145
  %v521 = vpack.c.b16 %v442, %v441
  %v522 = vpack.c.b16 %v444, %v443
  %v523 = vpack.c.b16 %v446, %v445
  %v524 = vpack.c.b16 %v448, %v447
  %v525 = vpack.c.b16 %v450, %v449
  %v526 = vpack.c.b16 %v452, %v451
  %v527 = vpack.c.b16 %v454, %v453
  %v528 = vpack.c.b16 %v456, %v455
  %v529 = vpack.c.b16 %v458, %v457
  %v530 = vpack.c.b16 %v460, %v459
  %v531 = vpack.c.b16 %v462, %v461
  %v532 = vpack.c.b16 %v464, %v463
  %v533 = vpack.c.b16 %v466, %v465
  %v534 = vpack.c.b16 %v468, %v467
  %v535 = vpack.c.b16 %v470, %v469
  %v536 = vpack.c.b16 %v472, %v471
  %v537 = vpack.c.b16 %v474, %v473
  %v538 = vpack.c.b16 %v476, %v475
  %v539 = vpack.c.b16 %v478, %v477
  %v540 = vpack.c.b16 %v480, %v479
  %v541 = vpack.c.b16 %v482, %v481
  %v542 = vpack.c.b16 %v484, %v483
  %v543 = vpack.c.b16 %v486, %v485
  %v544 = vpack.c.b16 %v488, %v487
  %v545 = vpack.c.b16 %v490, %v489
  %v546 = vpack.c.b16 %v492, %v491
  %v547 = vpack.c.b16 %v494, %v493
  %v548 = vpack.c.b16 %v496, %v495
  %v549 = vpack.c.b16 %v498, %v497
  %v550 = vpack.c.b16 %v500, %v499
  %v551 = vpack.c.b16 %v502, %v501
  %v552 = vpack.c.b16 %v504, %v503
  %v553 = vpack.c.b16 %v506, %v505
  %v554 = vpack.c.b16 %v508, %v507
  %v555 = vpack.c.b16 %v510, %v509
  %v556 = vpack.c.b16 %v512, %v511
  %v557 = vpack.c.b16 %v514, %v513
  %v558 = vpack.c.b16 %v516, %v515
  %v559 = vpack.c.b16 %v518, %v517
  %v560 = vpack.c.b16 %v520, %v519
  %601 = vmatprep.subr.bf16.mxu0 0
  %602 = vmatpush1.bf16.msra.mxu0 %v521
  %603 = vmatprep.subr.bf16.mxu0 0
  %604 = vmatpush1.bf16.msra.mxu0 %v522
  %605 = vmatprep.subr.bf16.mxu0 0
  %606 = vmatpush1.bf16.msra.mxu0 %v523
  %607 = vmatprep.subr.bf16.mxu0 0
  %608 = vmatpush1.bf16.msra.mxu0 %v524
  %609 = vmatprep.subr.bf16.mxu0 0
  %610 = vmatpush1.bf16.msra.mxu0 %v525
  %611 = vmatprep.subr.bf16.mxu0 0
  %612 = vmatpush1.bf16.msra.mxu0 %v526
  %613 = vmatprep.subr.bf16.mxu0 0
  %614 = vmatpush1.bf16.msra.mxu0 %v527
  %615 = vmatprep.subr.bf16.mxu0 0
  %616 = vmatpush1.bf16.msra.mxu0 %v528
  %617 = vmatprep.subr.bf16.mxu0 0
  %618 = vmatpush1.bf16.msra.mxu0 %v529
  %619 = vmatprep.subr.bf16.mxu0 0
  %620 = vmatpush1.bf16.msra.mxu0 %v530
  %621 = vmatprep.subr.bf16.mxu0 0
  %622 = vmatpush1.bf16.msra.mxu0 %v531
  %623 = vmatprep.subr.bf16.mxu0 0
  %624 = vmatpush1.bf16.msra.mxu0 %v532
  %625 = vmatprep.subr.bf16.mxu0 0
  %626 = vmatpush1.bf16.msra.mxu0 %v533
  %627 = vmatprep.subr.bf16.mxu0 0
  %628 = vmatpush1.bf16.msra.mxu0 %v534
  %629 = vmatprep.subr.bf16.mxu0 0
  %630 = vmatpush1.bf16.msra.mxu0 %v535
  %631 = vmatprep.subr.bf16.mxu0 0
  %632 = vmatpush1.bf16.msra.mxu0 %v536
  %633 = vmatprep.mubr.bf16.mxu0 %v282
  %634 = vmatmul.mubr.bf16.gmra.mrb[0].mxu0 %v281
  %v635 = vpop.f32.mrb[0].mxu0
  %v636 = vadd.f32 %v151, %v635
  %v637 = vpop.f32.mrb[0].mxu0
  %v638 = vpop.f32.mrb[0].mxu0
  %v639 = vadd.f32 %v151, %v638
  %v640 = vpop.f32.mrb[0].mxu0
  %641 = vmatprep.mubr.bf16.mxu0 %v287
  %642 = vmatmul.mubr.bf16.gmra.mrb[0].mxu0 %v286
  %v643 = vpop.f32.mrb[0].mxu0
  %v644 = vadd.f32 %v151, %v643
  %v645 = vpop.f32.mrb[0].mxu0
  %v646 = vpop.f32.mrb[0].mxu0
  %v647 = vadd.f32 %v151, %v646
  %v648 = vpop.f32.mrb[0].mxu0
  %649 = vmatprep.mubr.bf16.mxu0 %v292
  %650 = vmatmul.mubr.bf16.gmra.mrb[0].mxu0 %v291
  %v651 = vpop.f32.mrb[0].mxu0
  %v652 = vadd.f32 %v151, %v651
  %v653 = vpop.f32.mrb[0].mxu0
  %v654 = vpop.f32.mrb[0].mxu0
  %v655 = vadd.f32 %v151, %v654
  %v656 = vpop.f32.mrb[0].mxu0
  %657 = vmatprep.mubr.bf16.mxu0 %v297
  %658 = vmatmul.mubr.bf16.gmra.mrb[0].mxu0 %v296
  %v659 = vpop.f32.mrb[0].mxu0
  %v660 = vadd.f32 %v151, %v659
  %v661 = vpop.f32.mrb[0].mxu0
  %v662 = vpop.f32.mrb[0].mxu0
  %v663 = vadd.f32 %v151, %v662
  %v664 = vpop.f32.mrb[0].mxu0
  %665 = vmatprep.mubr.bf16.mxu0 %v302
  %666 = vmatmul.mubr.bf16.gmra.mrb[0].mxu0 %v301
  %v667 = vpop.f32.mrb[0].mxu0
  %v668 = vadd.f32 %v151, %v667
  %v669 = vpop.f32.mrb[0].mxu0
  %v670 = vpop.f32.mrb[0].mxu0
  %v671 = vadd.f32 %v151, %v670
  %v672 = vpop.f32.mrb[0].mxu0
  %673 = vmatprep.mubr.bf16.mxu0 %v307
  %674 = vmatmul.mubr.bf16.gmra.mrb[0].mxu0 %v306
  %v675 = vpop.f32.mrb[0].mxu0
  %v676 = vadd.f32 %v151, %v675
  %v677 = vpop.f32.mrb[0].mxu0
  %v678 = vpop.f32.mrb[0].mxu0
  %v679 = vadd.f32 %v151, %v678
  %v680 = vpop.f32.mrb[0].mxu0
  %681 = vmatprep.mubr.bf16.mxu0 %v312
  %682 = vmatmul.mubr.bf16.gmra.mrb[0].mxu0 %v311
  %v683 = vpop.f32.mrb[0].mxu0
  %v684 = vadd.f32 %v151, %v683
  %v685 = vpop.f32.mrb[0].mxu0
  %v686 = vpop.f32.mrb[0].mxu0
  %v687 = vadd.f32 %v151, %v686
  %v688 = vpop.f32.mrb[0].mxu0
  %689 = vmatprep.mubr.bf16.mxu0 %v317
  %690 = vmatmul.mubr.bf16.gmra.mrb[0].mxu0 %v316
  %v691 = vpop.f32.mrb[0].mxu0
  %v692 = vadd.f32 %v151, %v691
  %v693 = vpop.f32.mrb[0].mxu0
  %v694 = vpop.f32.mrb[0].mxu0
  %v695 = vadd.f32 %v151, %v694
  %v696 = vpop.f32.mrb[0].mxu0
  %697 = vdwg.mxu0
  %698 = vmatprep.subr.bf16.mxu0 0
  %699 = vmatpush1.bf16.msra.mxu0 %v537
  %700 = vmatprep.subr.bf16.mxu0 0
  %701 = vmatpush1.bf16.msra.mxu0 %v538
  %702 = vmatprep.subr.bf16.mxu0 0
  %703 = vmatpush1.bf16.msra.mxu0 %v539
  %704 = vmatprep.subr.bf16.mxu0 0
  %705 = vmatpush1.bf16.msra.mxu0 %v540
  %706 = vmatprep.subr.bf16.mxu0 0
  %707 = vmatpush1.bf16.msra.mxu0 %v541
  %708 = vmatprep.subr.bf16.mxu0 0
  %709 = vmatpush1.bf16.msra.mxu0 %v542
  %710 = vmatprep.subr.bf16.mxu0 0
  %711 = vmatpush1.bf16.msra.mxu0 %v543
  %712 = vmatprep.subr.bf16.mxu0 0
  %713 = vmatpush1.bf16.msra.mxu0 %v544
  %714 = vmatprep.subr.bf16.mxu0 0
  %715 = vmatpush1.bf16.msra.mxu0 %v545
  %716 = vmatprep.subr.bf16.mxu0 0
  %717 = vmatpush1.bf16.msra.mxu0 %v546
  %718 = vmatprep.subr.bf16.mxu0 0
  %719 = vmatpush1.bf16.msra.mxu0 %v547
  %720 = vmatprep.subr.bf16.mxu0 0
  %721 = vmatpush1.bf16.msra.mxu0 %v548
  %722 = vmatprep.subr.bf16.mxu0 0
  %723 = vmatpush1.bf16.msra.mxu0 %v549
  %724 = vmatprep.subr.bf16.mxu0 0
  %725 = vmatpush1.bf16.msra.mxu0 %v550
  %726 = vmatprep.subr.bf16.mxu0 0
  %727 = vmatpush1.bf16.msra.mxu0 %v551
  %728 = vmatprep.subr.bf16.mxu0 0
  %729 = vmatpush1.bf16.msra.mxu0 %v552
  %730 = vmatprep.mubr.bf16.mxu0 %v284
  %731 = vmatmul.mubr.bf16.gmra.mrb[0].mxu0 %v283
  %v732 = vpop.f32.mrb[0].mxu0
  %v733 = vadd.f32 %v636, %v732
  %v734 = vpop.f32.mrb[0].mxu0
  %v735 = vpop.f32.mrb[0].mxu0
  %v736 = vadd.f32 %v639, %v735
  %v737 = vpop.f32.mrb[0].mxu0
  %738 = vmatprep.mubr.bf16.mxu0 %v289
  %739 = vmatmul.mubr.bf16.gmra.mrb[0].mxu0 %v288
  %v740 = vpop.f32.mrb[0].mxu0
  %v741 = vadd.f32 %v644, %v740
  %v742 = vpop.f32.mrb[0].mxu0
  %v743 = vpop.f32.mrb[0].mxu0
  %v744 = vadd.f32 %v647, %v743
  %v745 = vpop.f32.mrb[0].mxu0
  %746 = vmatprep.mubr.bf16.mxu0 %v294
  %747 = vmatmul.mubr.bf16.gmra.mrb[0].mxu0 %v293
  %v748 = vpop.f32.mrb[0].mxu0
  %v749 = vadd.f32 %v652, %v748
  %v750 = vpop.f32.mrb[0].mxu0
  %v751 = vpop.f32.mrb[0].mxu0
  %v752 = vadd.f32 %v655, %v751
  %v753 = vpop.f32.mrb[0].mxu0
  %754 = vmatprep.mubr.bf16.mxu0 %v299
  %755 = vmatmul.mubr.bf16.gmra.mrb[0].mxu0 %v298
  %v756 = vpop.f32.mrb[0].mxu0
  %v757 = vadd.f32 %v660, %v756
  %v758 = vpop.f32.mrb[0].mxu0
  %v759 = vpop.f32.mrb[0].mxu0
  %v760 = vadd.f32 %v663, %v759
  %v761 = vpop.f32.mrb[0].mxu0
  %762 = vmatprep.mubr.bf16.mxu0 %v304
  %763 = vmatmul.mubr.bf16.gmra.mrb[0].mxu0 %v303
  %v764 = vpop.f32.mrb[0].mxu0
  %v765 = vadd.f32 %v668, %v764
  %v766 = vpop.f32.mrb[0].mxu0
  %v767 = vpop.f32.mrb[0].mxu0
  %v768 = vadd.f32 %v671, %v767
  %v769 = vpop.f32.mrb[0].mxu0
  %770 = vmatprep.mubr.bf16.mxu0 %v309
  %771 = vmatmul.mubr.bf16.gmra.mrb[0].mxu0 %v308
  %v772 = vpop.f32.mrb[0].mxu0
  %v773 = vadd.f32 %v676, %v772
  %v774 = vpop.f32.mrb[0].mxu0
  %v775 = vpop.f32.mrb[0].mxu0
  %v776 = vadd.f32 %v679, %v775
  %v777 = vpop.f32.mrb[0].mxu0
  %778 = vmatprep.mubr.bf16.mxu0 %v314
  %779 = vmatmul.mubr.bf16.gmra.mrb[0].mxu0 %v313
  %v780 = vpop.f32.mrb[0].mxu0
  %v781 = vadd.f32 %v684, %v780
  %v782 = vpop.f32.mrb[0].mxu0
  %v783 = vpop.f32.mrb[0].mxu0
  %v784 = vadd.f32 %v687, %v783
  %v785 = vpop.f32.mrb[0].mxu0
  %786 = vmatprep.mubr.bf16.mxu0 %v319
  %787 = vmatmul.mubr.bf16.gmra.mrb[0].mxu0 %v318
  %v788 = vpop.f32.mrb[0].mxu0
  %v789 = vadd.f32 %v692, %v788
  %v790 = vpop.f32.mrb[0].mxu0
  %v791 = vpop.f32.mrb[0].mxu0
  %v792 = vadd.f32 %v695, %v791
  %v793 = vpop.f32.mrb[0].mxu0
  %794 = vdwg.mxu0
  %795 = vmatprep.subr.bf16.mxu0 0
  %796 = vmatpush1.bf16.msra.mxu0 %v553
  %797 = vmatprep.subr.bf16.mxu0 0
  %798 = vmatpush1.bf16.msra.mxu0 %v554
  %799 = vmatprep.subr.bf16.mxu0 0
  %800 = vmatpush1.bf16.msra.mxu0 %v555
  %801 = vmatprep.subr.bf16.mxu0 0
  %802 = vmatpush1.bf16.msra.mxu0 %v556
  %803 = vmatprep.subr.bf16.mxu0 0
  %804 = vmatpush1.bf16.msra.mxu0 %v557
  %805 = vmatprep.subr.bf16.mxu0 0
  %806 = vmatpush1.bf16.msra.mxu0 %v558
  %807 = vmatprep.subr.bf16.mxu0 0
  %808 = vmatpush1.bf16.msra.mxu0 %v559
  %809 = vmatprep.subr.bf16.mxu0 0
  %810 = vmatpush1.bf16.msra.mxu0 %v560
  %811 = vmatprep.subr.bf16.mxu0 0
  %812 = vmatpush1.bf16.msra.mxu0 0
  %813 = vmatprep.subr.bf16.mxu0 0
  %814 = vmatpush1.bf16.msra.mxu0 0
  %815 = vmatprep.subr.bf16.mxu0 0
  %816 = vmatpush1.bf16.msra.mxu0 0
  %817 = vmatprep.subr.bf16.mxu0 0
  %818 = vmatpush1.bf16.msra.mxu0 0
  %819 = vmatprep.subr.bf16.mxu0 0
  %820 = vmatpush1.bf16.msra.mxu0 0
  %821 = vmatprep.subr.bf16.mxu0 0
  %822 = vmatpush1.bf16.msra.mxu0 0
  %823 = vmatprep.subr.bf16.mxu0 0
  %824 = vmatpush1.bf16.msra.mxu0 0
  %825 = vmatprep.subr.bf16.mxu0 0
  %826 = vmatpush1.bf16.msra.mxu0 0
  %827 = vmatprep.mubr.bf16.mxu0 0
  %828 = vmatmul.mubr.bf16.gmra.mrb[0].mxu0 %v285
  %v829 = vpop.f32.mrb[0].mxu0
  %v830 = vadd.f32 %v733, %v829
  %v831 = vpop.f32.mrb[0].mxu0
  %v832 = vpop.f32.mrb[0].mxu0
  %v833 = vadd.f32 %v736, %v832
  %v834 = vpop.f32.mrb[0].mxu0
  %835 = vmatprep.mubr.bf16.mxu0 0
  %836 = vmatmul.mubr.bf16.gmra.mrb[0].mxu0 %v290
  %v837 = vpop.f32.mrb[0].mxu0
  %v838 = vadd.f32 %v741, %v837
  %v839 = vpop.f32.mrb[0].mxu0
  %v840 = vpop.f32.mrb[0].mxu0
  %v841 = vadd.f32 %v744, %v840
  %v842 = vpop.f32.mrb[0].mxu0
  %843 = vmatprep.mubr.bf16.mxu0 0
  %844 = vmatmul.mubr.bf16.gmra.mrb[0].mxu0 %v295
  %v845 = vpop.f32.mrb[0].mxu0
  %v846 = vadd.f32 %v749, %v845
  %v847 = vpop.f32.mrb[0].mxu0
  %v848 = vpop.f32.mrb[0].mxu0
  %v849 = vadd.f32 %v752, %v848
  %v850 = vpop.f32.mrb[0].mxu0
  %851 = vmatprep.mubr.bf16.mxu0 0
  %852 = vmatmul.mubr.bf16.gmra.mrb[0].mxu0 %v300
  %v853 = vpop.f32.mrb[0].mxu0
  %v854 = vadd.f32 %v757, %v853
  %v855 = vpop.f32.mrb[0].mxu0
  %v856 = vpop.f32.mrb[0].mxu0
  %v857 = vadd.f32 %v760, %v856
  %v858 = vpop.f32.mrb[0].mxu0
  %859 = vmatprep.mubr.bf16.mxu0 0
  %860 = vmatmul.mubr.bf16.gmra.mrb[0].mxu0 %v305
  %v861 = vpop.f32.mrb[0].mxu0
  %v862 = vadd.f32 %v765, %v861
  %v863 = vpop.f32.mrb[0].mxu0
  %v864 = vpop.f32.mrb[0].mxu0
  %v865 = vadd.f32 %v768, %v864
  %v866 = vpop.f32.mrb[0].mxu0
  %867 = vmatprep.mubr.bf16.mxu0 0
  %868 = vmatmul.mubr.bf16.gmra.mrb[0].mxu0 %v310
  %v869 = vpop.f32.mrb[0].mxu0
  %v870 = vadd.f32 %v773, %v869
  %v871 = vpop.f32.mrb[0].mxu0
  %v872 = vpop.f32.mrb[0].mxu0
  %v873 = vadd.f32 %v776, %v872
  %v874 = vpop.f32.mrb[0].mxu0
  %875 = vmatprep.mubr.bf16.mxu0 0
  %876 = vmatmul.mubr.bf16.gmra.mrb[0].mxu0 %v315
  %v877 = vpop.f32.mrb[0].mxu0
  %v878 = vadd.f32 %v781, %v877
  %v879 = vpop.f32.mrb[0].mxu0
  %v880 = vpop.f32.mrb[0].mxu0
  %v881 = vadd.f32 %v784, %v880
  %v882 = vpop.f32.mrb[0].mxu0
  %883 = vmatprep.mubr.bf16.mxu0 0
  %884 = vmatmul.mubr.bf16.gmra.mrb[0].mxu0 %v320
  %v885 = vpop.f32.mrb[0].mxu0
  %v886 = vadd.f32 %v789, %v885
  %v887 = vpop.f32.mrb[0].mxu0
  %v888 = vpop.f32.mrb[0].mxu0
  %v889 = vadd.f32 %v792, %v888
  %v890 = vpop.f32.mrb[0].mxu0
  %891 = vdwg.mxu0
  %v892 = vld [vmem:[%s3] sm:$0xf]
  %v893 = vld [vmem:[%s3 + $0x4] sm:$0xf]
  %v894 = vld [vmem:[%s3 + $0x8] sm:$0xf]
  %v895 = vld [vmem:[%s3 + $0xc] sm:$0xf]
  %v896 = vld [vmem:[%s3 + $0x10] sm:$0xf]
  %v897 = vld [vmem:[%s3 + $0x14] sm:$0xf]
  %v898 = vld [vmem:[%s3 + $0x18] sm:$0xf]
  %v899 = vld [vmem:[%s3 + $0x1c] sm:$0xf]
  %v900 = vld [vmem:[%s3 + $0x20] sm:$0xf]
  %v901 = vld [vmem:[%s3 + $0x24] sm:$0xf]
  %v902 = vld [vmem:[%s3 + $0x28] sm:$0xf]
  %v903 = vld [vmem:[%s3 + $0x2c] sm:$0xf]
  %v904 = vld [vmem:[%s3 + $0x30] sm:$0xf]
  %v905 = vld [vmem:[%s3 + $0x34] sm:$0xf]
  %v906 = vld [vmem:[%s3 + $0x38] sm:$0xf]
  %v907 = vld [vmem:[%s3 + $0x3c] sm:$0xf]
  %v908 = vunpack.c.l.bf16 %v892
  %v909 = vunpack.c.l.bf16 %v893
  %v910 = vunpack.c.l.bf16 %v894
  %v911 = vunpack.c.l.bf16 %v895
  %v912 = vunpack.c.l.bf16 %v896
  %v913 = vunpack.c.l.bf16 %v897
  %v914 = vunpack.c.l.bf16 %v898
  %v915 = vunpack.c.l.bf16 %v899
  %v916 = vunpack.c.l.bf16 %v900
  %v917 = vunpack.c.l.bf16 %v901
  %v918 = vunpack.c.l.bf16 %v902
  %v919 = vunpack.c.l.bf16 %v903
  %v920 = vunpack.c.l.bf16 %v904
  %v921 = vunpack.c.l.bf16 %v905
  %v922 = vunpack.c.l.bf16 %v906
  %v923 = vunpack.c.l.bf16 %v907
  %v924 = vadd.f32 %v830, %v908
  %v925 = vadd.f32 %v833, %v909
  %v926 = vadd.f32 %v838, %v910
  %v927 = vadd.f32 %v841, %v911
  %v928 = vadd.f32 %v846, %v912
  %v929 = vadd.f32 %v849, %v913
  %v930 = vadd.f32 %v854, %v914
  %v931 = vadd.f32 %v857, %v915
  %v932 = vadd.f32 %v862, %v916
  %v933 = vadd.f32 %v865, %v917
  %v934 = vadd.f32 %v870, %v918
  %v935 = vadd.f32 %v873, %v919
  %v936 = vadd.f32 %v878, %v920
  %v937 = vadd.f32 %v881, %v921
  %v938 = vadd.f32 %v886, %v922
  %v939 = vadd.f32 %v889, %v923
  %v940 = vmax.f32 %v924, 0.0
  %v941 = vmax.f32 %v925, 0.0
  %v942 = vmax.f32 %v926, 0.0
  %v943 = vmax.f32 %v927, 0.0
  %v944 = vmax.f32 %v928, 0.0
  %v945 = vmax.f32 %v929, 0.0
  %v946 = vmax.f32 %v930, 0.0
  %v947 = vmax.f32 %v931, 0.0
  %v948 = vmax.f32 %v932, 0.0
  %v949 = vmax.f32 %v933, 0.0
  %v950 = vmax.f32 %v934, 0.0
  %v951 = vmax.f32 %v935, 0.0
  %v952 = vmax.f32 %v936, 0.0
  %v953 = vmax.f32 %v937, 0.0
  %v954 = vmax.f32 %v938, 0.0
  %v955 = vmax.f32 %v939, 0.0
  %v956 = vpack.c.bf16 %v941, %v940
  %v957 = vpack.c.bf16 %v943, %v942
  %v958 = vpack.c.bf16 %v945, %v944
  %v959 = vpack.c.bf16 %v947, %v946
  %v960 = vpack.c.bf16 %v949, %v948
  %v961 = vpack.c.bf16 %v951, %v950
  %v962 = vpack.c.bf16 %v953, %v952
  %v963 = vpack.c.bf16 %v955, %v954
  %v972 = vunpack.c.l.b16 %v956
  %v973 = vunpack.c.h.b16 %v956
  %v974 = vunpack.c.l.b16 %v957
  %v975 = vunpack.c.h.b16 %v957
  %v976 = vunpack.c.l.b16 %v958
  %v977 = vunpack.c.h.b16 %v958
  %v978 = vunpack.c.l.b16 %v959
  %v979 = vunpack.c.h.b16 %v959
  %v980 = vunpack.c.l.b16 %v960
  %v981 = vunpack.c.h.b16 %v960
  %v982 = vunpack.c.l.b16 %v961
  %v983 = vunpack.c.h.b16 %v961
  %v984 = vunpack.c.l.b16 %v962
  %v985 = vunpack.c.h.b16 %v962
  %v986 = vunpack.c.l.b16 %v963
  %v987 = vunpack.c.h.b16 %v963
  %v988 = vpack.c.b16 %v972, %v972
  %v989 = vpack.c.b16 %v973, %v973
  %v990 = vpack.c.b16 %v974, %v974
  %v991 = vpack.c.b16 %v975, %v975
  %v992 = vpack.c.b16 %v976, %v976
  %v993 = vpack.c.b16 %v977, %v977
  %v994 = vpack.c.b16 %v978, %v978
  %v995 = vpack.c.b16 %v979, %v979
  %v996 = vpack.c.b16 %v980, %v980
  %v997 = vpack.c.b16 %v981, %v981
  %v998 = vpack.c.b16 %v982, %v982
  %v999 = vpack.c.b16 %v983, %v983
  %v1000 = vpack.c.b16 %v984, %v984
  %v1001 = vpack.c.b16 %v985, %v985
  %v1002 = vpack.c.b16 %v986, %v986
  %v1003 = vpack.c.b16 %v987, %v987
  %1020 = vst [vmem:[%s4] sm:$0xf] %v988
  %1021 = vst [vmem:[%s4 + $0x4] sm:$0xf] %v989
  %1022 = vst [vmem:[%s4 + $0x8] sm:$0xf] %v990
  %1023 = vst [vmem:[%s4 + $0xc] sm:$0xf] %v991
  %1024 = vst [vmem:[%s4 + $0x10] sm:$0xf] %v992
  %1025 = vst [vmem:[%s4 + $0x14] sm:$0xf] %v993
  %1026 = vst [vmem:[%s4 + $0x18] sm:$0xf] %v994
  %1027 = vst [vmem:[%s4 + $0x1c] sm:$0xf] %v995
  %1028 = vst [vmem:[%s4 + $0x20] sm:$0xf] %v996
  %1029 = vst [vmem:[%s4 + $0x24] sm:$0xf] %v997
  %1030 = vst [vmem:[%s4 + $0x28] sm:$0xf] %v998
  %1031 = vst [vmem:[%s4 + $0x2c] sm:$0xf] %v999
  %1032 = vst [vmem:[%s4 + $0x30] sm:$0xf] %v1000
  %1033 = vst [vmem:[%s4 + $0x34] sm:$0xf] %v1001
  %1034 = vst [vmem:[%s4 + $0x38] sm:$0xf] %v1002
  %1035 = vst [vmem:[%s4 + $0x3c] sm:$0xf] %v1003
  // Predicated region
  $region18: #{fwd.22} parent=0 // pred_check
    _
  $region19: #{fwd.22} parent=0 // pred_check_branch
    %1037 = sbr.rel (0) target = $region21
  $region20: #{fwd.22} parent=0 // pred_region
    _
  $region21: #{fwd.22} parent=0 // pred_fallthru
    _
  // Predicated region
  $region22: #{fwd.22} parent=0 // pred_check
    _
  $region23: #{fwd.22} parent=0 // pred_check_branch
    %1039 = sbr.rel (0) target = $region25
  $region24: #{fwd.22} parent=0 // pred_region
    _
  $region25: #{fwd.22} parent=0 // pred_fallthru
    _

// kernel: fwd.27
$region0: #{fwd.27}
  #allocation0 [shape = 'u32[]', space=smem, size = 0x4, offset = 0x4, fixed_abs, tag = 'smem constant byte address 0x4 - core index']
  #allocation1 [shape = 'u32[144,128]{1,0:T(1,128)}', space=vmem, size = 0x12000, scoped, tag = 'internal scratch']
  %s0 = inlined_call_operand.vmem [shape: bf16[32,640], index: 0, kind: input, shape index: {}]
  %s1 = inlined_call_operand.vmem [shape: bf16[640,256], index: 1, kind: input, shape index: {}]
  %s2 = inlined_call_operand.vmem [shape: f32[1,256], index: 2, kind: input, shape index: {}]
  %s3 = inlined_call_operand.vmem [shape: bf16[32,256], index: 3, kind: output, shape index: {}]
  %s4 = sld [smem:[#allocation0]]
  $region22: #{fwd.27} parent=0
    _
  %s6 = ssub.s32 1, %s4
  %s7 = scalar_select 0, %s6, %s4
  // Predicated region
  $region2: #{fwd.27} parent=0 // pred_check
    _
  $region3: #{fwd.27} parent=0 // pred_check_branch
    %9 = sbr.rel (0) target = $region5
  $region4: #{fwd.27} parent=0 // pred_region
    _
  $region5: #{fwd.27} parent=0 // pred_fallthru
    _
  // Predicated region
  $region6: #{fwd.27} parent=0 // pred_check
    _
  $region7: #{fwd.27} parent=0 // pred_check_branch
    %11 = sbr.rel (0) target = $region9
  $region8: #{fwd.27} parent=0 // pred_region
    _
  $region9: #{fwd.27} parent=0 // pred_fallthru
    _
  // Predicated region
  $region10: #{fwd.27} parent=0 // pred_check
    _
  $region11: #{fwd.27} parent=0 // pred_check_branch
    %13 = sbr.rel (0) target = $region13
  $region12: #{fwd.27} parent=0 // pred_region
    _
  $region13: #{fwd.27} parent=0 // pred_fallthru
    _
  %v15 = vld [vmem:[%s0] sm:$0xff]
  %v16 = vld [vmem:[%s0 + $0x8] sm:$0xff]
  %v17 = vld [vmem:[%s0 + $0x10] sm:$0xf]
  %v18 = vld [vmem:[%s0 + $0x14] sm:$0xff]
  %v19 = vld [vmem:[%s0 + $0x1c] sm:$0xff]
  %v20 = vld [vmem:[%s0 + $0x24] sm:$0xf]
  %v21 = vld [vmem:[%s0 + $0x28] sm:$0xff]
  %v22 = vld [vmem:[%s0 + $0x30] sm:$0xff]
  %v23 = vld [vmem:[%s0 + $0x38] sm:$0xf]
  %v24 = vld [vmem:[%s0 + $0x3c] sm:$0xff]
  %v25 = vld [vmem:[%s0 + $0x44] sm:$0xff]
  %v26 = vld [vmem:[%s0 + $0x4c] sm:$0xf]
  %v27 = vld [vmem:[%s1] sm:$0xff]
  %v28 = vld [vmem:[%s1 + $0x8] sm:$0xff]
  %v29 = vld [vmem:[%s1 + $0x10] sm:$0xff]
  %v30 = vld [vmem:[%s1 + $0x18] sm:$0xff]
  %v31 = vld [vmem:[%s1 + $0x20] sm:$0xff]
  %v32 = vld [vmem:[%s1 + $0x28] sm:$0xff]
  %v33 = vld [vmem:[%s1 + $0x30] sm:$0xff]
  %v34 = vld [vmem:[%s1 + $0x38] sm:$0xff]
  %v35 = vld [vmem:[%s1 + $0x40] sm:$0xff]
  %v36 = vld [vmem:[%s1 + $0x48] sm:$0xff]
  %v37 = vld [vmem:[%s1 + $0x50] sm:$0xff]
  %v38 = vld [vmem:[%s1 + $0x58] sm:$0xff]
  %v39 = vld [vmem:[%s1 + $0x60] sm:$0xff]
  %v40 = vld [vmem:[%s1 + $0x68] sm:$0xff]
  %v41 = vld [vmem:[%s1 + $0x70] sm:$0xff]
  %v42 = vld [vmem:[%s1 + $0x78] sm:$0xff]
  %v43 = vld [vmem:[%s1 + $0x80] sm:$0xff]
  %v44 = vld [vmem:[%s1 + $0x88] sm:$0xff]
  %v45 = vld [vmem:[%s1 + $0x90] sm:$0xff]
  %v46 = vld [vmem:[%s1 + $0x98] sm:$0xff]
  %v47 = vld [vmem:[%s1 + $0xa0] sm:$0xff]
  %v48 = vld [vmem:[%s1 + $0xa8] sm:$0xff]
  %v49 = vld [vmem:[%s1 + $0xb0] sm:$0xff]
  %v50 = vld [vmem:[%s1 + $0xb8] sm:$0xff]
  %v51 = vld [vmem:[%s1 + $0xc0] sm:$0xff]
  %v52 = vld [vmem:[%s1 + $0xc8] sm:$0xff]
  %v53 = vld [vmem:[%s1 + $0xd0] sm:$0xff]
  %v54 = vld [vmem:[%s1 + $0xd8] sm:$0xff]
  %v55 = vld [vmem:[%s1 + $0xe0] sm:$0xff]
  %v56 = vld [vmem:[%s1 + $0xe8] sm:$0xff]
  %v57 = vld [vmem:[%s1 + $0xf0] sm:$0xff]
  %v58 = vld [vmem:[%s1 + $0xf8] sm:$0xff]
  %v59 = vld [vmem:[%s1 + $0x100] sm:$0xff]
  %v60 = vld [vmem:[%s1 + $0x108] sm:$0xff]
  %v61 = vld [vmem:[%s1 + $0x110] sm:$0xff]
  %v62 = vld [vmem:[%s1 + $0x118] sm:$0xff]
  %v63 = vld [vmem:[%s1 + $0x120] sm:$0xff]
  %v64 = vld [vmem:[%s1 + $0x128] sm:$0xff]
  %v65 = vld [vmem:[%s1 + $0x130] sm:$0xff]
  %v66 = vld [vmem:[%s1 + $0x138] sm:$0xff]
  %v67 = vld [vmem:[%s1 + $0x140] sm:$0xff]
  %v68 = vld [vmem:[%s1 + $0x148] sm:$0xff]
  %v69 = vld [vmem:[%s1 + $0x150] sm:$0xff]
  %v70 = vld [vmem:[%s1 + $0x158] sm:$0xff]
  %v71 = vld [vmem:[%s1 + $0x160] sm:$0xff]
  %v72 = vld [vmem:[%s1 + $0x168] sm:$0xff]
  %v73 = vld [vmem:[%s1 + $0x170] sm:$0xff]
  %v74 = vld [vmem:[%s1 + $0x178] sm:$0xff]
  %v75 = vld [vmem:[%s1 + $0x180] sm:$0xff]
  %v76 = vld [vmem:[%s1 + $0x188] sm:$0xff]
  %v77 = vld [vmem:[%s1 + $0x190] sm:$0xff]
  %v78 = vld [vmem:[%s1 + $0x198] sm:$0xff]
  %v79 = vld [vmem:[%s1 + $0x1a0] sm:$0xff]
  %v80 = vld [vmem:[%s1 + $0x1a8] sm:$0xff]
  %v81 = vld [vmem:[%s1 + $0x1b0] sm:$0xff]
  %v82 = vld [vmem:[%s1 + $0x1b8] sm:$0xff]
  %v83 = vld [vmem:[%s1 + $0x1c0] sm:$0xff]
  %v84 = vld [vmem:[%s1 + $0x1c8] sm:$0xff]
  %v85 = vld [vmem:[%s1 + $0x1d0] sm:$0xff]
  %v86 = vld [vmem:[%s1 + $0x1d8] sm:$0xff]
  %v87 = vld [vmem:[%s1 + $0x1e0] sm:$0xff]
  %v88 = vld [vmem:[%s1 + $0x1e8] sm:$0xff]
  %v89 = vld [vmem:[%s1 + $0x1f0] sm:$0xff]
  %v90 = vld [vmem:[%s1 + $0x1f8] sm:$0xff]
  %v91 = vld [vmem:[%s1 + $0x200] sm:$0xff]
  %v92 = vld [vmem:[%s1 + $0x208] sm:$0xff]
  %v93 = vld [vmem:[%s1 + $0x210] sm:$0xff]
  %v94 = vld [vmem:[%s1 + $0x218] sm:$0xff]
  %v95 = vld [vmem:[%s1 + $0x220] sm:$0xff]
  %v96 = vld [vmem:[%s1 + $0x228] sm:$0xff]
  %v97 = vld [vmem:[%s1 + $0x230] sm:$0xff]
  %v98 = vld [vmem:[%s1 + $0x238] sm:$0xff]
  %v99 = vld [vmem:[%s1 + $0x240] sm:$0xff]
  %v100 = vld [vmem:[%s1 + $0x248] sm:$0xff]
  %v101 = vld [vmem:[%s1 + $0x250] sm:$0xff]
  %v102 = vld [vmem:[%s1 + $0x258] sm:$0xff]
  %v103 = vld [vmem:[%s1 + $0x260] sm:$0xff]
  %v104 = vld [vmem:[%s1 + $0x268] sm:$0xff]
  %v105 = vld [vmem:[%s1 + $0x270] sm:$0xff]
  %v106 = vld [vmem:[%s1 + $0x278] sm:$0xff]
  %v107 = vld [vmem:[%s2] sm:$0x3]
  %v109 = vlaneseq
  %v110 = vshrl.u32 %v109, 7
  %v111 = vsub.s32 0, %v110
  %v112 = vrot.slane %v107, %v111
  %v113 = vlaneseq
  %v114 = vshrl.u32 %v113, 7
  %v115 = vsub.s32 1, %v114
  %v116 = vrot.slane %v107, %v115
  %v131 = vunpack.c.l.b16 %v15
  %v132 = vunpack.c.h.b16 %v15
  %v133 = vunpack.c.l.b16 %v16
  %v134 = vunpack.c.h.b16 %v16
  %v135 = vunpack.c.l.b16 %v17
  %v136 = vunpack.c.l.b16 %v18
  %v137 = vunpack.c.h.b16 %v18
  %v138 = vunpack.c.l.b16 %v19
  %v139 = vunpack.c.h.b16 %v19
  %v140 = vunpack.c.l.b16 %v20
  %v141 = vunpack.c.l.b16 %v21
  %v142 = vunpack.c.h.b16 %v21
  %v143 = vunpack.c.l.b16 %v22
  %v144 = vunpack.c.h.b16 %v22
  %v145 = vunpack.c.l.b16 %v23
  %v146 = vunpack.c.l.b16 %v24
  %v147 = vunpack.c.h.b16 %v24
  %v148 = vunpack.c.l.b16 %v25
  %v149 = vunpack.c.h.b16 %v25
  %v150 = vunpack.c.l.b16 %v26
  %v151 = vpack.c.b16 %v136, %v131
  %v152 = vpack.c.b16 %v137, %v132
  %v153 = vpack.c.b16 %v138, %v133
  %v154 = vpack.c.b16 %v139, %v134
  %v155 = vpack.c.b16 %v140, %v135
  %v156 = vpack.c.b16 %v146, %v141
  %v157 = vpack.c.b16 %v147, %v142
  %v158 = vpack.c.b16 %v148, %v143
  %v159 = vpack.c.b16 %v149, %v144
  %v160 = vpack.c.b16 %v150, %v145
  %v251 = vunpack.c.l.b16 %v27
  %v252 = vunpack.c.h.b16 %v27
  %v253 = vunpack.c.l.b16 %v28
  %v254 = vunpack.c.h.b16 %v28
  %v255 = vunpack.c.l.b16 %v29
  %v256 = vunpack.c.h.b16 %v29
  %v257 = vunpack.c.l.b16 %v30
  %v258 = vunpack.c.h.b16 %v30
  %v259 = vunpack.c.l.b16 %v31
  %v260 = vunpack.c.h.b16 %v31
  %v261 = vunpack.c.l.b16 %v32
  %v262 = vunpack.c.h.b16 %v32
  %v263 = vunpack.c.l.b16 %v33
  %v264 = vunpack.c.h.b16 %v33
  %v265 = vunpack.c.l.b16 %v34
  %v266 = vunpack.c.h.b16 %v34
  %v267 = vunpack.c.l.b16 %v35
  %v268 = vunpack.c.h.b16 %v35
  %v269 = vunpack.c.l.b16 %v36
  %v270 = vunpack.c.h.b16 %v36
  %v271 = vunpack.c.l.b16 %v37
  %v272 = vunpack.c.h.b16 %v37
  %v273 = vunpack.c.l.b16 %v38
  %v274 = vunpack.c.h.b16 %v38
  %v275 = vunpack.c.l.b16 %v39
  %v276 = vunpack.c.h.b16 %v39
  %v277 = vunpack.c.l.b16 %v40
  %v278 = vunpack.c.h.b16 %v40
  %v279 = vunpack.c.l.b16 %v41
  %v280 = vunpack.c.h.b16 %v41
  %v281 = vunpack.c.l.b16 %v42
  %v282 = vunpack.c.h.b16 %v42
  %v283 = vunpack.c.l.b16 %v43
  %v284 = vunpack.c.h.b16 %v43
  %v285 = vunpack.c.l.b16 %v44
  %v286 = vunpack.c.h.b16 %v44
  %v287 = vunpack.c.l.b16 %v45
  %v288 = vunpack.c.h.b16 %v45
  %v289 = vunpack.c.l.b16 %v46
  %v290 = vunpack.c.h.b16 %v46
  %v291 = vunpack.c.l.b16 %v47
  %v292 = vunpack.c.h.b16 %v47
  %v293 = vunpack.c.l.b16 %v48
  %v294 = vunpack.c.h.b16 %v48
  %v295 = vunpack.c.l.b16 %v49
  %v296 = vunpack.c.h.b16 %v49
  %v297 = vunpack.c.l.b16 %v50
  %v298 = vunpack.c.h.b16 %v50
  %v299 = vunpack.c.l.b16 %v51
  %v300 = vunpack.c.h.b16 %v51
  %v301 = vunpack.c.l.b16 %v52
  %v302 = vunpack.c.h.b16 %v52
  %v303 = vunpack.c.l.b16 %v53
  %v304 = vunpack.c.h.b16 %v53
  %v305 = vunpack.c.l.b16 %v54
  %v306 = vunpack.c.h.b16 %v54
  %v307 = vunpack.c.l.b16 %v55
  %v308 = vunpack.c.h.b16 %v55
  %v309 = vunpack.c.l.b16 %v56
  %v310 = vunpack.c.h.b16 %v56
  %v311 = vunpack.c.l.b16 %v57
  %v312 = vunpack.c.h.b16 %v57
  %v313 = vunpack.c.l.b16 %v58
  %v314 = vunpack.c.h.b16 %v58
  %v315 = vunpack.c.l.b16 %v59
  %v316 = vunpack.c.h.b16 %v59
  %v317 = vunpack.c.l.b16 %v60
  %v318 = vunpack.c.h.b16 %v60
  %v319 = vunpack.c.l.b16 %v61
  %v320 = vunpack.c.h.b16 %v61
  %v321 = vunpack.c.l.b16 %v62
  %v322 = vunpack.c.h.b16 %v62
  %v323 = vunpack.c.l.b16 %v63
  %v324 = vunpack.c.h.b16 %v63
  %v325 = vunpack.c.l.b16 %v64
  %v326 = vunpack.c.h.b16 %v64
  %v327 = vunpack.c.l.b16 %v65
  %v328 = vunpack.c.h.b16 %v65
  %v329 = vunpack.c.l.b16 %v66
  %v330 = vunpack.c.h.b16 %v66
  %v331 = vunpack.c.l.b16 %v67
  %v332 = vunpack.c.h.b16 %v67
  %v333 = vunpack.c.l.b16 %v68
  %v334 = vunpack.c.h.b16 %v68
  %v335 = vunpack.c.l.b16 %v69
  %v336 = vunpack.c.h.b16 %v69
  %v337 = vunpack.c.l.b16 %v70
  %v338 = vunpack.c.h.b16 %v70
  %v339 = vunpack.c.l.b16 %v71
  %v340 = vunpack.c.h.b16 %v71
  %v341 = vunpack.c.l.b16 %v72
  %v342 = vunpack.c.h.b16 %v72
  %v343 = vunpack.c.l.b16 %v73
  %v344 = vunpack.c.h.b16 %v73
  %v345 = vunpack.c.l.b16 %v74
  %v346 = vunpack.c.h.b16 %v74
  %v347 = vunpack.c.l.b16 %v75
  %v348 = vunpack.c.h.b16 %v75
  %v349 = vunpack.c.l.b16 %v76
  %v350 = vunpack.c.h.b16 %v76
  %v351 = vunpack.c.l.b16 %v77
  %v352 = vunpack.c.h.b16 %v77
  %v353 = vunpack.c.l.b16 %v78
  %v354 = vunpack.c.h.b16 %v78
  %v355 = vunpack.c.l.b16 %v79
  %v356 = vunpack.c.h.b16 %v79
  %v357 = vunpack.c.l.b16 %v80
  %v358 = vunpack.c.h.b16 %v80
  %v359 = vunpack.c.l.b16 %v81
  %v360 = vunpack.c.h.b16 %v81
  %v361 = vunpack.c.l.b16 %v82
  %v362 = vunpack.c.h.b16 %v82
  %v363 = vunpack.c.l.b16 %v83
  %v364 = vunpack.c.h.b16 %v83
  %v365 = vunpack.c.l.b16 %v84
  %v366 = vunpack.c.h.b16 %v84
  %v367 = vunpack.c.l.b16 %v85
  %v368 = vunpack.c.h.b16 %v85
  %v369 = vunpack.c.l.b16 %v86
  %v370 = vunpack.c.h.b16 %v86
  %v371 = vunpack.c.l.b16 %v87
  %v372 = vunpack.c.h.b16 %v87
  %v373 = vunpack.c.l.b16 %v88
  %v374 = vunpack.c.h.b16 %v88
  %v375 = vunpack.c.l.b16 %v89
  %v376 = vunpack.c.h.b16 %v89
  %v377 = vunpack.c.l.b16 %v90
  %v378 = vunpack.c.h.b16 %v90
  %v379 = vunpack.c.l.b16 %v91
  %v380 = vunpack.c.h.b16 %v91
  %v381 = vunpack.c.l.b16 %v92
  %v382 = vunpack.c.h.b16 %v92
  %v383 = vunpack.c.l.b16 %v93
  %v384 = vunpack.c.h.b16 %v93
  %v385 = vunpack.c.l.b16 %v94
  %v386 = vunpack.c.h.b16 %v94
  %v387 = vunpack.c.l.b16 %v95
  %v388 = vunpack.c.h.b16 %v95
  %v389 = vunpack.c.l.b16 %v96
  %v390 = vunpack.c.h.b16 %v96
  %v391 = vunpack.c.l.b16 %v97
  %v392 = vunpack.c.h.b16 %v97
  %v393 = vunpack.c.l.b16 %v98
  %v394 = vunpack.c.h.b16 %v98
  %v395 = vunpack.c.l.b16 %v99
  %v396 = vunpack.c.h.b16 %v99
  %v397 = vunpack.c.l.b16 %v100
  %v398 = vunpack.c.h.b16 %v100
  %v399 = vunpack.c.l.b16 %v101
  %v400 = vunpack.c.h.b16 %v101
  %v401 = vunpack.c.l.b16 %v102
  %v402 = vunpack.c.h.b16 %v102
  %v403 = vunpack.c.l.b16 %v103
  %v404 = vunpack.c.h.b16 %v103
  %v405 = vunpack.c.l.b16 %v104
  %v406 = vunpack.c.h.b16 %v104
  %v407 = vunpack.c.l.b16 %v105
  %v408 = vunpack.c.h.b16 %v105
  %v409 = vunpack.c.l.b16 %v106
  %v410 = vunpack.c.h.b16 %v106
  %v411 = vpack.c.b16 %v253, %v251
  %v412 = vpack.c.b16 %v254, %v252
  %v413 = vpack.c.b16 %v257, %v255
  %v414 = vpack.c.b16 %v258, %v256
  %v415 = vpack.c.b16 %v261, %v259
  %v416 = vpack.c.b16 %v262, %v260
  %v417 = vpack.c.b16 %v265, %v263
  %v418 = vpack.c.b16 %v266, %v264
  %v419 = vpack.c.b16 %v269, %v267
  %v420 = vpack.c.b16 %v270, %v268
  %v421 = vpack.c.b16 %v273, %v271
  %v422 = vpack.c.b16 %v274, %v272
  %v423 = vpack.c.b16 %v277, %v275
  %v424 = vpack.c.b16 %v278, %v276
  %v425 = vpack.c.b16 %v281, %v279
  %v426 = vpack.c.b16 %v282, %v280
  %v427 = vpack.c.b16 %v285, %v283
  %v428 = vpack.c.b16 %v286, %v284
  %v429 = vpack.c.b16 %v289, %v287
  %v430 = vpack.c.b16 %v290, %v288
  %v431 = vpack.c.b16 %v293, %v291
  %v432 = vpack.c.b16 %v294, %v292
  %v433 = vpack.c.b16 %v297, %v295
  %v434 = vpack.c.b16 %v298, %v296
  %v435 = vpack.c.b16 %v301, %v299
  %v436 = vpack.c.b16 %v302, %v300
  %v437 = vpack.c.b16 %v305, %v303
  %v438 = vpack.c.b16 %v306, %v304
  %v439 = vpack.c.b16 %v309, %v307
  %v440 = vpack.c.b16 %v310, %v308
  %v441 = vpack.c.b16 %v313, %v311
  %v442 = vpack.c.b16 %v314, %v312
  %v443 = vpack.c.b16 %v317, %v315
  %v444 = vpack.c.b16 %v318, %v316
  %v445 = vpack.c.b16 %v321, %v319
  %v446 = vpack.c.b16 %v322, %v320
  %v447 = vpack.c.b16 %v325, %v323
  %v448 = vpack.c.b16 %v326, %v324
  %v449 = vpack.c.b16 %v329, %v327
  %v450 = vpack.c.b16 %v330, %v328
  %v451 = vpack.c.b16 %v333, %v331
  %v452 = vpack.c.b16 %v334, %v332
  %v453 = vpack.c.b16 %v337, %v335
  %v454 = vpack.c.b16 %v338, %v336
  %v455 = vpack.c.b16 %v341, %v339
  %v456 = vpack.c.b16 %v342, %v340
  %v457 = vpack.c.b16 %v345, %v343
  %v458 = vpack.c.b16 %v346, %v344
  %v459 = vpack.c.b16 %v349, %v347
  %v460 = vpack.c.b16 %v350, %v348
  %v461 = vpack.c.b16 %v353, %v351
  %v462 = vpack.c.b16 %v354, %v352
  %v463 = vpack.c.b16 %v357, %v355
  %v464 = vpack.c.b16 %v358, %v356
  %v465 = vpack.c.b16 %v361, %v359
  %v466 = vpack.c.b16 %v362, %v360
  %v467 = vpack.c.b16 %v365, %v363
  %v468 = vpack.c.b16 %v366, %v364
  %v469 = vpack.c.b16 %v369, %v367
  %v470 = vpack.c.b16 %v370, %v368
  %v471 = vpack.c.b16 %v373, %v371
  %v472 = vpack.c.b16 %v374, %v372
  %v473 = vpack.c.b16 %v377, %v375
  %v474 = vpack.c.b16 %v378, %v376
  %v475 = vpack.c.b16 %v381, %v379
  %v476 = vpack.c.b16 %v382, %v380
  %v477 = vpack.c.b16 %v385, %v383
  %v478 = vpack.c.b16 %v386, %v384
  %v479 = vpack.c.b16 %v389, %v387
  %v480 = vpack.c.b16 %v390, %v388
  %v481 = vpack.c.b16 %v393, %v391
  %v482 = vpack.c.b16 %v394, %v392
  %v483 = vpack.c.b16 %v397, %v395
  %v484 = vpack.c.b16 %v398, %v396
  %v485 = vpack.c.b16 %v401, %v399
  %v486 = vpack.c.b16 %v402, %v400
  %v487 = vpack.c.b16 %v405, %v403
  %v488 = vpack.c.b16 %v406, %v404
  %v489 = vpack.c.b16 %v409, %v407
  %v490 = vpack.c.b16 %v410, %v408
  %571 = vmatprep.subr.bf16.mxu0 %v412
  %572 = vmatpush1.bf16.msra.mxu0 %v411
  %573 = vmatprep.subr.bf16.mxu0 %v414
  %574 = vmatpush1.bf16.msra.mxu0 %v413
  %575 = vmatprep.subr.bf16.mxu0 %v416
  %576 = vmatpush1.bf16.msra.mxu0 %v415
  %577 = vmatprep.subr.bf16.mxu0 %v418
  %578 = vmatpush1.bf16.msra.mxu0 %v417
  %579 = vmatprep.subr.bf16.mxu0 %v420
  %580 = vmatpush1.bf16.msra.mxu0 %v419
  %581 = vmatprep.subr.bf16.mxu0 %v422
  %582 = vmatpush1.bf16.msra.mxu0 %v421
  %583 = vmatprep.subr.bf16.mxu0 %v424
  %584 = vmatpush1.bf16.msra.mxu0 %v423
  %585 = vmatprep.subr.bf16.mxu0 %v426
  %586 = vmatpush1.bf16.msra.mxu0 %v425
  %587 = vmatprep.subr.bf16.mxu0 %v428
  %588 = vmatpush1.bf16.msra.mxu0 %v427
  %589 = vmatprep.subr.bf16.mxu0 %v430
  %590 = vmatpush1.bf16.msra.mxu0 %v429
  %591 = vmatprep.subr.bf16.mxu0 %v432
  %592 = vmatpush1.bf16.msra.mxu0 %v431
  %593 = vmatprep.subr.bf16.mxu0 %v434
  %594 = vmatpush1.bf16.msra.mxu0 %v433
  %595 = vmatprep.subr.bf16.mxu0 %v436
  %596 = vmatpush1.bf16.msra.mxu0 %v435
  %597 = vmatprep.subr.bf16.mxu0 %v438
  %598 = vmatpush1.bf16.msra.mxu0 %v437
  %599 = vmatprep.subr.bf16.mxu0 %v440
  %600 = vmatpush1.bf16.msra.mxu0 %v439
  %601 = vmatprep.subr.bf16.mxu0 %v442
  %602 = vmatpush1.bf16.msra.mxu0 %v441
  %603 = vmatprep.mubr.bf16.mxu0 %v152
  %604 = vmatmul.mubr.bf16.gmra.mrb[0].mxu0 %v151
  %v605 = vpop.f32.mrb[0].mxu0
  %v606 = vadd.f32 %v112, %v605
  %v607 = vpop.f32.mrb[0].mxu0
  %v608 = vadd.f32 %v116, %v607
  %v609 = vpop.f32.mrb[0].mxu0
  %v610 = vadd.f32 %v112, %v609
  %v611 = vpop.f32.mrb[0].mxu0
  %v612 = vadd.f32 %v116, %v611
  %613 = vmatprep.mubr.bf16.mxu0 %v157
  %614 = vmatmul.mubr.bf16.gmra.mrb[0].mxu0 %v156
  %v615 = vpop.f32.mrb[0].mxu0
  %v616 = vadd.f32 %v112, %v615
  %v617 = vpop.f32.mrb[0].mxu0
  %v618 = vadd.f32 %v116, %v617
  %v619 = vpop.f32.mrb[0].mxu0
  %v620 = vadd.f32 %v112, %v619
  %v621 = vpop.f32.mrb[0].mxu0
  %v622 = vadd.f32 %v116, %v621
  %623 = vdwg.mxu0
  %624 = vmatprep.subr.bf16.mxu0 %v444
  %625 = vmatpush1.bf16.msra.mxu0 %v443
  %626 = vmatprep.subr.bf16.mxu0 %v446
  %627 = vmatpush1.bf16.msra.mxu0 %v445
  %628 = vmatprep.subr.bf16.mxu0 %v448
  %629 = vmatpush1.bf16.msra.mxu0 %v447
  %630 = vmatprep.subr.bf16.mxu0 %v450
  %631 = vmatpush1.bf16.msra.mxu0 %v449
  %632 = vmatprep.subr.bf16.mxu0 %v452
  %633 = vmatpush1.bf16.msra.mxu0 %v451
  %634 = vmatprep.subr.bf16.mxu0 %v454
  %635 = vmatpush1.bf16.msra.mxu0 %v453
  %636 = vmatprep.subr.bf16.mxu0 %v456
  %637 = vmatpush1.bf16.msra.mxu0 %v455
  %638 = vmatprep.subr.bf16.mxu0 %v458
  %639 = vmatpush1.bf16.msra.mxu0 %v457
  %640 = vmatprep.subr.bf16.mxu0 %v460
  %641 = vmatpush1.bf16.msra.mxu0 %v459
  %642 = vmatprep.subr.bf16.mxu0 %v462
  %643 = vmatpush1.bf16.msra.mxu0 %v461
  %644 = vmatprep.subr.bf16.mxu0 %v464
  %645 = vmatpush1.bf16.msra.mxu0 %v463
  %646 = vmatprep.subr.bf16.mxu0 %v466
  %647 = vmatpush1.bf16.msra.mxu0 %v465
  %648 = vmatprep.subr.bf16.mxu0 %v468
  %649 = vmatpush1.bf16.msra.mxu0 %v467
  %650 = vmatprep.subr.bf16.mxu0 %v470
  %651 = vmatpush1.bf16.msra.mxu0 %v469
  %652 = vmatprep.subr.bf16.mxu0 %v472
  %653 = vmatpush1.bf16.msra.mxu0 %v471
  %654 = vmatprep.subr.bf16.mxu0 %v474
  %655 = vmatpush1.bf16.msra.mxu0 %v473
  %656 = vmatprep.mubr.bf16.mxu0 %v154
  %657 = vmatmul.mubr.bf16.gmra.mrb[0].mxu0 %v153
  %v658 = vpop.f32.mrb[0].mxu0
  %v659 = vadd.f32 %v606, %v658
  %v660 = vpop.f32.mrb[0].mxu0
  %v661 = vadd.f32 %v608, %v660
  %v662 = vpop.f32.mrb[0].mxu0
  %v663 = vadd.f32 %v610, %v662
  %v664 = vpop.f32.mrb[0].mxu0
  %v665 = vadd.f32 %v612, %v664
  %666 = vmatprep.mubr.bf16.mxu0 %v159
  %667 = vmatmul.mubr.bf16.gmra.mrb[0].mxu0 %v158
  %v668 = vpop.f32.mrb[0].mxu0
  %v669 = vadd.f32 %v616, %v668
  %v670 = vpop.f32.mrb[0].mxu0
  %v671 = vadd.f32 %v618, %v670
  %v672 = vpop.f32.mrb[0].mxu0
  %v673 = vadd.f32 %v620, %v672
  %v674 = vpop.f32.mrb[0].mxu0
  %v675 = vadd.f32 %v622, %v674
  %676 = vdwg.mxu0
  %677 = vmatprep.subr.bf16.mxu0 %v476
  %678 = vmatpush1.bf16.msra.mxu0 %v475
  %679 = vmatprep.subr.bf16.mxu0 %v478
  %680 = vmatpush1.bf16.msra.mxu0 %v477
  %681 = vmatprep.subr.bf16.mxu0 %v480
  %682 = vmatpush1.bf16.msra.mxu0 %v479
  %683 = vmatprep.subr.bf16.mxu0 %v482
  %684 = vmatpush1.bf16.msra.mxu0 %v481
  %685 = vmatprep.subr.bf16.mxu0 %v484
  %686 = vmatpush1.bf16.msra.mxu0 %v483
  %687 = vmatprep.subr.bf16.mxu0 %v486
  %688 = vmatpush1.bf16.msra.mxu0 %v485
  %689 = vmatprep.subr.bf16.mxu0 %v488
  %690 = vmatpush1.bf16.msra.mxu0 %v487
  %691 = vmatprep.subr.bf16.mxu0 %v490
  %692 = vmatpush1.bf16.msra.mxu0 %v489
  %693 = vmatprep.subr.bf16.mxu0 0
  %694 = vmatpush1.bf16.msra.mxu0 0
  %695 = vmatprep.subr.bf16.mxu0 0
  %696 = vmatpush1.bf16.msra.mxu0 0
  %697 = vmatprep.subr.bf16.mxu0 0
  %698 = vmatpush1.bf16.msra.mxu0 0
  %699 = vmatprep.subr.bf16.mxu0 0
  %700 = vmatpush1.bf16.msra.mxu0 0
  %701 = vmatprep.subr.bf16.mxu0 0
  %702 = vmatpush1.bf16.msra.mxu0 0
  %703 = vmatprep.subr.bf16.mxu0 0
  %704 = vmatpush1.bf16.msra.mxu0 0
  %705 = vmatprep.subr.bf16.mxu0 0
  %706 = vmatpush1.bf16.msra.mxu0 0
  %707 = vmatprep.subr.bf16.mxu0 0
  %708 = vmatpush1.bf16.msra.mxu0 0
  %709 = vmatprep.mubr.bf16.mxu0 0
  %710 = vmatmul.mubr.bf16.gmra.mrb[0].mxu0 %v155
  %v711 = vpop.f32.mrb[0].mxu0
  %v712 = vadd.f32 %v659, %v711
  %v713 = vpop.f32.mrb[0].mxu0
  %v714 = vadd.f32 %v661, %v713
  %v715 = vpop.f32.mrb[0].mxu0
  %v716 = vadd.f32 %v663, %v715
  %v717 = vpop.f32.mrb[0].mxu0
  %v718 = vadd.f32 %v665, %v717
  %719 = vmatprep.mubr.bf16.mxu0 0
  %720 = vmatmul.mubr.bf16.gmra.mrb[0].mxu0 %v160
  %v721 = vpop.f32.mrb[0].mxu0
  %v722 = vadd.f32 %v669, %v721
  %v723 = vpop.f32.mrb[0].mxu0
  %v724 = vadd.f32 %v671, %v723
  %v725 = vpop.f32.mrb[0].mxu0
  %v726 = vadd.f32 %v673, %v725
  %v727 = vpop.f32.mrb[0].mxu0
  %v728 = vadd.f32 %v675, %v727
  %729 = vdwg.mxu0
  %v730 = vmax.f32 %v712, 0.0
  %v731 = vmax.f32 %v714, 0.0
  %v732 = vmax.f32 %v716, 0.0
  %v733 = vmax.f32 %v718, 0.0
  %v734 = vmax.f32 %v722, 0.0
  %v735 = vmax.f32 %v724, 0.0
  %v736 = vmax.f32 %v726, 0.0
  %v737 = vmax.f32 %v728, 0.0
  %v738 = vlaneseq
  %v739 = vand.u32 %v738, 127
  %v740 = vadd.s32 %v739, 128
  %vm741 = vcmp.lt.s32.totalorder %v739, 128
  %vm742 = vcmp.lt.s32.totalorder %v740, 128
  %v743 = vsel %vm741, %v730, %v712
  %v744 = vsel %vm742, %v731, %v714
  %v745 = vsel %vm741, %v732, %v716
  %v746 = vsel %vm742, %v733, %v718
  %v747 = vsel %vm741, %v734, %v722
  %v748 = vsel %vm742, %v735, %v724
  %v749 = vsel %vm741, %v736, %v726
  %v750 = vsel %vm742, %v737, %v728
  %v751 = vpack.c.bf16 %v745, %v743
  %v752 = vpack.c.bf16 %v746, %v744
  %v753 = vpack.c.bf16 %v749, %v747
  %v754 = vpack.c.bf16 %v750, %v748
  %v759 = vunpack.c.l.b16 %v751
  %v760 = vunpack.c.l.b16 %v752
  %v761 = vunpack.c.h.b16 %v751
  %v762 = vunpack.c.h.b16 %v752
  %v763 = vunpack.c.l.b16 %v753
  %v764 = vunpack.c.l.b16 %v754
  %v765 = vunpack.c.h.b16 %v753
  %v766 = vunpack.c.h.b16 %v754
  %v767 = vpack.c.b16 %v760, %v759
  %v768 = vpack.c.b16 %v762, %v761
  %v769 = vpack.c.b16 %v764, %v763
  %v770 = vpack.c.b16 %v766, %v765
  %775 = vst [vmem:[%s3] sm:$0xff] %v767
  %776 = vst [vmem:[%s3 + $0x8] sm:$0xff] %v768
  %777 = vst [vmem:[%s3 + $0x10] sm:$0xff] %v769
  %778 = vst [vmem:[%s3 + $0x18] sm:$0xff] %v770
  // Predicated region
  $region14: #{fwd.27} parent=0 // pred_check
    _
  $region15: #{fwd.27} parent=0 // pred_check_branch
    %780 = sbr.rel (0) target = $region17
  $region16: #{fwd.27} parent=0 // pred_region
    _
  $region17: #{fwd.27} parent=0 // pred_fallthru
    _
  // Predicated region
  $region18: #{fwd.27} parent=0 // pred_check
    _
  $region19: #{fwd.27} parent=0 // pred_check_branch
    %782 = sbr.rel (0) target = $region21
  $region20: #{fwd.27} parent=0 // pred_region
    _
  $region21: #{fwd.27} parent=0 // pred_fallthru
    _

// kernel: fwd.35
$region0: #{fwd.35}
  #allocation0 [shape = 'u32[]', space=smem, size = 0x4, offset = 0x4, fixed_abs, tag = 'smem constant byte address 0x4 - core index']
  #allocation1 [shape = 'u32[144,128]{1,0:T(1,128)}', space=vmem, size = 0x12000, scoped, tag = 'internal scratch']
  %s0 = inlined_call_operand.vmem [shape: bf16[32,128], index: 0, kind: input, shape index: {}]
  %s1 = inlined_call_operand.vmem [shape: bf16[128,128], index: 1, kind: input, shape index: {}]
  %s2 = inlined_call_operand.vmem [shape: f32[1,128], index: 2, kind: input, shape index: {}]
  %s3 = inlined_call_operand.vmem [shape: f32[32,128], index: 3, kind: output, shape index: {}]
  %s4 = sld [smem:[#allocation0]]
  $region22: #{fwd.35} parent=0
    _
  %s6 = ssub.s32 1, %s4
  %s7 = scalar_select 0, %s6, %s4
  // Predicated region
  $region2: #{fwd.35} parent=0 // pred_check
    _
  $region3: #{fwd.35} parent=0 // pred_check_branch
    %9 = sbr.rel (0) target = $region5
  $region4: #{fwd.35} parent=0 // pred_region
    _
  $region5: #{fwd.35} parent=0 // pred_fallthru
    _
  // Predicated region
  $region6: #{fwd.35} parent=0 // pred_check
    _
  $region7: #{fwd.35} parent=0 // pred_check_branch
    %11 = sbr.rel (0) target = $region9
  $region8: #{fwd.35} parent=0 // pred_region
    _
  $region9: #{fwd.35} parent=0 // pred_fallthru
    _
  // Predicated region
  $region10: #{fwd.35} parent=0 // pred_check
    _
  $region11: #{fwd.35} parent=0 // pred_check_branch
    %13 = sbr.rel (0) target = $region13
  $region12: #{fwd.35} parent=0 // pred_region
    _
  $region13: #{fwd.35} parent=0 // pred_fallthru
    _
  %v15 = vld [vmem:[%s0] sm:$0xf]
  %v16 = vld [vmem:[%s0 + $0x4] sm:$0xf]
  %v17 = vld [vmem:[%s0 + $0x8] sm:$0xf]
  %v18 = vld [vmem:[%s0 + $0xc] sm:$0xf]
  %v19 = vld [vmem:[%s1] sm:$0xf]
  %v20 = vld [vmem:[%s1 + $0x4] sm:$0xf]
  %v21 = vld [vmem:[%s1 + $0x8] sm:$0xf]
  %v22 = vld [vmem:[%s1 + $0xc] sm:$0xf]
  %v23 = vld [vmem:[%s1 + $0x10] sm:$0xf]
  %v24 = vld [vmem:[%s1 + $0x14] sm:$0xf]
  %v25 = vld [vmem:[%s1 + $0x18] sm:$0xf]
  %v26 = vld [vmem:[%s1 + $0x1c] sm:$0xf]
  %v27 = vld [vmem:[%s1 + $0x20] sm:$0xf]
  %v28 = vld [vmem:[%s1 + $0x24] sm:$0xf]
  %v29 = vld [vmem:[%s1 + $0x28] sm:$0xf]
  %v30 = vld [vmem:[%s1 + $0x2c] sm:$0xf]
  %v31 = vld [vmem:[%s1 + $0x30] sm:$0xf]
  %v32 = vld [vmem:[%s1 + $0x34] sm:$0xf]
  %v33 = vld [vmem:[%s1 + $0x38] sm:$0xf]
  %v34 = vld [vmem:[%s1 + $0x3c] sm:$0xf]
  %v35 = vld [vmem:[%s2] sm:$0x1]
  %v37 = vlaneseq
  %v38 = vshrl.u32 %v37, 7
  %v39 = vsub.s32 0, %v38
  %v40 = vrot.slane %v35, %v39
  %v46 = vunpack.c.l.b16 %v15
  %v47 = vunpack.c.l.b16 %v16
  %v48 = vunpack.c.l.b16 %v17
  %v49 = vunpack.c.l.b16 %v18
  %v50 = vpack.c.b16 %v47, %v46
  %v51 = vpack.c.b16 %v49, %v48
  %v70 = vunpack.c.l.b16 %v19
  %v71 = vunpack.c.l.b16 %v20
  %v72 = vunpack.c.l.b16 %v21
  %v73 = vunpack.c.l.b16 %v22
  %v74 = vunpack.c.l.b16 %v23
  %v75 = vunpack.c.l.b16 %v24
  %v76 = vunpack.c.l.b16 %v25
  %v77 = vunpack.c.l.b16 %v26
  %v78 = vunpack.c.l.b16 %v27
  %v79 = vunpack.c.l.b16 %v28
  %v80 = vunpack.c.l.b16 %v29
  %v81 = vunpack.c.l.b16 %v30
  %v82 = vunpack.c.l.b16 %v31
  %v83 = vunpack.c.l.b16 %v32
  %v84 = vunpack.c.l.b16 %v33
  %v85 = vunpack.c.l.b16 %v34
  %v86 = vpack.c.b16 %v71, %v70
  %v87 = vpack.c.b16 %v73, %v72
  %v88 = vpack.c.b16 %v75, %v74
  %v89 = vpack.c.b16 %v77, %v76
  %v90 = vpack.c.b16 %v79, %v78
  %v91 = vpack.c.b16 %v81, %v80
  %v92 = vpack.c.b16 %v83, %v82
  %v93 = vpack.c.b16 %v85, %v84
  %102 = vmatprep.subr.bf16.mxu0 0
  %103 = vmatpush1.bf16.msra.mxu0 %v86
  %104 = vmatprep.subr.bf16.mxu0 0
  %105 = vmatpush1.bf16.msra.mxu0 %v87
  %106 = vmatprep.subr.bf16.mxu0 0
  %107 = vmatpush1.bf16.msra.mxu0 %v88
  %108 = vmatprep.subr.bf16.mxu0 0
  %109 = vmatpush1.bf16.msra.mxu0 %v89
  %110 = vmatprep.subr.bf16.mxu0 0
  %111 = vmatpush1.bf16.msra.mxu0 %v90
  %112 = vmatprep.subr.bf16.mxu0 0
  %113 = vmatpush1.bf16.msra.mxu0 %v91
  %114 = vmatprep.subr.bf16.mxu0 0
  %115 = vmatpush1.bf16.msra.mxu0 %v92
  %116 = vmatprep.subr.bf16.mxu0 0
  %117 = vmatpush1.bf16.msra.mxu0 %v93
  %118 = vmatprep.subr.bf16.mxu0 0
  %119 = vmatpush1.bf16.msra.mxu0 0
  %120 = vmatprep.subr.bf16.mxu0 0
  %121 = vmatpush1.bf16.msra.mxu0 0
  %122 = vmatprep.subr.bf16.mxu0 0
  %123 = vmatpush1.bf16.msra.mxu0 0
  %124 = vmatprep.subr.bf16.mxu0 0
  %125 = vmatpush1.bf16.msra.mxu0 0
  %126 = vmatprep.subr.bf16.mxu0 0
  %127 = vmatpush1.bf16.msra.mxu0 0
  %128 = vmatprep.subr.bf16.mxu0 0
  %129 = vmatpush1.bf16.msra.mxu0 0
  %130 = vmatprep.subr.bf16.mxu0 0
  %131 = vmatpush1.bf16.msra.mxu0 0
  %132 = vmatprep.subr.bf16.mxu0 0
  %133 = vmatpush1.bf16.msra.mxu0 0
  %134 = vmatprep.mubr.bf16.mxu0 0
  %135 = vmatmul.mubr.bf16.gmra.mrb[0].mxu0 %v50
  %v136 = vpop.f32.mrb[0].mxu0
  %v137 = vadd.f32 %v40, %v136
  %v138 = vpop.f32.mrb[0].mxu0
  %v139 = vpop.f32.mrb[0].mxu0
  %v140 = vadd.f32 %v40, %v139
  %v141 = vpop.f32.mrb[0].mxu0
  %142 = vmatprep.mubr.bf16.mxu0 0
  %143 = vmatmul.mubr.bf16.gmra.mrb[0].mxu0 %v51
  %v144 = vpop.f32.mrb[0].mxu0
  %v145 = vadd.f32 %v40, %v144
  %v146 = vpop.f32.mrb[0].mxu0
  %v147 = vpop.f32.mrb[0].mxu0
  %v148 = vadd.f32 %v40, %v147
  %v149 = vpop.f32.mrb[0].mxu0
  %150 = vdwg.mxu0
  %151 = vst [vmem:[%s3] sm:$0xff] %v137
  %152 = vst [vmem:[%s3 + $0x8] sm:$0xff] %v140
  %153 = vst [vmem:[%s3 + $0x10] sm:$0xff] %v145
  %154 = vst [vmem:[%s3 + $0x18] sm:$0xff] %v148
  // Predicated region
  $region14: #{fwd.35} parent=0 // pred_check
    _
  $region15: #{fwd.35} parent=0 // pred_check_branch
    %156 = sbr.rel (0) target = $region17
  $region16: #{fwd.35} parent=0 // pred_region
    _
  $region17: #{fwd.35} parent=0 // pred_fallthru
    _
  // Predicated region
  $region18: #{fwd.35} parent=0 // pred_check
    _
  $region19: #{fwd.35} parent=0 // pred_check_branch
    %158 = sbr.rel (0) target = $region21
  $region20: #{fwd.35} parent=0 // pred_region
    _
  $region21: #{fwd.35} parent=0 // pred_fallthru
    _

// kernel: fwd.28
$region0: #{fwd.28}
  #allocation0 [shape = 'u32[]', space=smem, size = 0x4, offset = 0x4, fixed_abs, tag = 'smem constant byte address 0x4 - core index']
  #allocation1 [shape = 'u32[144,128]{1,0:T(1,128)}', space=vmem, size = 0x12000, scoped, tag = 'internal scratch']
  %s0 = inlined_call_operand.vmem [shape: bf16[32,1152], index: 0, kind: input, shape index: {}]
  %s1 = inlined_call_operand.vmem [shape: bf16[1152,128], index: 1, kind: input, shape index: {}]
  %s2 = inlined_call_operand.vmem [shape: f32[1,128], index: 2, kind: input, shape index: {}]
  %s3 = inlined_call_operand.vmem [shape: bf16[32,128], index: 3, kind: input, shape index: {}]
  %s4 = inlined_call_operand.vmem [shape: bf16[32,128], index: 4, kind: output, shape index: {}]
  %s5 = sld [smem:[#allocation0]]
  $region26: #{fwd.28} parent=0
    _
  %s7 = ssub.s32 1, %s5
  %s8 = scalar_select 0, %s7, %s5
  // Predicated region
  $region2: #{fwd.28} parent=0 // pred_check
    _
  $region3: #{fwd.28} parent=0 // pred_check_branch
    %10 = sbr.rel (0) target = $region5
  $region4: #{fwd.28} parent=0 // pred_region
    _
  $region5: #{fwd.28} parent=0 // pred_fallthru
    _
  // Predicated region
  $region6: #{fwd.28} parent=0 // pred_check
    _
  $region7: #{fwd.28} parent=0 // pred_check_branch
    %12 = sbr.rel (0) target = $region9
  $region8: #{fwd.28} parent=0 // pred_region
    _
  $region9: #{fwd.28} parent=0 // pred_fallthru
    _
  // Predicated region
  $region10: #{fwd.28} parent=0 // pred_check
    _
  $region11: #{fwd.28} parent=0 // pred_check_branch
    %14 = sbr.rel (0) target = $region13
  $region12: #{fwd.28} parent=0 // pred_region
    _
  $region13: #{fwd.28} parent=0 // pred_fallthru
    _
  // Predicated region
  $region14: #{fwd.28} parent=0 // pred_check
    _
  $region15: #{fwd.28} parent=0 // pred_check_branch
    %16 = sbr.rel (0) target = $region17
  $region16: #{fwd.28} parent=0 // pred_region
    _
  $region17: #{fwd.28} parent=0 // pred_fallthru
    _
  %v18 = vld [vmem:[%s0] sm:$0xff]
  %v19 = vld [vmem:[%s0 + $0x8] sm:$0xff]
  %v20 = vld [vmem:[%s0 + $0x10] sm:$0xff]
  %v21 = vld [vmem:[%s0 + $0x18] sm:$0xff]
  %v22 = vld [vmem:[%s0 + $0x20] sm:$0xf]
  %v23 = vld [vmem:[%s0 + $0x24] sm:$0xff]
  %v24 = vld [vmem:[%s0 + $0x2c] sm:$0xff]
  %v25 = vld [vmem:[%s0 + $0x34] sm:$0xff]
  %v26 = vld [vmem:[%s0 + $0x3c] sm:$0xff]
  %v27 = vld [vmem:[%s0 + $0x44] sm:$0xf]
  %v28 = vld [vmem:[%s0 + $0x48] sm:$0xff]
  %v29 = vld [vmem:[%s0 + $0x50] sm:$0xff]
  %v30 = vld [vmem:[%s0 + $0x58] sm:$0xff]
  %v31 = vld [vmem:[%s0 + $0x60] sm:$0xff]
  %v32 = vld [vmem:[%s0 + $0x68] sm:$0xf]
  %v33 = vld [vmem:[%s0 + $0x6c] sm:$0xff]
  %v34 = vld [vmem:[%s0 + $0x74] sm:$0xff]
  %v35 = vld [vmem:[%s0 + $0x7c] sm:$0xff]
  %v36 = vld [vmem:[%s0 + $0x84] sm:$0xff]
  %v37 = vld [vmem:[%s0 + $0x8c] sm:$0xf]
  %v38 = vld [vmem:[%s1] sm:$0xf]
  %v39 = vld [vmem:[%s1 + $0x4] sm:$0xf]
  %v40 = vld [vmem:[%s1 + $0x8] sm:$0xf]
  %v41 = vld [vmem:[%s1 + $0xc] sm:$0xf]
  %v42 = vld [vmem:[%s1 + $0x10] sm:$0xf]
  %v43 = vld [vmem:[%s1 + $0x14] sm:$0xf]
  %v44 = vld [vmem:[%s1 + $0x18] sm:$0xf]
  %v45 = vld [vmem:[%s1 + $0x1c] sm:$0xf]
  %v46 = vld [vmem:[%s1 + $0x20] sm:$0xf]
  %v47 = vld [vmem:[%s1 + $0x24] sm:$0xf]
  %v48 = vld [vmem:[%s1 + $0x28] sm:$0xf]
  %v49 = vld [vmem:[%s1 + $0x2c] sm:$0xf]
  %v50 = vld [vmem:[%s1 + $0x30] sm:$0xf]
  %v51 = vld [vmem:[%s1 + $0x34] sm:$0xf]
  %v52 = vld [vmem:[%s1 + $0x38] sm:$0xf]
  %v53 = vld [vmem:[%s1 + $0x3c] sm:$0xf]
  %v54 = vld [vmem:[%s1 + $0x40] sm:$0xf]
  %v55 = vld [vmem:[%s1 + $0x44] sm:$0xf]
  %v56 = vld [vmem:[%s1 + $0x48] sm:$0xf]
  %v57 = vld [vmem:[%s1 + $0x4c] sm:$0xf]
  %v58 = vld [vmem:[%s1 + $0x50] sm:$0xf]
  %v59 = vld [vmem:[%s1 + $0x54] sm:$0xf]
  %v60 = vld [vmem:[%s1 + $0x58] sm:$0xf]
  %v61 = vld [vmem:[%s1 + $0x5c] sm:$0xf]
  %v62 = vld [vmem:[%s1 + $0x60] sm:$0xf]
  %v63 = vld [vmem:[%s1 + $0x64] sm:$0xf]
  %v64 = vld [vmem:[%s1 + $0x68] sm:$0xf]
  %v65 = vld [vmem:[%s1 + $0x6c] sm:$0xf]
  %v66 = vld [vmem:[%s1 + $0x70] sm:$0xf]
  %v67 = vld [vmem:[%s1 + $0x74] sm:$0xf]
  %v68 = vld [vmem:[%s1 + $0x78] sm:$0xf]
  %v69 = vld [vmem:[%s1 + $0x7c] sm:$0xf]
  %v70 = vld [vmem:[%s1 + $0x80] sm:$0xf]
  %v71 = vld [vmem:[%s1 + $0x84] sm:$0xf]
  %v72 = vld [vmem:[%s1 + $0x88] sm:$0xf]
  %v73 = vld [vmem:[%s1 + $0x8c] sm:$0xf]
  %v74 = vld [vmem:[%s1 + $0x90] sm:$0xf]
  %v75 = vld [vmem:[%s1 + $0x94] sm:$0xf]
  %v76 = vld [vmem:[%s1 + $0x98] sm:$0xf]
  %v77 = vld [vmem:[%s1 + $0x9c] sm:$0xf]
  %v78 = vld [vmem:[%s1 + $0xa0] sm:$0xf]
  %v79 = vld [vmem:[%s1 + $0xa4] sm:$0xf]
  %v80 = vld [vmem:[%s1 + $0xa8] sm:$0xf]
  %v81 = vld [vmem:[%s1 + $0xac] sm:$0xf]
  %v82 = vld [vmem:[%s1 + $0xb0] sm:$0xf]
  %v83 = vld [vmem:[%s1 + $0xb4] sm:$0xf]
  %v84 = vld [vmem:[%s1 + $0xb8] sm:$0xf]
  %v85 = vld [vmem:[%s1 + $0xbc] sm:$0xf]
  %v86 = vld [vmem:[%s1 + $0xc0] sm:$0xf]
  %v87 = vld [vmem:[%s1 + $0xc4] sm:$0xf]
  %v88 = vld [vmem:[%s1 + $0xc8] sm:$0xf]
  %v89 = vld [vmem:[%s1 + $0xcc] sm:$0xf]
  %v90 = vld [vmem:[%s1 + $0xd0] sm:$0xf]
  %v91 = vld [vmem:[%s1 + $0xd4] sm:$0xf]
  %v92 = vld [vmem:[%s1 + $0xd8] sm:$0xf]
  %v93 = vld [vmem:[%s1 + $0xdc] sm:$0xf]
  %v94 = vld [vmem:[%s1 + $0xe0] sm:$0xf]
  %v95 = vld [vmem:[%s1 + $0xe4] sm:$0xf]
  %v96 = vld [vmem:[%s1 + $0xe8] sm:$0xf]
  %v97 = vld [vmem:[%s1 + $0xec] sm:$0xf]
  %v98 = vld [vmem:[%s1 + $0xf0] sm:$0xf]
  %v99 = vld [vmem:[%s1 + $0xf4] sm:$0xf]
  %v100 = vld [vmem:[%s1 + $0xf8] sm:$0xf]
  %v101 = vld [vmem:[%s1 + $0xfc] sm:$0xf]
  %v102 = vld [vmem:[%s1 + $0x100] sm:$0xf]
  %v103 = vld [vmem:[%s1 + $0x104] sm:$0xf]
  %v104 = vld [vmem:[%s1 + $0x108] sm:$0xf]
  %v105 = vld [vmem:[%s1 + $0x10c] sm:$0xf]
  %v106 = vld [vmem:[%s1 + $0x110] sm:$0xf]
  %v107 = vld [vmem:[%s1 + $0x114] sm:$0xf]
  %v108 = vld [vmem:[%s1 + $0x118] sm:$0xf]
  %v109 = vld [vmem:[%s1 + $0x11c] sm:$0xf]
  %v110 = vld [vmem:[%s1 + $0x120] sm:$0xf]
  %v111 = vld [vmem:[%s1 + $0x124] sm:$0xf]
  %v112 = vld [vmem:[%s1 + $0x128] sm:$0xf]
  %v113 = vld [vmem:[%s1 + $0x12c] sm:$0xf]
  %v114 = vld [vmem:[%s1 + $0x130] sm:$0xf]
  %v115 = vld [vmem:[%s1 + $0x134] sm:$0xf]
  %v116 = vld [vmem:[%s1 + $0x138] sm:$0xf]
  %v117 = vld [vmem:[%s1 + $0x13c] sm:$0xf]
  %v118 = vld [vmem:[%s1 + $0x140] sm:$0xf]
  %v119 = vld [vmem:[%s1 + $0x144] sm:$0xf]
  %v120 = vld [vmem:[%s1 + $0x148] sm:$0xf]
  %v121 = vld [vmem:[%s1 + $0x14c] sm:$0xf]
  %v122 = vld [vmem:[%s1 + $0x150] sm:$0xf]
  %v123 = vld [vmem:[%s1 + $0x154] sm:$0xf]
  %v124 = vld [vmem:[%s1 + $0x158] sm:$0xf]
  %v125 = vld [vmem:[%s1 + $0x15c] sm:$0xf]
  %v126 = vld [vmem:[%s1 + $0x160] sm:$0xf]
  %v127 = vld [vmem:[%s1 + $0x164] sm:$0xf]
  %v128 = vld [vmem:[%s1 + $0x168] sm:$0xf]
  %v129 = vld [vmem:[%s1 + $0x16c] sm:$0xf]
  %v130 = vld [vmem:[%s1 + $0x170] sm:$0xf]
  %v131 = vld [vmem:[%s1 + $0x174] sm:$0xf]
  %v132 = vld [vmem:[%s1 + $0x178] sm:$0xf]
  %v133 = vld [vmem:[%s1 + $0x17c] sm:$0xf]
  %v134 = vld [vmem:[%s1 + $0x180] sm:$0xf]
  %v135 = vld [vmem:[%s1 + $0x184] sm:$0xf]
  %v136 = vld [vmem:[%s1 + $0x188] sm:$0xf]
  %v137 = vld [vmem:[%s1 + $0x18c] sm:$0xf]
  %v138 = vld [vmem:[%s1 + $0x190] sm:$0xf]
  %v139 = vld [vmem:[%s1 + $0x194] sm:$0xf]
  %v140 = vld [vmem:[%s1 + $0x198] sm:$0xf]
  %v141 = vld [vmem:[%s1 + $0x19c] sm:$0xf]
  %v142 = vld [vmem:[%s1 + $0x1a0] sm:$0xf]
  %v143 = vld [vmem:[%s1 + $0x1a4] sm:$0xf]
  %v144 = vld [vmem:[%s1 + $0x1a8] sm:$0xf]
  %v145 = vld [vmem:[%s1 + $0x1ac] sm:$0xf]
  %v146 = vld [vmem:[%s1 + $0x1b0] sm:$0xf]
  %v147 = vld [vmem:[%s1 + $0x1b4] sm:$0xf]
  %v148 = vld [vmem:[%s1 + $0x1b8] sm:$0xf]
  %v149 = vld [vmem:[%s1 + $0x1bc] sm:$0xf]
  %v150 = vld [vmem:[%s1 + $0x1c0] sm:$0xf]
  %v151 = vld [vmem:[%s1 + $0x1c4] sm:$0xf]
  %v152 = vld [vmem:[%s1 + $0x1c8] sm:$0xf]
  %v153 = vld [vmem:[%s1 + $0x1cc] sm:$0xf]
  %v154 = vld [vmem:[%s1 + $0x1d0] sm:$0xf]
  %v155 = vld [vmem:[%s1 + $0x1d4] sm:$0xf]
  %v156 = vld [vmem:[%s1 + $0x1d8] sm:$0xf]
  %v157 = vld [vmem:[%s1 + $0x1dc] sm:$0xf]
  %v158 = vld [vmem:[%s1 + $0x1e0] sm:$0xf]
  %v159 = vld [vmem:[%s1 + $0x1e4] sm:$0xf]
  %v160 = vld [vmem:[%s1 + $0x1e8] sm:$0xf]
  %v161 = vld [vmem:[%s1 + $0x1ec] sm:$0xf]
  %v162 = vld [vmem:[%s1 + $0x1f0] sm:$0xf]
  %v163 = vld [vmem:[%s1 + $0x1f4] sm:$0xf]
  %v164 = vld [vmem:[%s1 + $0x1f8] sm:$0xf]
  %v165 = vld [vmem:[%s1 + $0x1fc] sm:$0xf]
  %v166 = vld [vmem:[%s1 + $0x200] sm:$0xf]
  %v167 = vld [vmem:[%s1 + $0x204] sm:$0xf]
  %v168 = vld [vmem:[%s1 + $0x208] sm:$0xf]
  %v169 = vld [vmem:[%s1 + $0x20c] sm:$0xf]
  %v170 = vld [vmem:[%s1 + $0x210] sm:$0xf]
  %v171 = vld [vmem:[%s1 + $0x214] sm:$0xf]
  %v172 = vld [vmem:[%s1 + $0x218] sm:$0xf]
  %v173 = vld [vmem:[%s1 + $0x21c] sm:$0xf]
  %v174 = vld [vmem:[%s1 + $0x220] sm:$0xf]
  %v175 = vld [vmem:[%s1 + $0x224] sm:$0xf]
  %v176 = vld [vmem:[%s1 + $0x228] sm:$0xf]
  %v177 = vld [vmem:[%s1 + $0x22c] sm:$0xf]
  %v178 = vld [vmem:[%s1 + $0x230] sm:$0xf]
  %v179 = vld [vmem:[%s1 + $0x234] sm:$0xf]
  %v180 = vld [vmem:[%s1 + $0x238] sm:$0xf]
  %v181 = vld [vmem:[%s1 + $0x23c] sm:$0xf]
  %v182 = vld [vmem:[%s2] sm:$0x1]
  %v184 = vlaneseq
  %v185 = vshrl.u32 %v184, 7
  %v186 = vsub.s32 0, %v185
  %v187 = vrot.slane %v182, %v186
  %v209 = vunpack.c.l.b16 %v18
  %v210 = vunpack.c.h.b16 %v18
  %v211 = vunpack.c.l.b16 %v19
  %v212 = vunpack.c.h.b16 %v19
  %v213 = vunpack.c.l.b16 %v20
  %v214 = vunpack.c.h.b16 %v20
  %v215 = vunpack.c.l.b16 %v21
  %v216 = vunpack.c.h.b16 %v21
  %v217 = vunpack.c.l.b16 %v22
  %v218 = vunpack.c.l.b16 %v23
  %v219 = vunpack.c.h.b16 %v23
  %v220 = vunpack.c.l.b16 %v24
  %v221 = vunpack.c.h.b16 %v24
  %v222 = vunpack.c.l.b16 %v25
  %v223 = vunpack.c.h.b16 %v25
  %v224 = vunpack.c.l.b16 %v26
  %v225 = vunpack.c.h.b16 %v26
  %v226 = vunpack.c.l.b16 %v27
  %v227 = vunpack.c.l.b16 %v28
  %v228 = vunpack.c.h.b16 %v28
  %v229 = vunpack.c.l.b16 %v29
  %v230 = vunpack.c.h.b16 %v29
  %v231 = vunpack.c.l.b16 %v30
  %v232 = vunpack.c.h.b16 %v30
  %v233 = vunpack.c.l.b16 %v31
  %v234 = vunpack.c.h.b16 %v31
  %v235 = vunpack.c.l.b16 %v32
  %v236 = vunpack.c.l.b16 %v33
  %v237 = vunpack.c.h.b16 %v33
  %v238 = vunpack.c.l.b16 %v34
  %v239 = vunpack.c.h.b16 %v34
  %v240 = vunpack.c.l.b16 %v35
  %v241 = vunpack.c.h.b16 %v35
  %v242 = vunpack.c.l.b16 %v36
  %v243 = vunpack.c.h.b16 %v36
  %v244 = vunpack.c.l.b16 %v37
  %v245 = vpack.c.b16 %v218, %v209
  %v246 = vpack.c.b16 %v219, %v210
  %v247 = vpack.c.b16 %v220, %v211
  %v248 = vpack.c.b16 %v221, %v212
  %v249 = vpack.c.b16 %v222, %v213
  %v250 = vpack.c.b16 %v223, %v214
  %v251 = vpack.c.b16 %v224, %v215
  %v252 = vpack.c.b16 %v225, %v216
  %v253 = vpack.c.b16 %v226, %v217
  %v254 = vpack.c.b16 %v236, %v227
  %v255 = vpack.c.b16 %v237, %v228
  %v256 = vpack.c.b16 %v238, %v229
  %v257 = vpack.c.b16 %v239, %v230
  %v258 = vpack.c.b16 %v240, %v231
  %v259 = vpack.c.b16 %v241, %v232
  %v260 = vpack.c.b16 %v242, %v233
  %v261 = vpack.c.b16 %v243, %v234
  %v262 = vpack.c.b16 %v244, %v235
  %v425 = vunpack.c.l.b16 %v38
  %v426 = vunpack.c.l.b16 %v39
  %v427 = vunpack.c.l.b16 %v40
  %v428 = vunpack.c.l.b16 %v41
  %v429 = vunpack.c.l.b16 %v42
  %v430 = vunpack.c.l.b16 %v43
  %v431 = vunpack.c.l.b16 %v44
  %v432 = vunpack.c.l.b16 %v45
  %v433 = vunpack.c.l.b16 %v46
  %v434 = vunpack.c.l.b16 %v47
  %v435 = vunpack.c.l.b16 %v48
  %v436 = vunpack.c.l.b16 %v49
  %v437 = vunpack.c.l.b16 %v50
  %v438 = vunpack.c.l.b16 %v51
  %v439 = vunpack.c.l.b16 %v52
  %v440 = vunpack.c.l.b16 %v53
  %v441 = vunpack.c.l.b16 %v54
  %v442 = vunpack.c.l.b16 %v55
  %v443 = vunpack.c.l.b16 %v56
  %v444 = vunpack.c.l.b16 %v57
  %v445 = vunpack.c.l.b16 %v58
  %v446 = vunpack.c.l.b16 %v59
  %v447 = vunpack.c.l.b16 %v60
  %v448 = vunpack.c.l.b16 %v61
  %v449 = vunpack.c.l.b16 %v62
  %v450 = vunpack.c.l.b16 %v63
  %v451 = vunpack.c.l.b16 %v64
  %v452 = vunpack.c.l.b16 %v65
  %v453 = vunpack.c.l.b16 %v66
  %v454 = vunpack.c.l.b16 %v67
  %v455 = vunpack.c.l.b16 %v68
  %v456 = vunpack.c.l.b16 %v69
  %v457 = vunpack.c.l.b16 %v70
  %v458 = vunpack.c.l.b16 %v71
  %v459 = vunpack.c.l.b16 %v72
  %v460 = vunpack.c.l.b16 %v73
  %v461 = vunpack.c.l.b16 %v74
  %v462 = vunpack.c.l.b16 %v75
  %v463 = vunpack.c.l.b16 %v76
  %v464 = vunpack.c.l.b16 %v77
  %v465 = vunpack.c.l.b16 %v78
  %v466 = vunpack.c.l.b16 %v79
  %v467 = vunpack.c.l.b16 %v80
  %v468 = vunpack.c.l.b16 %v81
  %v469 = vunpack.c.l.b16 %v82
  %v470 = vunpack.c.l.b16 %v83
  %v471 = vunpack.c.l.b16 %v84
  %v472 = vunpack.c.l.b16 %v85
  %v473 = vunpack.c.l.b16 %v86
  %v474 = vunpack.c.l.b16 %v87
  %v475 = vunpack.c.l.b16 %v88
  %v476 = vunpack.c.l.b16 %v89
  %v477 = vunpack.c.l.b16 %v90
  %v478 = vunpack.c.l.b16 %v91
  %v479 = vunpack.c.l.b16 %v92
  %v480 = vunpack.c.l.b16 %v93
  %v481 = vunpack.c.l.b16 %v94
  %v482 = vunpack.c.l.b16 %v95
  %v483 = vunpack.c.l.b16 %v96
  %v484 = vunpack.c.l.b16 %v97
  %v485 = vunpack.c.l.b16 %v98
  %v486 = vunpack.c.l.b16 %v99
  %v487 = vunpack.c.l.b16 %v100
  %v488 = vunpack.c.l.b16 %v101
  %v489 = vunpack.c.l.b16 %v102
  %v490 = vunpack.c.l.b16 %v103
  %v491 = vunpack.c.l.b16 %v104
  %v492 = vunpack.c.l.b16 %v105
  %v493 = vunpack.c.l.b16 %v106
  %v494 = vunpack.c.l.b16 %v107
  %v495 = vunpack.c.l.b16 %v108
  %v496 = vunpack.c.l.b16 %v109
  %v497 = vunpack.c.l.b16 %v110
  %v498 = vunpack.c.l.b16 %v111
  %v499 = vunpack.c.l.b16 %v112
  %v500 = vunpack.c.l.b16 %v113
  %v501 = vunpack.c.l.b16 %v114
  %v502 = vunpack.c.l.b16 %v115
  %v503 = vunpack.c.l.b16 %v116
  %v504 = vunpack.c.l.b16 %v117
  %v505 = vunpack.c.l.b16 %v118
  %v506 = vunpack.c.l.b16 %v119
  %v507 = vunpack.c.l.b16 %v120
  %v508 = vunpack.c.l.b16 %v121
  %v509 = vunpack.c.l.b16 %v122
  %v510 = vunpack.c.l.b16 %v123
  %v511 = vunpack.c.l.b16 %v124
  %v512 = vunpack.c.l.b16 %v125
  %v513 = vunpack.c.l.b16 %v126
  %v514 = vunpack.c.l.b16 %v127
  %v515 = vunpack.c.l.b16 %v128
  %v516 = vunpack.c.l.b16 %v129
  %v517 = vunpack.c.l.b16 %v130
  %v518 = vunpack.c.l.b16 %v131
  %v519 = vunpack.c.l.b16 %v132
  %v520 = vunpack.c.l.b16 %v133
  %v521 = vunpack.c.l.b16 %v134
  %v522 = vunpack.c.l.b16 %v135
  %v523 = vunpack.c.l.b16 %v136
  %v524 = vunpack.c.l.b16 %v137
  %v525 = vunpack.c.l.b16 %v138
  %v526 = vunpack.c.l.b16 %v139
  %v527 = vunpack.c.l.b16 %v140
  %v528 = vunpack.c.l.b16 %v141
  %v529 = vunpack.c.l.b16 %v142
  %v530 = vunpack.c.l.b16 %v143
  %v531 = vunpack.c.l.b16 %v144
  %v532 = vunpack.c.l.b16 %v145
  %v533 = vunpack.c.l.b16 %v146
  %v534 = vunpack.c.l.b16 %v147
  %v535 = vunpack.c.l.b16 %v148
  %v536 = vunpack.c.l.b16 %v149
  %v537 = vunpack.c.l.b16 %v150
  %v538 = vunpack.c.l.b16 %v151
  %v539 = vunpack.c.l.b16 %v152
  %v540 = vunpack.c.l.b16 %v153
  %v541 = vunpack.c.l.b16 %v154
  %v542 = vunpack.c.l.b16 %v155
  %v543 = vunpack.c.l.b16 %v156
  %v544 = vunpack.c.l.b16 %v157
  %v545 = vunpack.c.l.b16 %v158
  %v546 = vunpack.c.l.b16 %v159
  %v547 = vunpack.c.l.b16 %v160
  %v548 = vunpack.c.l.b16 %v161
  %v549 = vunpack.c.l.b16 %v162
  %v550 = vunpack.c.l.b16 %v163
  %v551 = vunpack.c.l.b16 %v164
  %v552 = vunpack.c.l.b16 %v165
  %v553 = vunpack.c.l.b16 %v166
  %v554 = vunpack.c.l.b16 %v167
  %v555 = vunpack.c.l.b16 %v168
  %v556 = vunpack.c.l.b16 %v169
  %v557 = vunpack.c.l.b16 %v170
  %v558 = vunpack.c.l.b16 %v171
  %v559 = vunpack.c.l.b16 %v172
  %v560 = vunpack.c.l.b16 %v173
  %v561 = vunpack.c.l.b16 %v174
  %v562 = vunpack.c.l.b16 %v175
  %v563 = vunpack.c.l.b16 %v176
  %v564 = vunpack.c.l.b16 %v177
  %v565 = vunpack.c.l.b16 %v178
  %v566 = vunpack.c.l.b16 %v179
  %v567 = vunpack.c.l.b16 %v180
  %v568 = vunpack.c.l.b16 %v181
  %v569 = vpack.c.b16 %v426, %v425
  %v570 = vpack.c.b16 %v428, %v427
  %v571 = vpack.c.b16 %v430, %v429
  %v572 = vpack.c.b16 %v432, %v431
  %v573 = vpack.c.b16 %v434, %v433
  %v574 = vpack.c.b16 %v436, %v435
  %v575 = vpack.c.b16 %v438, %v437
  %v576 = vpack.c.b16 %v440, %v439
  %v577 = vpack.c.b16 %v442, %v441
  %v578 = vpack.c.b16 %v444, %v443
  %v579 = vpack.c.b16 %v446, %v445
  %v580 = vpack.c.b16 %v448, %v447
  %v581 = vpack.c.b16 %v450, %v449
  %v582 = vpack.c.b16 %v452, %v451
  %v583 = vpack.c.b16 %v454, %v453
  %v584 = vpack.c.b16 %v456, %v455
  %v585 = vpack.c.b16 %v458, %v457
  %v586 = vpack.c.b16 %v460, %v459
  %v587 = vpack.c.b16 %v462, %v461
  %v588 = vpack.c.b16 %v464, %v463
  %v589 = vpack.c.b16 %v466, %v465
  %v590 = vpack.c.b16 %v468, %v467
  %v591 = vpack.c.b16 %v470, %v469
  %v592 = vpack.c.b16 %v472, %v471
  %v593 = vpack.c.b16 %v474, %v473
  %v594 = vpack.c.b16 %v476, %v475
  %v595 = vpack.c.b16 %v478, %v477
  %v596 = vpack.c.b16 %v480, %v479
  %v597 = vpack.c.b16 %v482, %v481
  %v598 = vpack.c.b16 %v484, %v483
  %v599 = vpack.c.b16 %v486, %v485
  %v600 = vpack.c.b16 %v488, %v487
  %v601 = vpack.c.b16 %v490, %v489
  %v602 = vpack.c.b16 %v492, %v491
  %v603 = vpack.c.b16 %v494, %v493
  %v604 = vpack.c.b16 %v496, %v495
  %v605 = vpack.c.b16 %v498, %v497
  %v606 = vpack.c.b16 %v500, %v499
  %v607 = vpack.c.b16 %v502, %v501
  %v608 = vpack.c.b16 %v504, %v503
  %v609 = vpack.c.b16 %v506, %v505
  %v610 = vpack.c.b16 %v508, %v507
  %v611 = vpack.c.b16 %v510, %v509
  %v612 = vpack.c.b16 %v512, %v511
  %v613 = vpack.c.b16 %v514, %v513
  %v614 = vpack.c.b16 %v516, %v515
  %v615 = vpack.c.b16 %v518, %v517
  %v616 = vpack.c.b16 %v520, %v519
  %v617 = vpack.c.b16 %v522, %v521
  %v618 = vpack.c.b16 %v524, %v523
  %v619 = vpack.c.b16 %v526, %v525
  %v620 = vpack.c.b16 %v528, %v527
  %v621 = vpack.c.b16 %v530, %v529
  %v622 = vpack.c.b16 %v532, %v531
  %v623 = vpack.c.b16 %v534, %v533
  %v624 = vpack.c.b16 %v536, %v535
  %v625 = vpack.c.b16 %v538, %v537
  %v626 = vpack.c.b16 %v540, %v539
  %v627 = vpack.c.b16 %v542, %v541
  %v628 = vpack.c.b16 %v544, %v543
  %v629 = vpack.c.b16 %v546, %v545
  %v630 = vpack.c.b16 %v548, %v547
  %v631 = vpack.c.b16 %v550, %v549
  %v632 = vpack.c.b16 %v552, %v551
  %v633 = vpack.c.b16 %v554, %v553
  %v634 = vpack.c.b16 %v556, %v555
  %v635 = vpack.c.b16 %v558, %v557
  %v636 = vpack.c.b16 %v560, %v559
  %v637 = vpack.c.b16 %v562, %v561
  %v638 = vpack.c.b16 %v564, %v563
  %v639 = vpack.c.b16 %v566, %v565
  %v640 = vpack.c.b16 %v568, %v567
  %713 = vmatprep.subr.bf16.mxu0 0
  %714 = vmatpush1.bf16.msra.mxu0 %v569
  %715 = vmatprep.subr.bf16.mxu0 0
  %716 = vmatpush1.bf16.msra.mxu0 %v570
  %717 = vmatprep.subr.bf16.mxu0 0
  %718 = vmatpush1.bf16.msra.mxu0 %v571
  %719 = vmatprep.subr.bf16.mxu0 0
  %720 = vmatpush1.bf16.msra.mxu0 %v572
  %721 = vmatprep.subr.bf16.mxu0 0
  %722 = vmatpush1.bf16.msra.mxu0 %v573
  %723 = vmatprep.subr.bf16.mxu0 0
  %724 = vmatpush1.bf16.msra.mxu0 %v574
  %725 = vmatprep.subr.bf16.mxu0 0
  %726 = vmatpush1.bf16.msra.mxu0 %v575
  %727 = vmatprep.subr.bf16.mxu0 0
  %728 = vmatpush1.bf16.msra.mxu0 %v576
  %729 = vmatprep.subr.bf16.mxu0 0
  %730 = vmatpush1.bf16.msra.mxu0 %v577
  %731 = vmatprep.subr.bf16.mxu0 0
  %732 = vmatpush1.bf16.msra.mxu0 %v578
  %733 = vmatprep.subr.bf16.mxu0 0
  %734 = vmatpush1.bf16.msra.mxu0 %v579
  %735 = vmatprep.subr.bf16.mxu0 0
  %736 = vmatpush1.bf16.msra.mxu0 %v580
  %737 = vmatprep.subr.bf16.mxu0 0
  %738 = vmatpush1.bf16.msra.mxu0 %v581
  %739 = vmatprep.subr.bf16.mxu0 0
  %740 = vmatpush1.bf16.msra.mxu0 %v582
  %741 = vmatprep.subr.bf16.mxu0 0
  %742 = vmatpush1.bf16.msra.mxu0 %v583
  %743 = vmatprep.subr.bf16.mxu0 0
  %744 = vmatpush1.bf16.msra.mxu0 %v584
  %745 = vmatprep.mubr.bf16.mxu0 %v246
  %746 = vmatmul.mubr.bf16.gmra.mrb[0].mxu0 %v245
  %v747 = vpop.f32.mrb[0].mxu0
  %v748 = vadd.f32 %v187, %v747
  %v749 = vpop.f32.mrb[0].mxu0
  %v750 = vpop.f32.mrb[0].mxu0
  %v751 = vadd.f32 %v187, %v750
  %v752 = vpop.f32.mrb[0].mxu0
  %753 = vmatprep.mubr.bf16.mxu0 %v255
  %754 = vmatmul.mubr.bf16.gmra.mrb[0].mxu0 %v254
  %v755 = vpop.f32.mrb[0].mxu0
  %v756 = vadd.f32 %v187, %v755
  %v757 = vpop.f32.mrb[0].mxu0
  %v758 = vpop.f32.mrb[0].mxu0
  %v759 = vadd.f32 %v187, %v758
  %v760 = vpop.f32.mrb[0].mxu0
  %761 = vdwg.mxu0
  %762 = vmatprep.subr.bf16.mxu0 0
  %763 = vmatpush1.bf16.msra.mxu0 %v585
  %764 = vmatprep.subr.bf16.mxu0 0
  %765 = vmatpush1.bf16.msra.mxu0 %v586
  %766 = vmatprep.subr.bf16.mxu0 0
  %767 = vmatpush1.bf16.msra.mxu0 %v587
  %768 = vmatprep.subr.bf16.mxu0 0
  %769 = vmatpush1.bf16.msra.mxu0 %v588
  %770 = vmatprep.subr.bf16.mxu0 0
  %771 = vmatpush1.bf16.msra.mxu0 %v589
  %772 = vmatprep.subr.bf16.mxu0 0
  %773 = vmatpush1.bf16.msra.mxu0 %v590
  %774 = vmatprep.subr.bf16.mxu0 0
  %775 = vmatpush1.bf16.msra.mxu0 %v591
  %776 = vmatprep.subr.bf16.mxu0 0
  %777 = vmatpush1.bf16.msra.mxu0 %v592
  %778 = vmatprep.subr.bf16.mxu0 0
  %779 = vmatpush1.bf16.msra.mxu0 %v593
  %780 = vmatprep.subr.bf16.mxu0 0
  %781 = vmatpush1.bf16.msra.mxu0 %v594
  %782 = vmatprep.subr.bf16.mxu0 0
  %783 = vmatpush1.bf16.msra.mxu0 %v595
  %784 = vmatprep.subr.bf16.mxu0 0
  %785 = vmatpush1.bf16.msra.mxu0 %v596
  %786 = vmatprep.subr.bf16.mxu0 0
  %787 = vmatpush1.bf16.msra.mxu0 %v597
  %788 = vmatprep.subr.bf16.mxu0 0
  %789 = vmatpush1.bf16.msra.mxu0 %v598
  %790 = vmatprep.subr.bf16.mxu0 0
  %791 = vmatpush1.bf16.msra.mxu0 %v599
  %792 = vmatprep.subr.bf16.mxu0 0
  %793 = vmatpush1.bf16.msra.mxu0 %v600
  %794 = vmatprep.mubr.bf16.mxu0 %v248
  %795 = vmatmul.mubr.bf16.gmra.mrb[0].mxu0 %v247
  %v796 = vpop.f32.mrb[0].mxu0
  %v797 = vadd.f32 %v748, %v796
  %v798 = vpop.f32.mrb[0].mxu0
  %v799 = vpop.f32.mrb[0].mxu0
  %v800 = vadd.f32 %v751, %v799
  %v801 = vpop.f32.mrb[0].mxu0
  %802 = vmatprep.mubr.bf16.mxu0 %v257
  %803 = vmatmul.mubr.bf16.gmra.mrb[0].mxu0 %v256
  %v804 = vpop.f32.mrb[0].mxu0
  %v805 = vadd.f32 %v756, %v804
  %v806 = vpop.f32.mrb[0].mxu0
  %v807 = vpop.f32.mrb[0].mxu0
  %v808 = vadd.f32 %v759, %v807
  %v809 = vpop.f32.mrb[0].mxu0
  %810 = vdwg.mxu0
  %811 = vmatprep.subr.bf16.mxu0 0
  %812 = vmatpush1.bf16.msra.mxu0 %v601
  %813 = vmatprep.subr.bf16.mxu0 0
  %814 = vmatpush1.bf16.msra.mxu0 %v602
  %815 = vmatprep.subr.bf16.mxu0 0
  %816 = vmatpush1.bf16.msra.mxu0 %v603
  %817 = vmatprep.subr.bf16.mxu0 0
  %818 = vmatpush1.bf16.msra.mxu0 %v604
  %819 = vmatprep.subr.bf16.mxu0 0
  %820 = vmatpush1.bf16.msra.mxu0 %v605
  %821 = vmatprep.subr.bf16.mxu0 0
  %822 = vmatpush1.bf16.msra.mxu0 %v606
  %823 = vmatprep.subr.bf16.mxu0 0
  %824 = vmatpush1.bf16.msra.mxu0 %v607
  %825 = vmatprep.subr.bf16.mxu0 0
  %826 = vmatpush1.bf16.msra.mxu0 %v608
  %827 = vmatprep.subr.bf16.mxu0 0
  %828 = vmatpush1.bf16.msra.mxu0 %v609
  %829 = vmatprep.subr.bf16.mxu0 0
  %830 = vmatpush1.bf16.msra.mxu0 %v610
  %831 = vmatprep.subr.bf16.mxu0 0
  %832 = vmatpush1.bf16.msra.mxu0 %v611
  %833 = vmatprep.subr.bf16.mxu0 0
  %834 = vmatpush1.bf16.msra.mxu0 %v612
  %835 = vmatprep.subr.bf16.mxu0 0
  %836 = vmatpush1.bf16.msra.mxu0 %v613
  %837 = vmatprep.subr.bf16.mxu0 0
  %838 = vmatpush1.bf16.msra.mxu0 %v614
  %839 = vmatprep.subr.bf16.mxu0 0
  %840 = vmatpush1.bf16.msra.mxu0 %v615
  %841 = vmatprep.subr.bf16.mxu0 0
  %842 = vmatpush1.bf16.msra.mxu0 %v616
  %843 = vmatprep.mubr.bf16.mxu0 %v250
  %844 = vmatmul.mubr.bf16.gmra.mrb[0].mxu0 %v249
  %v845 = vpop.f32.mrb[0].mxu0
  %v846 = vadd.f32 %v797, %v845
  %v847 = vpop.f32.mrb[0].mxu0
  %v848 = vpop.f32.mrb[0].mxu0
  %v849 = vadd.f32 %v800, %v848
  %v850 = vpop.f32.mrb[0].mxu0
  %851 = vmatprep.mubr.bf16.mxu0 %v259
  %852 = vmatmul.mubr.bf16.gmra.mrb[0].mxu0 %v258
  %v853 = vpop.f32.mrb[0].mxu0
  %v854 = vadd.f32 %v805, %v853
  %v855 = vpop.f32.mrb[0].mxu0
  %v856 = vpop.f32.mrb[0].mxu0
  %v857 = vadd.f32 %v808, %v856
  %v858 = vpop.f32.mrb[0].mxu0
  %859 = vdwg.mxu0
  %860 = vmatprep.subr.bf16.mxu0 0
  %861 = vmatpush1.bf16.msra.mxu0 %v617
  %862 = vmatprep.subr.bf16.mxu0 0
  %863 = vmatpush1.bf16.msra.mxu0 %v618
  %864 = vmatprep.subr.bf16.mxu0 0
  %865 = vmatpush1.bf16.msra.mxu0 %v619
  %866 = vmatprep.subr.bf16.mxu0 0
  %867 = vmatpush1.bf16.msra.mxu0 %v620
  %868 = vmatprep.subr.bf16.mxu0 0
  %869 = vmatpush1.bf16.msra.mxu0 %v621
  %870 = vmatprep.subr.bf16.mxu0 0
  %871 = vmatpush1.bf16.msra.mxu0 %v622
  %872 = vmatprep.subr.bf16.mxu0 0
  %873 = vmatpush1.bf16.msra.mxu0 %v623
  %874 = vmatprep.subr.bf16.mxu0 0
  %875 = vmatpush1.bf16.msra.mxu0 %v624
  %876 = vmatprep.subr.bf16.mxu0 0
  %877 = vmatpush1.bf16.msra.mxu0 %v625
  %878 = vmatprep.subr.bf16.mxu0 0
  %879 = vmatpush1.bf16.msra.mxu0 %v626
  %880 = vmatprep.subr.bf16.mxu0 0
  %881 = vmatpush1.bf16.msra.mxu0 %v627
  %882 = vmatprep.subr.bf16.mxu0 0
  %883 = vmatpush1.bf16.msra.mxu0 %v628
  %884 = vmatprep.subr.bf16.mxu0 0
  %885 = vmatpush1.bf16.msra.mxu0 %v629
  %886 = vmatprep.subr.bf16.mxu0 0
  %887 = vmatpush1.bf16.msra.mxu0 %v630
  %888 = vmatprep.subr.bf16.mxu0 0
  %889 = vmatpush1.bf16.msra.mxu0 %v631
  %890 = vmatprep.subr.bf16.mxu0 0
  %891 = vmatpush1.bf16.msra.mxu0 %v632
  %892 = vmatprep.mubr.bf16.mxu0 %v252
  %893 = vmatmul.mubr.bf16.gmra.mrb[0].mxu0 %v251
  %v894 = vpop.f32.mrb[0].mxu0
  %v895 = vadd.f32 %v846, %v894
  %v896 = vpop.f32.mrb[0].mxu0
  %v897 = vpop.f32.mrb[0].mxu0
  %v898 = vadd.f32 %v849, %v897
  %v899 = vpop.f32.mrb[0].mxu0
  %900 = vmatprep.mubr.bf16.mxu0 %v261
  %901 = vmatmul.mubr.bf16.gmra.mrb[0].mxu0 %v260
  %v902 = vpop.f32.mrb[0].mxu0
  %v903 = vadd.f32 %v854, %v902
  %v904 = vpop.f32.mrb[0].mxu0
  %v905 = vpop.f32.mrb[0].mxu0
  %v906 = vadd.f32 %v857, %v905
  %v907 = vpop.f32.mrb[0].mxu0
  %908 = vdwg.mxu0
  %909 = vmatprep.subr.bf16.mxu0 0
  %910 = vmatpush1.bf16.msra.mxu0 %v633
  %911 = vmatprep.subr.bf16.mxu0 0
  %912 = vmatpush1.bf16.msra.mxu0 %v634
  %913 = vmatprep.subr.bf16.mxu0 0
  %914 = vmatpush1.bf16.msra.mxu0 %v635
  %915 = vmatprep.subr.bf16.mxu0 0
  %916 = vmatpush1.bf16.msra.mxu0 %v636
  %917 = vmatprep.subr.bf16.mxu0 0
  %918 = vmatpush1.bf16.msra.mxu0 %v637
  %919 = vmatprep.subr.bf16.mxu0 0
  %920 = vmatpush1.bf16.msra.mxu0 %v638
  %921 = vmatprep.subr.bf16.mxu0 0
  %922 = vmatpush1.bf16.msra.mxu0 %v639
  %923 = vmatprep.subr.bf16.mxu0 0
  %924 = vmatpush1.bf16.msra.mxu0 %v640
  %925 = vmatprep.subr.bf16.mxu0 0
  %926 = vmatpush1.bf16.msra.mxu0 0
  %927 = vmatprep.subr.bf16.mxu0 0
  %928 = vmatpush1.bf16.msra.mxu0 0
  %929 = vmatprep.subr.bf16.mxu0 0
  %930 = vmatpush1.bf16.msra.mxu0 0
  %931 = vmatprep.subr.bf16.mxu0 0
  %932 = vmatpush1.bf16.msra.mxu0 0
  %933 = vmatprep.subr.bf16.mxu0 0
  %934 = vmatpush1.bf16.msra.mxu0 0
  %935 = vmatprep.subr.bf16.mxu0 0
  %936 = vmatpush1.bf16.msra.mxu0 0
  %937 = vmatprep.subr.bf16.mxu0 0
  %938 = vmatpush1.bf16.msra.mxu0 0
  %939 = vmatprep.subr.bf16.mxu0 0
  %940 = vmatpush1.bf16.msra.mxu0 0
  %941 = vmatprep.mubr.bf16.mxu0 0
  %942 = vmatmul.mubr.bf16.gmra.mrb[0].mxu0 %v253
  %v943 = vpop.f32.mrb[0].mxu0
  %v944 = vadd.f32 %v895, %v943
  %v945 = vpop.f32.mrb[0].mxu0
  %v946 = vpop.f32.mrb[0].mxu0
  %v947 = vadd.f32 %v898, %v946
  %v948 = vpop.f32.mrb[0].mxu0
  %949 = vmatprep.mubr.bf16.mxu0 0
  %950 = vmatmul.mubr.bf16.gmra.mrb[0].mxu0 %v262
  %v951 = vpop.f32.mrb[0].mxu0
  %v952 = vadd.f32 %v903, %v951
  %v953 = vpop.f32.mrb[0].mxu0
  %v954 = vpop.f32.mrb[0].mxu0
  %v955 = vadd.f32 %v906, %v954
  %v956 = vpop.f32.mrb[0].mxu0
  %957 = vdwg.mxu0
  %v958 = vld [vmem:[%s3] sm:$0xf]
  %v959 = vld [vmem:[%s3 + $0x4] sm:$0xf]
  %v960 = vld [vmem:[%s3 + $0x8] sm:$0xf]
  %v961 = vld [vmem:[%s3 + $0xc] sm:$0xf]
  %v962 = vunpack.c.l.bf16 %v958
  %v963 = vunpack.c.l.bf16 %v959
  %v964 = vunpack.c.l.bf16 %v960
  %v965 = vunpack.c.l.bf16 %v961
  %v966 = vadd.f32 %v944, %v962
  %v967 = vadd.f32 %v947, %v963
  %v968 = vadd.f32 %v952, %v964
  %v969 = vadd.f32 %v955, %v965
  %v970 = vmax.f32 %v966, 0.0
  %v971 = vmax.f32 %v967, 0.0
  %v972 = vmax.f32 %v968, 0.0
  %v973 = vmax.f32 %v969, 0.0
  %v974 = vpack.c.bf16 %v971, %v970
  %v975 = vpack.c.bf16 %v973, %v972
  %v978 = vunpack.c.l.b16 %v974
  %v979 = vunpack.c.h.b16 %v974
  %v980 = vunpack.c.l.b16 %v975
  %v981 = vunpack.c.h.b16 %v975
  %v982 = vpack.c.b16 %v978, %v978
  %v983 = vpack.c.b16 %v979, %v979
  %v984 = vpack.c.b16 %v980, %v980
  %v985 = vpack.c.b16 %v981, %v981
  %990 = vst [vmem:[%s4] sm:$0xf] %v982
  %991 = vst [vmem:[%s4 + $0x4] sm:$0xf] %v983
  %992 = vst [vmem:[%s4 + $0x8] sm:$0xf] %v984
  %993 = vst [vmem:[%s4 + $0xc] sm:$0xf] %v985
  // Predicated region
  $region18: #{fwd.28} parent=0 // pred_check
    _
  $region19: #{fwd.28} parent=0 // pred_check_branch
    %995 = sbr.rel (0) target = $region21
  $region20: #{fwd.28} parent=0 // pred_region
    _
  $region21: #{fwd.28} parent=0 // pred_fallthru
    _
  // Predicated region
  $region22: #{fwd.28} parent=0 // pred_check
    _
  $region23: #{fwd.28} parent=0 // pred_check_branch
    %997 = sbr.rel (0) target = $region25
  $region24: #{fwd.28} parent=0 // pred_region
    _
  $region25: #{fwd.28} parent=0 // pred_fallthru
    _

// kernel: fwd.36
$region0: #{fwd.36}
  #allocation0 [shape = 'u32[]', space=smem, size = 0x4, offset = 0x4, fixed_abs, tag = 'smem constant byte address 0x4 - core index']
  #allocation1 [shape = 'u32[144,128]{1,0:T(1,128)}', space=vmem, size = 0x12000, scoped, tag = 'internal scratch']
  %s0 = inlined_call_operand.vmem [shape: bf16[32,128], index: 0, kind: input, shape index: {}]
  %s1 = inlined_call_operand.vmem [shape: bf16[128,128], index: 1, kind: input, shape index: {}]
  %s2 = inlined_call_operand.vmem [shape: f32[1,128], index: 2, kind: input, shape index: {}]
  %s3 = inlined_call_operand.vmem [shape: bf16[32,128], index: 3, kind: output, shape index: {}]
  %s4 = sld [smem:[#allocation0]]
  $region22: #{fwd.36} parent=0
    _
  %s6 = ssub.s32 1, %s4
  %s7 = scalar_select 0, %s6, %s4
  // Predicated region
  $region2: #{fwd.36} parent=0 // pred_check
    _
  $region3: #{fwd.36} parent=0 // pred_check_branch
    %9 = sbr.rel (0) target = $region5
  $region4: #{fwd.36} parent=0 // pred_region
    _
  $region5: #{fwd.36} parent=0 // pred_fallthru
    _
  // Predicated region
  $region6: #{fwd.36} parent=0 // pred_check
    _
  $region7: #{fwd.36} parent=0 // pred_check_branch
    %11 = sbr.rel (0) target = $region9
  $region8: #{fwd.36} parent=0 // pred_region
    _
  $region9: #{fwd.36} parent=0 // pred_fallthru
    _
  // Predicated region
  $region10: #{fwd.36} parent=0 // pred_check
    _
  $region11: #{fwd.36} parent=0 // pred_check_branch
    %13 = sbr.rel (0) target = $region13
  $region12: #{fwd.36} parent=0 // pred_region
    _
  $region13: #{fwd.36} parent=0 // pred_fallthru
    _
  %v15 = vld [vmem:[%s0] sm:$0xf]
  %v16 = vld [vmem:[%s0 + $0x4] sm:$0xf]
  %v17 = vld [vmem:[%s0 + $0x8] sm:$0xf]
  %v18 = vld [vmem:[%s0 + $0xc] sm:$0xf]
  %v19 = vld [vmem:[%s1] sm:$0xf]
  %v20 = vld [vmem:[%s1 + $0x4] sm:$0xf]
  %v21 = vld [vmem:[%s1 + $0x8] sm:$0xf]
  %v22 = vld [vmem:[%s1 + $0xc] sm:$0xf]
  %v23 = vld [vmem:[%s1 + $0x10] sm:$0xf]
  %v24 = vld [vmem:[%s1 + $0x14] sm:$0xf]
  %v25 = vld [vmem:[%s1 + $0x18] sm:$0xf]
  %v26 = vld [vmem:[%s1 + $0x1c] sm:$0xf]
  %v27 = vld [vmem:[%s1 + $0x20] sm:$0xf]
  %v28 = vld [vmem:[%s1 + $0x24] sm:$0xf]
  %v29 = vld [vmem:[%s1 + $0x28] sm:$0xf]
  %v30 = vld [vmem:[%s1 + $0x2c] sm:$0xf]
  %v31 = vld [vmem:[%s1 + $0x30] sm:$0xf]
  %v32 = vld [vmem:[%s1 + $0x34] sm:$0xf]
  %v33 = vld [vmem:[%s1 + $0x38] sm:$0xf]
  %v34 = vld [vmem:[%s1 + $0x3c] sm:$0xf]
  %v35 = vld [vmem:[%s2] sm:$0x1]
  %v37 = vlaneseq
  %v38 = vshrl.u32 %v37, 7
  %v39 = vsub.s32 0, %v38
  %v40 = vrot.slane %v35, %v39
  %v46 = vunpack.c.l.b16 %v15
  %v47 = vunpack.c.l.b16 %v16
  %v48 = vunpack.c.l.b16 %v17
  %v49 = vunpack.c.l.b16 %v18
  %v50 = vpack.c.b16 %v47, %v46
  %v51 = vpack.c.b16 %v49, %v48
  %v70 = vunpack.c.l.b16 %v19
  %v71 = vunpack.c.l.b16 %v20
  %v72 = vunpack.c.l.b16 %v21
  %v73 = vunpack.c.l.b16 %v22
  %v74 = vunpack.c.l.b16 %v23
  %v75 = vunpack.c.l.b16 %v24
  %v76 = vunpack.c.l.b16 %v25
  %v77 = vunpack.c.l.b16 %v26
  %v78 = vunpack.c.l.b16 %v27
  %v79 = vunpack.c.l.b16 %v28
  %v80 = vunpack.c.l.b16 %v29
  %v81 = vunpack.c.l.b16 %v30
  %v82 = vunpack.c.l.b16 %v31
  %v83 = vunpack.c.l.b16 %v32
  %v84 = vunpack.c.l.b16 %v33
  %v85 = vunpack.c.l.b16 %v34
  %v86 = vpack.c.b16 %v71, %v70
  %v87 = vpack.c.b16 %v73, %v72
  %v88 = vpack.c.b16 %v75, %v74
  %v89 = vpack.c.b16 %v77, %v76
  %v90 = vpack.c.b16 %v79, %v78
  %v91 = vpack.c.b16 %v81, %v80
  %v92 = vpack.c.b16 %v83, %v82
  %v93 = vpack.c.b16 %v85, %v84
  %102 = vmatprep.subr.bf16.mxu0 0
  %103 = vmatpush1.bf16.msra.mxu0 %v86
  %104 = vmatprep.subr.bf16.mxu0 0
  %105 = vmatpush1.bf16.msra.mxu0 %v87
  %106 = vmatprep.subr.bf16.mxu0 0
  %107 = vmatpush1.bf16.msra.mxu0 %v88
  %108 = vmatprep.subr.bf16.mxu0 0
  %109 = vmatpush1.bf16.msra.mxu0 %v89
  %110 = vmatprep.subr.bf16.mxu0 0
  %111 = vmatpush1.bf16.msra.mxu0 %v90
  %112 = vmatprep.subr.bf16.mxu0 0
  %113 = vmatpush1.bf16.msra.mxu0 %v91
  %114 = vmatprep.subr.bf16.mxu0 0
  %115 = vmatpush1.bf16.msra.mxu0 %v92
  %116 = vmatprep.subr.bf16.mxu0 0
  %117 = vmatpush1.bf16.msra.mxu0 %v93
  %118 = vmatprep.subr.bf16.mxu0 0
  %119 = vmatpush1.bf16.msra.mxu0 0
  %120 = vmatprep.subr.bf16.mxu0 0
  %121 = vmatpush1.bf16.msra.mxu0 0
  %122 = vmatprep.subr.bf16.mxu0 0
  %123 = vmatpush1.bf16.msra.mxu0 0
  %124 = vmatprep.subr.bf16.mxu0 0
  %125 = vmatpush1.bf16.msra.mxu0 0
  %126 = vmatprep.subr.bf16.mxu0 0
  %127 = vmatpush1.bf16.msra.mxu0 0
  %128 = vmatprep.subr.bf16.mxu0 0
  %129 = vmatpush1.bf16.msra.mxu0 0
  %130 = vmatprep.subr.bf16.mxu0 0
  %131 = vmatpush1.bf16.msra.mxu0 0
  %132 = vmatprep.subr.bf16.mxu0 0
  %133 = vmatpush1.bf16.msra.mxu0 0
  %134 = vmatprep.mubr.bf16.mxu0 0
  %135 = vmatmul.mubr.bf16.gmra.mrb[0].mxu0 %v50
  %v136 = vpop.f32.mrb[0].mxu0
  %v137 = vadd.f32 %v40, %v136
  %v138 = vpop.f32.mrb[0].mxu0
  %v139 = vpop.f32.mrb[0].mxu0
  %v140 = vadd.f32 %v40, %v139
  %v141 = vpop.f32.mrb[0].mxu0
  %142 = vmatprep.mubr.bf16.mxu0 0
  %143 = vmatmul.mubr.bf16.gmra.mrb[0].mxu0 %v51
  %v144 = vpop.f32.mrb[0].mxu0
  %v145 = vadd.f32 %v40, %v144
  %v146 = vpop.f32.mrb[0].mxu0
  %v147 = vpop.f32.mrb[0].mxu0
  %v148 = vadd.f32 %v40, %v147
  %v149 = vpop.f32.mrb[0].mxu0
  %150 = vdwg.mxu0
  %v151 = vmax.f32 %v137, 0.0
  %v152 = vmax.f32 %v140, 0.0
  %v153 = vmax.f32 %v145, 0.0
  %v154 = vmax.f32 %v148, 0.0
  %v155 = vpack.c.bf16 %v152, %v151
  %v156 = vpack.c.bf16 %v154, %v153
  %v159 = vunpack.c.l.b16 %v155
  %v160 = vunpack.c.h.b16 %v155
  %v161 = vunpack.c.l.b16 %v156
  %v162 = vunpack.c.h.b16 %v156
  %v163 = vpack.c.b16 %v159, %v159
  %v164 = vpack.c.b16 %v160, %v160
  %v165 = vpack.c.b16 %v161, %v161
  %v166 = vpack.c.b16 %v162, %v162
  %171 = vst [vmem:[%s3] sm:$0xf] %v163
  %172 = vst [vmem:[%s3 + $0x4] sm:$0xf] %v164
  %173 = vst [vmem:[%s3 + $0x8] sm:$0xf] %v165
  %174 = vst [vmem:[%s3 + $0xc] sm:$0xf] %v166
  // Predicated region
  $region14: #{fwd.36} parent=0 // pred_check
    _
  $region15: #{fwd.36} parent=0 // pred_check_branch
    %176 = sbr.rel (0) target = $region17
  $region16: #{fwd.36} parent=0 // pred_region
    _
  $region17: #{fwd.36} parent=0 // pred_fallthru
    _
  // Predicated region
  $region18: #{fwd.36} parent=0 // pred_check
    _
  $region19: #{fwd.36} parent=0 // pred_check_branch
    %178 = sbr.rel (0) target = $region21
  $region20: #{fwd.36} parent=0 // pred_region
    _
  $region21: #{fwd.36} parent=0 // pred_fallthru
    _

// kernel: fwd.29
$region0: #{fwd.29}
  #allocation0 [shape = 'u32[]', space=smem, size = 0x4, offset = 0x4, fixed_abs, tag = 'smem constant byte address 0x4 - core index']
  #allocation1 [shape = 'u32[144,128]{1,0:T(1,128)}', space=vmem, size = 0x12000, scoped, tag = 'internal scratch']
  %s0 = inlined_call_operand.vmem [shape: bf16[32,1152], index: 0, kind: input, shape index: {}]
  %s1 = inlined_call_operand.vmem [shape: bf16[1152,128], index: 1, kind: input, shape index: {}]
  %s2 = inlined_call_operand.vmem [shape: f32[1,128], index: 2, kind: input, shape index: {}]
  %s3 = inlined_call_operand.vmem [shape: bf16[32,128], index: 3, kind: output, shape index: {}]
  %s4 = sld [smem:[#allocation0]]
  $region22: #{fwd.29} parent=0
    _
  %s6 = ssub.s32 1, %s4
  %s7 = scalar_select 0, %s6, %s4
  // Predicated region
  $region2: #{fwd.29} parent=0 // pred_check
    _
  $region3: #{fwd.29} parent=0 // pred_check_branch
    %9 = sbr.rel (0) target = $region5
  $region4: #{fwd.29} parent=0 // pred_region
    _
  $region5: #{fwd.29} parent=0 // pred_fallthru
    _
  // Predicated region
  $region6: #{fwd.29} parent=0 // pred_check
    _
  $region7: #{fwd.29} parent=0 // pred_check_branch
    %11 = sbr.rel (0) target = $region9
  $region8: #{fwd.29} parent=0 // pred_region
    _
  $region9: #{fwd.29} parent=0 // pred_fallthru
    _
  // Predicated region
  $region10: #{fwd.29} parent=0 // pred_check
    _
  $region11: #{fwd.29} parent=0 // pred_check_branch
    %13 = sbr.rel (0) target = $region13
  $region12: #{fwd.29} parent=0 // pred_region
    _
  $region13: #{fwd.29} parent=0 // pred_fallthru
    _
  %v15 = vld [vmem:[%s0] sm:$0xff]
  %v16 = vld [vmem:[%s0 + $0x8] sm:$0xff]
  %v17 = vld [vmem:[%s0 + $0x10] sm:$0xff]
  %v18 = vld [vmem:[%s0 + $0x18] sm:$0xff]
  %v19 = vld [vmem:[%s0 + $0x20] sm:$0xf]
  %v20 = vld [vmem:[%s0 + $0x24] sm:$0xff]
  %v21 = vld [vmem:[%s0 + $0x2c] sm:$0xff]
  %v22 = vld [vmem:[%s0 + $0x34] sm:$0xff]
  %v23 = vld [vmem:[%s0 + $0x3c] sm:$0xff]
  %v24 = vld [vmem:[%s0 + $0x44] sm:$0xf]
  %v25 = vld [vmem:[%s0 + $0x48] sm:$0xff]
  %v26 = vld [vmem:[%s0 + $0x50] sm:$0xff]
  %v27 = vld [vmem:[%s0 + $0x58] sm:$0xff]
  %v28 = vld [vmem:[%s0 + $0x60] sm:$0xff]
  %v29 = vld [vmem:[%s0 + $0x68] sm:$0xf]
  %v30 = vld [vmem:[%s0 + $0x6c] sm:$0xff]
  %v31 = vld [vmem:[%s0 + $0x74] sm:$0xff]
  %v32 = vld [vmem:[%s0 + $0x7c] sm:$0xff]
  %v33 = vld [vmem:[%s0 + $0x84] sm:$0xff]
  %v34 = vld [vmem:[%s0 + $0x8c] sm:$0xf]
  %v35 = vld [vmem:[%s1] sm:$0xf]
  %v36 = vld [vmem:[%s1 + $0x4] sm:$0xf]
  %v37 = vld [vmem:[%s1 + $0x8] sm:$0xf]
  %v38 = vld [vmem:[%s1 + $0xc] sm:$0xf]
  %v39 = vld [vmem:[%s1 + $0x10] sm:$0xf]
  %v40 = vld [vmem:[%s1 + $0x14] sm:$0xf]
  %v41 = vld [vmem:[%s1 + $0x18] sm:$0xf]
  %v42 = vld [vmem:[%s1 + $0x1c] sm:$0xf]
  %v43 = vld [vmem:[%s1 + $0x20] sm:$0xf]
  %v44 = vld [vmem:[%s1 + $0x24] sm:$0xf]
  %v45 = vld [vmem:[%s1 + $0x28] sm:$0xf]
  %v46 = vld [vmem:[%s1 + $0x2c] sm:$0xf]
  %v47 = vld [vmem:[%s1 + $0x30] sm:$0xf]
  %v48 = vld [vmem:[%s1 + $0x34] sm:$0xf]
  %v49 = vld [vmem:[%s1 + $0x38] sm:$0xf]
  %v50 = vld [vmem:[%s1 + $0x3c] sm:$0xf]
  %v51 = vld [vmem:[%s1 + $0x40] sm:$0xf]
  %v52 = vld [vmem:[%s1 + $0x44] sm:$0xf]
  %v53 = vld [vmem:[%s1 + $0x48] sm:$0xf]
  %v54 = vld [vmem:[%s1 + $0x4c] sm:$0xf]
  %v55 = vld [vmem:[%s1 + $0x50] sm:$0xf]
  %v56 = vld [vmem:[%s1 + $0x54] sm:$0xf]
  %v57 = vld [vmem:[%s1 + $0x58] sm:$0xf]
  %v58 = vld [vmem:[%s1 + $0x5c] sm:$0xf]
  %v59 = vld [vmem:[%s1 + $0x60] sm:$0xf]
  %v60 = vld [vmem:[%s1 + $0x64] sm:$0xf]
  %v61 = vld [vmem:[%s1 + $0x68] sm:$0xf]
  %v62 = vld [vmem:[%s1 + $0x6c] sm:$0xf]
  %v63 = vld [vmem:[%s1 + $0x70] sm:$0xf]
  %v64 = vld [vmem:[%s1 + $0x74] sm:$0xf]
  %v65 = vld [vmem:[%s1 + $0x78] sm:$0xf]
  %v66 = vld [vmem:[%s1 + $0x7c] sm:$0xf]
  %v67 = vld [vmem:[%s1 + $0x80] sm:$0xf]
  %v68 = vld [vmem:[%s1 + $0x84] sm:$0xf]
  %v69 = vld [vmem:[%s1 + $0x88] sm:$0xf]
  %v70 = vld [vmem:[%s1 + $0x8c] sm:$0xf]
  %v71 = vld [vmem:[%s1 + $0x90] sm:$0xf]
  %v72 = vld [vmem:[%s1 + $0x94] sm:$0xf]
  %v73 = vld [vmem:[%s1 + $0x98] sm:$0xf]
  %v74 = vld [vmem:[%s1 + $0x9c] sm:$0xf]
  %v75 = vld [vmem:[%s1 + $0xa0] sm:$0xf]
  %v76 = vld [vmem:[%s1 + $0xa4] sm:$0xf]
  %v77 = vld [vmem:[%s1 + $0xa8] sm:$0xf]
  %v78 = vld [vmem:[%s1 + $0xac] sm:$0xf]
  %v79 = vld [vmem:[%s1 + $0xb0] sm:$0xf]
  %v80 = vld [vmem:[%s1 + $0xb4] sm:$0xf]
  %v81 = vld [vmem:[%s1 + $0xb8] sm:$0xf]
  %v82 = vld [vmem:[%s1 + $0xbc] sm:$0xf]
  %v83 = vld [vmem:[%s1 + $0xc0] sm:$0xf]
  %v84 = vld [vmem:[%s1 + $0xc4] sm:$0xf]
  %v85 = vld [vmem:[%s1 + $0xc8] sm:$0xf]
  %v86 = vld [vmem:[%s1 + $0xcc] sm:$0xf]
  %v87 = vld [vmem:[%s1 + $0xd0] sm:$0xf]
  %v88 = vld [vmem:[%s1 + $0xd4] sm:$0xf]
  %v89 = vld [vmem:[%s1 + $0xd8] sm:$0xf]
  %v90 = vld [vmem:[%s1 + $0xdc] sm:$0xf]
  %v91 = vld [vmem:[%s1 + $0xe0] sm:$0xf]
  %v92 = vld [vmem:[%s1 + $0xe4] sm:$0xf]
  %v93 = vld [vmem:[%s1 + $0xe8] sm:$0xf]
  %v94 = vld [vmem:[%s1 + $0xec] sm:$0xf]
  %v95 = vld [vmem:[%s1 + $0xf0] sm:$0xf]
  %v96 = vld [vmem:[%s1 + $0xf4] sm:$0xf]
  %v97 = vld [vmem:[%s1 + $0xf8] sm:$0xf]
  %v98 = vld [vmem:[%s1 + $0xfc] sm:$0xf]
  %v99 = vld [vmem:[%s1 + $0x100] sm:$0xf]
  %v100 = vld [vmem:[%s1 + $0x104] sm:$0xf]
  %v101 = vld [vmem:[%s1 + $0x108] sm:$0xf]
  %v102 = vld [vmem:[%s1 + $0x10c] sm:$0xf]
  %v103 = vld [vmem:[%s1 + $0x110] sm:$0xf]
  %v104 = vld [vmem:[%s1 + $0x114] sm:$0xf]
  %v105 = vld [vmem:[%s1 + $0x118] sm:$0xf]
  %v106 = vld [vmem:[%s1 + $0x11c] sm:$0xf]
  %v107 = vld [vmem:[%s1 + $0x120] sm:$0xf]
  %v108 = vld [vmem:[%s1 + $0x124] sm:$0xf]
  %v109 = vld [vmem:[%s1 + $0x128] sm:$0xf]
  %v110 = vld [vmem:[%s1 + $0x12c] sm:$0xf]
  %v111 = vld [vmem:[%s1 + $0x130] sm:$0xf]
  %v112 = vld [vmem:[%s1 + $0x134] sm:$0xf]
  %v113 = vld [vmem:[%s1 + $0x138] sm:$0xf]
  %v114 = vld [vmem:[%s1 + $0x13c] sm:$0xf]
  %v115 = vld [vmem:[%s1 + $0x140] sm:$0xf]
  %v116 = vld [vmem:[%s1 + $0x144] sm:$0xf]
  %v117 = vld [vmem:[%s1 + $0x148] sm:$0xf]
  %v118 = vld [vmem:[%s1 + $0x14c] sm:$0xf]
  %v119 = vld [vmem:[%s1 + $0x150] sm:$0xf]
  %v120 = vld [vmem:[%s1 + $0x154] sm:$0xf]
  %v121 = vld [vmem:[%s1 + $0x158] sm:$0xf]
  %v122 = vld [vmem:[%s1 + $0x15c] sm:$0xf]
  %v123 = vld [vmem:[%s1 + $0x160] sm:$0xf]
  %v124 = vld [vmem:[%s1 + $0x164] sm:$0xf]
  %v125 = vld [vmem:[%s1 + $0x168] sm:$0xf]
  %v126 = vld [vmem:[%s1 + $0x16c] sm:$0xf]
  %v127 = vld [vmem:[%s1 + $0x170] sm:$0xf]
  %v128 = vld [vmem:[%s1 + $0x174] sm:$0xf]
  %v129 = vld [vmem:[%s1 + $0x178] sm:$0xf]
  %v130 = vld [vmem:[%s1 + $0x17c] sm:$0xf]
  %v131 = vld [vmem:[%s1 + $0x180] sm:$0xf]
  %v132 = vld [vmem:[%s1 + $0x184] sm:$0xf]
  %v133 = vld [vmem:[%s1 + $0x188] sm:$0xf]
  %v134 = vld [vmem:[%s1 + $0x18c] sm:$0xf]
  %v135 = vld [vmem:[%s1 + $0x190] sm:$0xf]
  %v136 = vld [vmem:[%s1 + $0x194] sm:$0xf]
  %v137 = vld [vmem:[%s1 + $0x198] sm:$0xf]
  %v138 = vld [vmem:[%s1 + $0x19c] sm:$0xf]
  %v139 = vld [vmem:[%s1 + $0x1a0] sm:$0xf]
  %v140 = vld [vmem:[%s1 + $0x1a4] sm:$0xf]
  %v141 = vld [vmem:[%s1 + $0x1a8] sm:$0xf]
  %v142 = vld [vmem:[%s1 + $0x1ac] sm:$0xf]
  %v143 = vld [vmem:[%s1 + $0x1b0] sm:$0xf]
  %v144 = vld [vmem:[%s1 + $0x1b4] sm:$0xf]
  %v145 = vld [vmem:[%s1 + $0x1b8] sm:$0xf]
  %v146 = vld [vmem:[%s1 + $0x1bc] sm:$0xf]
  %v147 = vld [vmem:[%s1 + $0x1c0] sm:$0xf]
  %v148 = vld [vmem:[%s1 + $0x1c4] sm:$0xf]
  %v149 = vld [vmem:[%s1 + $0x1c8] sm:$0xf]
  %v150 = vld [vmem:[%s1 + $0x1cc] sm:$0xf]
  %v151 = vld [vmem:[%s1 + $0x1d0] sm:$0xf]
  %v152 = vld [vmem:[%s1 + $0x1d4] sm:$0xf]
  %v153 = vld [vmem:[%s1 + $0x1d8] sm:$0xf]
  %v154 = vld [vmem:[%s1 + $0x1dc] sm:$0xf]
  %v155 = vld [vmem:[%s1 + $0x1e0] sm:$0xf]
  %v156 = vld [vmem:[%s1 + $0x1e4] sm:$0xf]
  %v157 = vld [vmem:[%s1 + $0x1e8] sm:$0xf]
  %v158 = vld [vmem:[%s1 + $0x1ec] sm:$0xf]
  %v159 = vld [vmem:[%s1 + $0x1f0] sm:$0xf]
  %v160 = vld [vmem:[%s1 + $0x1f4] sm:$0xf]
  %v161 = vld [vmem:[%s1 + $0x1f8] sm:$0xf]
  %v162 = vld [vmem:[%s1 + $0x1fc] sm:$0xf]
  %v163 = vld [vmem:[%s1 + $0x200] sm:$0xf]
  %v164 = vld [vmem:[%s1 + $0x204] sm:$0xf]
  %v165 = vld [vmem:[%s1 + $0x208] sm:$0xf]
  %v166 = vld [vmem:[%s1 + $0x20c] sm:$0xf]
  %v167 = vld [vmem:[%s1 + $0x210] sm:$0xf]
  %v168 = vld [vmem:[%s1 + $0x214] sm:$0xf]
  %v169 = vld [vmem:[%s1 + $0x218] sm:$0xf]
  %v170 = vld [vmem:[%s1 + $0x21c] sm:$0xf]
  %v171 = vld [vmem:[%s1 + $0x220] sm:$0xf]
  %v172 = vld [vmem:[%s1 + $0x224] sm:$0xf]
  %v173 = vld [vmem:[%s1 + $0x228] sm:$0xf]
  %v174 = vld [vmem:[%s1 + $0x22c] sm:$0xf]
  %v175 = vld [vmem:[%s1 + $0x230] sm:$0xf]
  %v176 = vld [vmem:[%s1 + $0x234] sm:$0xf]
  %v177 = vld [vmem:[%s1 + $0x238] sm:$0xf]
  %v178 = vld [vmem:[%s1 + $0x23c] sm:$0xf]
  %v179 = vld [vmem:[%s2] sm:$0x1]
  %v181 = vlaneseq
  %v182 = vshrl.u32 %v181, 7
  %v183 = vsub.s32 0, %v182
  %v184 = vrot.slane %v179, %v183
  %v206 = vunpack.c.l.b16 %v15
  %v207 = vunpack.c.h.b16 %v15
  %v208 = vunpack.c.l.b16 %v16
  %v209 = vunpack.c.h.b16 %v16
  %v210 = vunpack.c.l.b16 %v17
  %v211 = vunpack.c.h.b16 %v17
  %v212 = vunpack.c.l.b16 %v18
  %v213 = vunpack.c.h.b16 %v18
  %v214 = vunpack.c.l.b16 %v19
  %v215 = vunpack.c.l.b16 %v20
  %v216 = vunpack.c.h.b16 %v20
  %v217 = vunpack.c.l.b16 %v21
  %v218 = vunpack.c.h.b16 %v21
  %v219 = vunpack.c.l.b16 %v22
  %v220 = vunpack.c.h.b16 %v22
  %v221 = vunpack.c.l.b16 %v23
  %v222 = vunpack.c.h.b16 %v23
  %v223 = vunpack.c.l.b16 %v24
  %v224 = vunpack.c.l.b16 %v25
  %v225 = vunpack.c.h.b16 %v25
  %v226 = vunpack.c.l.b16 %v26
  %v227 = vunpack.c.h.b16 %v26
  %v228 = vunpack.c.l.b16 %v27
  %v229 = vunpack.c.h.b16 %v27
  %v230 = vunpack.c.l.b16 %v28
  %v231 = vunpack.c.h.b16 %v28
  %v232 = vunpack.c.l.b16 %v29
  %v233 = vunpack.c.l.b16 %v30
  %v234 = vunpack.c.h.b16 %v30
  %v235 = vunpack.c.l.b16 %v31
  %v236 = vunpack.c.h.b16 %v31
  %v237 = vunpack.c.l.b16 %v32
  %v238 = vunpack.c.h.b16 %v32
  %v239 = vunpack.c.l.b16 %v33
  %v240 = vunpack.c.h.b16 %v33
  %v241 = vunpack.c.l.b16 %v34
  %v242 = vpack.c.b16 %v215, %v206
  %v243 = vpack.c.b16 %v216, %v207
  %v244 = vpack.c.b16 %v217, %v208
  %v245 = vpack.c.b16 %v218, %v209
  %v246 = vpack.c.b16 %v219, %v210
  %v247 = vpack.c.b16 %v220, %v211
  %v248 = vpack.c.b16 %v221, %v212
  %v249 = vpack.c.b16 %v222, %v213
  %v250 = vpack.c.b16 %v223, %v214
  %v251 = vpack.c.b16 %v233, %v224
  %v252 = vpack.c.b16 %v234, %v225
  %v253 = vpack.c.b16 %v235, %v226
  %v254 = vpack.c.b16 %v236, %v227
  %v255 = vpack.c.b16 %v237, %v228
  %v256 = vpack.c.b16 %v238, %v229
  %v257 = vpack.c.b16 %v239, %v230
  %v258 = vpack.c.b16 %v240, %v231
  %v259 = vpack.c.b16 %v241, %v232
  %v422 = vunpack.c.l.b16 %v35
  %v423 = vunpack.c.l.b16 %v36
  %v424 = vunpack.c.l.b16 %v37
  %v425 = vunpack.c.l.b16 %v38
  %v426 = vunpack.c.l.b16 %v39
  %v427 = vunpack.c.l.b16 %v40
  %v428 = vunpack.c.l.b16 %v41
  %v429 = vunpack.c.l.b16 %v42
  %v430 = vunpack.c.l.b16 %v43
  %v431 = vunpack.c.l.b16 %v44
  %v432 = vunpack.c.l.b16 %v45
  %v433 = vunpack.c.l.b16 %v46
  %v434 = vunpack.c.l.b16 %v47
  %v435 = vunpack.c.l.b16 %v48
  %v436 = vunpack.c.l.b16 %v49
  %v437 = vunpack.c.l.b16 %v50
  %v438 = vunpack.c.l.b16 %v51
  %v439 = vunpack.c.l.b16 %v52
  %v440 = vunpack.c.l.b16 %v53
  %v441 = vunpack.c.l.b16 %v54
  %v442 = vunpack.c.l.b16 %v55
  %v443 = vunpack.c.l.b16 %v56
  %v444 = vunpack.c.l.b16 %v57
  %v445 = vunpack.c.l.b16 %v58
  %v446 = vunpack.c.l.b16 %v59
  %v447 = vunpack.c.l.b16 %v60
  %v448 = vunpack.c.l.b16 %v61
  %v449 = vunpack.c.l.b16 %v62
  %v450 = vunpack.c.l.b16 %v63
  %v451 = vunpack.c.l.b16 %v64
  %v452 = vunpack.c.l.b16 %v65
  %v453 = vunpack.c.l.b16 %v66
  %v454 = vunpack.c.l.b16 %v67
  %v455 = vunpack.c.l.b16 %v68
  %v456 = vunpack.c.l.b16 %v69
  %v457 = vunpack.c.l.b16 %v70
  %v458 = vunpack.c.l.b16 %v71
  %v459 = vunpack.c.l.b16 %v72
  %v460 = vunpack.c.l.b16 %v73
  %v461 = vunpack.c.l.b16 %v74
  %v462 = vunpack.c.l.b16 %v75
  %v463 = vunpack.c.l.b16 %v76
  %v464 = vunpack.c.l.b16 %v77
  %v465 = vunpack.c.l.b16 %v78
  %v466 = vunpack.c.l.b16 %v79
  %v467 = vunpack.c.l.b16 %v80
  %v468 = vunpack.c.l.b16 %v81
  %v469 = vunpack.c.l.b16 %v82
  %v470 = vunpack.c.l.b16 %v83
  %v471 = vunpack.c.l.b16 %v84
  %v472 = vunpack.c.l.b16 %v85
  %v473 = vunpack.c.l.b16 %v86
  %v474 = vunpack.c.l.b16 %v87
  %v475 = vunpack.c.l.b16 %v88
  %v476 = vunpack.c.l.b16 %v89
  %v477 = vunpack.c.l.b16 %v90
  %v478 = vunpack.c.l.b16 %v91
  %v479 = vunpack.c.l.b16 %v92
  %v480 = vunpack.c.l.b16 %v93
  %v481 = vunpack.c.l.b16 %v94
  %v482 = vunpack.c.l.b16 %v95
  %v483 = vunpack.c.l.b16 %v96
  %v484 = vunpack.c.l.b16 %v97
  %v485 = vunpack.c.l.b16 %v98
  %v486 = vunpack.c.l.b16 %v99
  %v487 = vunpack.c.l.b16 %v100
  %v488 = vunpack.c.l.b16 %v101
  %v489 = vunpack.c.l.b16 %v102
  %v490 = vunpack.c.l.b16 %v103
  %v491 = vunpack.c.l.b16 %v104
  %v492 = vunpack.c.l.b16 %v105
  %v493 = vunpack.c.l.b16 %v106
  %v494 = vunpack.c.l.b16 %v107
  %v495 = vunpack.c.l.b16 %v108
  %v496 = vunpack.c.l.b16 %v109
  %v497 = vunpack.c.l.b16 %v110
  %v498 = vunpack.c.l.b16 %v111
  %v499 = vunpack.c.l.b16 %v112
  %v500 = vunpack.c.l.b16 %v113
  %v501 = vunpack.c.l.b16 %v114
  %v502 = vunpack.c.l.b16 %v115
  %v503 = vunpack.c.l.b16 %v116
  %v504 = vunpack.c.l.b16 %v117
  %v505 = vunpack.c.l.b16 %v118
  %v506 = vunpack.c.l.b16 %v119
  %v507 = vunpack.c.l.b16 %v120
  %v508 = vunpack.c.l.b16 %v121
  %v509 = vunpack.c.l.b16 %v122
  %v510 = vunpack.c.l.b16 %v123
  %v511 = vunpack.c.l.b16 %v124
  %v512 = vunpack.c.l.b16 %v125
  %v513 = vunpack.c.l.b16 %v126
  %v514 = vunpack.c.l.b16 %v127
  %v515 = vunpack.c.l.b16 %v128
  %v516 = vunpack.c.l.b16 %v129
  %v517 = vunpack.c.l.b16 %v130
  %v518 = vunpack.c.l.b16 %v131
  %v519 = vunpack.c.l.b16 %v132
  %v520 = vunpack.c.l.b16 %v133
  %v521 = vunpack.c.l.b16 %v134
  %v522 = vunpack.c.l.b16 %v135
  %v523 = vunpack.c.l.b16 %v136
  %v524 = vunpack.c.l.b16 %v137
  %v525 = vunpack.c.l.b16 %v138
  %v526 = vunpack.c.l.b16 %v139
  %v527 = vunpack.c.l.b16 %v140
  %v528 = vunpack.c.l.b16 %v141
  %v529 = vunpack.c.l.b16 %v142
  %v530 = vunpack.c.l.b16 %v143
  %v531 = vunpack.c.l.b16 %v144
  %v532 = vunpack.c.l.b16 %v145
  %v533 = vunpack.c.l.b16 %v146
  %v534 = vunpack.c.l.b16 %v147
  %v535 = vunpack.c.l.b16 %v148
  %v536 = vunpack.c.l.b16 %v149
  %v537 = vunpack.c.l.b16 %v150
  %v538 = vunpack.c.l.b16 %v151
  %v539 = vunpack.c.l.b16 %v152
  %v540 = vunpack.c.l.b16 %v153
  %v541 = vunpack.c.l.b16 %v154
  %v542 = vunpack.c.l.b16 %v155
  %v543 = vunpack.c.l.b16 %v156
  %v544 = vunpack.c.l.b16 %v157
  %v545 = vunpack.c.l.b16 %v158
  %v546 = vunpack.c.l.b16 %v159
  %v547 = vunpack.c.l.b16 %v160
  %v548 = vunpack.c.l.b16 %v161
  %v549 = vunpack.c.l.b16 %v162
  %v550 = vunpack.c.l.b16 %v163
  %v551 = vunpack.c.l.b16 %v164
  %v552 = vunpack.c.l.b16 %v165
  %v553 = vunpack.c.l.b16 %v166
  %v554 = vunpack.c.l.b16 %v167
  %v555 = vunpack.c.l.b16 %v168
  %v556 = vunpack.c.l.b16 %v169
  %v557 = vunpack.c.l.b16 %v170
  %v558 = vunpack.c.l.b16 %v171
  %v559 = vunpack.c.l.b16 %v172
  %v560 = vunpack.c.l.b16 %v173
  %v561 = vunpack.c.l.b16 %v174
  %v562 = vunpack.c.l.b16 %v175
  %v563 = vunpack.c.l.b16 %v176
  %v564 = vunpack.c.l.b16 %v177
  %v565 = vunpack.c.l.b16 %v178
  %v566 = vpack.c.b16 %v423, %v422
  %v567 = vpack.c.b16 %v425, %v424
  %v568 = vpack.c.b16 %v427, %v426
  %v569 = vpack.c.b16 %v429, %v428
  %v570 = vpack.c.b16 %v431, %v430
  %v571 = vpack.c.b16 %v433, %v432
  %v572 = vpack.c.b16 %v435, %v434
  %v573 = vpack.c.b16 %v437, %v436
  %v574 = vpack.c.b16 %v439, %v438
  %v575 = vpack.c.b16 %v441, %v440
  %v576 = vpack.c.b16 %v443, %v442
  %v577 = vpack.c.b16 %v445, %v444
  %v578 = vpack.c.b16 %v447, %v446
  %v579 = vpack.c.b16 %v449, %v448
  %v580 = vpack.c.b16 %v451, %v450
  %v581 = vpack.c.b16 %v453, %v452
  %v582 = vpack.c.b16 %v455, %v454
  %v583 = vpack.c.b16 %v457, %v456
  %v584 = vpack.c.b16 %v459, %v458
  %v585 = vpack.c.b16 %v461, %v460
  %v586 = vpack.c.b16 %v463, %v462
  %v587 = vpack.c.b16 %v465, %v464
  %v588 = vpack.c.b16 %v467, %v466
  %v589 = vpack.c.b16 %v469, %v468
  %v590 = vpack.c.b16 %v471, %v470
  %v591 = vpack.c.b16 %v473, %v472
  %v592 = vpack.c.b16 %v475, %v474
  %v593 = vpack.c.b16 %v477, %v476
  %v594 = vpack.c.b16 %v479, %v478
  %v595 = vpack.c.b16 %v481, %v480
  %v596 = vpack.c.b16 %v483, %v482
  %v597 = vpack.c.b16 %v485, %v484
  %v598 = vpack.c.b16 %v487, %v486
  %v599 = vpack.c.b16 %v489, %v488
  %v600 = vpack.c.b16 %v491, %v490
  %v601 = vpack.c.b16 %v493, %v492
  %v602 = vpack.c.b16 %v495, %v494
  %v603 = vpack.c.b16 %v497, %v496
  %v604 = vpack.c.b16 %v499, %v498
  %v605 = vpack.c.b16 %v501, %v500
  %v606 = vpack.c.b16 %v503, %v502
  %v607 = vpack.c.b16 %v505, %v504
  %v608 = vpack.c.b16 %v507, %v506
  %v609 = vpack.c.b16 %v509, %v508
  %v610 = vpack.c.b16 %v511, %v510
  %v611 = vpack.c.b16 %v513, %v512
  %v612 = vpack.c.b16 %v515, %v514
  %v613 = vpack.c.b16 %v517, %v516
  %v614 = vpack.c.b16 %v519, %v518
  %v615 = vpack.c.b16 %v521, %v520
  %v616 = vpack.c.b16 %v523, %v522
  %v617 = vpack.c.b16 %v525, %v524
  %v618 = vpack.c.b16 %v527, %v526
  %v619 = vpack.c.b16 %v529, %v528
  %v620 = vpack.c.b16 %v531, %v530
  %v621 = vpack.c.b16 %v533, %v532
  %v622 = vpack.c.b16 %v535, %v534
  %v623 = vpack.c.b16 %v537, %v536
  %v624 = vpack.c.b16 %v539, %v538
  %v625 = vpack.c.b16 %v541, %v540
  %v626 = vpack.c.b16 %v543, %v542
  %v627 = vpack.c.b16 %v545, %v544
  %v628 = vpack.c.b16 %v547, %v546
  %v629 = vpack.c.b16 %v549, %v548
  %v630 = vpack.c.b16 %v551, %v550
  %v631 = vpack.c.b16 %v553, %v552
  %v632 = vpack.c.b16 %v555, %v554
  %v633 = vpack.c.b16 %v557, %v556
  %v634 = vpack.c.b16 %v559, %v558
  %v635 = vpack.c.b16 %v561, %v560
  %v636 = vpack.c.b16 %v563, %v562
  %v637 = vpack.c.b16 %v565, %v564
  %710 = vmatprep.subr.bf16.mxu0 0
  %711 = vmatpush1.bf16.msra.mxu0 %v566
  %712 = vmatprep.subr.bf16.mxu0 0
  %713 = vmatpush1.bf16.msra.mxu0 %v567
  %714 = vmatprep.subr.bf16.mxu0 0
  %715 = vmatpush1.bf16.msra.mxu0 %v568
  %716 = vmatprep.subr.bf16.mxu0 0
  %717 = vmatpush1.bf16.msra.mxu0 %v569
  %718 = vmatprep.subr.bf16.mxu0 0
  %719 = vmatpush1.bf16.msra.mxu0 %v570
  %720 = vmatprep.subr.bf16.mxu0 0
  %721 = vmatpush1.bf16.msra.mxu0 %v571
  %722 = vmatprep.subr.bf16.mxu0 0
  %723 = vmatpush1.bf16.msra.mxu0 %v572
  %724 = vmatprep.subr.bf16.mxu0 0
  %725 = vmatpush1.bf16.msra.mxu0 %v573
  %726 = vmatprep.subr.bf16.mxu0 0
  %727 = vmatpush1.bf16.msra.mxu0 %v574
  %728 = vmatprep.subr.bf16.mxu0 0
  %729 = vmatpush1.bf16.msra.mxu0 %v575
  %730 = vmatprep.subr.bf16.mxu0 0
  %731 = vmatpush1.bf16.msra.mxu0 %v576
  %732 = vmatprep.subr.bf16.mxu0 0
  %733 = vmatpush1.bf16.msra.mxu0 %v577
  %734 = vmatprep.subr.bf16.mxu0 0
  %735 = vmatpush1.bf16.msra.mxu0 %v578
  %736 = vmatprep.subr.bf16.mxu0 0
  %737 = vmatpush1.bf16.msra.mxu0 %v579
  %738 = vmatprep.subr.bf16.mxu0 0
  %739 = vmatpush1.bf16.msra.mxu0 %v580
  %740 = vmatprep.subr.bf16.mxu0 0
  %741 = vmatpush1.bf16.msra.mxu0 %v581
  %742 = vmatprep.mubr.bf16.mxu0 %v243
  %743 = vmatmul.mubr.bf16.gmra.mrb[0].mxu0 %v242
  %v744 = vpop.f32.mrb[0].mxu0
  %v745 = vadd.f32 %v184, %v744
  %v746 = vpop.f32.mrb[0].mxu0
  %v747 = vpop.f32.mrb[0].mxu0
  %v748 = vadd.f32 %v184, %v747
  %v749 = vpop.f32.mrb[0].mxu0
  %750 = vmatprep.mubr.bf16.mxu0 %v252
  %751 = vmatmul.mubr.bf16.gmra.mrb[0].mxu0 %v251
  %v752 = vpop.f32.mrb[0].mxu0
  %v753 = vadd.f32 %v184, %v752
  %v754 = vpop.f32.mrb[0].mxu0
  %v755 = vpop.f32.mrb[0].mxu0
  %v756 = vadd.f32 %v184, %v755
  %v757 = vpop.f32.mrb[0].mxu0
  %758 = vdwg.mxu0
  %759 = vmatprep.subr.bf16.mxu0 0
  %760 = vmatpush1.bf16.msra.mxu0 %v582
  %761 = vmatprep.subr.bf16.mxu0 0
  %762 = vmatpush1.bf16.msra.mxu0 %v583
  %763 = vmatprep.subr.bf16.mxu0 0
  %764 = vmatpush1.bf16.msra.mxu0 %v584
  %765 = vmatprep.subr.bf16.mxu0 0
  %766 = vmatpush1.bf16.msra.mxu0 %v585
  %767 = vmatprep.subr.bf16.mxu0 0
  %768 = vmatpush1.bf16.msra.mxu0 %v586
  %769 = vmatprep.subr.bf16.mxu0 0
  %770 = vmatpush1.bf16.msra.mxu0 %v587
  %771 = vmatprep.subr.bf16.mxu0 0
  %772 = vmatpush1.bf16.msra.mxu0 %v588
  %773 = vmatprep.subr.bf16.mxu0 0
  %774 = vmatpush1.bf16.msra.mxu0 %v589
  %775 = vmatprep.subr.bf16.mxu0 0
  %776 = vmatpush1.bf16.msra.mxu0 %v590
  %777 = vmatprep.subr.bf16.mxu0 0
  %778 = vmatpush1.bf16.msra.mxu0 %v591
  %779 = vmatprep.subr.bf16.mxu0 0
  %780 = vmatpush1.bf16.msra.mxu0 %v592
  %781 = vmatprep.subr.bf16.mxu0 0
  %782 = vmatpush1.bf16.msra.mxu0 %v593
  %783 = vmatprep.subr.bf16.mxu0 0
  %784 = vmatpush1.bf16.msra.mxu0 %v594
  %785 = vmatprep.subr.bf16.mxu0 0
  %786 = vmatpush1.bf16.msra.mxu0 %v595
  %787 = vmatprep.subr.bf16.mxu0 0
  %788 = vmatpush1.bf16.msra.mxu0 %v596
  %789 = vmatprep.subr.bf16.mxu0 0
  %790 = vmatpush1.bf16.msra.mxu0 %v597
  %791 = vmatprep.mubr.bf16.mxu0 %v245
  %792 = vmatmul.mubr.bf16.gmra.mrb[0].mxu0 %v244
  %v793 = vpop.f32.mrb[0].mxu0
  %v794 = vadd.f32 %v745, %v793
  %v795 = vpop.f32.mrb[0].mxu0
  %v796 = vpop.f32.mrb[0].mxu0
  %v797 = vadd.f32 %v748, %v796
  %v798 = vpop.f32.mrb[0].mxu0
  %799 = vmatprep.mubr.bf16.mxu0 %v254
  %800 = vmatmul.mubr.bf16.gmra.mrb[0].mxu0 %v253
  %v801 = vpop.f32.mrb[0].mxu0
  %v802 = vadd.f32 %v753, %v801
  %v803 = vpop.f32.mrb[0].mxu0
  %v804 = vpop.f32.mrb[0].mxu0
  %v805 = vadd.f32 %v756, %v804
  %v806 = vpop.f32.mrb[0].mxu0
  %807 = vdwg.mxu0
  %808 = vmatprep.subr.bf16.mxu0 0
  %809 = vmatpush1.bf16.msra.mxu0 %v598
  %810 = vmatprep.subr.bf16.mxu0 0
  %811 = vmatpush1.bf16.msra.mxu0 %v599
  %812 = vmatprep.subr.bf16.mxu0 0
  %813 = vmatpush1.bf16.msra.mxu0 %v600
  %814 = vmatprep.subr.bf16.mxu0 0
  %815 = vmatpush1.bf16.msra.mxu0 %v601
  %816 = vmatprep.subr.bf16.mxu0 0
  %817 = vmatpush1.bf16.msra.mxu0 %v602
  %818 = vmatprep.subr.bf16.mxu0 0
  %819 = vmatpush1.bf16.msra.mxu0 %v603
  %820 = vmatprep.subr.bf16.mxu0 0
  %821 = vmatpush1.bf16.msra.mxu0 %v604
  %822 = vmatprep.subr.bf16.mxu0 0
  %823 = vmatpush1.bf16.msra.mxu0 %v605
  %824 = vmatprep.subr.bf16.mxu0 0
  %825 = vmatpush1.bf16.msra.mxu0 %v606
  %826 = vmatprep.subr.bf16.mxu0 0
  %827 = vmatpush1.bf16.msra.mxu0 %v607
  %828 = vmatprep.subr.bf16.mxu0 0
  %829 = vmatpush1.bf16.msra.mxu0 %v608
  %830 = vmatprep.subr.bf16.mxu0 0
  %831 = vmatpush1.bf16.msra.mxu0 %v609
  %832 = vmatprep.subr.bf16.mxu0 0
  %833 = vmatpush1.bf16.msra.mxu0 %v610
  %834 = vmatprep.subr.bf16.mxu0 0
  %835 = vmatpush1.bf16.msra.mxu0 %v611
  %836 = vmatprep.subr.bf16.mxu0 0
  %837 = vmatpush1.bf16.msra.mxu0 %v612
  %838 = vmatprep.subr.bf16.mxu0 0
  %839 = vmatpush1.bf16.msra.mxu0 %v613
  %840 = vmatprep.mubr.bf16.mxu0 %v247
  %841 = vmatmul.mubr.bf16.gmra.mrb[0].mxu0 %v246
  %v842 = vpop.f32.mrb[0].mxu0
  %v843 = vadd.f32 %v794, %v842
  %v844 = vpop.f32.mrb[0].mxu0
  %v845 = vpop.f32.mrb[0].mxu0
  %v846 = vadd.f32 %v797, %v845
  %v847 = vpop.f32.mrb[0].mxu0
  %848 = vmatprep.mubr.bf16.mxu0 %v256
  %849 = vmatmul.mubr.bf16.gmra.mrb[0].mxu0 %v255
  %v850 = vpop.f32.mrb[0].mxu0
  %v851 = vadd.f32 %v802, %v850
  %v852 = vpop.f32.mrb[0].mxu0
  %v853 = vpop.f32.mrb[0].mxu0
  %v854 = vadd.f32 %v805, %v853
  %v855 = vpop.f32.mrb[0].mxu0
  %856 = vdwg.mxu0
  %857 = vmatprep.subr.bf16.mxu0 0
  %858 = vmatpush1.bf16.msra.mxu0 %v614
  %859 = vmatprep.subr.bf16.mxu0 0
  %860 = vmatpush1.bf16.msra.mxu0 %v615
  %861 = vmatprep.subr.bf16.mxu0 0
  %862 = vmatpush1.bf16.msra.mxu0 %v616
  %863 = vmatprep.subr.bf16.mxu0 0
  %864 = vmatpush1.bf16.msra.mxu0 %v617
  %865 = vmatprep.subr.bf16.mxu0 0
  %866 = vmatpush1.bf16.msra.mxu0 %v618
  %867 = vmatprep.subr.bf16.mxu0 0
  %868 = vmatpush1.bf16.msra.mxu0 %v619
  %869 = vmatprep.subr.bf16.mxu0 0
  %870 = vmatpush1.bf16.msra.mxu0 %v620
  %871 = vmatprep.subr.bf16.mxu0 0
  %872 = vmatpush1.bf16.msra.mxu0 %v621
  %873 = vmatprep.subr.bf16.mxu0 0
  %874 = vmatpush1.bf16.msra.mxu0 %v622
  %875 = vmatprep.subr.bf16.mxu0 0
  %876 = vmatpush1.bf16.msra.mxu0 %v623
  %877 = vmatprep.subr.bf16.mxu0 0
  %878 = vmatpush1.bf16.msra.mxu0 %v624
  %879 = vmatprep.subr.bf16.mxu0 0
  %880 = vmatpush1.bf16.msra.mxu0 %v625
  %881 = vmatprep.subr.bf16.mxu0 0
  %882 = vmatpush1.bf16.msra.mxu0 %v626
  %883 = vmatprep.subr.bf16.mxu0 0
  %884 = vmatpush1.bf16.msra.mxu0 %v627
  %885 = vmatprep.subr.bf16.mxu0 0
  %886 = vmatpush1.bf16.msra.mxu0 %v628
  %887 = vmatprep.subr.bf16.mxu0 0
  %888 = vmatpush1.bf16.msra.mxu0 %v629
  %889 = vmatprep.mubr.bf16.mxu0 %v249
  %890 = vmatmul.mubr.bf16.gmra.mrb[0].mxu0 %v248
  %v891 = vpop.f32.mrb[0].mxu0
  %v892 = vadd.f32 %v843, %v891
  %v893 = vpop.f32.mrb[0].mxu0
  %v894 = vpop.f32.mrb[0].mxu0
  %v895 = vadd.f32 %v846, %v894
  %v896 = vpop.f32.mrb[0].mxu0
  %897 = vmatprep.mubr.bf16.mxu0 %v258
  %898 = vmatmul.mubr.bf16.gmra.mrb[0].mxu0 %v257
  %v899 = vpop.f32.mrb[0].mxu0
  %v900 = vadd.f32 %v851, %v899
  %v901 = vpop.f32.mrb[0].mxu0
  %v902 = vpop.f32.mrb[0].mxu0
  %v903 = vadd.f32 %v854, %v902
  %v904 = vpop.f32.mrb[0].mxu0
  %905 = vdwg.mxu0
  %906 = vmatprep.subr.bf16.mxu0 0
  %907 = vmatpush1.bf16.msra.mxu0 %v630
  %908 = vmatprep.subr.bf16.mxu0 0
  %909 = vmatpush1.bf16.msra.mxu0 %v631
  %910 = vmatprep.subr.bf16.mxu0 0
  %911 = vmatpush1.bf16.msra.mxu0 %v632
  %912 = vmatprep.subr.bf16.mxu0 0
  %913 = vmatpush1.bf16.msra.mxu0 %v633
  %914 = vmatprep.subr.bf16.mxu0 0
  %915 = vmatpush1.bf16.msra.mxu0 %v634
  %916 = vmatprep.subr.bf16.mxu0 0
  %917 = vmatpush1.bf16.msra.mxu0 %v635
  %918 = vmatprep.subr.bf16.mxu0 0
  %919 = vmatpush1.bf16.msra.mxu0 %v636
  %920 = vmatprep.subr.bf16.mxu0 0
  %921 = vmatpush1.bf16.msra.mxu0 %v637
  %922 = vmatprep.subr.bf16.mxu0 0
  %923 = vmatpush1.bf16.msra.mxu0 0
  %924 = vmatprep.subr.bf16.mxu0 0
  %925 = vmatpush1.bf16.msra.mxu0 0
  %926 = vmatprep.subr.bf16.mxu0 0
  %927 = vmatpush1.bf16.msra.mxu0 0
  %928 = vmatprep.subr.bf16.mxu0 0
  %929 = vmatpush1.bf16.msra.mxu0 0
  %930 = vmatprep.subr.bf16.mxu0 0
  %931 = vmatpush1.bf16.msra.mxu0 0
  %932 = vmatprep.subr.bf16.mxu0 0
  %933 = vmatpush1.bf16.msra.mxu0 0
  %934 = vmatprep.subr.bf16.mxu0 0
  %935 = vmatpush1.bf16.msra.mxu0 0
  %936 = vmatprep.subr.bf16.mxu0 0
  %937 = vmatpush1.bf16.msra.mxu0 0
  %938 = vmatprep.mubr.bf16.mxu0 0
  %939 = vmatmul.mubr.bf16.gmra.mrb[0].mxu0 %v250
  %v940 = vpop.f32.mrb[0].mxu0
  %v941 = vadd.f32 %v892, %v940
  %v942 = vpop.f32.mrb[0].mxu0
  %v943 = vpop.f32.mrb[0].mxu0
  %v944 = vadd.f32 %v895, %v943
  %v945 = vpop.f32.mrb[0].mxu0
  %946 = vmatprep.mubr.bf16.mxu0 0
  %947 = vmatmul.mubr.bf16.gmra.mrb[0].mxu0 %v259
  %v948 = vpop.f32.mrb[0].mxu0
  %v949 = vadd.f32 %v900, %v948
  %v950 = vpop.f32.mrb[0].mxu0
  %v951 = vpop.f32.mrb[0].mxu0
  %v952 = vadd.f32 %v903, %v951
  %v953 = vpop.f32.mrb[0].mxu0
  %954 = vdwg.mxu0
  %v955 = vmax.f32 %v941, 0.0
  %v956 = vmax.f32 %v944, 0.0
  %v957 = vmax.f32 %v949, 0.0
  %v958 = vmax.f32 %v952, 0.0
  %v959 = vpack.c.bf16 %v956, %v955
  %v960 = vpack.c.bf16 %v958, %v957
  %v963 = vunpack.c.l.b16 %v959
  %v964 = vunpack.c.h.b16 %v959
  %v965 = vunpack.c.l.b16 %v960
  %v966 = vunpack.c.h.b16 %v960
  %v967 = vpack.c.b16 %v963, %v963
  %v968 = vpack.c.b16 %v964, %v964
  %v969 = vpack.c.b16 %v965, %v965
  %v970 = vpack.c.b16 %v966, %v966
  %975 = vst [vmem:[%s3] sm:$0xf] %v967
  %976 = vst [vmem:[%s3 + $0x4] sm:$0xf] %v968
  %977 = vst [vmem:[%s3 + $0x8] sm:$0xf] %v969
  %978 = vst [vmem:[%s3 + $0xc] sm:$0xf] %v970
  // Predicated region
  $region14: #{fwd.29} parent=0 // pred_check
    _
  $region15: #{fwd.29} parent=0 // pred_check_branch
    %980 = sbr.rel (0) target = $region17
  $region16: #{fwd.29} parent=0 // pred_region
    _
  $region17: #{fwd.29} parent=0 // pred_fallthru
    _
  // Predicated region
  $region18: #{fwd.29} parent=0 // pred_check
    _
  $region19: #{fwd.29} parent=0 // pred_check_branch
    %982 = sbr.rel (0) target = $region21
  $region20: #{fwd.29} parent=0 // pred_region
    _
  $region21: #{fwd.29} parent=0 // pred_fallthru
    _

// kernel: fwd.37
$region0: #{fwd.37}
  #allocation0 [shape = 'u32[]', space=smem, size = 0x4, offset = 0x4, fixed_abs, tag = 'smem constant byte address 0x4 - core index']
  #allocation1 [shape = 'u32[144,128]{1,0:T(1,128)}', space=vmem, size = 0x12000, scoped, tag = 'internal scratch']
  %s0 = inlined_call_operand.vmem [shape: bf16[32,1152], index: 0, kind: input, shape index: {}]
  %s1 = inlined_call_operand.vmem [shape: bf16[1152,256], index: 1, kind: input, shape index: {}]
  %s2 = inlined_call_operand.vmem [shape: f32[1,256], index: 2, kind: input, shape index: {}]
  %s3 = inlined_call_operand.vmem [shape: bf16[32,256], index: 3, kind: output, shape index: {}]
  %s4 = sld [smem:[#allocation0]]
  $region22: #{fwd.37} parent=0
    _
  %s6 = ssub.s32 1, %s4
  %s7 = scalar_select 0, %s6, %s4
  // Predicated region
  $region2: #{fwd.37} parent=0 // pred_check
    _
  $region3: #{fwd.37} parent=0 // pred_check_branch
    %9 = sbr.rel (0) target = $region5
  $region4: #{fwd.37} parent=0 // pred_region
    _
  $region5: #{fwd.37} parent=0 // pred_fallthru
    _
  // Predicated region
  $region6: #{fwd.37} parent=0 // pred_check
    _
  $region7: #{fwd.37} parent=0 // pred_check_branch
    %11 = sbr.rel (0) target = $region9
  $region8: #{fwd.37} parent=0 // pred_region
    _
  $region9: #{fwd.37} parent=0 // pred_fallthru
    _
  // Predicated region
  $region10: #{fwd.37} parent=0 // pred_check
    _
  $region11: #{fwd.37} parent=0 // pred_check_branch
    %13 = sbr.rel (0) target = $region13
  $region12: #{fwd.37} parent=0 // pred_region
    _
  $region13: #{fwd.37} parent=0 // pred_fallthru
    _
  %v15 = vld [vmem:[%s0] sm:$0xff]
  %v16 = vld [vmem:[%s0 + $0x8] sm:$0xff]
  %v17 = vld [vmem:[%s0 + $0x10] sm:$0xff]
  %v18 = vld [vmem:[%s0 + $0x18] sm:$0xff]
  %v19 = vld [vmem:[%s0 + $0x20] sm:$0xf]
  %v20 = vld [vmem:[%s0 + $0x24] sm:$0xff]
  %v21 = vld [vmem:[%s0 + $0x2c] sm:$0xff]
  %v22 = vld [vmem:[%s0 + $0x34] sm:$0xff]
  %v23 = vld [vmem:[%s0 + $0x3c] sm:$0xff]
  %v24 = vld [vmem:[%s0 + $0x44] sm:$0xf]
  %v25 = vld [vmem:[%s0 + $0x48] sm:$0xff]
  %v26 = vld [vmem:[%s0 + $0x50] sm:$0xff]
  %v27 = vld [vmem:[%s0 + $0x58] sm:$0xff]
  %v28 = vld [vmem:[%s0 + $0x60] sm:$0xff]
  %v29 = vld [vmem:[%s0 + $0x68] sm:$0xf]
  %v30 = vld [vmem:[%s0 + $0x6c] sm:$0xff]
  %v31 = vld [vmem:[%s0 + $0x74] sm:$0xff]
  %v32 = vld [vmem:[%s0 + $0x7c] sm:$0xff]
  %v33 = vld [vmem:[%s0 + $0x84] sm:$0xff]
  %v34 = vld [vmem:[%s0 + $0x8c] sm:$0xf]
  %v35 = vld [vmem:[%s1] sm:$0xff]
  %v36 = vld [vmem:[%s1 + $0x8] sm:$0xff]
  %v37 = vld [vmem:[%s1 + $0x10] sm:$0xff]
  %v38 = vld [vmem:[%s1 + $0x18] sm:$0xff]
  %v39 = vld [vmem:[%s1 + $0x20] sm:$0xff]
  %v40 = vld [vmem:[%s1 + $0x28] sm:$0xff]
  %v41 = vld [vmem:[%s1 + $0x30] sm:$0xff]
  %v42 = vld [vmem:[%s1 + $0x38] sm:$0xff]
  %v43 = vld [vmem:[%s1 + $0x40] sm:$0xff]
  %v44 = vld [vmem:[%s1 + $0x48] sm:$0xff]
  %v45 = vld [vmem:[%s1 + $0x50] sm:$0xff]
  %v46 = vld [vmem:[%s1 + $0x58] sm:$0xff]
  %v47 = vld [vmem:[%s1 + $0x60] sm:$0xff]
  %v48 = vld [vmem:[%s1 + $0x68] sm:$0xff]
  %v49 = vld [vmem:[%s1 + $0x70] sm:$0xff]
  %v50 = vld [vmem:[%s1 + $0x78] sm:$0xff]
  %v51 = vld [vmem:[%s1 + $0x80] sm:$0xff]
  %v52 = vld [vmem:[%s1 + $0x88] sm:$0xff]
  %v53 = vld [vmem:[%s1 + $0x90] sm:$0xff]
  %v54 = vld [vmem:[%s1 + $0x98] sm:$0xff]
  %v55 = vld [vmem:[%s1 + $0xa0] sm:$0xff]
  %v56 = vld [vmem:[%s1 + $0xa8] sm:$0xff]
  %v57 = vld [vmem:[%s1 + $0xb0] sm:$0xff]
  %v58 = vld [vmem:[%s1 + $0xb8] sm:$0xff]
  %v59 = vld [vmem:[%s1 + $0xc0] sm:$0xff]
  %v60 = vld [vmem:[%s1 + $0xc8] sm:$0xff]
  %v61 = vld [vmem:[%s1 + $0xd0] sm:$0xff]
  %v62 = vld [vmem:[%s1 + $0xd8] sm:$0xff]
  %v63 = vld [vmem:[%s1 + $0xe0] sm:$0xff]
  %v64 = vld [vmem:[%s1 + $0xe8] sm:$0xff]
  %v65 = vld [vmem:[%s1 + $0xf0] sm:$0xff]
  %v66 = vld [vmem:[%s1 + $0xf8] sm:$0xff]
  %v67 = vld [vmem:[%s1 + $0x100] sm:$0xff]
  %v68 = vld [vmem:[%s1 + $0x108] sm:$0xff]
  %v69 = vld [vmem:[%s1 + $0x110] sm:$0xff]
  %v70 = vld [vmem:[%s1 + $0x118] sm:$0xff]
  %v71 = vld [vmem:[%s1 + $0x120] sm:$0xff]
  %v72 = vld [vmem:[%s1 + $0x128] sm:$0xff]
  %v73 = vld [vmem:[%s1 + $0x130] sm:$0xff]
  %v74 = vld [vmem:[%s1 + $0x138] sm:$0xff]
  %v75 = vld [vmem:[%s1 + $0x140] sm:$0xff]
  %v76 = vld [vmem:[%s1 + $0x148] sm:$0xff]
  %v77 = vld [vmem:[%s1 + $0x150] sm:$0xff]
  %v78 = vld [vmem:[%s1 + $0x158] sm:$0xff]
  %v79 = vld [vmem:[%s1 + $0x160] sm:$0xff]
  %v80 = vld [vmem:[%s1 + $0x168] sm:$0xff]
  %v81 = vld [vmem:[%s1 + $0x170] sm:$0xff]
  %v82 = vld [vmem:[%s1 + $0x178] sm:$0xff]
  %v83 = vld [vmem:[%s1 + $0x180] sm:$0xff]
  %v84 = vld [vmem:[%s1 + $0x188] sm:$0xff]
  %v85 = vld [vmem:[%s1 + $0x190] sm:$0xff]
  %v86 = vld [vmem:[%s1 + $0x198] sm:$0xff]
  %v87 = vld [vmem:[%s1 + $0x1a0] sm:$0xff]
  %v88 = vld [vmem:[%s1 + $0x1a8] sm:$0xff]
  %v89 = vld [vmem:[%s1 + $0x1b0] sm:$0xff]
  %v90 = vld [vmem:[%s1 + $0x1b8] sm:$0xff]
  %v91 = vld [vmem:[%s1 + $0x1c0] sm:$0xff]
  %v92 = vld [vmem:[%s1 + $0x1c8] sm:$0xff]
  %v93 = vld [vmem:[%s1 + $0x1d0] sm:$0xff]
  %v94 = vld [vmem:[%s1 + $0x1d8] sm:$0xff]
  %v95 = vld [vmem:[%s1 + $0x1e0] sm:$0xff]
  %v96 = vld [vmem:[%s1 + $0x1e8] sm:$0xff]
  %v97 = vld [vmem:[%s1 + $0x1f0] sm:$0xff]
  %v98 = vld [vmem:[%s1 + $0x1f8] sm:$0xff]
  %v99 = vld [vmem:[%s1 + $0x200] sm:$0xff]
  %v100 = vld [vmem:[%s1 + $0x208] sm:$0xff]
  %v101 = vld [vmem:[%s1 + $0x210] sm:$0xff]
  %v102 = vld [vmem:[%s1 + $0x218] sm:$0xff]
  %v103 = vld [vmem:[%s1 + $0x220] sm:$0xff]
  %v104 = vld [vmem:[%s1 + $0x228] sm:$0xff]
  %v105 = vld [vmem:[%s1 + $0x230] sm:$0xff]
  %v106 = vld [vmem:[%s1 + $0x238] sm:$0xff]
  %v107 = vld [vmem:[%s1 + $0x240] sm:$0xff]
  %v108 = vld [vmem:[%s1 + $0x248] sm:$0xff]
  %v109 = vld [vmem:[%s1 + $0x250] sm:$0xff]
  %v110 = vld [vmem:[%s1 + $0x258] sm:$0xff]
  %v111 = vld [vmem:[%s1 + $0x260] sm:$0xff]
  %v112 = vld [vmem:[%s1 + $0x268] sm:$0xff]
  %v113 = vld [vmem:[%s1 + $0x270] sm:$0xff]
  %v114 = vld [vmem:[%s1 + $0x278] sm:$0xff]
  %v115 = vld [vmem:[%s1 + $0x280] sm:$0xff]
  %v116 = vld [vmem:[%s1 + $0x288] sm:$0xff]
  %v117 = vld [vmem:[%s1 + $0x290] sm:$0xff]
  %v118 = vld [vmem:[%s1 + $0x298] sm:$0xff]
  %v119 = vld [vmem:[%s1 + $0x2a0] sm:$0xff]
  %v120 = vld [vmem:[%s1 + $0x2a8] sm:$0xff]
  %v121 = vld [vmem:[%s1 + $0x2b0] sm:$0xff]
  %v122 = vld [vmem:[%s1 + $0x2b8] sm:$0xff]
  %v123 = vld [vmem:[%s1 + $0x2c0] sm:$0xff]
  %v124 = vld [vmem:[%s1 + $0x2c8] sm:$0xff]
  %v125 = vld [vmem:[%s1 + $0x2d0] sm:$0xff]
  %v126 = vld [vmem:[%s1 + $0x2d8] sm:$0xff]
  %v127 = vld [vmem:[%s1 + $0x2e0] sm:$0xff]
  %v128 = vld [vmem:[%s1 + $0x2e8] sm:$0xff]
  %v129 = vld [vmem:[%s1 + $0x2f0] sm:$0xff]
  %v130 = vld [vmem:[%s1 + $0x2f8] sm:$0xff]
  %v131 = vld [vmem:[%s1 + $0x300] sm:$0xff]
  %v132 = vld [vmem:[%s1 + $0x308] sm:$0xff]
  %v133 = vld [vmem:[%s1 + $0x310] sm:$0xff]
  %v134 = vld [vmem:[%s1 + $0x318] sm:$0xff]
  %v135 = vld [vmem:[%s1 + $0x320] sm:$0xff]
  %v136 = vld [vmem:[%s1 + $0x328] sm:$0xff]
  %v137 = vld [vmem:[%s1 + $0x330] sm:$0xff]
  %v138 = vld [vmem:[%s1 + $0x338] sm:$0xff]
  %v139 = vld [vmem:[%s1 + $0x340] sm:$0xff]
  %v140 = vld [vmem:[%s1 + $0x348] sm:$0xff]
  %v141 = vld [vmem:[%s1 + $0x350] sm:$0xff]
  %v142 = vld [vmem:[%s1 + $0x358] sm:$0xff]
  %v143 = vld [vmem:[%s1 + $0x360] sm:$0xff]
  %v144 = vld [vmem:[%s1 + $0x368] sm:$0xff]
  %v145 = vld [vmem:[%s1 + $0x370] sm:$0xff]
  %v146 = vld [vmem:[%s1 + $0x378] sm:$0xff]
  %v147 = vld [vmem:[%s1 + $0x380] sm:$0xff]
  %v148 = vld [vmem:[%s1 + $0x388] sm:$0xff]
  %v149 = vld [vmem:[%s1 + $0x390] sm:$0xff]
  %v150 = vld [vmem:[%s1 + $0x398] sm:$0xff]
  %v151 = vld [vmem:[%s1 + $0x3a0] sm:$0xff]
  %v152 = vld [vmem:[%s1 + $0x3a8] sm:$0xff]
  %v153 = vld [vmem:[%s1 + $0x3b0] sm:$0xff]
  %v154 = vld [vmem:[%s1 + $0x3b8] sm:$0xff]
  %v155 = vld [vmem:[%s1 + $0x3c0] sm:$0xff]
  %v156 = vld [vmem:[%s1 + $0x3c8] sm:$0xff]
  %v157 = vld [vmem:[%s1 + $0x3d0] sm:$0xff]
  %v158 = vld [vmem:[%s1 + $0x3d8] sm:$0xff]
  %v159 = vld [vmem:[%s1 + $0x3e0] sm:$0xff]
  %v160 = vld [vmem:[%s1 + $0x3e8] sm:$0xff]
  %v161 = vld [vmem:[%s1 + $0x3f0] sm:$0xff]
  %v162 = vld [vmem:[%s1 + $0x3f8] sm:$0xff]
  %v163 = vld [vmem:[%s1 + $0x400] sm:$0xff]
  %v164 = vld [vmem:[%s1 + $0x408] sm:$0xff]
  %v165 = vld [vmem:[%s1 + $0x410] sm:$0xff]
  %v166 = vld [vmem:[%s1 + $0x418] sm:$0xff]
  %v167 = vld [vmem:[%s1 + $0x420] sm:$0xff]
  %v168 = vld [vmem:[%s1 + $0x428] sm:$0xff]
  %v169 = vld [vmem:[%s1 + $0x430] sm:$0xff]
  %v170 = vld [vmem:[%s1 + $0x438] sm:$0xff]
  %v171 = vld [vmem:[%s1 + $0x440] sm:$0xff]
  %v172 = vld [vmem:[%s1 + $0x448] sm:$0xff]
  %v173 = vld [vmem:[%s1 + $0x450] sm:$0xff]
  %v174 = vld [vmem:[%s1 + $0x458] sm:$0xff]
  %v175 = vld [vmem:[%s1 + $0x460] sm:$0xff]
  %v176 = vld [vmem:[%s1 + $0x468] sm:$0xff]
  %v177 = vld [vmem:[%s1 + $0x470] sm:$0xff]
  %v178 = vld [vmem:[%s1 + $0x478] sm:$0xff]
  %v179 = vld [vmem:[%s2] sm:$0x3]
  %v181 = vlaneseq
  %v182 = vshrl.u32 %v181, 7
  %v183 = vsub.s32 0, %v182
  %v184 = vrot.slane %v179, %v183
  %v185 = vlaneseq
  %v186 = vshrl.u32 %v185, 7
  %v187 = vsub.s32 1, %v186
  %v188 = vrot.slane %v179, %v187
  %v211 = vunpack.c.l.b16 %v15
  %v212 = vunpack.c.h.b16 %v15
  %v213 = vunpack.c.l.b16 %v16
  %v214 = vunpack.c.h.b16 %v16
  %v215 = vunpack.c.l.b16 %v17
  %v216 = vunpack.c.h.b16 %v17
  %v217 = vunpack.c.l.b16 %v18
  %v218 = vunpack.c.h.b16 %v18
  %v219 = vunpack.c.l.b16 %v19
  %v220 = vunpack.c.l.b16 %v20
  %v221 = vunpack.c.h.b16 %v20
  %v222 = vunpack.c.l.b16 %v21
  %v223 = vunpack.c.h.b16 %v21
  %v224 = vunpack.c.l.b16 %v22
  %v225 = vunpack.c.h.b16 %v22
  %v226 = vunpack.c.l.b16 %v23
  %v227 = vunpack.c.h.b16 %v23
  %v228 = vunpack.c.l.b16 %v24
  %v229 = vunpack.c.l.b16 %v25
  %v230 = vunpack.c.h.b16 %v25
  %v231 = vunpack.c.l.b16 %v26
  %v232 = vunpack.c.h.b16 %v26
  %v233 = vunpack.c.l.b16 %v27
  %v234 = vunpack.c.h.b16 %v27
  %v235 = vunpack.c.l.b16 %v28
  %v236 = vunpack.c.h.b16 %v28
  %v237 = vunpack.c.l.b16 %v29
  %v238 = vunpack.c.l.b16 %v30
  %v239 = vunpack.c.h.b16 %v30
  %v240 = vunpack.c.l.b16 %v31
  %v241 = vunpack.c.h.b16 %v31
  %v242 = vunpack.c.l.b16 %v32
  %v243 = vunpack.c.h.b16 %v32
  %v244 = vunpack.c.l.b16 %v33
  %v245 = vunpack.c.h.b16 %v33
  %v246 = vunpack.c.l.b16 %v34
  %v247 = vpack.c.b16 %v220, %v211
  %v248 = vpack.c.b16 %v221, %v212
  %v249 = vpack.c.b16 %v222, %v213
  %v250 = vpack.c.b16 %v223, %v214
  %v251 = vpack.c.b16 %v224, %v215
  %v252 = vpack.c.b16 %v225, %v216
  %v253 = vpack.c.b16 %v226, %v217
  %v254 = vpack.c.b16 %v227, %v218
  %v255 = vpack.c.b16 %v228, %v219
  %v256 = vpack.c.b16 %v238, %v229
  %v257 = vpack.c.b16 %v239, %v230
  %v258 = vpack.c.b16 %v240, %v231
  %v259 = vpack.c.b16 %v241, %v232
  %v260 = vpack.c.b16 %v242, %v233
  %v261 = vpack.c.b16 %v243, %v234
  %v262 = vpack.c.b16 %v244, %v235
  %v263 = vpack.c.b16 %v245, %v236
  %v264 = vpack.c.b16 %v246, %v237
  %v427 = vunpack.c.l.b16 %v35
  %v428 = vunpack.c.h.b16 %v35
  %v429 = vunpack.c.l.b16 %v36
  %v430 = vunpack.c.h.b16 %v36
  %v431 = vunpack.c.l.b16 %v37
  %v432 = vunpack.c.h.b16 %v37
  %v433 = vunpack.c.l.b16 %v38
  %v434 = vunpack.c.h.b16 %v38
  %v435 = vunpack.c.l.b16 %v39
  %v436 = vunpack.c.h.b16 %v39
  %v437 = vunpack.c.l.b16 %v40
  %v438 = vunpack.c.h.b16 %v40
  %v439 = vunpack.c.l.b16 %v41
  %v440 = vunpack.c.h.b16 %v41
  %v441 = vunpack.c.l.b16 %v42
  %v442 = vunpack.c.h.b16 %v42
  %v443 = vunpack.c.l.b16 %v43
  %v444 = vunpack.c.h.b16 %v43
  %v445 = vunpack.c.l.b16 %v44
  %v446 = vunpack.c.h.b16 %v44
  %v447 = vunpack.c.l.b16 %v45
  %v448 = vunpack.c.h.b16 %v45
  %v449 = vunpack.c.l.b16 %v46
  %v450 = vunpack.c.h.b16 %v46
  %v451 = vunpack.c.l.b16 %v47
  %v452 = vunpack.c.h.b16 %v47
  %v453 = vunpack.c.l.b16 %v48
  %v454 = vunpack.c.h.b16 %v48
  %v455 = vunpack.c.l.b16 %v49
  %v456 = vunpack.c.h.b16 %v49
  %v457 = vunpack.c.l.b16 %v50
  %v458 = vunpack.c.h.b16 %v50
  %v459 = vunpack.c.l.b16 %v51
  %v460 = vunpack.c.h.b16 %v51
  %v461 = vunpack.c.l.b16 %v52
  %v462 = vunpack.c.h.b16 %v52
  %v463 = vunpack.c.l.b16 %v53
  %v464 = vunpack.c.h.b16 %v53
  %v465 = vunpack.c.l.b16 %v54
  %v466 = vunpack.c.h.b16 %v54
  %v467 = vunpack.c.l.b16 %v55
  %v468 = vunpack.c.h.b16 %v55
  %v469 = vunpack.c.l.b16 %v56
  %v470 = vunpack.c.h.b16 %v56
  %v471 = vunpack.c.l.b16 %v57
  %v472 = vunpack.c.h.b16 %v57
  %v473 = vunpack.c.l.b16 %v58
  %v474 = vunpack.c.h.b16 %v58
  %v475 = vunpack.c.l.b16 %v59
  %v476 = vunpack.c.h.b16 %v59
  %v477 = vunpack.c.l.b16 %v60
  %v478 = vunpack.c.h.b16 %v60
  %v479 = vunpack.c.l.b16 %v61
  %v480 = vunpack.c.h.b16 %v61
  %v481 = vunpack.c.l.b16 %v62
  %v482 = vunpack.c.h.b16 %v62
  %v483 = vunpack.c.l.b16 %v63
  %v484 = vunpack.c.h.b16 %v63
  %v485 = vunpack.c.l.b16 %v64
  %v486 = vunpack.c.h.b16 %v64
  %v487 = vunpack.c.l.b16 %v65
  %v488 = vunpack.c.h.b16 %v65
  %v489 = vunpack.c.l.b16 %v66
  %v490 = vunpack.c.h.b16 %v66
  %v491 = vunpack.c.l.b16 %v67
  %v492 = vunpack.c.h.b16 %v67
  %v493 = vunpack.c.l.b16 %v68
  %v494 = vunpack.c.h.b16 %v68
  %v495 = vunpack.c.l.b16 %v69
  %v496 = vunpack.c.h.b16 %v69
  %v497 = vunpack.c.l.b16 %v70
  %v498 = vunpack.c.h.b16 %v70
  %v499 = vunpack.c.l.b16 %v71
  %v500 = vunpack.c.h.b16 %v71
  %v501 = vunpack.c.l.b16 %v72
  %v502 = vunpack.c.h.b16 %v72
  %v503 = vunpack.c.l.b16 %v73
  %v504 = vunpack.c.h.b16 %v73
  %v505 = vunpack.c.l.b16 %v74
  %v506 = vunpack.c.h.b16 %v74
  %v507 = vunpack.c.l.b16 %v75
  %v508 = vunpack.c.h.b16 %v75
  %v509 = vunpack.c.l.b16 %v76
  %v510 = vunpack.c.h.b16 %v76
  %v511 = vunpack.c.l.b16 %v77
  %v512 = vunpack.c.h.b16 %v77
  %v513 = vunpack.c.l.b16 %v78
  %v514 = vunpack.c.h.b16 %v78
  %v515 = vunpack.c.l.b16 %v79
  %v516 = vunpack.c.h.b16 %v79
  %v517 = vunpack.c.l.b16 %v80
  %v518 = vunpack.c.h.b16 %v80
  %v519 = vunpack.c.l.b16 %v81
  %v520 = vunpack.c.h.b16 %v81
  %v521 = vunpack.c.l.b16 %v82
  %v522 = vunpack.c.h.b16 %v82
  %v523 = vunpack.c.l.b16 %v83
  %v524 = vunpack.c.h.b16 %v83
  %v525 = vunpack.c.l.b16 %v84
  %v526 = vunpack.c.h.b16 %v84
  %v527 = vunpack.c.l.b16 %v85
  %v528 = vunpack.c.h.b16 %v85
  %v529 = vunpack.c.l.b16 %v86
  %v530 = vunpack.c.h.b16 %v86
  %v531 = vunpack.c.l.b16 %v87
  %v532 = vunpack.c.h.b16 %v87
  %v533 = vunpack.c.l.b16 %v88
  %v534 = vunpack.c.h.b16 %v88
  %v535 = vunpack.c.l.b16 %v89
  %v536 = vunpack.c.h.b16 %v89
  %v537 = vunpack.c.l.b16 %v90
  %v538 = vunpack.c.h.b16 %v90
  %v539 = vunpack.c.l.b16 %v91
  %v540 = vunpack.c.h.b16 %v91
  %v541 = vunpack.c.l.b16 %v92
  %v542 = vunpack.c.h.b16 %v92
  %v543 = vunpack.c.l.b16 %v93
  %v544 = vunpack.c.h.b16 %v93
  %v545 = vunpack.c.l.b16 %v94
  %v546 = vunpack.c.h.b16 %v94
  %v547 = vunpack.c.l.b16 %v95
  %v548 = vunpack.c.h.b16 %v95
  %v549 = vunpack.c.l.b16 %v96
  %v550 = vunpack.c.h.b16 %v96
  %v551 = vunpack.c.l.b16 %v97
  %v552 = vunpack.c.h.b16 %v97
  %v553 = vunpack.c.l.b16 %v98
  %v554 = vunpack.c.h.b16 %v98
  %v555 = vunpack.c.l.b16 %v99
  %v556 = vunpack.c.h.b16 %v99
  %v557 = vunpack.c.l.b16 %v100
  %v558 = vunpack.c.h.b16 %v100
  %v559 = vunpack.c.l.b16 %v101
  %v560 = vunpack.c.h.b16 %v101
  %v561 = vunpack.c.l.b16 %v102
  %v562 = vunpack.c.h.b16 %v102
  %v563 = vunpack.c.l.b16 %v103
  %v564 = vunpack.c.h.b16 %v103
  %v565 = vunpack.c.l.b16 %v104
  %v566 = vunpack.c.h.b16 %v104
  %v567 = vunpack.c.l.b16 %v105
  %v568 = vunpack.c.h.b16 %v105
  %v569 = vunpack.c.l.b16 %v106
  %v570 = vunpack.c.h.b16 %v106
  %v571 = vunpack.c.l.b16 %v107
  %v572 = vunpack.c.h.b16 %v107
  %v573 = vunpack.c.l.b16 %v108
  %v574 = vunpack.c.h.b16 %v108
  %v575 = vunpack.c.l.b16 %v109
  %v576 = vunpack.c.h.b16 %v109
  %v577 = vunpack.c.l.b16 %v110
  %v578 = vunpack.c.h.b16 %v110
  %v579 = vunpack.c.l.b16 %v111
  %v580 = vunpack.c.h.b16 %v111
  %v581 = vunpack.c.l.b16 %v112
  %v582 = vunpack.c.h.b16 %v112
  %v583 = vunpack.c.l.b16 %v113
  %v584 = vunpack.c.h.b16 %v113
  %v585 = vunpack.c.l.b16 %v114
  %v586 = vunpack.c.h.b16 %v114
  %v587 = vunpack.c.l.b16 %v115
  %v588 = vunpack.c.h.b16 %v115
  %v589 = vunpack.c.l.b16 %v116
  %v590 = vunpack.c.h.b16 %v116
  %v591 = vunpack.c.l.b16 %v117
  %v592 = vunpack.c.h.b16 %v117
  %v593 = vunpack.c.l.b16 %v118
  %v594 = vunpack.c.h.b16 %v118
  %v595 = vunpack.c.l.b16 %v119
  %v596 = vunpack.c.h.b16 %v119
  %v597 = vunpack.c.l.b16 %v120
  %v598 = vunpack.c.h.b16 %v120
  %v599 = vunpack.c.l.b16 %v121
  %v600 = vunpack.c.h.b16 %v121
  %v601 = vunpack.c.l.b16 %v122
  %v602 = vunpack.c.h.b16 %v122
  %v603 = vunpack.c.l.b16 %v123
  %v604 = vunpack.c.h.b16 %v123
  %v605 = vunpack.c.l.b16 %v124
  %v606 = vunpack.c.h.b16 %v124
  %v607 = vunpack.c.l.b16 %v125
  %v608 = vunpack.c.h.b16 %v125
  %v609 = vunpack.c.l.b16 %v126
  %v610 = vunpack.c.h.b16 %v126
  %v611 = vunpack.c.l.b16 %v127
  %v612 = vunpack.c.h.b16 %v127
  %v613 = vunpack.c.l.b16 %v128
  %v614 = vunpack.c.h.b16 %v128
  %v615 = vunpack.c.l.b16 %v129
  %v616 = vunpack.c.h.b16 %v129
  %v617 = vunpack.c.l.b16 %v130
  %v618 = vunpack.c.h.b16 %v130
  %v619 = vunpack.c.l.b16 %v131
  %v620 = vunpack.c.h.b16 %v131
  %v621 = vunpack.c.l.b16 %v132
  %v622 = vunpack.c.h.b16 %v132
  %v623 = vunpack.c.l.b16 %v133
  %v624 = vunpack.c.h.b16 %v133
  %v625 = vunpack.c.l.b16 %v134
  %v626 = vunpack.c.h.b16 %v134
  %v627 = vunpack.c.l.b16 %v135
  %v628 = vunpack.c.h.b16 %v135
  %v629 = vunpack.c.l.b16 %v136
  %v630 = vunpack.c.h.b16 %v136
  %v631 = vunpack.c.l.b16 %v137
  %v632 = vunpack.c.h.b16 %v137
  %v633 = vunpack.c.l.b16 %v138
  %v634 = vunpack.c.h.b16 %v138
  %v635 = vunpack.c.l.b16 %v139
  %v636 = vunpack.c.h.b16 %v139
  %v637 = vunpack.c.l.b16 %v140
  %v638 = vunpack.c.h.b16 %v140
  %v639 = vunpack.c.l.b16 %v141
  %v640 = vunpack.c.h.b16 %v141
  %v641 = vunpack.c.l.b16 %v142
  %v642 = vunpack.c.h.b16 %v142
  %v643 = vunpack.c.l.b16 %v143
  %v644 = vunpack.c.h.b16 %v143
  %v645 = vunpack.c.l.b16 %v144
  %v646 = vunpack.c.h.b16 %v144
  %v647 = vunpack.c.l.b16 %v145
  %v648 = vunpack.c.h.b16 %v145
  %v649 = vunpack.c.l.b16 %v146
  %v650 = vunpack.c.h.b16 %v146
  %v651 = vunpack.c.l.b16 %v147
  %v652 = vunpack.c.h.b16 %v147
  %v653 = vunpack.c.l.b16 %v148
  %v654 = vunpack.c.h.b16 %v148
  %v655 = vunpack.c.l.b16 %v149
  %v656 = vunpack.c.h.b16 %v149
  %v657 = vunpack.c.l.b16 %v150
  %v658 = vunpack.c.h.b16 %v150
  %v659 = vunpack.c.l.b16 %v151
  %v660 = vunpack.c.h.b16 %v151
  %v661 = vunpack.c.l.b16 %v152
  %v662 = vunpack.c.h.b16 %v152
  %v663 = vunpack.c.l.b16 %v153
  %v664 = vunpack.c.h.b16 %v153
  %v665 = vunpack.c.l.b16 %v154
  %v666 = vunpack.c.h.b16 %v154
  %v667 = vunpack.c.l.b16 %v155
  %v668 = vunpack.c.h.b16 %v155
  %v669 = vunpack.c.l.b16 %v156
  %v670 = vunpack.c.h.b16 %v156
  %v671 = vunpack.c.l.b16 %v157
  %v672 = vunpack.c.h.b16 %v157
  %v673 = vunpack.c.l.b16 %v158
  %v674 = vunpack.c.h.b16 %v158
  %v675 = vunpack.c.l.b16 %v159
  %v676 = vunpack.c.h.b16 %v159
  %v677 = vunpack.c.l.b16 %v160
  %v678 = vunpack.c.h.b16 %v160
  %v679 = vunpack.c.l.b16 %v161
  %v680 = vunpack.c.h.b16 %v161
  %v681 = vunpack.c.l.b16 %v162
  %v682 = vunpack.c.h.b16 %v162
  %v683 = vunpack.c.l.b16 %v163
  %v684 = vunpack.c.h.b16 %v163
  %v685 = vunpack.c.l.b16 %v164
  %v686 = vunpack.c.h.b16 %v164
  %v687 = vunpack.c.l.b16 %v165
  %v688 = vunpack.c.h.b16 %v165
  %v689 = vunpack.c.l.b16 %v166
  %v690 = vunpack.c.h.b16 %v166
  %v691 = vunpack.c.l.b16 %v167
  %v692 = vunpack.c.h.b16 %v167
  %v693 = vunpack.c.l.b16 %v168
  %v694 = vunpack.c.h.b16 %v168
  %v695 = vunpack.c.l.b16 %v169
  %v696 = vunpack.c.h.b16 %v169
  %v697 = vunpack.c.l.b16 %v170
  %v698 = vunpack.c.h.b16 %v170
  %v699 = vunpack.c.l.b16 %v171
  %v700 = vunpack.c.h.b16 %v171
  %v701 = vunpack.c.l.b16 %v172
  %v702 = vunpack.c.h.b16 %v172
  %v703 = vunpack.c.l.b16 %v173
  %v704 = vunpack.c.h.b16 %v173
  %v705 = vunpack.c.l.b16 %v174
  %v706 = vunpack.c.h.b16 %v174
  %v707 = vunpack.c.l.b16 %v175
  %v708 = vunpack.c.h.b16 %v175
  %v709 = vunpack.c.l.b16 %v176
  %v710 = vunpack.c.h.b16 %v176
  %v711 = vunpack.c.l.b16 %v177
  %v712 = vunpack.c.h.b16 %v177
  %v713 = vunpack.c.l.b16 %v178
  %v714 = vunpack.c.h.b16 %v178
  %v715 = vpack.c.b16 %v429, %v427
  %v716 = vpack.c.b16 %v430, %v428
  %v717 = vpack.c.b16 %v433, %v431
  %v718 = vpack.c.b16 %v434, %v432
  %v719 = vpack.c.b16 %v437, %v435
  %v720 = vpack.c.b16 %v438, %v436
  %v721 = vpack.c.b16 %v441, %v439
  %v722 = vpack.c.b16 %v442, %v440
  %v723 = vpack.c.b16 %v445, %v443
  %v724 = vpack.c.b16 %v446, %v444
  %v725 = vpack.c.b16 %v449, %v447
  %v726 = vpack.c.b16 %v450, %v448
  %v727 = vpack.c.b16 %v453, %v451
  %v728 = vpack.c.b16 %v454, %v452
  %v729 = vpack.c.b16 %v457, %v455
  %v730 = vpack.c.b16 %v458, %v456
  %v731 = vpack.c.b16 %v461, %v459
  %v732 = vpack.c.b16 %v462, %v460
  %v733 = vpack.c.b16 %v465, %v463
  %v734 = vpack.c.b16 %v466, %v464
  %v735 = vpack.c.b16 %v469, %v467
  %v736 = vpack.c.b16 %v470, %v468
  %v737 = vpack.c.b16 %v473, %v471
  %v738 = vpack.c.b16 %v474, %v472
  %v739 = vpack.c.b16 %v477, %v475
  %v740 = vpack.c.b16 %v478, %v476
  %v741 = vpack.c.b16 %v481, %v479
  %v742 = vpack.c.b16 %v482, %v480
  %v743 = vpack.c.b16 %v485, %v483
  %v744 = vpack.c.b16 %v486, %v484
  %v745 = vpack.c.b16 %v489, %v487
  %v746 = vpack.c.b16 %v490, %v488
  %v747 = vpack.c.b16 %v493, %v491
  %v748 = vpack.c.b16 %v494, %v492
  %v749 = vpack.c.b16 %v497, %v495
  %v750 = vpack.c.b16 %v498, %v496
  %v751 = vpack.c.b16 %v501, %v499
  %v752 = vpack.c.b16 %v502, %v500
  %v753 = vpack.c.b16 %v505, %v503
  %v754 = vpack.c.b16 %v506, %v504
  %v755 = vpack.c.b16 %v509, %v507
  %v756 = vpack.c.b16 %v510, %v508
  %v757 = vpack.c.b16 %v513, %v511
  %v758 = vpack.c.b16 %v514, %v512
  %v759 = vpack.c.b16 %v517, %v515
  %v760 = vpack.c.b16 %v518, %v516
  %v761 = vpack.c.b16 %v521, %v519
  %v762 = vpack.c.b16 %v522, %v520
  %v763 = vpack.c.b16 %v525, %v523
  %v764 = vpack.c.b16 %v526, %v524
  %v765 = vpack.c.b16 %v529, %v527
  %v766 = vpack.c.b16 %v530, %v528
  %v767 = vpack.c.b16 %v533, %v531
  %v768 = vpack.c.b16 %v534, %v532
  %v769 = vpack.c.b16 %v537, %v535
  %v770 = vpack.c.b16 %v538, %v536
  %v771 = vpack.c.b16 %v541, %v539
  %v772 = vpack.c.b16 %v542, %v540
  %v773 = vpack.c.b16 %v545, %v543
  %v774 = vpack.c.b16 %v546, %v544
  %v775 = vpack.c.b16 %v549, %v547
  %v776 = vpack.c.b16 %v550, %v548
  %v777 = vpack.c.b16 %v553, %v551
  %v778 = vpack.c.b16 %v554, %v552
  %v779 = vpack.c.b16 %v557, %v555
  %v780 = vpack.c.b16 %v558, %v556
  %v781 = vpack.c.b16 %v561, %v559
  %v782 = vpack.c.b16 %v562, %v560
  %v783 = vpack.c.b16 %v565, %v563
  %v784 = vpack.c.b16 %v566, %v564
  %v785 = vpack.c.b16 %v569, %v567
  %v786 = vpack.c.b16 %v570, %v568
  %v787 = vpack.c.b16 %v573, %v571
  %v788 = vpack.c.b16 %v574, %v572
  %v789 = vpack.c.b16 %v577, %v575
  %v790 = vpack.c.b16 %v578, %v576
  %v791 = vpack.c.b16 %v581, %v579
  %v792 = vpack.c.b16 %v582, %v580
  %v793 = vpack.c.b16 %v585, %v583
  %v794 = vpack.c.b16 %v586, %v584
  %v795 = vpack.c.b16 %v589, %v587
  %v796 = vpack.c.b16 %v590, %v588
  %v797 = vpack.c.b16 %v593, %v591
  %v798 = vpack.c.b16 %v594, %v592
  %v799 = vpack.c.b16 %v597, %v595
  %v800 = vpack.c.b16 %v598, %v596
  %v801 = vpack.c.b16 %v601, %v599
  %v802 = vpack.c.b16 %v602, %v600
  %v803 = vpack.c.b16 %v605, %v603
  %v804 = vpack.c.b16 %v606, %v604
  %v805 = vpack.c.b16 %v609, %v607
  %v806 = vpack.c.b16 %v610, %v608
  %v807 = vpack.c.b16 %v613, %v611
  %v808 = vpack.c.b16 %v614, %v612
  %v809 = vpack.c.b16 %v617, %v615
  %v810 = vpack.c.b16 %v618, %v616
  %v811 = vpack.c.b16 %v621, %v619
  %v812 = vpack.c.b16 %v622, %v620
  %v813 = vpack.c.b16 %v625, %v623
  %v814 = vpack.c.b16 %v626, %v624
  %v815 = vpack.c.b16 %v629, %v627
  %v816 = vpack.c.b16 %v630, %v628
  %v817 = vpack.c.b16 %v633, %v631
  %v818 = vpack.c.b16 %v634, %v632
  %v819 = vpack.c.b16 %v637, %v635
  %v820 = vpack.c.b16 %v638, %v636
  %v821 = vpack.c.b16 %v641, %v639
  %v822 = vpack.c.b16 %v642, %v640
  %v823 = vpack.c.b16 %v645, %v643
  %v824 = vpack.c.b16 %v646, %v644
  %v825 = vpack.c.b16 %v649, %v647
  %v826 = vpack.c.b16 %v650, %v648
  %v827 = vpack.c.b16 %v653, %v651
  %v828 = vpack.c.b16 %v654, %v652
  %v829 = vpack.c.b16 %v657, %v655
  %v830 = vpack.c.b16 %v658, %v656
  %v831 = vpack.c.b16 %v661, %v659
  %v832 = vpack.c.b16 %v662, %v660
  %v833 = vpack.c.b16 %v665, %v663
  %v834 = vpack.c.b16 %v666, %v664
  %v835 = vpack.c.b16 %v669, %v667
  %v836 = vpack.c.b16 %v670, %v668
  %v837 = vpack.c.b16 %v673, %v671
  %v838 = vpack.c.b16 %v674, %v672
  %v839 = vpack.c.b16 %v677, %v675
  %v840 = vpack.c.b16 %v678, %v676
  %v841 = vpack.c.b16 %v681, %v679
  %v842 = vpack.c.b16 %v682, %v680
  %v843 = vpack.c.b16 %v685, %v683
  %v844 = vpack.c.b16 %v686, %v684
  %v845 = vpack.c.b16 %v689, %v687
  %v846 = vpack.c.b16 %v690, %v688
  %v847 = vpack.c.b16 %v693, %v691
  %v848 = vpack.c.b16 %v694, %v692
  %v849 = vpack.c.b16 %v697, %v695
  %v850 = vpack.c.b16 %v698, %v696
  %v851 = vpack.c.b16 %v701, %v699
  %v852 = vpack.c.b16 %v702, %v700
  %v853 = vpack.c.b16 %v705, %v703
  %v854 = vpack.c.b16 %v706, %v704
  %v855 = vpack.c.b16 %v709, %v707
  %v856 = vpack.c.b16 %v710, %v708
  %v857 = vpack.c.b16 %v713, %v711
  %v858 = vpack.c.b16 %v714, %v712
  %1003 = vmatprep.subr.bf16.mxu0 %v716
  %1004 = vmatpush1.bf16.msra.mxu0 %v715
  %1005 = vmatprep.subr.bf16.mxu0 %v718
  %1006 = vmatpush1.bf16.msra.mxu0 %v717
  %1007 = vmatprep.subr.bf16.mxu0 %v720
  %1008 = vmatpush1.bf16.msra.mxu0 %v719
  %1009 = vmatprep.subr.bf16.mxu0 %v722
  %1010 = vmatpush1.bf16.msra.mxu0 %v721
  %1011 = vmatprep.subr.bf16.mxu0 %v724
  %1012 = vmatpush1.bf16.msra.mxu0 %v723
  %1013 = vmatprep.subr.bf16.mxu0 %v726
  %1014 = vmatpush1.bf16.msra.mxu0 %v725
  %1015 = vmatprep.subr.bf16.mxu0 %v728
  %1016 = vmatpush1.bf16.msra.mxu0 %v727
  %1017 = vmatprep.subr.bf16.mxu0 %v730
  %1018 = vmatpush1.bf16.msra.mxu0 %v729
  %1019 = vmatprep.subr.bf16.mxu0 %v732
  %1020 = vmatpush1.bf16.msra.mxu0 %v731
  %1021 = vmatprep.subr.bf16.mxu0 %v734
  %1022 = vmatpush1.bf16.msra.mxu0 %v733
  %1023 = vmatprep.subr.bf16.mxu0 %v736
  %1024 = vmatpush1.bf16.msra.mxu0 %v735
  %1025 = vmatprep.subr.bf16.mxu0 %v738
  %1026 = vmatpush1.bf16.msra.mxu0 %v737
  %1027 = vmatprep.subr.bf16.mxu0 %v740
  %1028 = vmatpush1.bf16.msra.mxu0 %v739
  %1029 = vmatprep.subr.bf16.mxu0 %v742
  %1030 = vmatpush1.bf16.msra.mxu0 %v741
  %1031 = vmatprep.subr.bf16.mxu0 %v744
  %1032 = vmatpush1.bf16.msra.mxu0 %v743
  %1033 = vmatprep.subr.bf16.mxu0 %v746
  %1034 = vmatpush1.bf16.msra.mxu0 %v745
  %1035 = vmatprep.mubr.bf16.mxu0 %v248
  %1036 = vmatmul.mubr.bf16.gmra.mrb[0].mxu0 %v247
  %v1037 = vpop.f32.mrb[0].mxu0
  %v1038 = vadd.f32 %v184, %v1037
  %v1039 = vpop.f32.mrb[0].mxu0
  %v1040 = vadd.f32 %v188, %v1039
  %v1041 = vpop.f32.mrb[0].mxu0
  %v1042 = vadd.f32 %v184, %v1041
  %v1043 = vpop.f32.mrb[0].mxu0
  %v1044 = vadd.f32 %v188, %v1043
  %1045 = vmatprep.mubr.bf16.mxu0 %v257
  %1046 = vmatmul.mubr.bf16.gmra.mrb[0].mxu0 %v256
  %v1047 = vpop.f32.mrb[0].mxu0
  %v1048 = vadd.f32 %v184, %v1047
  %v1049 = vpop.f32.mrb[0].mxu0
  %v1050 = vadd.f32 %v188, %v1049
  %v1051 = vpop.f32.mrb[0].mxu0
  %v1052 = vadd.f32 %v184, %v1051
  %v1053 = vpop.f32.mrb[0].mxu0
  %v1054 = vadd.f32 %v188, %v1053
  %1055 = vdwg.mxu0
  %1056 = vmatprep.subr.bf16.mxu0 %v748
  %1057 = vmatpush1.bf16.msra.mxu0 %v747
  %1058 = vmatprep.subr.bf16.mxu0 %v750
  %1059 = vmatpush1.bf16.msra.mxu0 %v749
  %1060 = vmatprep.subr.bf16.mxu0 %v752
  %1061 = vmatpush1.bf16.msra.mxu0 %v751
  %1062 = vmatprep.subr.bf16.mxu0 %v754
  %1063 = vmatpush1.bf16.msra.mxu0 %v753
  %1064 = vmatprep.subr.bf16.mxu0 %v756
  %1065 = vmatpush1.bf16.msra.mxu0 %v755
  %1066 = vmatprep.subr.bf16.mxu0 %v758
  %1067 = vmatpush1.bf16.msra.mxu0 %v757
  %1068 = vmatprep.subr.bf16.mxu0 %v760
  %1069 = vmatpush1.bf16.msra.mxu0 %v759
  %1070 = vmatprep.subr.bf16.mxu0 %v762
  %1071 = vmatpush1.bf16.msra.mxu0 %v761
  %1072 = vmatprep.subr.bf16.mxu0 %v764
  %1073 = vmatpush1.bf16.msra.mxu0 %v763
  %1074 = vmatprep.subr.bf16.mxu0 %v766
  %1075 = vmatpush1.bf16.msra.mxu0 %v765
  %1076 = vmatprep.subr.bf16.mxu0 %v768
  %1077 = vmatpush1.bf16.msra.mxu0 %v767
  %1078 = vmatprep.subr.bf16.mxu0 %v770
  %1079 = vmatpush1.bf16.msra.mxu0 %v769
  %1080 = vmatprep.subr.bf16.mxu0 %v772
  %1081 = vmatpush1.bf16.msra.mxu0 %v771
  %1082 = vmatprep.subr.bf16.mxu0 %v774
  %1083 = vmatpush1.bf16.msra.mxu0 %v773
  %1084 = vmatprep.subr.bf16.mxu0 %v776
  %1085 = vmatpush1.bf16.msra.mxu0 %v775
  %1086 = vmatprep.subr.bf16.mxu0 %v778
  %1087 = vmatpush1.bf16.msra.mxu0 %v777
  %1088 = vmatprep.mubr.bf16.mxu0 %v250
  %1089 = vmatmul.mubr.bf16.gmra.mrb[0].mxu0 %v249
  %v1090 = vpop.f32.mrb[0].mxu0
  %v1091 = vadd.f32 %v1038, %v1090
  %v1092 = vpop.f32.mrb[0].mxu0
  %v1093 = vadd.f32 %v1040, %v1092
  %v1094 = vpop.f32.mrb[0].mxu0
  %v1095 = vadd.f32 %v1042, %v1094
  %v1096 = vpop.f32.mrb[0].mxu0
  %v1097 = vadd.f32 %v1044, %v1096
  %1098 = vmatprep.mubr.bf16.mxu0 %v259
  %1099 = vmatmul.mubr.bf16.gmra.mrb[0].mxu0 %v258
  %v1100 = vpop.f32.mrb[0].mxu0
  %v1101 = vadd.f32 %v1048, %v1100
  %v1102 = vpop.f32.mrb[0].mxu0
  %v1103 = vadd.f32 %v1050, %v1102
  %v1104 = vpop.f32.mrb[0].mxu0
  %v1105 = vadd.f32 %v1052, %v1104
  %v1106 = vpop.f32.mrb[0].mxu0
  %v1107 = vadd.f32 %v1054, %v1106
  %1108 = vdwg.mxu0
  %1109 = vmatprep.subr.bf16.mxu0 %v780
  %1110 = vmatpush1.bf16.msra.mxu0 %v779
  %1111 = vmatprep.subr.bf16.mxu0 %v782
  %1112 = vmatpush1.bf16.msra.mxu0 %v781
  %1113 = vmatprep.subr.bf16.mxu0 %v784
  %1114 = vmatpush1.bf16.msra.mxu0 %v783
  %1115 = vmatprep.subr.bf16.mxu0 %v786
  %1116 = vmatpush1.bf16.msra.mxu0 %v785
  %1117 = vmatprep.subr.bf16.mxu0 %v788
  %1118 = vmatpush1.bf16.msra.mxu0 %v787
  %1119 = vmatprep.subr.bf16.mxu0 %v790
  %1120 = vmatpush1.bf16.msra.mxu0 %v789
  %1121 = vmatprep.subr.bf16.mxu0 %v792
  %1122 = vmatpush1.bf16.msra.mxu0 %v791
  %1123 = vmatprep.subr.bf16.mxu0 %v794
  %1124 = vmatpush1.bf16.msra.mxu0 %v793
  %1125 = vmatprep.subr.bf16.mxu0 %v796
  %1126 = vmatpush1.bf16.msra.mxu0 %v795
  %1127 = vmatprep.subr.bf16.mxu0 %v798
  %1128 = vmatpush1.bf16.msra.mxu0 %v797
  %1129 = vmatprep.subr.bf16.mxu0 %v800
  %1130 = vmatpush1.bf16.msra.mxu0 %v799
  %1131 = vmatprep.subr.bf16.mxu0 %v802
  %1132 = vmatpush1.bf16.msra.mxu0 %v801
  %1133 = vmatprep.subr.bf16.mxu0 %v804
  %1134 = vmatpush1.bf16.msra.mxu0 %v803
  %1135 = vmatprep.subr.bf16.mxu0 %v806
  %1136 = vmatpush1.bf16.msra.mxu0 %v805
  %1137 = vmatprep.subr.bf16.mxu0 %v808
  %1138 = vmatpush1.bf16.msra.mxu0 %v807
  %1139 = vmatprep.subr.bf16.mxu0 %v810
  %1140 = vmatpush1.bf16.msra.mxu0 %v809
  %1141 = vmatprep.mubr.bf16.mxu0 %v252
  %1142 = vmatmul.mubr.bf16.gmra.mrb[0].mxu0 %v251
  %v1143 = vpop.f32.mrb[0].mxu0
  %v1144 = vadd.f32 %v1091, %v1143
  %v1145 = vpop.f32.mrb[0].mxu0
  %v1146 = vadd.f32 %v1093, %v1145
  %v1147 = vpop.f32.mrb[0].mxu0
  %v1148 = vadd.f32 %v1095, %v1147
  %v1149 = vpop.f32.mrb[0].mxu0
  %v1150 = vadd.f32 %v1097, %v1149
  %1151 = vmatprep.mubr.bf16.mxu0 %v261
  %1152 = vmatmul.mubr.bf16.gmra.mrb[0].mxu0 %v260
  %v1153 = vpop.f32.mrb[0].mxu0
  %v1154 = vadd.f32 %v1101, %v1153
  %v1155 = vpop.f32.mrb[0].mxu0
  %v1156 = vadd.f32 %v1103, %v1155
  %v1157 = vpop.f32.mrb[0].mxu0
  %v1158 = vadd.f32 %v1105, %v1157
  %v1159 = vpop.f32.mrb[0].mxu0
  %v1160 = vadd.f32 %v1107, %v1159
  %1161 = vdwg.mxu0
  %1162 = vmatprep.subr.bf16.mxu0 %v812
  %1163 = vmatpush1.bf16.msra.mxu0 %v811
  %1164 = vmatprep.subr.bf16.mxu0 %v814
  %1165 = vmatpush1.bf16.msra.mxu0 %v813
  %1166 = vmatprep.subr.bf16.mxu0 %v816
  %1167 = vmatpush1.bf16.msra.mxu0 %v815
  %1168 = vmatprep.subr.bf16.mxu0 %v818
  %1169 = vmatpush1.bf16.msra.mxu0 %v817
  %1170 = vmatprep.subr.bf16.mxu0 %v820
  %1171 = vmatpush1.bf16.msra.mxu0 %v819
  %1172 = vmatprep.subr.bf16.mxu0 %v822
  %1173 = vmatpush1.bf16.msra.mxu0 %v821
  %1174 = vmatprep.subr.bf16.mxu0 %v824
  %1175 = vmatpush1.bf16.msra.mxu0 %v823
  %1176 = vmatprep.subr.bf16.mxu0 %v826
  %1177 = vmatpush1.bf16.msra.mxu0 %v825
  %1178 = vmatprep.subr.bf16.mxu0 %v828
  %1179 = vmatpush1.bf16.msra.mxu0 %v827
  %1180 = vmatprep.subr.bf16.mxu0 %v830
  %1181 = vmatpush1.bf16.msra.mxu0 %v829
  %1182 = vmatprep.subr.bf16.mxu0 %v832
  %1183 = vmatpush1.bf16.msra.mxu0 %v831
  %1184 = vmatprep.subr.bf16.mxu0 %v834
  %1185 = vmatpush1.bf16.msra.mxu0 %v833
  %1186 = vmatprep.subr.bf16.mxu0 %v836
  %1187 = vmatpush1.bf16.msra.mxu0 %v835
  %1188 = vmatprep.subr.bf16.mxu0 %v838
  %1189 = vmatpush1.bf16.msra.mxu0 %v837
  %1190 = vmatprep.subr.bf16.mxu0 %v840
  %1191 = vmatpush1.bf16.msra.mxu0 %v839
  %1192 = vmatprep.subr.bf16.mxu0 %v842
  %1193 = vmatpush1.bf16.msra.mxu0 %v841
  %1194 = vmatprep.mubr.bf16.mxu0 %v254
  %1195 = vmatmul.mubr.bf16.gmra.mrb[0].mxu0 %v253
  %v1196 = vpop.f32.mrb[0].mxu0
  %v1197 = vadd.f32 %v1144, %v1196
  %v1198 = vpop.f32.mrb[0].mxu0
  %v1199 = vadd.f32 %v1146, %v1198
  %v1200 = vpop.f32.mrb[0].mxu0
  %v1201 = vadd.f32 %v1148, %v1200
  %v1202 = vpop.f32.mrb[0].mxu0
  %v1203 = vadd.f32 %v1150, %v1202
  %1204 = vmatprep.mubr.bf16.mxu0 %v263
  %1205 = vmatmul.mubr.bf16.gmra.mrb[0].mxu0 %v262
  %v1206 = vpop.f32.mrb[0].mxu0
  %v1207 = vadd.f32 %v1154, %v1206
  %v1208 = vpop.f32.mrb[0].mxu0
  %v1209 = vadd.f32 %v1156, %v1208
  %v1210 = vpop.f32.mrb[0].mxu0
  %v1211 = vadd.f32 %v1158, %v1210
  %v1212 = vpop.f32.mrb[0].mxu0
  %v1213 = vadd.f32 %v1160, %v1212
  %1214 = vdwg.mxu0
  %1215 = vmatprep.subr.bf16.mxu0 %v844
  %1216 = vmatpush1.bf16.msra.mxu0 %v843
  %1217 = vmatprep.subr.bf16.mxu0 %v846
  %1218 = vmatpush1.bf16.msra.mxu0 %v845
  %1219 = vmatprep.subr.bf16.mxu0 %v848
  %1220 = vmatpush1.bf16.msra.mxu0 %v847
  %1221 = vmatprep.subr.bf16.mxu0 %v850
  %1222 = vmatpush1.bf16.msra.mxu0 %v849
  %1223 = vmatprep.subr.bf16.mxu0 %v852
  %1224 = vmatpush1.bf16.msra.mxu0 %v851
  %1225 = vmatprep.subr.bf16.mxu0 %v854
  %1226 = vmatpush1.bf16.msra.mxu0 %v853
  %1227 = vmatprep.subr.bf16.mxu0 %v856
  %1228 = vmatpush1.bf16.msra.mxu0 %v855
  %1229 = vmatprep.subr.bf16.mxu0 %v858
  %1230 = vmatpush1.bf16.msra.mxu0 %v857
  %1231 = vmatprep.subr.bf16.mxu0 0
  %1232 = vmatpush1.bf16.msra.mxu0 0
  %1233 = vmatprep.subr.bf16.mxu0 0
  %1234 = vmatpush1.bf16.msra.mxu0 0
  %1235 = vmatprep.subr.bf16.mxu0 0
  %1236 = vmatpush1.bf16.msra.mxu0 0
  %1237 = vmatprep.subr.bf16.mxu0 0
  %1238 = vmatpush1.bf16.msra.mxu0 0
  %1239 = vmatprep.subr.bf16.mxu0 0
  %1240 = vmatpush1.bf16.msra.mxu0 0
  %1241 = vmatprep.subr.bf16.mxu0 0
  %1242 = vmatpush1.bf16.msra.mxu0 0
  %1243 = vmatprep.subr.bf16.mxu0 0
  %1244 = vmatpush1.bf16.msra.mxu0 0
  %1245 = vmatprep.subr.bf16.mxu0 0
  %1246 = vmatpush1.bf16.msra.mxu0 0
  %1247 = vmatprep.mubr.bf16.mxu0 0
  %1248 = vmatmul.mubr.bf16.gmra.mrb[0].mxu0 %v255
  %v1249 = vpop.f32.mrb[0].mxu0
  %v1250 = vadd.f32 %v1197, %v1249
  %v1251 = vpop.f32.mrb[0].mxu0
  %v1252 = vadd.f32 %v1199, %v1251
  %v1253 = vpop.f32.mrb[0].mxu0
  %v1254 = vadd.f32 %v1201, %v1253
  %v1255 = vpop.f32.mrb[0].mxu0
  %v1256 = vadd.f32 %v1203, %v1255
  %1257 = vmatprep.mubr.bf16.mxu0 0
  %1258 = vmatmul.mubr.bf16.gmra.mrb[0].mxu0 %v264
  %v1259 = vpop.f32.mrb[0].mxu0
  %v1260 = vadd.f32 %v1207, %v1259
  %v1261 = vpop.f32.mrb[0].mxu0
  %v1262 = vadd.f32 %v1209, %v1261
  %v1263 = vpop.f32.mrb[0].mxu0
  %v1264 = vadd.f32 %v1211, %v1263
  %v1265 = vpop.f32.mrb[0].mxu0
  %v1266 = vadd.f32 %v1213, %v1265
  %1267 = vdwg.mxu0
  %v1268 = vmax.f32 %v1250, 0.0
  %v1269 = vmax.f32 %v1252, 0.0
  %v1270 = vmax.f32 %v1254, 0.0
  %v1271 = vmax.f32 %v1256, 0.0
  %v1272 = vmax.f32 %v1260, 0.0
  %v1273 = vmax.f32 %v1262, 0.0
  %v1274 = vmax.f32 %v1264, 0.0
  %v1275 = vmax.f32 %v1266, 0.0
  %v1276 = vpack.c.bf16 %v1270, %v1268
  %v1277 = vpack.c.bf16 %v1271, %v1269
  %v1278 = vpack.c.bf16 %v1274, %v1272
  %v1279 = vpack.c.bf16 %v1275, %v1273
  %v1284 = vunpack.c.l.b16 %v1276
  %v1285 = vunpack.c.l.b16 %v1277
  %v1286 = vunpack.c.h.b16 %v1276
  %v1287 = vunpack.c.h.b16 %v1277
  %v1288 = vunpack.c.l.b16 %v1278
  %v1289 = vunpack.c.l.b16 %v1279
  %v1290 = vunpack.c.h.b16 %v1278
  %v1291 = vunpack.c.h.b16 %v1279
  %v1292 = vpack.c.b16 %v1285, %v1284
  %v1293 = vpack.c.b16 %v1287, %v1286
  %v1294 = vpack.c.b16 %v1289, %v1288
  %v1295 = vpack.c.b16 %v1291, %v1290
  %1300 = vst [vmem:[%s3] sm:$0xff] %v1292
  %1301 = vst [vmem:[%s3 + $0x8] sm:$0xff] %v1293
  %1302 = vst [vmem:[%s3 + $0x10] sm:$0xff] %v1294
  %1303 = vst [vmem:[%s3 + $0x18] sm:$0xff] %v1295
  // Predicated region
  $region14: #{fwd.37} parent=0 // pred_check
    _
  $region15: #{fwd.37} parent=0 // pred_check_branch
    %1305 = sbr.rel (0) target = $region17
  $region16: #{fwd.37} parent=0 // pred_region
    _
  $region17: #{fwd.37} parent=0 // pred_fallthru
    _
  // Predicated region
  $region18: #{fwd.37} parent=0 // pred_check
    _
  $region19: #{fwd.37} parent=0 // pred_check_branch
    %1307 = sbr.rel (0) target = $region21
  $region20: #{fwd.37} parent=0 // pred_region
    _
  $region21: #{fwd.37} parent=0 // pred_fallthru
    _

// kernel: fwd.39
$region0: #{fwd.39}
  #allocation0 [shape = 'u32[]', space=smem, size = 0x4, offset = 0x4, fixed_abs, tag = 'smem constant byte address 0x4 - core index']
  #allocation1 [shape = 'u32[144,128]{1,0:T(1,128)}', space=vmem, size = 0x12000, scoped, tag = 'internal scratch']
  %s0 = inlined_call_operand.vmem [shape: bf16[512,384], index: 0, kind: input, shape index: {}]
  %s1 = inlined_call_operand.vmem [shape: bf16[384,128], index: 1, kind: input, shape index: {}]
  %s2 = inlined_call_operand.vmem [shape: f32[1,128], index: 2, kind: input, shape index: {}]
  %s3 = inlined_call_operand.vmem [shape: f32[512,128], index: 3, kind: output, shape index: {}]
  %s4 = sld [smem:[#allocation0]]
  $region45: #{fwd.39} parent=0
    _
  %s6 = ssub.s32 1, %s4
  %s7 = scalar_select 0, %s6, %s4
  loop: start=0, step=1, limit=4
  $region2: #{fwd.39} parent=0 // loop_pre_header
    _
  $region3: #{fwd.39} parent=0 // loop_header
    %s9 = sphi 0, %s13
    %p10 = scmp.ge.s32.totalorder %s9, 4
    %s19 = sphi 0, %s21
    %s22 = sphi 0, %s19
    %s23 = sphi 0, %s22
    %s39 = sphi 0, %s23
    %s43 = sphi 0, %s43
    %s45 = sphi 0, %s43
    %s46 = sphi 0, %s45
    %s60 = sphi 0, %s46
    %s64 = sphi 0, %s64
    %s66 = sphi 0, %s64
    %s67 = sphi 0, %s66
    %s81 = sphi 0, %s67
    %s87 = sphi 0, %s89
    %s90 = sphi 0, %s87
    %s91 = sphi 0, %s90
    %s107 = sphi 0, %s91
  $region4: #{fwd.39} parent=0 // loop_header_branch
    %12 = sbr.rel (%p10) target = $region8
  $region5: #{fwd.39} parent=0 // loop_body
    %s14 = ssub.s32 %s9, 1
    %s15 = ssub.s32 %s9, 2
    %s16 = sadd.s32 %s9, 1
    %s17 = ssub.s32 %s9, %s16
    %p18 = scmp.eq.s32.totalorder %s17, 0
    %s20 = sadd.s32 %s19, 1
    %s21 = scalar_select %p18, %s19, %s20
    %p24 = pneg %p18
    %p25 = scmp.eq.s32.totalorder %s9, 1
    %p26 = por %p24, %p25
    %p27 = scmp.ne.s32.totalorder %s19, %s22
    %p28 = scmp.eq.s32.totalorder %s9, 0
    %p29 = por %p27, %p28
    %p30 = scmp.ne.s32.totalorder %s19, %s22
    %p31 = scmp.eq.s32.totalorder %s14, 1
    %p32 = por %p30, %p31
    %p33 = scmp.ne.s32.totalorder %s22, %s23
    %p34 = scmp.eq.s32.totalorder %s14, 0
    %p35 = por %p33, %p34
    %p36 = scmp.ne.s32.totalorder %s22, %s23
    %p37 = scmp.eq.s32.totalorder %s15, 1
    %p38 = por %p36, %p37
    %p40 = scmp.ne.s32.totalorder %s23, %s39
    %p41 = scmp.eq.s32.totalorder %s15, 0
    %p42 = por %p40, %p41
    %s44 = sadd.s32 %s43, 1
    %p47 = scmp.eq.s32.totalorder %s9, 1
    %p48 = scmp.ne.s32.totalorder %s43, %s45
    %p49 = scmp.eq.s32.totalorder %s9, 0
    %p50 = por %p48, %p49
    %p51 = scmp.ne.s32.totalorder %s43, %s45
    %p52 = scmp.eq.s32.totalorder %s14, 1
    %p53 = por %p51, %p52
    %p54 = scmp.ne.s32.totalorder %s45, %s46
    %p55 = scmp.eq.s32.totalorder %s14, 0
    %p56 = por %p54, %p55
    %p57 = scmp.ne.s32.totalorder %s45, %s46
    %p58 = scmp.eq.s32.totalorder %s15, 1
    %p59 = por %p57, %p58
    %p61 = scmp.ne.s32.totalorder %s46, %s60
    %p62 = scmp.eq.s32.totalorder %s15, 0
    %p63 = por %p61, %p62
    %s65 = sadd.s32 %s64, 1
    %p68 = scmp.eq.s32.totalorder %s9, 1
    %p69 = scmp.ne.s32.totalorder %s64, %s66
    %p70 = scmp.eq.s32.totalorder %s9, 0
    %p71 = por %p69, %p70
    %p72 = scmp.ne.s32.totalorder %s64, %s66
    %p73 = scmp.eq.s32.totalorder %s14, 1
    %p74 = por %p72, %p73
    %p75 = scmp.ne.s32.totalorder %s66, %s67
    %p76 = scmp.eq.s32.totalorder %s14, 0
    %p77 = por %p75, %p76
    %p78 = scmp.ne.s32.totalorder %s66, %s67
    %p79 = scmp.eq.s32.totalorder %s15, 1
    %p80 = por %p78, %p79
    %p82 = scmp.ne.s32.totalorder %s67, %s81
    %p83 = scmp.eq.s32.totalorder %s15, 0
    %p84 = por %p82, %p83
    %s85 = ssub.s32 %s9, %s16
    %p86 = scmp.eq.s32.totalorder %s85, 0
    %s88 = sadd.s32 %s87, 1
    %s89 = scalar_select %p86, %s87, %s88
    %p92 = pneg %p86
    %p93 = scmp.eq.s32.totalorder %s9, 1
    %p94 = por %p92, %p93
    %p95 = scmp.ne.s32.totalorder %s87, %s90
    %p96 = scmp.eq.s32.totalorder %s9, 0
    %p97 = por %p95, %p96
    %p98 = scmp.ne.s32.totalorder %s87, %s90
    %p99 = scmp.eq.s32.totalorder %s14, 1
    %p100 = por %p98, %p99
    %p101 = scmp.ne.s32.totalorder %s90, %s91
    %p102 = scmp.eq.s32.totalorder %s14, 0
    %p103 = por %p101, %p102
    %p104 = scmp.ne.s32.totalorder %s90, %s91
    %p105 = scmp.eq.s32.totalorder %s15, 1
    %p106 = por %p104, %p105
    %p108 = scmp.ne.s32.totalorder %s91, %s107
    %p109 = scmp.eq.s32.totalorder %s15, 0
    %p110 = por %p108, %p109
    %p111 = scmp.le.s32.totalorder 1, %s9
    %p112 = scmp.lt.s32.totalorder %s9, 3
    %p113 = pnand %p111, %p112
    %p114 = pneg %p113
    // Predicated region
    $region9: #{fwd.39} parent=5 // pred_check
      _
    $region10: #{fwd.39} parent=5 // pred_check_branch
      %116 = sbr.rel (%p113) target = $region12
    $region11: #{fwd.39} parent=5 // pred_region
      %s117 = ssub.s32 %s9, 1
      // Predicated region
      $region13: #{fwd.39} parent=11 // pred_check
        %p118 = pneg %p56
      $region14: #{fwd.39} parent=11 // pred_check_branch
        %120 = sbr.rel (%p118) target = $region16
      $region15: #{fwd.39} parent=11 // pred_region
        _
      $region16: #{fwd.39} parent=11 // pred_fallthru
        _
      // Predicated region
      $region17: #{fwd.39} parent=11 // pred_check
        %p121 = pneg %p77
      $region18: #{fwd.39} parent=11 // pred_check_branch
        %123 = sbr.rel (%p121) target = $region20
      $region19: #{fwd.39} parent=11 // pred_region
        _
      $region20: #{fwd.39} parent=11 // pred_fallthru
        _
    $region12: #{fwd.39} parent=5 // pred_fallthru
      _
    %p124 = scmp.lt.s32.totalorder %s9, 2
    // Predicated region
    $region21: #{fwd.39} parent=5 // pred_check
      %p125 = pneg %p124
    $region22: #{fwd.39} parent=5 // pred_check_branch
      %127 = sbr.rel (%p125) target = $region24
    $region23: #{fwd.39} parent=5 // pred_region
      // Predicated region
      $region25: #{fwd.39} parent=23 // pred_check
        %p128 = pneg %p29
      $region26: #{fwd.39} parent=23 // pred_check_branch
        %130 = sbr.rel (%p128) target = $region28
      $region27: #{fwd.39} parent=23 // pred_region
        %s131 = smul.u32 32, %s9
        %p132 = scmp.lt.s32.totalorder %s131, 63
        %s133 = scalar_select %p132, %s131, 63
        %s134 = smul.addr %s133, 3
        %s135 = smul.addr %s134, 4
        %s136 = scalar_lea.vmem %s0, %s135
        %s137 = smul.u32 32, %s9
      $region28: #{fwd.39} parent=23 // pred_fallthru
        _
    $region24: #{fwd.39} parent=5 // pred_fallthru
      _
    %p138 = scmp.le.s32.totalorder 1, %s9
    %p139 = scmp.lt.s32.totalorder %s9, 3
    %p140 = pnand %p138, %p139
    %p141 = pneg %p140
    // Predicated region
    $region29: #{fwd.39} parent=5 // pred_check
      _
    $region30: #{fwd.39} parent=5 // pred_check_branch
      %143 = sbr.rel (%p140) target = $region32
    $region31: #{fwd.39} parent=5 // pred_region
      %s144 = ssub.s32 %s9, 1
      %s145 = smul.u32 32, %s14
      %p146 = scmp.lt.s32.totalorder %s145, 63
      %s147 = scalar_select %p146, %s145, 63
      %s148 = smul.addr %s147, 3
      %s149 = smul.addr %s148, 4
      %s150 = scalar_lea.vmem %s0, %s149
      %p151 = pneg %p35
      %p152 = pneg %p32
      %p153 = pneg %p56
      %p154 = pneg %p53
      %p155 = pneg %p77
      %p156 = pneg %p74
      %p157 = pneg %p103
      %p158 = pneg %p100
      %s159 = smul.u32 32, %s14
      %p160 = scmp.lt.s32.totalorder %s159, 63
      %s161 = scalar_select %p160, %s159, 63
      %s162 = smul.addr %s161, 8
      %s163 = scalar_lea.vmem %s3, %s162
      %s164 = smul.u32 32, %s14
      %p165 = scmp.lt.s32.totalorder %s164, 63
      %s166 = scalar_select %p165, %s164, 63
      %s167 = smul.addr %s166, 3
      %s168 = smul.addr %s167, 4
      %s169 = scalar_lea.vmem %s0, %s168
      %s170 = smul.u32 32, %s14
      %s171 = smul.u32 32, %s14
      %p172 = scmp.lt.s32.totalorder %s171, 63
      %s173 = scalar_select %p172, %s171, 63
      %s174 = smul.addr %s173, 8
      %s175 = scalar_lea.vmem %s3, %s174
      %s176 = smul.u32 32, %s14
      %v178 = vld [vmem:[%s169] sm:$0xff]
      %v179 = vld [vmem:[%s169 + $0x8] sm:$0xf]
      %v180 = vld [vmem:[%s169 + $0xc] sm:$0xff]
      %v181 = vld [vmem:[%s169 + $0x14] sm:$0xf]
      %v182 = vld [vmem:[%s169 + $0x18] sm:$0xff]
      %v183 = vld [vmem:[%s169 + $0x20] sm:$0xf]
      %v184 = vld [vmem:[%s169 + $0x24] sm:$0xff]
      %v185 = vld [vmem:[%s169 + $0x2c] sm:$0xf]
      %v186 = vld [vmem:[%s169 + $0x30] sm:$0xff]
      %v187 = vld [vmem:[%s169 + $0x38] sm:$0xf]
      %v188 = vld [vmem:[%s169 + $0x3c] sm:$0xff]
      %v189 = vld [vmem:[%s169 + $0x44] sm:$0xf]
      %v190 = vld [vmem:[%s169 + $0x48] sm:$0xff]
      %v191 = vld [vmem:[%s169 + $0x50] sm:$0xf]
      %v192 = vld [vmem:[%s169 + $0x54] sm:$0xff]
      %v193 = vld [vmem:[%s169 + $0x5c] sm:$0xf]
      %v194 = vld [vmem:[%s169 + $0x60] sm:$0xff]
      %v195 = vld [vmem:[%s169 + $0x68] sm:$0xf]
      %v196 = vld [vmem:[%s169 + $0x6c] sm:$0xff]
      %v197 = vld [vmem:[%s169 + $0x74] sm:$0xf]
      %v198 = vld [vmem:[%s169 + $0x78] sm:$0xff]
      %v199 = vld [vmem:[%s169 + $0x80] sm:$0xf]
      %v200 = vld [vmem:[%s169 + $0x84] sm:$0xff]
      %v201 = vld [vmem:[%s169 + $0x8c] sm:$0xf]
      %v202 = vld [vmem:[%s169 + $0x90] sm:$0xff]
      %v203 = vld [vmem:[%s169 + $0x98] sm:$0xf]
      %v204 = vld [vmem:[%s169 + $0x9c] sm:$0xff]
      %v205 = vld [vmem:[%s169 + $0xa4] sm:$0xf]
      %v206 = vld [vmem:[%s169 + $0xa8] sm:$0xff]
      %v207 = vld [vmem:[%s169 + $0xb0] sm:$0xf]
      %v208 = vld [vmem:[%s169 + $0xb4] sm:$0xff]
      %v209 = vld [vmem:[%s169 + $0xbc] sm:$0xf]
      %v210 = vld [vmem:[%s169 + $0xc0] sm:$0xff]
      %v211 = vld [vmem:[%s169 + $0xc8] sm:$0xf]
      %v212 = vld [vmem:[%s169 + $0xcc] sm:$0xff]
      %v213 = vld [vmem:[%s169 + $0xd4] sm:$0xf]
      %v214 = vld [vmem:[%s169 + $0xd8] sm:$0xff]
      %v215 = vld [vmem:[%s169 + $0xe0] sm:$0xf]
      %v216 = vld [vmem:[%s169 + $0xe4] sm:$0xff]
      %v217 = vld [vmem:[%s169 + $0xec] sm:$0xf]
      %v218 = vld [vmem:[%s169 + $0xf0] sm:$0xff]
      %v219 = vld [vmem:[%s169 + $0xf8] sm:$0xf]
      %v220 = vld [vmem:[%s169 + $0xfc] sm:$0xff]
      %v221 = vld [vmem:[%s169 + $0x104] sm:$0xf]
      %v222 = vld [vmem:[%s169 + $0x108] sm:$0xff]
      %v223 = vld [vmem:[%s169 + $0x110] sm:$0xf]
      %v224 = vld [vmem:[%s169 + $0x114] sm:$0xff]
      %v225 = vld [vmem:[%s169 + $0x11c] sm:$0xf]
      %v226 = vld [vmem:[%s169 + $0x120] sm:$0xff]
      %v227 = vld [vmem:[%s169 + $0x128] sm:$0xf]
      %v228 = vld [vmem:[%s169 + $0x12c] sm:$0xff]
      %v229 = vld [vmem:[%s169 + $0x134] sm:$0xf]
      %v230 = vld [vmem:[%s169 + $0x138] sm:$0xff]
      %v231 = vld [vmem:[%s169 + $0x140] sm:$0xf]
      %v232 = vld [vmem:[%s169 + $0x144] sm:$0xff]
      %v233 = vld [vmem:[%s169 + $0x14c] sm:$0xf]
      %v234 = vld [vmem:[%s169 + $0x150] sm:$0xff]
      %v235 = vld [vmem:[%s169 + $0x158] sm:$0xf]
      %v236 = vld [vmem:[%s169 + $0x15c] sm:$0xff]
      %v237 = vld [vmem:[%s169 + $0x164] sm:$0xf]
      %v238 = vld [vmem:[%s169 + $0x168] sm:$0xff]
      %v239 = vld [vmem:[%s169 + $0x170] sm:$0xf]
      %v240 = vld [vmem:[%s169 + $0x174] sm:$0xff]
      %v241 = vld [vmem:[%s169 + $0x17c] sm:$0xf]
      %v242 = vld [vmem:[%s1] sm:$0xf]
      %v243 = vld [vmem:[%s1 + $0x4] sm:$0xf]
      %v244 = vld [vmem:[%s1 + $0x8] sm:$0xf]
      %v245 = vld [vmem:[%s1 + $0xc] sm:$0xf]
      %v246 = vld [vmem:[%s1 + $0x10] sm:$0xf]
      %v247 = vld [vmem:[%s1 + $0x14] sm:$0xf]
      %v248 = vld [vmem:[%s1 + $0x18] sm:$0xf]
      %v249 = vld [vmem:[%s1 + $0x1c] sm:$0xf]
      %v250 = vld [vmem:[%s1 + $0x20] sm:$0xf]
      %v251 = vld [vmem:[%s1 + $0x24] sm:$0xf]
      %v252 = vld [vmem:[%s1 + $0x28] sm:$0xf]
      %v253 = vld [vmem:[%s1 + $0x2c] sm:$0xf]
      %v254 = vld [vmem:[%s1 + $0x30] sm:$0xf]
      %v255 = vld [vmem:[%s1 + $0x34] sm:$0xf]
      %v256 = vld [vmem:[%s1 + $0x38] sm:$0xf]
      %v257 = vld [vmem:[%s1 + $0x3c] sm:$0xf]
      %v258 = vld [vmem:[%s1 + $0x40] sm:$0xf]
      %v259 = vld [vmem:[%s1 + $0x44] sm:$0xf]
      %v260 = vld [vmem:[%s1 + $0x48] sm:$0xf]
      %v261 = vld [vmem:[%s1 + $0x4c] sm:$0xf]
      %v262 = vld [vmem:[%s1 + $0x50] sm:$0xf]
      %v263 = vld [vmem:[%s1 + $0x54] sm:$0xf]
      %v264 = vld [vmem:[%s1 + $0x58] sm:$0xf]
      %v265 = vld [vmem:[%s1 + $0x5c] sm:$0xf]
      %v266 = vld [vmem:[%s1 + $0x60] sm:$0xf]
      %v267 = vld [vmem:[%s1 + $0x64] sm:$0xf]
      %v268 = vld [vmem:[%s1 + $0x68] sm:$0xf]
      %v269 = vld [vmem:[%s1 + $0x6c] sm:$0xf]
      %v270 = vld [vmem:[%s1 + $0x70] sm:$0xf]
      %v271 = vld [vmem:[%s1 + $0x74] sm:$0xf]
      %v272 = vld [vmem:[%s1 + $0x78] sm:$0xf]
      %v273 = vld [vmem:[%s1 + $0x7c] sm:$0xf]
      %v274 = vld [vmem:[%s1 + $0x80] sm:$0xf]
      %v275 = vld [vmem:[%s1 + $0x84] sm:$0xf]
      %v276 = vld [vmem:[%s1 + $0x88] sm:$0xf]
      %v277 = vld [vmem:[%s1 + $0x8c] sm:$0xf]
      %v278 = vld [vmem:[%s1 + $0x90] sm:$0xf]
      %v279 = vld [vmem:[%s1 + $0x94] sm:$0xf]
      %v280 = vld [vmem:[%s1 + $0x98] sm:$0xf]
      %v281 = vld [vmem:[%s1 + $0x9c] sm:$0xf]
      %v282 = vld [vmem:[%s1 + $0xa0] sm:$0xf]
      %v283 = vld [vmem:[%s1 + $0xa4] sm:$0xf]
      %v284 = vld [vmem:[%s1 + $0xa8] sm:$0xf]
      %v285 = vld [vmem:[%s1 + $0xac] sm:$0xf]
      %v286 = vld [vmem:[%s1 + $0xb0] sm:$0xf]
      %v287 = vld [vmem:[%s1 + $0xb4] sm:$0xf]
      %v288 = vld [vmem:[%s1 + $0xb8] sm:$0xf]
      %v289 = vld [vmem:[%s1 + $0xbc] sm:$0xf]
      %v290 = vld [vmem:[%s2] sm:$0x1]
      %v292 = vlaneseq
      %v293 = vshrl.u32 %v292, 7
      %v294 = vsub.s32 0, %v293
      %v295 = vrot.slane %v290, %v294
      %v361 = vunpack.c.l.b16 %v178
      %v362 = vunpack.c.h.b16 %v178
      %v363 = vunpack.c.l.b16 %v179
      %v364 = vunpack.c.l.b16 %v180
      %v365 = vunpack.c.h.b16 %v180
      %v366 = vunpack.c.l.b16 %v181
      %v367 = vunpack.c.l.b16 %v182
      %v368 = vunpack.c.h.b16 %v182
      %v369 = vunpack.c.l.b16 %v183
      %v370 = vunpack.c.l.b16 %v184
      %v371 = vunpack.c.h.b16 %v184
      %v372 = vunpack.c.l.b16 %v185
      %v373 = vunpack.c.l.b16 %v186
      %v374 = vunpack.c.h.b16 %v186
      %v375 = vunpack.c.l.b16 %v187
      %v376 = vunpack.c.l.b16 %v188
      %v377 = vunpack.c.h.b16 %v188
      %v378 = vunpack.c.l.b16 %v189
      %v379 = vunpack.c.l.b16 %v190
      %v380 = vunpack.c.h.b16 %v190
      %v381 = vunpack.c.l.b16 %v191
      %v382 = vunpack.c.l.b16 %v192
      %v383 = vunpack.c.h.b16 %v192
      %v384 = vunpack.c.l.b16 %v193
      %v385 = vunpack.c.l.b16 %v194
      %v386 = vunpack.c.h.b16 %v194
      %v387 = vunpack.c.l.b16 %v195
      %v388 = vunpack.c.l.b16 %v196
      %v389 = vunpack.c.h.b16 %v196
      %v390 = vunpack.c.l.b16 %v197
      %v391 = vunpack.c.l.b16 %v198
      %v392 = vunpack.c.h.b16 %v198
      %v393 = vunpack.c.l.b16 %v199
      %v394 = vunpack.c.l.b16 %v200
      %v395 = vunpack.c.h.b16 %v200
      %v396 = vunpack.c.l.b16 %v201
      %v397 = vunpack.c.l.b16 %v202
      %v398 = vunpack.c.h.b16 %v202
      %v399 = vunpack.c.l.b16 %v203
      %v400 = vunpack.c.l.b16 %v204
      %v401 = vunpack.c.h.b16 %v204
      %v402 = vunpack.c.l.b16 %v205
      %v403 = vunpack.c.l.b16 %v206
      %v404 = vunpack.c.h.b16 %v206
      %v405 = vunpack.c.l.b16 %v207
      %v406 = vunpack.c.l.b16 %v208
      %v407 = vunpack.c.h.b16 %v208
      %v408 = vunpack.c.l.b16 %v209
      %v409 = vunpack.c.l.b16 %v210
      %v410 = vunpack.c.h.b16 %v210
      %v411 = vunpack.c.l.b16 %v211
      %v412 = vunpack.c.l.b16 %v212
      %v413 = vunpack.c.h.b16 %v212
      %v414 = vunpack.c.l.b16 %v213
      %v415 = vunpack.c.l.b16 %v214
      %v416 = vunpack.c.h.b16 %v214
      %v417 = vunpack.c.l.b16 %v215
      %v418 = vunpack.c.l.b16 %v216
      %v419 = vunpack.c.h.b16 %v216
      %v420 = vunpack.c.l.b16 %v217
      %v421 = vunpack.c.l.b16 %v218
      %v422 = vunpack.c.h.b16 %v218
      %v423 = vunpack.c.l.b16 %v219
      %v424 = vunpack.c.l.b16 %v220
      %v425 = vunpack.c.h.b16 %v220
      %v426 = vunpack.c.l.b16 %v221
      %v427 = vunpack.c.l.b16 %v222
      %v428 = vunpack.c.h.b16 %v222
      %v429 = vunpack.c.l.b16 %v223
      %v430 = vunpack.c.l.b16 %v224
      %v431 = vunpack.c.h.b16 %v224
      %v432 = vunpack.c.l.b16 %v225
      %v433 = vunpack.c.l.b16 %v226
      %v434 = vunpack.c.h.b16 %v226
      %v435 = vunpack.c.l.b16 %v227
      %v436 = vunpack.c.l.b16 %v228
      %v437 = vunpack.c.h.b16 %v228
      %v438 = vunpack.c.l.b16 %v229
      %v439 = vunpack.c.l.b16 %v230
      %v440 = vunpack.c.h.b16 %v230
      %v441 = vunpack.c.l.b16 %v231
      %v442 = vunpack.c.l.b16 %v232
      %v443 = vunpack.c.h.b16 %v232
      %v444 = vunpack.c.l.b16 %v233
      %v445 = vunpack.c.l.b16 %v234
      %v446 = vunpack.c.h.b16 %v234
      %v447 = vunpack.c.l.b16 %v235
      %v448 = vunpack.c.l.b16 %v236
      %v449 = vunpack.c.h.b16 %v236
      %v450 = vunpack.c.l.b16 %v237
      %v451 = vunpack.c.l.b16 %v238
      %v452 = vunpack.c.h.b16 %v238
      %v453 = vunpack.c.l.b16 %v239
      %v454 = vunpack.c.l.b16 %v240
      %v455 = vunpack.c.h.b16 %v240
      %v456 = vunpack.c.l.b16 %v241
      %v457 = vpack.c.b16 %v364, %v361
      %v458 = vpack.c.b16 %v365, %v362
      %v459 = vpack.c.b16 %v366, %v363
      %v460 = vpack.c.b16 %v370, %v367
      %v461 = vpack.c.b16 %v371, %v368
      %v462 = vpack.c.b16 %v372, %v369
      %v463 = vpack.c.b16 %v376, %v373
      %v464 = vpack.c.b16 %v377, %v374
      %v465 = vpack.c.b16 %v378, %v375
      %v466 = vpack.c.b16 %v382, %v379
      %v467 = vpack.c.b16 %v383, %v380
      %v468 = vpack.c.b16 %v384, %v381
      %v469 = vpack.c.b16 %v388, %v385
      %v470 = vpack.c.b16 %v389, %v386
      %v471 = vpack.c.b16 %v390, %v387
      %v472 = vpack.c.b16 %v394, %v391
      %v473 = vpack.c.b16 %v395, %v392
      %v474 = vpack.c.b16 %v396, %v393
      %v475 = vpack.c.b16 %v400, %v397
      %v476 = vpack.c.b16 %v401, %v398
      %v477 = vpack.c.b16 %v402, %v399
      %v478 = vpack.c.b16 %v406, %v403
      %v479 = vpack.c.b16 %v407, %v404
      %v480 = vpack.c.b16 %v408, %v405
      %v481 = vpack.c.b16 %v412, %v409
      %v482 = vpack.c.b16 %v413, %v410
      %v483 = vpack.c.b16 %v414, %v411
      %v484 = vpack.c.b16 %v418, %v415
      %v485 = vpack.c.b16 %v419, %v416
      %v486 = vpack.c.b16 %v420, %v417
      %v487 = vpack.c.b16 %v424, %v421
      %v488 = vpack.c.b16 %v425, %v422
      %v489 = vpack.c.b16 %v426, %v423
      %v490 = vpack.c.b16 %v430, %v427
      %v491 = vpack.c.b16 %v431, %v428
      %v492 = vpack.c.b16 %v432, %v429
      %v493 = vpack.c.b16 %v436, %v433
      %v494 = vpack.c.b16 %v437, %v434
      %v495 = vpack.c.b16 %v438, %v435
      %v496 = vpack.c.b16 %v442, %v439
      %v497 = vpack.c.b16 %v443, %v440
      %v498 = vpack.c.b16 %v444, %v441
      %v499 = vpack.c.b16 %v448, %v445
      %v500 = vpack.c.b16 %v449, %v446
      %v501 = vpack.c.b16 %v450, %v447
      %v502 = vpack.c.b16 %v454, %v451
      %v503 = vpack.c.b16 %v455, %v452
      %v504 = vpack.c.b16 %v456, %v453
      %v601 = vunpack.c.l.b16 %v242
      %v602 = vunpack.c.l.b16 %v243
      %v603 = vunpack.c.l.b16 %v244
      %v604 = vunpack.c.l.b16 %v245
      %v605 = vunpack.c.l.b16 %v246
      %v606 = vunpack.c.l.b16 %v247
      %v607 = vunpack.c.l.b16 %v248
      %v608 = vunpack.c.l.b16 %v249
      %v609 = vunpack.c.l.b16 %v250
      %v610 = vunpack.c.l.b16 %v251
      %v611 = vunpack.c.l.b16 %v252
      %v612 = vunpack.c.l.b16 %v253
      %v613 = vunpack.c.l.b16 %v254
      %v614 = vunpack.c.l.b16 %v255
      %v615 = vunpack.c.l.b16 %v256
      %v616 = vunpack.c.l.b16 %v257
      %v617 = vunpack.c.l.b16 %v258
      %v618 = vunpack.c.l.b16 %v259
      %v619 = vunpack.c.l.b16 %v260
      %v620 = vunpack.c.l.b16 %v261
      %v621 = vunpack.c.l.b16 %v262
      %v622 = vunpack.c.l.b16 %v263
      %v623 = vunpack.c.l.b16 %v264
      %v624 = vunpack.c.l.b16 %v265
      %v625 = vunpack.c.l.b16 %v266
      %v626 = vunpack.c.l.b16 %v267
      %v627 = vunpack.c.l.b16 %v268
      %v628 = vunpack.c.l.b16 %v269
      %v629 = vunpack.c.l.b16 %v270
      %v630 = vunpack.c.l.b16 %v271
      %v631 = vunpack.c.l.b16 %v272
      %v632 = vunpack.c.l.b16 %v273
      %v633 = vunpack.c.l.b16 %v274
      %v634 = vunpack.c.l.b16 %v275
      %v635 = vunpack.c.l.b16 %v276
      %v636 = vunpack.c.l.b16 %v277
      %v637 = vunpack.c.l.b16 %v278
      %v638 = vunpack.c.l.b16 %v279
      %v639 = vunpack.c.l.b16 %v280
      %v640 = vunpack.c.l.b16 %v281
      %v641 = vunpack.c.l.b16 %v282
      %v642 = vunpack.c.l.b16 %v283
      %v643 = vunpack.c.l.b16 %v284
      %v644 = vunpack.c.l.b16 %v285
      %v645 = vunpack.c.l.b16 %v286
      %v646 = vunpack.c.l.b16 %v287
      %v647 = vunpack.c.l.b16 %v288
      %v648 = vunpack.c.l.b16 %v289
      %v649 = vpack.c.b16 %v602, %v601
      %v650 = vpack.c.b16 %v604, %v603
      %v651 = vpack.c.b16 %v606, %v605
      %v652 = vpack.c.b16 %v608, %v607
      %v653 = vpack.c.b16 %v610, %v609
      %v654 = vpack.c.b16 %v612, %v611
      %v655 = vpack.c.b16 %v614, %v613
      %v656 = vpack.c.b16 %v616, %v615
      %v657 = vpack.c.b16 %v618, %v617
      %v658 = vpack.c.b16 %v620, %v619
      %v659 = vpack.c.b16 %v622, %v621
      %v660 = vpack.c.b16 %v624, %v623
      %v661 = vpack.c.b16 %v626, %v625
      %v662 = vpack.c.b16 %v628, %v627
      %v663 = vpack.c.b16 %v630, %v629
      %v664 = vpack.c.b16 %v632, %v631
      %v665 = vpack.c.b16 %v634, %v633
      %v666 = vpack.c.b16 %v636, %v635
      %v667 = vpack.c.b16 %v638, %v637
      %v668 = vpack.c.b16 %v640, %v639
      %v669 = vpack.c.b16 %v642, %v641
      %v670 = vpack.c.b16 %v644, %v643
      %v671 = vpack.c.b16 %v646, %v645
      %v672 = vpack.c.b16 %v648, %v647
      %697 = vmatprep.subr.bf16.mxu0 0
      %698 = vmatpush1.bf16.msra.mxu0 %v649
      %699 = vmatprep.subr.bf16.mxu0 0
      %700 = vmatpush1.bf16.msra.mxu0 %v650
      %701 = vmatprep.subr.bf16.mxu0 0
      %702 = vmatpush1.bf16.msra.mxu0 %v651
      %703 = vmatprep.subr.bf16.mxu0 0
      %704 = vmatpush1.bf16.msra.mxu0 %v652
      %705 = vmatprep.subr.bf16.mxu0 0
      %706 = vmatpush1.bf16.msra.mxu0 %v653
      %707 = vmatprep.subr.bf16.mxu0 0
      %708 = vmatpush1.bf16.msra.mxu0 %v654
      %709 = vmatprep.subr.bf16.mxu0 0
      %710 = vmatpush1.bf16.msra.mxu0 %v655
      %711 = vmatprep.subr.bf16.mxu0 0
      %712 = vmatpush1.bf16.msra.mxu0 %v656
      %713 = vmatprep.subr.bf16.mxu0 0
      %714 = vmatpush1.bf16.msra.mxu0 %v657
      %715 = vmatprep.subr.bf16.mxu0 0
      %716 = vmatpush1.bf16.msra.mxu0 %v658
      %717 = vmatprep.subr.bf16.mxu0 0
      %718 = vmatpush1.bf16.msra.mxu0 %v659
      %719 = vmatprep.subr.bf16.mxu0 0
      %720 = vmatpush1.bf16.msra.mxu0 %v660
      %721 = vmatprep.subr.bf16.mxu0 0
      %722 = vmatpush1.bf16.msra.mxu0 %v661
      %723 = vmatprep.subr.bf16.mxu0 0
      %724 = vmatpush1.bf16.msra.mxu0 %v662
      %725 = vmatprep.subr.bf16.mxu0 0
      %726 = vmatpush1.bf16.msra.mxu0 %v663
      %727 = vmatprep.subr.bf16.mxu0 0
      %728 = vmatpush1.bf16.msra.mxu0 %v664
      %729 = vmatprep.mubr.bf16.mxu0 %v458
      %730 = vmatmul.mubr.bf16.gmra.mrb[0].mxu0 %v457
      %v731 = vpop.f32.mrb[0].mxu0
      %v732 = vadd.f32 %v295, %v731
      %v733 = vpop.f32.mrb[0].mxu0
      %v734 = vpop.f32.mrb[0].mxu0
      %v735 = vadd.f32 %v295, %v734
      %v736 = vpop.f32.mrb[0].mxu0
      %737 = vmatprep.mubr.bf16.mxu0 %v461
      %738 = vmatmul.mubr.bf16.gmra.mrb[0].mxu0 %v460
      %v739 = vpop.f32.mrb[0].mxu0
      %v740 = vadd.f32 %v295, %v739
      %v741 = vpop.f32.mrb[0].mxu0
      %v742 = vpop.f32.mrb[0].mxu0
      %v743 = vadd.f32 %v295, %v742
      %v744 = vpop.f32.mrb[0].mxu0
      %745 = vmatprep.mubr.bf16.mxu0 %v464
      %746 = vmatmul.mubr.bf16.gmra.mrb[0].mxu0 %v463
      %v747 = vpop.f32.mrb[0].mxu0
      %v748 = vadd.f32 %v295, %v747
      %v749 = vpop.f32.mrb[0].mxu0
      %v750 = vpop.f32.mrb[0].mxu0
      %v751 = vadd.f32 %v295, %v750
      %v752 = vpop.f32.mrb[0].mxu0
      %753 = vmatprep.mubr.bf16.mxu0 %v467
      %754 = vmatmul.mubr.bf16.gmra.mrb[0].mxu0 %v466
      %v755 = vpop.f32.mrb[0].mxu0
      %v756 = vadd.f32 %v295, %v755
      %v757 = vpop.f32.mrb[0].mxu0
      %v758 = vpop.f32.mrb[0].mxu0
      %v759 = vadd.f32 %v295, %v758
      %v760 = vpop.f32.mrb[0].mxu0
      %761 = vmatprep.mubr.bf16.mxu0 %v470
      %762 = vmatmul.mubr.bf16.gmra.mrb[0].mxu0 %v469
      %v763 = vpop.f32.mrb[0].mxu0
      %v764 = vadd.f32 %v295, %v763
      %v765 = vpop.f32.mrb[0].mxu0
      %v766 = vpop.f32.mrb[0].mxu0
      %v767 = vadd.f32 %v295, %v766
      %v768 = vpop.f32.mrb[0].mxu0
      %769 = vmatprep.mubr.bf16.mxu0 %v473
      %770 = vmatmul.mubr.bf16.gmra.mrb[0].mxu0 %v472
      %v771 = vpop.f32.mrb[0].mxu0
      %v772 = vadd.f32 %v295, %v771
      %v773 = vpop.f32.mrb[0].mxu0
      %v774 = vpop.f32.mrb[0].mxu0
      %v775 = vadd.f32 %v295, %v774
      %v776 = vpop.f32.mrb[0].mxu0
      %777 = vmatprep.mubr.bf16.mxu0 %v476
      %778 = vmatmul.mubr.bf16.gmra.mrb[0].mxu0 %v475
      %v779 = vpop.f32.mrb[0].mxu0
      %v780 = vadd.f32 %v295, %v779
      %v781 = vpop.f32.mrb[0].mxu0
      %v782 = vpop.f32.mrb[0].mxu0
      %v783 = vadd.f32 %v295, %v782
      %v784 = vpop.f32.mrb[0].mxu0
      %785 = vmatprep.mubr.bf16.mxu0 %v479
      %786 = vmatmul.mubr.bf16.gmra.mrb[0].mxu0 %v478
      %v787 = vpop.f32.mrb[0].mxu0
      %v788 = vadd.f32 %v295, %v787
      %v789 = vpop.f32.mrb[0].mxu0
      %v790 = vpop.f32.mrb[0].mxu0
      %v791 = vadd.f32 %v295, %v790
      %v792 = vpop.f32.mrb[0].mxu0
      %793 = vmatprep.mubr.bf16.mxu0 %v482
      %794 = vmatmul.mubr.bf16.gmra.mrb[0].mxu0 %v481
      %v795 = vpop.f32.mrb[0].mxu0
      %v796 = vadd.f32 %v295, %v795
      %v797 = vpop.f32.mrb[0].mxu0
      %v798 = vpop.f32.mrb[0].mxu0
      %v799 = vadd.f32 %v295, %v798
      %v800 = vpop.f32.mrb[0].mxu0
      %801 = vmatprep.mubr.bf16.mxu0 %v485
      %802 = vmatmul.mubr.bf16.gmra.mrb[0].mxu0 %v484
      %v803 = vpop.f32.mrb[0].mxu0
      %v804 = vadd.f32 %v295, %v803
      %v805 = vpop.f32.mrb[0].mxu0
      %v806 = vpop.f32.mrb[0].mxu0
      %v807 = vadd.f32 %v295, %v806
      %v808 = vpop.f32.mrb[0].mxu0
      %809 = vmatprep.mubr.bf16.mxu0 %v488
      %810 = vmatmul.mubr.bf16.gmra.mrb[0].mxu0 %v487
      %v811 = vpop.f32.mrb[0].mxu0
      %v812 = vadd.f32 %v295, %v811
      %v813 = vpop.f32.mrb[0].mxu0
      %v814 = vpop.f32.mrb[0].mxu0
      %v815 = vadd.f32 %v295, %v814
      %v816 = vpop.f32.mrb[0].mxu0
      %817 = vmatprep.mubr.bf16.mxu0 %v491
      %818 = vmatmul.mubr.bf16.gmra.mrb[0].mxu0 %v490
      %v819 = vpop.f32.mrb[0].mxu0
      %v820 = vadd.f32 %v295, %v819
      %v821 = vpop.f32.mrb[0].mxu0
      %v822 = vpop.f32.mrb[0].mxu0
      %v823 = vadd.f32 %v295, %v822
      %v824 = vpop.f32.mrb[0].mxu0
      %825 = vmatprep.mubr.bf16.mxu0 %v494
      %826 = vmatmul.mubr.bf16.gmra.mrb[0].mxu0 %v493
      %v827 = vpop.f32.mrb[0].mxu0
      %v828 = vadd.f32 %v295, %v827
      %v829 = vpop.f32.mrb[0].mxu0
      %v830 = vpop.f32.mrb[0].mxu0
      %v831 = vadd.f32 %v295, %v830
      %v832 = vpop.f32.mrb[0].mxu0
      %833 = vmatprep.mubr.bf16.mxu0 %v497
      %834 = vmatmul.mubr.bf16.gmra.mrb[0].mxu0 %v496
      %v835 = vpop.f32.mrb[0].mxu0
      %v836 = vadd.f32 %v295, %v835
      %v837 = vpop.f32.mrb[0].mxu0
      %v838 = vpop.f32.mrb[0].mxu0
      %v839 = vadd.f32 %v295, %v838
      %v840 = vpop.f32.mrb[0].mxu0
      %841 = vmatprep.mubr.bf16.mxu0 %v500
      %842 = vmatmul.mubr.bf16.gmra.mrb[0].mxu0 %v499
      %v843 = vpop.f32.mrb[0].mxu0
      %v844 = vadd.f32 %v295, %v843
      %v845 = vpop.f32.mrb[0].mxu0
      %v846 = vpop.f32.mrb[0].mxu0
      %v847 = vadd.f32 %v295, %v846
      %v848 = vpop.f32.mrb[0].mxu0
      %849 = vmatprep.mubr.bf16.mxu0 %v503
      %850 = vmatmul.mubr.bf16.gmra.mrb[0].mxu0 %v502
      %v851 = vpop.f32.mrb[0].mxu0
      %v852 = vadd.f32 %v295, %v851
      %v853 = vpop.f32.mrb[0].mxu0
      %v854 = vpop.f32.mrb[0].mxu0
      %v855 = vadd.f32 %v295, %v854
      %v856 = vpop.f32.mrb[0].mxu0
      %857 = vdwg.mxu0
      %858 = vmatprep.subr.bf16.mxu0 0
      %859 = vmatpush1.bf16.msra.mxu0 %v665
      %860 = vmatprep.subr.bf16.mxu0 0
      %861 = vmatpush1.bf16.msra.mxu0 %v666
      %862 = vmatprep.subr.bf16.mxu0 0
      %863 = vmatpush1.bf16.msra.mxu0 %v667
      %864 = vmatprep.subr.bf16.mxu0 0
      %865 = vmatpush1.bf16.msra.mxu0 %v668
      %866 = vmatprep.subr.bf16.mxu0 0
      %867 = vmatpush1.bf16.msra.mxu0 %v669
      %868 = vmatprep.subr.bf16.mxu0 0
      %869 = vmatpush1.bf16.msra.mxu0 %v670
      %870 = vmatprep.subr.bf16.mxu0 0
      %871 = vmatpush1.bf16.msra.mxu0 %v671
      %872 = vmatprep.subr.bf16.mxu0 0
      %873 = vmatpush1.bf16.msra.mxu0 %v672
      %874 = vmatprep.subr.bf16.mxu0 0
      %875 = vmatpush1.bf16.msra.mxu0 0
      %876 = vmatprep.subr.bf16.mxu0 0
      %877 = vmatpush1.bf16.msra.mxu0 0
      %878 = vmatprep.subr.bf16.mxu0 0
      %879 = vmatpush1.bf16.msra.mxu0 0
      %880 = vmatprep.subr.bf16.mxu0 0
      %881 = vmatpush1.bf16.msra.mxu0 0
      %882 = vmatprep.subr.bf16.mxu0 0
      %883 = vmatpush1.bf16.msra.mxu0 0
      %884 = vmatprep.subr.bf16.mxu0 0
      %885 = vmatpush1.bf16.msra.mxu0 0
      %886 = vmatprep.subr.bf16.mxu0 0
      %887 = vmatpush1.bf16.msra.mxu0 0
      %888 = vmatprep.subr.bf16.mxu0 0
      %889 = vmatpush1.bf16.msra.mxu0 0
      %890 = vmatprep.mubr.bf16.mxu0 0
      %891 = vmatmul.mubr.bf16.gmra.mrb[0].mxu0 %v459
      %v892 = vpop.f32.mrb[0].mxu0
      %v893 = vadd.f32 %v732, %v892
      %v894 = vpop.f32.mrb[0].mxu0
      %v895 = vpop.f32.mrb[0].mxu0
      %v896 = vadd.f32 %v735, %v895
      %v897 = vpop.f32.mrb[0].mxu0
      %898 = vmatprep.mubr.bf16.mxu0 0
      %899 = vmatmul.mubr.bf16.gmra.mrb[0].mxu0 %v462
      %v900 = vpop.f32.mrb[0].mxu0
      %v901 = vadd.f32 %v740, %v900
      %v902 = vpop.f32.mrb[0].mxu0
      %v903 = vpop.f32.mrb[0].mxu0
      %v904 = vadd.f32 %v743, %v903
      %v905 = vpop.f32.mrb[0].mxu0
      %906 = vmatprep.mubr.bf16.mxu0 0
      %907 = vmatmul.mubr.bf16.gmra.mrb[0].mxu0 %v465
      %v908 = vpop.f32.mrb[0].mxu0
      %v909 = vadd.f32 %v748, %v908
      %v910 = vpop.f32.mrb[0].mxu0
      %v911 = vpop.f32.mrb[0].mxu0
      %v912 = vadd.f32 %v751, %v911
      %v913 = vpop.f32.mrb[0].mxu0
      %914 = vmatprep.mubr.bf16.mxu0 0
      %915 = vmatmul.mubr.bf16.gmra.mrb[0].mxu0 %v468
      %v916 = vpop.f32.mrb[0].mxu0
      %v917 = vadd.f32 %v756, %v916
      %v918 = vpop.f32.mrb[0].mxu0
      %v919 = vpop.f32.mrb[0].mxu0
      %v920 = vadd.f32 %v759, %v919
      %v921 = vpop.f32.mrb[0].mxu0
      %922 = vmatprep.mubr.bf16.mxu0 0
      %923 = vmatmul.mubr.bf16.gmra.mrb[0].mxu0 %v471
      %v924 = vpop.f32.mrb[0].mxu0
      %v925 = vadd.f32 %v764, %v924
      %v926 = vpop.f32.mrb[0].mxu0
      %v927 = vpop.f32.mrb[0].mxu0
      %v928 = vadd.f32 %v767, %v927
      %v929 = vpop.f32.mrb[0].mxu0
      %930 = vmatprep.mubr.bf16.mxu0 0
      %931 = vmatmul.mubr.bf16.gmra.mrb[0].mxu0 %v474
      %v932 = vpop.f32.mrb[0].mxu0
      %v933 = vadd.f32 %v772, %v932
      %v934 = vpop.f32.mrb[0].mxu0
      %v935 = vpop.f32.mrb[0].mxu0
      %v936 = vadd.f32 %v775, %v935
      %v937 = vpop.f32.mrb[0].mxu0
      %938 = vmatprep.mubr.bf16.mxu0 0
      %939 = vmatmul.mubr.bf16.gmra.mrb[0].mxu0 %v477
      %v940 = vpop.f32.mrb[0].mxu0
      %v941 = vadd.f32 %v780, %v940
      %v942 = vpop.f32.mrb[0].mxu0
      %v943 = vpop.f32.mrb[0].mxu0
      %v944 = vadd.f32 %v783, %v943
      %v945 = vpop.f32.mrb[0].mxu0
      %946 = vmatprep.mubr.bf16.mxu0 0
      %947 = vmatmul.mubr.bf16.gmra.mrb[0].mxu0 %v480
      %v948 = vpop.f32.mrb[0].mxu0
      %v949 = vadd.f32 %v788, %v948
      %v950 = vpop.f32.mrb[0].mxu0
      %v951 = vpop.f32.mrb[0].mxu0
      %v952 = vadd.f32 %v791, %v951
      %v953 = vpop.f32.mrb[0].mxu0
      %954 = vmatprep.mubr.bf16.mxu0 0
      %955 = vmatmul.mubr.bf16.gmra.mrb[0].mxu0 %v483
      %v956 = vpop.f32.mrb[0].mxu0
      %v957 = vadd.f32 %v796, %v956
      %v958 = vpop.f32.mrb[0].mxu0
      %v959 = vpop.f32.mrb[0].mxu0
      %v960 = vadd.f32 %v799, %v959
      %v961 = vpop.f32.mrb[0].mxu0
      %962 = vmatprep.mubr.bf16.mxu0 0
      %963 = vmatmul.mubr.bf16.gmra.mrb[0].mxu0 %v486
      %v964 = vpop.f32.mrb[0].mxu0
      %v965 = vadd.f32 %v804, %v964
      %v966 = vpop.f32.mrb[0].mxu0
      %v967 = vpop.f32.mrb[0].mxu0
      %v968 = vadd.f32 %v807, %v967
      %v969 = vpop.f32.mrb[0].mxu0
      %970 = vmatprep.mubr.bf16.mxu0 0
      %971 = vmatmul.mubr.bf16.gmra.mrb[0].mxu0 %v489
      %v972 = vpop.f32.mrb[0].mxu0
      %v973 = vadd.f32 %v812, %v972
      %v974 = vpop.f32.mrb[0].mxu0
      %v975 = vpop.f32.mrb[0].mxu0
      %v976 = vadd.f32 %v815, %v975
      %v977 = vpop.f32.mrb[0].mxu0
      %978 = vmatprep.mubr.bf16.mxu0 0
      %979 = vmatmul.mubr.bf16.gmra.mrb[0].mxu0 %v492
      %v980 = vpop.f32.mrb[0].mxu0
      %v981 = vadd.f32 %v820, %v980
      %v982 = vpop.f32.mrb[0].mxu0
      %v983 = vpop.f32.mrb[0].mxu0
      %v984 = vadd.f32 %v823, %v983
      %v985 = vpop.f32.mrb[0].mxu0
      %986 = vmatprep.mubr.bf16.mxu0 0
      %987 = vmatmul.mubr.bf16.gmra.mrb[0].mxu0 %v495
      %v988 = vpop.f32.mrb[0].mxu0
      %v989 = vadd.f32 %v828, %v988
      %v990 = vpop.f32.mrb[0].mxu0
      %v991 = vpop.f32.mrb[0].mxu0
      %v992 = vadd.f32 %v831, %v991
      %v993 = vpop.f32.mrb[0].mxu0
      %994 = vmatprep.mubr.bf16.mxu0 0
      %995 = vmatmul.mubr.bf16.gmra.mrb[0].mxu0 %v498
      %v996 = vpop.f32.mrb[0].mxu0
      %v997 = vadd.f32 %v836, %v996
      %v998 = vpop.f32.mrb[0].mxu0
      %v999 = vpop.f32.mrb[0].mxu0
      %v1000 = vadd.f32 %v839, %v999
      %v1001 = vpop.f32.mrb[0].mxu0
      %1002 = vmatprep.mubr.bf16.mxu0 0
      %1003 = vmatmul.mubr.bf16.gmra.mrb[0].mxu0 %v501
      %v1004 = vpop.f32.mrb[0].mxu0
      %v1005 = vadd.f32 %v844, %v1004
      %v1006 = vpop.f32.mrb[0].mxu0
      %v1007 = vpop.f32.mrb[0].mxu0
      %v1008 = vadd.f32 %v847, %v1007
      %v1009 = vpop.f32.mrb[0].mxu0
      %1010 = vmatprep.mubr.bf16.mxu0 0
      %1011 = vmatmul.mubr.bf16.gmra.mrb[0].mxu0 %v504
      %v1012 = vpop.f32.mrb[0].mxu0
      %v1013 = vadd.f32 %v852, %v1012
      %v1014 = vpop.f32.mrb[0].mxu0
      %v1015 = vpop.f32.mrb[0].mxu0
      %v1016 = vadd.f32 %v855, %v1015
      %v1017 = vpop.f32.mrb[0].mxu0
      %1018 = vdwg.mxu0
      %v1019 = vsub.f32 0.0, %v893
      %v1020 = vsub.f32 0.0, %v896
      %v1021 = vsub.f32 0.0, %v901
      %v1022 = vsub.f32 0.0, %v904
      %v1023 = vsub.f32 0.0, %v909
      %v1024 = vsub.f32 0.0, %v912
      %v1025 = vsub.f32 0.0, %v917
      %v1026 = vsub.f32 0.0, %v920
      %v1027 = vsub.f32 0.0, %v925
      %v1028 = vsub.f32 0.0, %v928
      %v1029 = vsub.f32 0.0, %v933
      %v1030 = vsub.f32 0.0, %v936
      %v1031 = vsub.f32 0.0, %v941
      %v1032 = vsub.f32 0.0, %v944
      %v1033 = vsub.f32 0.0, %v949
      %v1034 = vsub.f32 0.0, %v952
      %v1035 = vsub.f32 0.0, %v957
      %v1036 = vsub.f32 0.0, %v960
      %v1037 = vsub.f32 0.0, %v965
      %v1038 = vsub.f32 0.0, %v968
      %v1039 = vsub.f32 0.0, %v973
      %v1040 = vsub.f32 0.0, %v976
      %v1041 = vsub.f32 0.0, %v981
      %v1042 = vsub.f32 0.0, %v984
      %v1043 = vsub.f32 0.0, %v989
      %v1044 = vsub.f32 0.0, %v992
      %v1045 = vsub.f32 0.0, %v997
      %v1046 = vsub.f32 0.0, %v1000
      %v1047 = vsub.f32 0.0, %v1005
      %v1048 = vsub.f32 0.0, %v1008
      %v1049 = vsub.f32 0.0, %v1013
      %v1050 = vsub.f32 0.0, %v1016
      %v1051 = vmul.f32 %v1019, 1.442695
      %v1052 = vpow.pop %v1051
      %v1053 = vmul.f32 %v1020, 1.442695
      %v1054 = vpow.pop %v1053
      %v1055 = vmul.f32 %v1021, 1.442695
      %v1056 = vpow.pop %v1055
      %v1057 = vmul.f32 %v1022, 1.442695
      %v1058 = vpow.pop %v1057
      %v1059 = vmul.f32 %v1023, 1.442695
      %v1060 = vpow.pop %v1059
      %v1061 = vmul.f32 %v1024, 1.442695
      %v1062 = vpow.pop %v1061
      %v1063 = vmul.f32 %v1025, 1.442695
      %v1064 = vpow.pop %v1063
      %v1065 = vmul.f32 %v1026, 1.442695
      %v1066 = vpow.pop %v1065
      %v1067 = vmul.f32 %v1027, 1.442695
      %v1068 = vpow.pop %v1067
      %v1069 = vmul.f32 %v1028, 1.442695
      %v1070 = vpow.pop %v1069
      %v1071 = vmul.f32 %v1029, 1.442695
      %v1072 = vpow.pop %v1071
      %v1073 = vmul.f32 %v1030, 1.442695
      %v1074 = vpow.pop %v1073
      %v1075 = vmul.f32 %v1031, 1.442695
      %v1076 = vpow.pop %v1075
      %v1077 = vmul.f32 %v1032, 1.442695
      %v1078 = vpow.pop %v1077
      %v1079 = vmul.f32 %v1033, 1.442695
      %v1080 = vpow.pop %v1079
      %v1081 = vmul.f32 %v1034, 1.442695
      %v1082 = vpow.pop %v1081
      %v1083 = vmul.f32 %v1035, 1.442695
      %v1084 = vpow.pop %v1083
      %v1085 = vmul.f32 %v1036, 1.442695
      %v1086 = vpow.pop %v1085
      %v1087 = vmul.f32 %v1037, 1.442695
      %v1088 = vpow.pop %v1087
      %v1089 = vmul.f32 %v1038, 1.442695
      %v1090 = vpow.pop %v1089
      %v1091 = vmul.f32 %v1039, 1.442695
      %v1092 = vpow.pop %v1091
      %v1093 = vmul.f32 %v1040, 1.442695
      %v1094 = vpow.pop %v1093
      %v1095 = vmul.f32 %v1041, 1.442695
      %v1096 = vpow.pop %v1095
      %v1097 = vmul.f32 %v1042, 1.442695
      %v1098 = vpow.pop %v1097
      %v1099 = vmul.f32 %v1043, 1.442695
      %v1100 = vpow.pop %v1099
      %v1101 = vmul.f32 %v1044, 1.442695
      %v1102 = vpow.pop %v1101
      %v1103 = vmul.f32 %v1045, 1.442695
      %v1104 = vpow.pop %v1103
      %v1105 = vmul.f32 %v1046, 1.442695
      %v1106 = vpow.pop %v1105
      %v1107 = vmul.f32 %v1047, 1.442695
      %v1108 = vpow.pop %v1107
      %v1109 = vmul.f32 %v1048, 1.442695
      %v1110 = vpow.pop %v1109
      %v1111 = vmul.f32 %v1049, 1.442695
      %v1112 = vpow.pop %v1111
      %v1113 = vmul.f32 %v1050, 1.442695
      %v1114 = vpow.pop %v1113
      %v1115 = vadd.f32 %v1052, 1.0
      %v1116 = vadd.f32 %v1054, 1.0
      %v1117 = vadd.f32 %v1056, 1.0
      %v1118 = vadd.f32 %v1058, 1.0
      %v1119 = vadd.f32 %v1060, 1.0
      %v1120 = vadd.f32 %v1062, 1.0
      %v1121 = vadd.f32 %v1064, 1.0
      %v1122 = vadd.f32 %v1066, 1.0
      %v1123 = vadd.f32 %v1068, 1.0
      %v1124 = vadd.f32 %v1070, 1.0
      %v1125 = vadd.f32 %v1072, 1.0
      %v1126 = vadd.f32 %v1074, 1.0
      %v1127 = vadd.f32 %v1076, 1.0
      %v1128 = vadd.f32 %v1078, 1.0
      %v1129 = vadd.f32 %v1080, 1.0
      %v1130 = vadd.f32 %v1082, 1.0
      %v1131 = vadd.f32 %v1084, 1.0
      %v1132 = vadd.f32 %v1086, 1.0
      %v1133 = vadd.f32 %v1088, 1.0
      %v1134 = vadd.f32 %v1090, 1.0
      %v1135 = vadd.f32 %v1092, 1.0
      %v1136 = vadd.f32 %v1094, 1.0
      %v1137 = vadd.f32 %v1096, 1.0
      %v1138 = vadd.f32 %v1098, 1.0
      %v1139 = vadd.f32 %v1100, 1.0
      %v1140 = vadd.f32 %v1102, 1.0
      %v1141 = vadd.f32 %v1104, 1.0
      %v1142 = vadd.f32 %v1106, 1.0
      %v1143 = vadd.f32 %v1108, 1.0
      %v1144 = vadd.f32 %v1110, 1.0
      %v1145 = vadd.f32 %v1112, 1.0
      %v1146 = vadd.f32 %v1114, 1.0
      %v1147 = vrcp.pop %v1115
      %v1148 = vrcp.pop %v1116
      %v1149 = vrcp.pop %v1117
      %v1150 = vrcp.pop %v1118
      %v1151 = vrcp.pop %v1119
      %v1152 = vrcp.pop %v1120
      %v1153 = vrcp.pop %v1121
      %v1154 = vrcp.pop %v1122
      %v1155 = vrcp.pop %v1123
      %v1156 = vrcp.pop %v1124
      %v1157 = vrcp.pop %v1125
      %v1158 = vrcp.pop %v1126
      %v1159 = vrcp.pop %v1127
      %v1160 = vrcp.pop %v1128
      %v1161 = vrcp.pop %v1129
      %v1162 = vrcp.pop %v1130
      %v1163 = vrcp.pop %v1131
      %v1164 = vrcp.pop %v1132
      %v1165 = vrcp.pop %v1133
      %v1166 = vrcp.pop %v1134
      %v1167 = vrcp.pop %v1135
      %v1168 = vrcp.pop %v1136
      %v1169 = vrcp.pop %v1137
      %v1170 = vrcp.pop %v1138
      %v1171 = vrcp.pop %v1139
      %v1172 = vrcp.pop %v1140
      %v1173 = vrcp.pop %v1141
      %v1174 = vrcp.pop %v1142
      %v1175 = vrcp.pop %v1143
      %v1176 = vrcp.pop %v1144
      %v1177 = vrcp.pop %v1145
      %v1178 = vrcp.pop %v1146
      %1179 = vst [vmem:[%s175] sm:$0xff] %v1147
      %1180 = vst [vmem:[%s175 + $0x8] sm:$0xff] %v1148
      %1181 = vst [vmem:[%s175 + $0x10] sm:$0xff] %v1149
      %1182 = vst [vmem:[%s175 + $0x18] sm:$0xff] %v1150
      %1183 = vst [vmem:[%s175 + $0x20] sm:$0xff] %v1151
      %1184 = vst [vmem:[%s175 + $0x28] sm:$0xff] %v1152
      %1185 = vst [vmem:[%s175 + $0x30] sm:$0xff] %v1153
      %1186 = vst [vmem:[%s175 + $0x38] sm:$0xff] %v1154
      %1187 = vst [vmem:[%s175 + $0x40] sm:$0xff] %v1155
      %1188 = vst [vmem:[%s175 + $0x48] sm:$0xff] %v1156
      %1189 = vst [vmem:[%s175 + $0x50] sm:$0xff] %v1157
      %1190 = vst [vmem:[%s175 + $0x58] sm:$0xff] %v1158
      %1191 = vst [vmem:[%s175 + $0x60] sm:$0xff] %v1159
      %1192 = vst [vmem:[%s175 + $0x68] sm:$0xff] %v1160
      %1193 = vst [vmem:[%s175 + $0x70] sm:$0xff] %v1161
      %1194 = vst [vmem:[%s175 + $0x78] sm:$0xff] %v1162
      %1195 = vst [vmem:[%s175 + $0x80] sm:$0xff] %v1163
      %1196 = vst [vmem:[%s175 + $0x88] sm:$0xff] %v1164
      %1197 = vst [vmem:[%s175 + $0x90] sm:$0xff] %v1165
      %1198 = vst [vmem:[%s175 + $0x98] sm:$0xff] %v1166
      %1199 = vst [vmem:[%s175 + $0xa0] sm:$0xff] %v1167
      %1200 = vst [vmem:[%s175 + $0xa8] sm:$0xff] %v1168
      %1201 = vst [vmem:[%s175 + $0xb0] sm:$0xff] %v1169
      %1202 = vst [vmem:[%s175 + $0xb8] sm:$0xff] %v1170
      %1203 = vst [vmem:[%s175 + $0xc0] sm:$0xff] %v1171
      %1204 = vst [vmem:[%s175 + $0xc8] sm:$0xff] %v1172
      %1205 = vst [vmem:[%s175 + $0xd0] sm:$0xff] %v1173
      %1206 = vst [vmem:[%s175 + $0xd8] sm:$0xff] %v1174
      %1207 = vst [vmem:[%s175 + $0xe0] sm:$0xff] %v1175
      %1208 = vst [vmem:[%s175 + $0xe8] sm:$0xff] %v1176
      %1209 = vst [vmem:[%s175 + $0xf0] sm:$0xff] %v1177
      %1210 = vst [vmem:[%s175 + $0xf8] sm:$0xff] %v1178
      %s1211 = smul.u32 32, %s14
      %p1212 = scmp.lt.s32.totalorder %s1211, 63
      %s1213 = scalar_select %p1212, %s1211, 63
      %s1214 = smul.addr %s1213, 8
      %s1215 = scalar_lea.vmem %s3, %s1214
      // Predicated region
      $region33: #{fwd.39} parent=31 // pred_check
        %p1216 = pneg %p100
      $region34: #{fwd.39} parent=31 // pred_check_branch
        %1218 = sbr.rel (%p1216) target = $region36
      $region35: #{fwd.39} parent=31 // pred_region
        %s1219 = smul.u32 32, %s14
      $region36: #{fwd.39} parent=31 // pred_fallthru
        _
    $region32: #{fwd.39} parent=5 // pred_fallthru
      _
    %p1220 = scmp.le.s32.totalorder 2, %s9
    // Predicated region
    $region37: #{fwd.39} parent=5 // pred_check
      %p1221 = pneg %p1220
    $region38: #{fwd.39} parent=5 // pred_check_branch
      %1223 = sbr.rel (%p1221) target = $region40
    $region39: #{fwd.39} parent=5 // pred_region
      %s1224 = ssub.s32 %s9, 2
      // Predicated region
      $region41: #{fwd.39} parent=39 // pred_check
        %p1225 = pneg %p106
      $region42: #{fwd.39} parent=39 // pred_check_branch
        %1227 = sbr.rel (%p1225) target = $region44
      $region43: #{fwd.39} parent=39 // pred_region
        %s1228 = smul.u32 32, %s15
        %p1229 = scmp.lt.s32.totalorder %s1228, 63
        %s1230 = scalar_select %p1229, %s1228, 63
        %s1231 = smul.addr %s1230, 8
        %s1232 = scalar_lea.vmem %s3, %s1231
      $region44: #{fwd.39} parent=39 // pred_fallthru
        _
    $region40: #{fwd.39} parent=5 // pred_fallthru
      _
  $region6: #{fwd.39} parent=0 // loop_footer
    %s13 = sadd.s32 1, %s9
  $region7: #{fwd.39} parent=0 // loop_footer_branch
    %8 = sbr.rel target = $region3
  $region8: #{fwd.39} parent=0 // loop_exit
    _

</llo_original>
